<compile_context>
chip_gen: v6e
topology: v6e:2x2x1
jax: 0.10.0
libtpu: 0.0.40
codegen_flags: <defaults>
</compile_context>

<pallas_src>
import functools
import math

import jax
import jax.numpy as jnp
from jax import lax
from jax.experimental import pallas as pl
from jax.experimental.pallas import tpu as pltpu

_NS_ITERS = 24  # Newton-Schulz steps for the (s,s) matrix square roots (quadratic conv.)


# ----------------------------------------------------------------------------
# Pallas kernel: fully fused SoS loss (all operands fit in VMEM -> single grid
# point, full-array blocks, scalar outputs in SMEM).
# ----------------------------------------------------------------------------
def _sos_loss_kernel(xs_ref, xt_ref, ms_ref, mt_ref, u_ref, o_ref, *, ns_iters):
    xs = xs_ref[...]          # (n_s, d) raw source samples
    xt = xt_ref[...]          # (n_t, d) raw target samples
    ms = ms_ref[...]          # (s, s)   source moment matrix
    mt = mt_ref[...]          # (s, s)   target moment matrix
    u = u_ref[...]            # (s, s)
    n_s, d = xs.shape
    s = u.shape[0]            # = d + 1 for mord=1
    f32 = jnp.float32

    # (s, s) identity, reused by Newton-Schulz and the reg term.
    rows = lax.broadcasted_iota(jnp.int32, (s, s), 0)
    cols = lax.broadcasted_iota(jnp.int32, (s, s), 1)
    eye = (rows == cols).astype(f32)

    # ---- rho & sqloss (no Veronese slab) ------------------------------------
    # Vsr = [1^T ; Xs^T]  =>  Vsr^T Vsr = 1 + Xs Xs^T   (n_s, n_s)
    k = lax.dot_general(xs, xs, (((1,), (1,)), ((), ())),
                        preferred_element_type=f32) + 1.0
    rho = jnp.sqrt(jnp.sum(k * k)) / (500.0 * math.sqrt(n_s))
    # ||Vsr||_F^2 = n_s + ||Xs||_F^2   (plain sum of squares, no diagonal extraction)
    sq_num = float(n_s) + jnp.sum(xs * xs)

    # ---- Msh = Ms^{1/2}, Mth = Mt^{-1/2} via coupled Newton-Schulz ----------
    # TODO(synk): scipy.linalg.fractional_matrix_power (general, Schur-based) has no
    # Pallas equivalent; Ms/Mt are symmetric PSD moment matrices, so the coupled
    # Newton-Schulz iteration reproduces real(M^{+/-1/2}) for PD inputs (documented
    # deviation if M is singular / indefinite).
    def ns_sqrt(m):
        nrm = jnp.sqrt(jnp.sum(m * m))          # >= lambda_max for symmetric PSD
        a = m / nrm
        y, z = a, eye
        for _ in range(ns_iters):               # static unroll; 3 tiny MXU matmuls/step
            t = 1.5 * eye - 0.5 * jnp.dot(z, y, preferred_element_type=f32)
            y = jnp.dot(y, t, preferred_element_type=f32)
            z = jnp.dot(t, z, preferred_element_type=f32)
        return y, z, nrm                        # y ~ a^{1/2}, z ~ a^{-1/2}

    ys, _, nrm_s = ns_sqrt(ms)
    _, zt, nrm_t = ns_sqrt(mt)
    msh = jnp.sqrt(nrm_s) * ys                  # Ms^{1/2}
    mth = zt / jnp.sqrt(nrm_t)                  # Mt^{-1/2}

    # ---- trloss --------------------------------------------------------------
    a_mat = jnp.dot(jnp.dot(msh, u, preferred_element_type=f32), mth,
                    preferred_element_type=f32)                      # A = Msh U Mth

    # Vtr^T = [1 | Xt] built without concatenate: Xt @ ET shifts Xt right by one lane,
    # the iota mask supplies the ones column.
    r_ds = lax.broadcasted_iota(jnp.int32, (d, s), 0)
    c_ds = lax.broadcasted_iota(jnp.int32, (d, s), 1)
    et = (c_ds == r_ds + 1).astype(f32)                              # (d, s) shifted eye
    ones_col = (lax.broadcasted_iota(jnp.int32, (1, s), 1) == 0).astype(f32)
    vt_row = jnp.dot(xt, et, preferred_element_type=f32) + ones_col  # (n_t, s) = Vtr^T

    # ||A @ Vtr||_F^2 = ||Vtr^T @ A^T||_F^2
    y_mat = lax.dot_general(vt_row, a_mat, (((1,), (1,)), ((), ())),
                            preferred_element_type=f32)              # (n_t, s)
    trterm = jnp.sum(y_mat * y_mat)

    # reg = ||U U^T - I||_F^2  (explicit subtraction: no cancellation)
    uut = lax.dot_general(u, u, (((1,), (1,)), ((), ())), preferred_element_type=f32)
    reg = jnp.sum((uut - eye) ** 2)

    # TODO(synk): the original forward passes the scalar rho as `Minv` to calcQ (an
    # invalid matmul in PyTorch); reproduced here as the scalar scaling it denotes.
    o_ref[0] = (1.0 - rho) * trterm + reg       # trloss
    o_ref[1] = (1.0 - rho) * sq_num             # sqloss


def _sos_loss_pallas(source_tr, target_tr, Ms, Mt, U, *, ns_iters=_NS_ITERS):
    xs = source_tr.astype(jnp.float32)          # no-ops when inputs are already f32
    xt = target_tr.astype(jnp.float32)
    ms = Ms.astype(jnp.float32)
    mt = Mt.astype(jnp.float32)
    u = U.astype(jnp.float32)

    vmem = pl.BlockSpec(memory_space=pltpu.MemorySpace.VMEM)
    out = pl.pallas_call(
        functools.partial(_sos_loss_kernel, ns_iters=ns_iters),
        out_shape=jax.ShapeDtypeStruct((2,), jnp.float32),
        in_specs=[vmem, vmem, vmem, vmem, vmem],   # 5 separate tiny DMAs, no host packing
        out_specs=pl.BlockSpec(memory_space=pltpu.MemorySpace.SMEM),
    )(xs, xt, ms, mt, u)
    return out[0], out[1]


# ----------------------------------------------------------------------------
# Public wrapper (signature parity with SoS_loss(d, mord=1).forward)
# ----------------------------------------------------------------------------
def sos_loss_forward(Ms, Mt, U, source_tr, target_tr, label_source=None,
                     use_squeeze=True):
    """Equivalent of SoS_loss(d, mord=1).forward(...). label_source is unused (as in torch)."""
    trloss, sqloss = _sos_loss_pallas(source_tr, target_tr, Ms, Mt, U)
    if not use_squeeze:
        sqloss = jnp.float32(0.0)
    return trloss, sqloss


# ----------------------------------------------------------------------------
# Pure-JAX reference (eigh-based fractional powers, explicit Veronese maps),
# used only for the correctness check in __main__.
# ----------------------------------------------------------------------------
def _vmap_mord1(x):
    n = x.shape[0]
    return jnp.concatenate([jnp.ones((1, n), x.dtype), x.T], axis=0)   # (d+1, n)


def _sym_fractional_power(m, p):
    w, q = jnp.linalg.eigh(m.astype(jnp.float32))
    w = jnp.maximum(w, 1e-12)
    return (q * (w ** p)) @ q.T


def _sos_loss_reference(Ms, Mt, U, source_tr, target_tr):
    vsr = _vmap_mord1(source_tr)
    vtr = _vmap_mord1(target_tr)
    n_s = vsr.shape[1]
    msh = _sym_fractional_power(Ms, 0.5)
    mth = _sym_fractional_power(Mt, -0.5)
    rho = jnp.linalg.norm(vsr.T @ vsr) / (500.0 * math.sqrt(n_s))
    a = msh @ U @ mth
    x = a @ vtr
    reg = jnp.sum((U @ U.T - jnp.eye(U.shape[0], dtype=jnp.float32)) ** 2)
    tr = (1.0 - rho) * jnp.sum(x * x) + reg
    sq = (1.0 - rho) * jnp.sum(vsr * vsr)
    return tr, sq


if __name__ == "__main__":
    key = jax.random.PRNGKey(0)
    d = 7                 # feature dim
    s = d + 1             # mord=1 -> s = binom(1+d, 1) = 8
    n_s, n_t = 16, 16     # num_samples=16

    k1, k2, k3 = jax.random.split(key, 3)
    source_tr = jax.random.normal(k1, (n_s, d), jnp.float32)
    target_tr = jax.random.normal(k2, (n_t, d), jnp.float32)
    U = 0.1 * jax.random.normal(k3, (s, s), jnp.float32) + jnp.eye(s, dtype=jnp.float32)

    # Moment matrices as produced by SoS_loss.mom(): M = V V^T / n (+ small ridge so that
    # Mt^{-1/2} is well defined).
    vs = _vmap_mord1(source_tr)
    vt = _vmap_mord1(target_tr)
    Ms = vs @ vs.T / n_s + 1e-3 * jnp.eye(s, dtype=jnp.float32)
    Mt = vt @ vt.T / n_t + 1e-3 * jnp.eye(s, dtype=jnp.float32)
    label_source = jnp.zeros((n_s,), jnp.int32)   # unused by forward (signature parity)

    trloss, sqloss = sos_loss_forward(Ms, Mt, U, source_tr, target_tr, label_source)
    jax.block_until_ready((trloss, sqloss))

    tr_ref, sq_ref = _sos_loss_reference(Ms, Mt, U, source_tr, target_tr)
    assert jnp.allclose(trloss, tr_ref, rtol=2e-2, atol=2e-2), (trloss, tr_ref)
    assert jnp.allclose(sqloss, sq_ref, rtol=2e-2, atol=2e-2), (sqloss, sq_ref)

    print("KERNEL_OK")
</pallas_src>

<mosaic_0001>
module attributes {stable_mosaic.version = 11 : i64} {
  func.func @_sos_loss_kernel(%arg0: memref<16x7xf32, #tpu.memory_space<vmem>>, %arg1: memref<16x7xf32, #tpu.memory_space<vmem>>, %arg2: memref<8x8xf32, #tpu.memory_space<vmem>>, %arg3: memref<8x8xf32, #tpu.memory_space<vmem>>, %arg4: memref<8x8xf32, #tpu.memory_space<vmem>>, %arg5: memref<2xf32, #tpu.memory_space<smem>>) attributes {dimension_semantics = [], scalar_prefetch = 0 : i64, scratch_operands = 0 : i64, tpu.core_type = #tpu.core_type<tc>} {
    %c0 = arith.constant 0 : index
    %c0_0 = arith.constant 0 : index
    %0 = vector.load %arg0[%c0, %c0_0] : memref<16x7xf32, #tpu.memory_space<vmem>>, vector<16x7xf32>
    %c0_1 = arith.constant 0 : index
    %c0_2 = arith.constant 0 : index
    %1 = vector.load %arg1[%c0_1, %c0_2] : memref<16x7xf32, #tpu.memory_space<vmem>>, vector<16x7xf32>
    %c0_3 = arith.constant 0 : index
    %c0_4 = arith.constant 0 : index
    %2 = vector.load %arg2[%c0_3, %c0_4] : memref<8x8xf32, #tpu.memory_space<vmem>>, vector<8x8xf32>
    %c0_5 = arith.constant 0 : index
    %c0_6 = arith.constant 0 : index
    %3 = vector.load %arg3[%c0_5, %c0_6] : memref<8x8xf32, #tpu.memory_space<vmem>>, vector<8x8xf32>
    %c0_7 = arith.constant 0 : index
    %c0_8 = arith.constant 0 : index
    %4 = vector.load %arg4[%c0_7, %c0_8] : memref<8x8xf32, #tpu.memory_space<vmem>>, vector<8x8xf32>
    %5 = tpu.iota {dimensions = array<i32: 0>} : vector<8x8xi32>
    %6 = tpu.iota {dimensions = array<i32: 1>} : vector<8x8xi32>
    %7 = arith.cmpi eq, %5, %6 : vector<8x8xi32>
    %8 = arith.extui %7 : vector<8x8xi1> to vector<8x8xi32>
    %9 = arith.sitofp %8 : vector<8x8xi32> to vector<8x8xf32>
    %cst = arith.constant dense<0.000000e+00> : vector<16x16xf32>
    %10 = tpu.matmul %0, %0, %cst {dimension_numbers = #tpu.dot_dimension_numbers<[1], [1], [0], [0], [0, 0, 1, 0], [], []>} : vector<16x7xf32>, vector<16x7xf32>, vector<16x16xf32> -> vector<16x16xf32>
    %cst_9 = arith.constant 1.000000e+00 : f32
    %11 = vector.broadcast %cst_9 : f32 to vector<16x16xf32>
    %12 = arith.addf %10, %11 : vector<16x16xf32>
    %13 = arith.mulf %12, %12 : vector<16x16xf32>
    %14 = vector.shape_cast %13 : vector<16x16xf32> to vector<1x16x16xf32>
    %cst_10 = arith.constant dense<0.000000e+00> : vector<1xf32>
    %15 = vector.multi_reduction <add>, %14, %cst_10 [1, 2] : vector<1x16x16xf32> to vector<1xf32>
    %16 = vector.shape_cast %15 : vector<1xf32> to vector<1x1x1xf32>
    %17 = vector.extract %16[0, 0, 0] : f32 from vector<1x1x1xf32>
    %18 = math.sqrt %17 : f32
    %cst_11 = arith.constant 2.000000e+03 : f32
    %19 = arith.divf %18, %cst_11 : f32
    %20 = arith.mulf %0, %0 : vector<16x7xf32>
    %21 = vector.shape_cast %20 : vector<16x7xf32> to vector<1x16x7xf32>
    %cst_12 = arith.constant dense<0.000000e+00> : vector<1xf32>
    %22 = vector.multi_reduction <add>, %21, %cst_12 [1, 2] : vector<1x16x7xf32> to vector<1xf32>
    %23 = vector.shape_cast %22 : vector<1xf32> to vector<1x1x1xf32>
    %24 = vector.extract %23[0, 0, 0] : f32 from vector<1x1x1xf32>
    %cst_13 = arith.constant 1.600000e+01 : f32
    %25 = arith.addf %cst_13, %24 : f32
    %26 = arith.mulf %2, %2 : vector<8x8xf32>
    %27 = vector.shape_cast %26 : vector<8x8xf32> to vector<1x8x8xf32>
    %cst_14 = arith.constant dense<0.000000e+00> : vector<1xf32>
    %28 = vector.multi_reduction <add>, %27, %cst_14 [1, 2] : vector<1x8x8xf32> to vector<1xf32>
    %29 = vector.shape_cast %28 : vector<1xf32> to vector<1x1x1xf32>
    %30 = vector.extract %29[0, 0, 0] : f32 from vector<1x1x1xf32>
    %31 = math.sqrt %30 : f32
    %32 = vector.broadcast %31 : f32 to vector<8x8xf32>
    %33 = arith.divf %2, %32 : vector<8x8xf32>
    %cst_15 = arith.constant 1.500000e+00 : f32
    %34 = vector.broadcast %cst_15 : f32 to vector<8x8xf32>
    %35 = arith.mulf %34, %9 : vector<8x8xf32>
    %cst_16 = arith.constant dense<0.000000e+00> : vector<8x8xf32>
    %36 = tpu.matmul %9, %33, %cst_16 {dimension_numbers = #tpu.dot_dimension_numbers<[1], [0], [0], [1], [0, 0, 1, 1], [], []>} : vector<8x8xf32>, vector<8x8xf32>, vector<8x8xf32> -> vector<8x8xf32>
    %cst_17 = arith.constant 5.000000e-01 : f32
    %37 = vector.broadcast %cst_17 : f32 to vector<8x8xf32>
    %38 = arith.mulf %37, %36 : vector<8x8xf32>
    %39 = arith.subf %35, %38 : vector<8x8xf32>
    %cst_18 = arith.constant dense<0.000000e+00> : vector<8x8xf32>
    %40 = tpu.matmul %33, %39, %cst_18 {dimension_numbers = #tpu.dot_dimension_numbers<[1], [0], [0], [1], [0, 0, 1, 1], [], []>} : vector<8x8xf32>, vector<8x8xf32>, vector<8x8xf32> -> vector<8x8xf32>
    %cst_19 = arith.constant dense<0.000000e+00> : vector<8x8xf32>
    %41 = tpu.matmul %39, %9, %cst_19 {dimension_numbers = #tpu.dot_dimension_numbers<[1], [0], [0], [1], [0, 0, 1, 1], [], []>} : vector<8x8xf32>, vector<8x8xf32>, vector<8x8xf32> -> vector<8x8xf32>
    %cst_20 = arith.constant 1.500000e+00 : f32
    %42 = vector.broadcast %cst_20 : f32 to vector<8x8xf32>
    %43 = arith.mulf %42, %9 : vector<8x8xf32>
    %cst_21 = arith.constant dense<0.000000e+00> : vector<8x8xf32>
    %44 = tpu.matmul %41, %40, %cst_21 {dimension_numbers = #tpu.dot_dimension_numbers<[1], [0], [0], [1], [0, 0, 1, 1], [], []>} : vector<8x8xf32>, vector<8x8xf32>, vector<8x8xf32> -> vector<8x8xf32>
    %cst_22 = arith.constant 5.000000e-01 : f32
    %45 = vector.broadcast %cst_22 : f32 to vector<8x8xf32>
    %46 = arith.mulf %45, %44 : vector<8x8xf32>
    %47 = arith.subf %43, %46 : vector<8x8xf32>
    %cst_23 = arith.constant dense<0.000000e+00> : vector<8x8xf32>
    %48 = tpu.matmul %40, %47, %cst_23 {dimension_numbers = #tpu.dot_dimension_numbers<[1], [0], [0], [1], [0, 0, 1, 1], [], []>} : vector<8x8xf32>, vector<8x8xf32>, vector<8x8xf32> -> vector<8x8xf32>
    %cst_24 = arith.constant dense<0.000000e+00> : vector<8x8xf32>
    %49 = tpu.matmul %47, %41, %cst_24 {dimension_numbers = #tpu.dot_dimension_numbers<[1], [0], [0], [1], [0, 0, 1, 1], [], []>} : vector<8x8xf32>, vector<8x8xf32>, vector<8x8xf32> -> vector<8x8xf32>
    %cst_25 = arith.constant 1.500000e+00 : f32
    %50 = vector.broadcast %cst_25 : f32 to vector<8x8xf32>
    %51 = arith.mulf %50, %9 : vector<8x8xf32>
    %cst_26 = arith.constant dense<0.000000e+00> : vector<8x8xf32>
    %52 = tpu.matmul %49, %48, %cst_26 {dimension_numbers = #tpu.dot_dimension_numbers<[1], [0], [0], [1], [0, 0, 1, 1], [], []>} : vector<8x8xf32>, vector<8x8xf32>, vector<8x8xf32> -> vector<8x8xf32>
    %cst_27 = arith.constant 5.000000e-01 : f32
    %53 = vector.broadcast %cst_27 : f32 to vector<8x8xf32>
    %54 = arith.mulf %53, %52 : vector<8x8xf32>
    %55 = arith.subf %51, %54 : vector<8x8xf32>
    %cst_28 = arith.constant dense<0.000000e+00> : vector<8x8xf32>
    %56 = tpu.matmul %48, %55, %cst_28 {dimension_numbers = #tpu.dot_dimension_numbers<[1], [0], [0], [1], [0, 0, 1, 1], [], []>} : vector<8x8xf32>, vector<8x8xf32>, vector<8x8xf32> -> vector<8x8xf32>
    %cst_29 = arith.constant dense<0.000000e+00> : vector<8x8xf32>
    %57 = tpu.matmul %55, %49, %cst_29 {dimension_numbers = #tpu.dot_dimension_numbers<[1], [0], [0], [1], [0, 0, 1, 1], [], []>} : vector<8x8xf32>, vector<8x8xf32>, vector<8x8xf32> -> vector<8x8xf32>
    %cst_30 = arith.constant 1.500000e+00 : f32
    %58 = vector.broadcast %cst_30 : f32 to vector<8x8xf32>
    %59 = arith.mulf %58, %9 : vector<8x8xf32>
    %cst_31 = arith.constant dense<0.000000e+00> : vector<8x8xf32>
    %60 = tpu.matmul %57, %56, %cst_31 {dimension_numbers = #tpu.dot_dimension_numbers<[1], [0], [0], [1], [0, 0, 1, 1], [], []>} : vector<8x8xf32>, vector<8x8xf32>, vector<8x8xf32> -> vector<8x8xf32>
    %cst_32 = arith.constant 5.000000e-01 : f32
    %61 = vector.broadcast %cst_32 : f32 to vector<8x8xf32>
    %62 = arith.mulf %61, %60 : vector<8x8xf32>
    %63 = arith.subf %59, %62 : vector<8x8xf32>
    %cst_33 = arith.constant dense<0.000000e+00> : vector<8x8xf32>
    %64 = tpu.matmul %56, %63, %cst_33 {dimension_numbers = #tpu.dot_dimension_numbers<[1], [0], [0], [1], [0, 0, 1, 1], [], []>} : vector<8x8xf32>, vector<8x8xf32>, vector<8x8xf32> -> vector<8x8xf32>
    %cst_34 = arith.constant dense<0.000000e+00> : vector<8x8xf32>
    %65 = tpu.matmul %63, %57, %cst_34 {dimension_numbers = #tpu.dot_dimension_numbers<[1], [0], [0], [1], [0, 0, 1, 1], [], []>} : vector<8x8xf32>, vector<8x8xf32>, vector<8x8xf32> -> vector<8x8xf32>
    %cst_35 = arith.constant 1.500000e+00 : f32
    %66 = vector.broadcast %cst_35 : f32 to vector<8x8xf32>
    %67 = arith.mulf %66, %9 : vector<8x8xf32>
    %cst_36 = arith.constant dense<0.000000e+00> : vector<8x8xf32>
    %68 = tpu.matmul %65, %64, %cst_36 {dimension_numbers = #tpu.dot_dimension_numbers<[1], [0], [0], [1], [0, 0, 1, 1], [], []>} : vector<8x8xf32>, vector<8x8xf32>, vector<8x8xf32> -> vector<8x8xf32>
    %cst_37 = arith.constant 5.000000e-01 : f32
    %69 = vector.broadcast %cst_37 : f32 to vector<8x8xf32>
    %70 = arith.mulf %69, %68 : vector<8x8xf32>
    %71 = arith.subf %67, %70 : vector<8x8xf32>
    %cst_38 = arith.constant dense<0.000000e+00> : vector<8x8xf32>
    %72 = tpu.matmul %64, %71, %cst_38 {dimension_numbers = #tpu.dot_dimension_numbers<[1], [0], [0], [1], [0, 0, 1, 1], [], []>} : vector<8x8xf32>, vector<8x8xf32>, vector<8x8xf32> -> vector<8x8xf32>
    %cst_39 = arith.constant dense<0.000000e+00> : vector<8x8xf32>
    %73 = tpu.matmul %71, %65, %cst_39 {dimension_numbers = #tpu.dot_dimension_numbers<[1], [0], [0], [1], [0, 0, 1, 1], [], []>} : vector<8x8xf32>, vector<8x8xf32>, vector<8x8xf32> -> vector<8x8xf32>
    %cst_40 = arith.constant 1.500000e+00 : f32
    %74 = vector.broadcast %cst_40 : f32 to vector<8x8xf32>
    %75 = arith.mulf %74, %9 : vector<8x8xf32>
    %cst_41 = arith.constant dense<0.000000e+00> : vector<8x8xf32>
    %76 = tpu.matmul %73, %72, %cst_41 {dimension_numbers = #tpu.dot_dimension_numbers<[1], [0], [0], [1], [0, 0, 1, 1], [], []>} : vector<8x8xf32>, vector<8x8xf32>, vector<8x8xf32> -> vector<8x8xf32>
    %cst_42 = arith.constant 5.000000e-01 : f32
    %77 = vector.broadcast %cst_42 : f32 to vector<8x8xf32>
    %78 = arith.mulf %77, %76 : vector<8x8xf32>
    %79 = arith.subf %75, %78 : vector<8x8xf32>
    %cst_43 = arith.constant dense<0.000000e+00> : vector<8x8xf32>
    %80 = tpu.matmul %72, %79, %cst_43 {dimension_numbers = #tpu.dot_dimension_numbers<[1], [0], [0], [1], [0, 0, 1, 1], [], []>} : vector<8x8xf32>, vector<8x8xf32>, vector<8x8xf32> -> vector<8x8xf32>
    %cst_44 = arith.constant dense<0.000000e+00> : vector<8x8xf32>
    %81 = tpu.matmul %79, %73, %cst_44 {dimension_numbers = #tpu.dot_dimension_numbers<[1], [0], [0], [1], [0, 0, 1, 1], [], []>} : vector<8x8xf32>, vector<8x8xf32>, vector<8x8xf32> -> vector<8x8xf32>
    %cst_45 = arith.constant 1.500000e+00 : f32
    %82 = vector.broadcast %cst_45 : f32 to vector<8x8xf32>
    %83 = arith.mulf %82, %9 : vector<8x8xf32>
    %cst_46 = arith.constant dense<0.000000e+00> : vector<8x8xf32>
    %84 = tpu.matmul %81, %80, %cst_46 {dimension_numbers = #tpu.dot_dimension_numbers<[1], [0], [0], [1], [0, 0, 1, 1], [], []>} : vector<8x8xf32>, vector<8x8xf32>, vector<8x8xf32> -> vector<8x8xf32>
    %cst_47 = arith.constant 5.000000e-01 : f32
    %85 = vector.broadcast %cst_47 : f32 to vector<8x8xf32>
    %86 = arith.mulf %85, %84 : vector<8x8xf32>
    %87 = arith.subf %83, %86 : vector<8x8xf32>
    %cst_48 = arith.constant dense<0.000000e+00> : vector<8x8xf32>
    %88 = tpu.matmul %80, %87, %cst_48 {dimension_numbers = #tpu.dot_dimension_numbers<[1], [0], [0], [1], [0, 0, 1, 1], [], []>} : vector<8x8xf32>, vector<8x8xf32>, vector<8x8xf32> -> vector<8x8xf32>
    %cst_49 = arith.constant dense<0.000000e+00> : vector<8x8xf32>
    %89 = tpu.matmul %87, %81, %cst_49 {dimension_numbers = #tpu.dot_dimension_numbers<[1], [0], [0], [1], [0, 0, 1, 1], [], []>} : vector<8x8xf32>, vector<8x8xf32>, vector<8x8xf32> -> vector<8x8xf32>
    %cst_50 = arith.constant 1.500000e+00 : f32
    %90 = vector.broadcast %cst_50 : f32 to vector<8x8xf32>
    %91 = arith.mulf %90, %9 : vector<8x8xf32>
    %cst_51 = arith.constant dense<0.000000e+00> : vector<8x8xf32>
    %92 = tpu.matmul %89, %88, %cst_51 {dimension_numbers = #tpu.dot_dimension_numbers<[1], [0], [0], [1], [0, 0, 1, 1], [], []>} : vector<8x8xf32>, vector<8x8xf32>, vector<8x8xf32> -> vector<8x8xf32>
    %cst_52 = arith.constant 5.000000e-01 : f32
    %93 = vector.broadcast %cst_52 : f32 to vector<8x8xf32>
    %94 = arith.mulf %93, %92 : vector<8x8xf32>
    %95 = arith.subf %91, %94 : vector<8x8xf32>
    %cst_53 = arith.constant dense<0.000000e+00> : vector<8x8xf32>
    %96 = tpu.matmul %88, %95, %cst_53 {dimension_numbers = #tpu.dot_dimension_numbers<[1], [0], [0], [1], [0, 0, 1, 1], [], []>} : vector<8x8xf32>, vector<8x8xf32>, vector<8x8xf32> -> vector<8x8xf32>
    %cst_54 = arith.constant dense<0.000000e+00> : vector<8x8xf32>
    %97 = tpu.matmul %95, %89, %cst_54 {dimension_numbers = #tpu.dot_dimension_numbers<[1], [0], [0], [1], [0, 0, 1, 1], [], []>} : vector<8x8xf32>, vector<8x8xf32>, vector<8x8xf32> -> vector<8x8xf32>
    %cst_55 = arith.constant 1.500000e+00 : f32
    %98 = vector.broadcast %cst_55 : f32 to vector<8x8xf32>
    %99 = arith.mulf %98, %9 : vector<8x8xf32>
    %cst_56 = arith.constant dense<0.000000e+00> : vector<8x8xf32>
    %100 = tpu.matmul %97, %96, %cst_56 {dimension_numbers = #tpu.dot_dimension_numbers<[1], [0], [0], [1], [0, 0, 1, 1], [], []>} : vector<8x8xf32>, vector<8x8xf32>, vector<8x8xf32> -> vector<8x8xf32>
    %cst_57 = arith.constant 5.000000e-01 : f32
    %101 = vector.broadcast %cst_57 : f32 to vector<8x8xf32>
    %102 = arith.mulf %101, %100 : vector<8x8xf32>
    %103 = arith.subf %99, %102 : vector<8x8xf32>
    %cst_58 = arith.constant dense<0.000000e+00> : vector<8x8xf32>
    %104 = tpu.matmul %96, %103, %cst_58 {dimension_numbers = #tpu.dot_dimension_numbers<[1], [0], [0], [1], [0, 0, 1, 1], [], []>} : vector<8x8xf32>, vector<8x8xf32>, vector<8x8xf32> -> vector<8x8xf32>
    %cst_59 = arith.constant dense<0.000000e+00> : vector<8x8xf32>
    %105 = tpu.matmul %103, %97, %cst_59 {dimension_numbers = #tpu.dot_dimension_numbers<[1], [0], [0], [1], [0, 0, 1, 1], [], []>} : vector<8x8xf32>, vector<8x8xf32>, vector<8x8xf32> -> vector<8x8xf32>
    %cst_60 = arith.constant 1.500000e+00 : f32
    %106 = vector.broadcast %cst_60 : f32 to vector<8x8xf32>
    %107 = arith.mulf %106, %9 : vector<8x8xf32>
    %cst_61 = arith.constant dense<0.000000e+00> : vector<8x8xf32>
    %108 = tpu.matmul %105, %104, %cst_61 {dimension_numbers = #tpu.dot_dimension_numbers<[1], [0], [0], [1], [0, 0, 1, 1], [], []>} : vector<8x8xf32>, vector<8x8xf32>, vector<8x8xf32> -> vector<8x8xf32>
    %cst_62 = arith.constant 5.000000e-01 : f32
    %109 = vector.broadcast %cst_62 : f32 to vector<8x8xf32>
    %110 = arith.mulf %109, %108 : vector<8x8xf32>
    %111 = arith.subf %107, %110 : vector<8x8xf32>
    %cst_63 = arith.constant dense<0.000000e+00> : vector<8x8xf32>
    %112 = tpu.matmul %104, %111, %cst_63 {dimension_numbers = #tpu.dot_dimension_numbers<[1], [0], [0], [1], [0, 0, 1, 1], [], []>} : vector<8x8xf32>, vector<8x8xf32>, vector<8x8xf32> -> vector<8x8xf32>
    %cst_64 = arith.constant dense<0.000000e+00> : vector<8x8xf32>
    %113 = tpu.matmul %111, %105, %cst_64 {dimension_numbers = #tpu.dot_dimension_numbers<[1], [0], [0], [1], [0, 0, 1, 1], [], []>} : vector<8x8xf32>, vector<8x8xf32>, vector<8x8xf32> -> vector<8x8xf32>
    %cst_65 = arith.constant 1.500000e+00 : f32
    %114 = vector.broadcast %cst_65 : f32 to vector<8x8xf32>
    %115 = arith.mulf %114, %9 : vector<8x8xf32>
    %cst_66 = arith.constant dense<0.000000e+00> : vector<8x8xf32>
    %116 = tpu.matmul %113, %112, %cst_66 {dimension_numbers = #tpu.dot_dimension_numbers<[1], [0], [0], [1], [0, 0, 1, 1], [], []>} : vector<8x8xf32>, vector<8x8xf32>, vector<8x8xf32> -> vector<8x8xf32>
    %cst_67 = arith.constant 5.000000e-01 : f32
    %117 = vector.broadcast %cst_67 : f32 to vector<8x8xf32>
    %118 = arith.mulf %117, %116 : vector<8x8xf32>
    %119 = arith.subf %115, %118 : vector<8x8xf32>
    %cst_68 = arith.constant dense<0.000000e+00> : vector<8x8xf32>
    %120 = tpu.matmul %112, %119, %cst_68 {dimension_numbers = #tpu.dot_dimension_numbers<[1], [0], [0], [1], [0, 0, 1, 1], [], []>} : vector<8x8xf32>, vector<8x8xf32>, vector<8x8xf32> -> vector<8x8xf32>
    %cst_69 = arith.constant dense<0.000000e+00> : vector<8x8xf32>
    %121 = tpu.matmul %119, %113, %cst_69 {dimension_numbers = #tpu.dot_dimension_numbers<[1], [0], [0], [1], [0, 0, 1, 1], [], []>} : vector<8x8xf32>, vector<8x8xf32>, vector<8x8xf32> -> vector<8x8xf32>
    %cst_70 = arith.constant 1.500000e+00 : f32
    %122 = vector.broadcast %cst_70 : f32 to vector<8x8xf32>
    %123 = arith.mulf %122, %9 : vector<8x8xf32>
    %cst_71 = arith.constant dense<0.000000e+00> : vector<8x8xf32>
    %124 = tpu.matmul %121, %120, %cst_71 {dimension_numbers = #tpu.dot_dimension_numbers<[1], [0], [0], [1], [0, 0, 1, 1], [], []>} : vector<8x8xf32>, vector<8x8xf32>, vector<8x8xf32> -> vector<8x8xf32>
    %cst_72 = arith.constant 5.000000e-01 : f32
    %125 = vector.broadcast %cst_72 : f32 to vector<8x8xf32>
    %126 = arith.mulf %125, %124 : vector<8x8xf32>
    %127 = arith.subf %123, %126 : vector<8x8xf32>
    %cst_73 = arith.constant dense<0.000000e+00> : vector<8x8xf32>
    %128 = tpu.matmul %120, %127, %cst_73 {dimension_numbers = #tpu.dot_dimension_numbers<[1], [0], [0], [1], [0, 0, 1, 1], [], []>} : vector<8x8xf32>, vector<8x8xf32>, vector<8x8xf32> -> vector<8x8xf32>
    %cst_74 = arith.constant dense<0.000000e+00> : vector<8x8xf32>
    %129 = tpu.matmul %127, %121, %cst_74 {dimension_numbers = #tpu.dot_dimension_numbers<[1], [0], [0], [1], [0, 0, 1, 1], [], []>} : vector<8x8xf32>, vector<8x8xf32>, vector<8x8xf32> -> vector<8x8xf32>
    %cst_75 = arith.constant 1.500000e+00 : f32
    %130 = vector.broadcast %cst_75 : f32 to vector<8x8xf32>
    %131 = arith.mulf %130, %9 : vector<8x8xf32>
    %cst_76 = arith.constant dense<0.000000e+00> : vector<8x8xf32>
    %132 = tpu.matmul %129, %128, %cst_76 {dimension_numbers = #tpu.dot_dimension_numbers<[1], [0], [0], [1], [0, 0, 1, 1], [], []>} : vector<8x8xf32>, vector<8x8xf32>, vector<8x8xf32> -> vector<8x8xf32>
    %cst_77 = arith.constant 5.000000e-01 : f32
    %133 = vector.broadcast %cst_77 : f32 to vector<8x8xf32>
    %134 = arith.mulf %133, %132 : vector<8x8xf32>
    %135 = arith.subf %131, %134 : vector<8x8xf32>
    %cst_78 = arith.constant dense<0.000000e+00> : vector<8x8xf32>
    %136 = tpu.matmul %128, %135, %cst_78 {dimension_numbers = #tpu.dot_dimension_numbers<[1], [0], [0], [1], [0, 0, 1, 1], [], []>} : vector<8x8xf32>, vector<8x8xf32>, vector<8x8xf32> -> vector<8x8xf32>
    %cst_79 = arith.constant dense<0.000000e+00> : vector<8x8xf32>
    %137 = tpu.matmul %135, %129, %cst_79 {dimension_numbers = #tpu.dot_dimension_numbers<[1], [0], [0], [1], [0, 0, 1, 1], [], []>} : vector<8x8xf32>, vector<8x8xf32>, vector<8x8xf32> -> vector<8x8xf32>
    %cst_80 = arith.constant 1.500000e+00 : f32
    %138 = vector.broadcast %cst_80 : f32 to vector<8x8xf32>
    %139 = arith.mulf %138, %9 : vector<8x8xf32>
    %cst_81 = arith.constant dense<0.000000e+00> : vector<8x8xf32>
    %140 = tpu.matmul %137, %136, %cst_81 {dimension_numbers = #tpu.dot_dimension_numbers<[1], [0], [0], [1], [0, 0, 1, 1], [], []>} : vector<8x8xf32>, vector<8x8xf32>, vector<8x8xf32> -> vector<8x8xf32>
    %cst_82 = arith.constant 5.000000e-01 : f32
    %141 = vector.broadcast %cst_82 : f32 to vector<8x8xf32>
    %142 = arith.mulf %141, %140 : vector<8x8xf32>
    %143 = arith.subf %139, %142 : vector<8x8xf32>
    %cst_83 = arith.constant dense<0.000000e+00> : vector<8x8xf32>
    %144 = tpu.matmul %136, %143, %cst_83 {dimension_numbers = #tpu.dot_dimension_numbers<[1], [0], [0], [1], [0, 0, 1, 1], [], []>} : vector<8x8xf32>, vector<8x8xf32>, vector<8x8xf32> -> vector<8x8xf32>
    %cst_84 = arith.constant dense<0.000000e+00> : vector<8x8xf32>
    %145 = tpu.matmul %143, %137, %cst_84 {dimension_numbers = #tpu.dot_dimension_numbers<[1], [0], [0], [1], [0, 0, 1, 1], [], []>} : vector<8x8xf32>, vector<8x8xf32>, vector<8x8xf32> -> vector<8x8xf32>
    %cst_85 = arith.constant 1.500000e+00 : f32
    %146 = vector.broadcast %cst_85 : f32 to vector<8x8xf32>
    %147 = arith.mulf %146, %9 : vector<8x8xf32>
    %cst_86 = arith.constant dense<0.000000e+00> : vector<8x8xf32>
    %148 = tpu.matmul %145, %144, %cst_86 {dimension_numbers = #tpu.dot_dimension_numbers<[1], [0], [0], [1], [0, 0, 1, 1], [], []>} : vector<8x8xf32>, vector<8x8xf32>, vector<8x8xf32> -> vector<8x8xf32>
    %cst_87 = arith.constant 5.000000e-01 : f32
    %149 = vector.broadcast %cst_87 : f32 to vector<8x8xf32>
    %150 = arith.mulf %149, %148 : vector<8x8xf32>
    %151 = arith.subf %147, %150 : vector<8x8xf32>
    %cst_88 = arith.constant dense<0.000000e+00> : vector<8x8xf32>
    %152 = tpu.matmul %144, %151, %cst_88 {dimension_numbers = #tpu.dot_dimension_numbers<[1], [0], [0], [1], [0, 0, 1, 1], [], []>} : vector<8x8xf32>, vector<8x8xf32>, vector<8x8xf32> -> vector<8x8xf32>
    %cst_89 = arith.constant dense<0.000000e+00> : vector<8x8xf32>
    %153 = tpu.matmul %151, %145, %cst_89 {dimension_numbers = #tpu.dot_dimension_numbers<[1], [0], [0], [1], [0, 0, 1, 1], [], []>} : vector<8x8xf32>, vector<8x8xf32>, vector<8x8xf32> -> vector<8x8xf32>
    %cst_90 = arith.constant 1.500000e+00 : f32
    %154 = vector.broadcast %cst_90 : f32 to vector<8x8xf32>
    %155 = arith.mulf %154, %9 : vector<8x8xf32>
    %cst_91 = arith.constant dense<0.000000e+00> : vector<8x8xf32>
    %156 = tpu.matmul %153, %152, %cst_91 {dimension_numbers = #tpu.dot_dimension_numbers<[1], [0], [0], [1], [0, 0, 1, 1], [], []>} : vector<8x8xf32>, vector<8x8xf32>, vector<8x8xf32> -> vector<8x8xf32>
    %cst_92 = arith.constant 5.000000e-01 : f32
    %157 = vector.broadcast %cst_92 : f32 to vector<8x8xf32>
    %158 = arith.mulf %157, %156 : vector<8x8xf32>
    %159 = arith.subf %155, %158 : vector<8x8xf32>
    %cst_93 = arith.constant dense<0.000000e+00> : vector<8x8xf32>
    %160 = tpu.matmul %152, %159, %cst_93 {dimension_numbers = #tpu.dot_dimension_numbers<[1], [0], [0], [1], [0, 0, 1, 1], [], []>} : vector<8x8xf32>, vector<8x8xf32>, vector<8x8xf32> -> vector<8x8xf32>
    %cst_94 = arith.constant dense<0.000000e+00> : vector<8x8xf32>
    %161 = tpu.matmul %159, %153, %cst_94 {dimension_numbers = #tpu.dot_dimension_numbers<[1], [0], [0], [1], [0, 0, 1, 1], [], []>} : vector<8x8xf32>, vector<8x8xf32>, vector<8x8xf32> -> vector<8x8xf32>
    %cst_95 = arith.constant 1.500000e+00 : f32
    %162 = vector.broadcast %cst_95 : f32 to vector<8x8xf32>
    %163 = arith.mulf %162, %9 : vector<8x8xf32>
    %cst_96 = arith.constant dense<0.000000e+00> : vector<8x8xf32>
    %164 = tpu.matmul %161, %160, %cst_96 {dimension_numbers = #tpu.dot_dimension_numbers<[1], [0], [0], [1], [0, 0, 1, 1], [], []>} : vector<8x8xf32>, vector<8x8xf32>, vector<8x8xf32> -> vector<8x8xf32>
    %cst_97 = arith.constant 5.000000e-01 : f32
    %165 = vector.broadcast %cst_97 : f32 to vector<8x8xf32>
    %166 = arith.mulf %165, %164 : vector<8x8xf32>
    %167 = arith.subf %163, %166 : vector<8x8xf32>
    %cst_98 = arith.constant dense<0.000000e+00> : vector<8x8xf32>
    %168 = tpu.matmul %160, %167, %cst_98 {dimension_numbers = #tpu.dot_dimension_numbers<[1], [0], [0], [1], [0, 0, 1, 1], [], []>} : vector<8x8xf32>, vector<8x8xf32>, vector<8x8xf32> -> vector<8x8xf32>
    %cst_99 = arith.constant dense<0.000000e+00> : vector<8x8xf32>
    %169 = tpu.matmul %167, %161, %cst_99 {dimension_numbers = #tpu.dot_dimension_numbers<[1], [0], [0], [1], [0, 0, 1, 1], [], []>} : vector<8x8xf32>, vector<8x8xf32>, vector<8x8xf32> -> vector<8x8xf32>
    %cst_100 = arith.constant 1.500000e+00 : f32
    %170 = vector.broadcast %cst_100 : f32 to vector<8x8xf32>
    %171 = arith.mulf %170, %9 : vector<8x8xf32>
    %cst_101 = arith.constant dense<0.000000e+00> : vector<8x8xf32>
    %172 = tpu.matmul %169, %168, %cst_101 {dimension_numbers = #tpu.dot_dimension_numbers<[1], [0], [0], [1], [0, 0, 1, 1], [], []>} : vector<8x8xf32>, vector<8x8xf32>, vector<8x8xf32> -> vector<8x8xf32>
    %cst_102 = arith.constant 5.000000e-01 : f32
    %173 = vector.broadcast %cst_102 : f32 to vector<8x8xf32>
    %174 = arith.mulf %173, %172 : vector<8x8xf32>
    %175 = arith.subf %171, %174 : vector<8x8xf32>
    %cst_103 = arith.constant dense<0.000000e+00> : vector<8x8xf32>
    %176 = tpu.matmul %168, %175, %cst_103 {dimension_numbers = #tpu.dot_dimension_numbers<[1], [0], [0], [1], [0, 0, 1, 1], [], []>} : vector<8x8xf32>, vector<8x8xf32>, vector<8x8xf32> -> vector<8x8xf32>
    %cst_104 = arith.constant dense<0.000000e+00> : vector<8x8xf32>
    %177 = tpu.matmul %175, %169, %cst_104 {dimension_numbers = #tpu.dot_dimension_numbers<[1], [0], [0], [1], [0, 0, 1, 1], [], []>} : vector<8x8xf32>, vector<8x8xf32>, vector<8x8xf32> -> vector<8x8xf32>
    %cst_105 = arith.constant 1.500000e+00 : f32
    %178 = vector.broadcast %cst_105 : f32 to vector<8x8xf32>
    %179 = arith.mulf %178, %9 : vector<8x8xf32>
    %cst_106 = arith.constant dense<0.000000e+00> : vector<8x8xf32>
    %180 = tpu.matmul %177, %176, %cst_106 {dimension_numbers = #tpu.dot_dimension_numbers<[1], [0], [0], [1], [0, 0, 1, 1], [], []>} : vector<8x8xf32>, vector<8x8xf32>, vector<8x8xf32> -> vector<8x8xf32>
    %cst_107 = arith.constant 5.000000e-01 : f32
    %181 = vector.broadcast %cst_107 : f32 to vector<8x8xf32>
    %182 = arith.mulf %181, %180 : vector<8x8xf32>
    %183 = arith.subf %179, %182 : vector<8x8xf32>
    %cst_108 = arith.constant dense<0.000000e+00> : vector<8x8xf32>
    %184 = tpu.matmul %176, %183, %cst_108 {dimension_numbers = #tpu.dot_dimension_numbers<[1], [0], [0], [1], [0, 0, 1, 1], [], []>} : vector<8x8xf32>, vector<8x8xf32>, vector<8x8xf32> -> vector<8x8xf32>
    %cst_109 = arith.constant dense<0.000000e+00> : vector<8x8xf32>
    %185 = tpu.matmul %183, %177, %cst_109 {dimension_numbers = #tpu.dot_dimension_numbers<[1], [0], [0], [1], [0, 0, 1, 1], [], []>} : vector<8x8xf32>, vector<8x8xf32>, vector<8x8xf32> -> vector<8x8xf32>
    %cst_110 = arith.constant 1.500000e+00 : f32
    %186 = vector.broadcast %cst_110 : f32 to vector<8x8xf32>
    %187 = arith.mulf %186, %9 : vector<8x8xf32>
    %cst_111 = arith.constant dense<0.000000e+00> : vector<8x8xf32>
    %188 = tpu.matmul %185, %184, %cst_111 {dimension_numbers = #tpu.dot_dimension_numbers<[1], [0], [0], [1], [0, 0, 1, 1], [], []>} : vector<8x8xf32>, vector<8x8xf32>, vector<8x8xf32> -> vector<8x8xf32>
    %cst_112 = arith.constant 5.000000e-01 : f32
    %189 = vector.broadcast %cst_112 : f32 to vector<8x8xf32>
    %190 = arith.mulf %189, %188 : vector<8x8xf32>
    %191 = arith.subf %187, %190 : vector<8x8xf32>
    %cst_113 = arith.constant dense<0.000000e+00> : vector<8x8xf32>
    %192 = tpu.matmul %184, %191, %cst_113 {dimension_numbers = #tpu.dot_dimension_numbers<[1], [0], [0], [1], [0, 0, 1, 1], [], []>} : vector<8x8xf32>, vector<8x8xf32>, vector<8x8xf32> -> vector<8x8xf32>
    %cst_114 = arith.constant dense<0.000000e+00> : vector<8x8xf32>
    %193 = tpu.matmul %191, %185, %cst_114 {dimension_numbers = #tpu.dot_dimension_numbers<[1], [0], [0], [1], [0, 0, 1, 1], [], []>} : vector<8x8xf32>, vector<8x8xf32>, vector<8x8xf32> -> vector<8x8xf32>
    %cst_115 = arith.constant 1.500000e+00 : f32
    %194 = vector.broadcast %cst_115 : f32 to vector<8x8xf32>
    %195 = arith.mulf %194, %9 : vector<8x8xf32>
    %cst_116 = arith.constant dense<0.000000e+00> : vector<8x8xf32>
    %196 = tpu.matmul %193, %192, %cst_116 {dimension_numbers = #tpu.dot_dimension_numbers<[1], [0], [0], [1], [0, 0, 1, 1], [], []>} : vector<8x8xf32>, vector<8x8xf32>, vector<8x8xf32> -> vector<8x8xf32>
    %cst_117 = arith.constant 5.000000e-01 : f32
    %197 = vector.broadcast %cst_117 : f32 to vector<8x8xf32>
    %198 = arith.mulf %197, %196 : vector<8x8xf32>
    %199 = arith.subf %195, %198 : vector<8x8xf32>
    %cst_118 = arith.constant dense<0.000000e+00> : vector<8x8xf32>
    %200 = tpu.matmul %192, %199, %cst_118 {dimension_numbers = #tpu.dot_dimension_numbers<[1], [0], [0], [1], [0, 0, 1, 1], [], []>} : vector<8x8xf32>, vector<8x8xf32>, vector<8x8xf32> -> vector<8x8xf32>
    %cst_119 = arith.constant dense<0.000000e+00> : vector<8x8xf32>
    %201 = tpu.matmul %199, %193, %cst_119 {dimension_numbers = #tpu.dot_dimension_numbers<[1], [0], [0], [1], [0, 0, 1, 1], [], []>} : vector<8x8xf32>, vector<8x8xf32>, vector<8x8xf32> -> vector<8x8xf32>
    %cst_120 = arith.constant 1.500000e+00 : f32
    %202 = vector.broadcast %cst_120 : f32 to vector<8x8xf32>
    %203 = arith.mulf %202, %9 : vector<8x8xf32>
    %cst_121 = arith.constant dense<0.000000e+00> : vector<8x8xf32>
    %204 = tpu.matmul %201, %200, %cst_121 {dimension_numbers = #tpu.dot_dimension_numbers<[1], [0], [0], [1], [0, 0, 1, 1], [], []>} : vector<8x8xf32>, vector<8x8xf32>, vector<8x8xf32> -> vector<8x8xf32>
    %cst_122 = arith.constant 5.000000e-01 : f32
    %205 = vector.broadcast %cst_122 : f32 to vector<8x8xf32>
    %206 = arith.mulf %205, %204 : vector<8x8xf32>
    %207 = arith.subf %203, %206 : vector<8x8xf32>
    %cst_123 = arith.constant dense<0.000000e+00> : vector<8x8xf32>
    %208 = tpu.matmul %200, %207, %cst_123 {dimension_numbers = #tpu.dot_dimension_numbers<[1], [0], [0], [1], [0, 0, 1, 1], [], []>} : vector<8x8xf32>, vector<8x8xf32>, vector<8x8xf32> -> vector<8x8xf32>
    %cst_124 = arith.constant dense<0.000000e+00> : vector<8x8xf32>
    %209 = tpu.matmul %207, %201, %cst_124 {dimension_numbers = #tpu.dot_dimension_numbers<[1], [0], [0], [1], [0, 0, 1, 1], [], []>} : vector<8x8xf32>, vector<8x8xf32>, vector<8x8xf32> -> vector<8x8xf32>
    %cst_125 = arith.constant 1.500000e+00 : f32
    %210 = vector.broadcast %cst_125 : f32 to vector<8x8xf32>
    %211 = arith.mulf %210, %9 : vector<8x8xf32>
    %cst_126 = arith.constant dense<0.000000e+00> : vector<8x8xf32>
    %212 = tpu.matmul %209, %208, %cst_126 {dimension_numbers = #tpu.dot_dimension_numbers<[1], [0], [0], [1], [0, 0, 1, 1], [], []>} : vector<8x8xf32>, vector<8x8xf32>, vector<8x8xf32> -> vector<8x8xf32>
    %cst_127 = arith.constant 5.000000e-01 : f32
    %213 = vector.broadcast %cst_127 : f32 to vector<8x8xf32>
    %214 = arith.mulf %213, %212 : vector<8x8xf32>
    %215 = arith.subf %211, %214 : vector<8x8xf32>
    %cst_128 = arith.constant dense<0.000000e+00> : vector<8x8xf32>
    %216 = tpu.matmul %208, %215, %cst_128 {dimension_numbers = #tpu.dot_dimension_numbers<[1], [0], [0], [1], [0, 0, 1, 1], [], []>} : vector<8x8xf32>, vector<8x8xf32>, vector<8x8xf32> -> vector<8x8xf32>
    %cst_129 = arith.constant dense<0.000000e+00> : vector<8x8xf32>
    %217 = tpu.matmul %215, %209, %cst_129 {dimension_numbers = #tpu.dot_dimension_numbers<[1], [0], [0], [1], [0, 0, 1, 1], [], []>} : vector<8x8xf32>, vector<8x8xf32>, vector<8x8xf32> -> vector<8x8xf32>
    %cst_130 = arith.constant 1.500000e+00 : f32
    %218 = vector.broadcast %cst_130 : f32 to vector<8x8xf32>
    %219 = arith.mulf %218, %9 : vector<8x8xf32>
    %cst_131 = arith.constant dense<0.000000e+00> : vector<8x8xf32>
    %220 = tpu.matmul %217, %216, %cst_131 {dimension_numbers = #tpu.dot_dimension_numbers<[1], [0], [0], [1], [0, 0, 1, 1], [], []>} : vector<8x8xf32>, vector<8x8xf32>, vector<8x8xf32> -> vector<8x8xf32>
    %cst_132 = arith.constant 5.000000e-01 : f32
    %221 = vector.broadcast %cst_132 : f32 to vector<8x8xf32>
    %222 = arith.mulf %221, %220 : vector<8x8xf32>
    %223 = arith.subf %219, %222 : vector<8x8xf32>
    %cst_133 = arith.constant dense<0.000000e+00> : vector<8x8xf32>
    %224 = tpu.matmul %216, %223, %cst_133 {dimension_numbers = #tpu.dot_dimension_numbers<[1], [0], [0], [1], [0, 0, 1, 1], [], []>} : vector<8x8xf32>, vector<8x8xf32>, vector<8x8xf32> -> vector<8x8xf32>
    %225 = arith.mulf %3, %3 : vector<8x8xf32>
    %226 = vector.shape_cast %225 : vector<8x8xf32> to vector<1x8x8xf32>
    %cst_134 = arith.constant dense<0.000000e+00> : vector<1xf32>
    %227 = vector.multi_reduction <add>, %226, %cst_134 [1, 2] : vector<1x8x8xf32> to vector<1xf32>
    %228 = vector.shape_cast %227 : vector<1xf32> to vector<1x1x1xf32>
    %229 = vector.extract %228[0, 0, 0] : f32 from vector<1x1x1xf32>
    %230 = math.sqrt %229 : f32
    %231 = vector.broadcast %230 : f32 to vector<8x8xf32>
    %232 = arith.divf %3, %231 : vector<8x8xf32>
    %cst_135 = arith.constant 1.500000e+00 : f32
    %233 = vector.broadcast %cst_135 : f32 to vector<8x8xf32>
    %234 = arith.mulf %233, %9 : vector<8x8xf32>
    %cst_136 = arith.constant dense<0.000000e+00> : vector<8x8xf32>
    %235 = tpu.matmul %9, %232, %cst_136 {dimension_numbers = #tpu.dot_dimension_numbers<[1], [0], [0], [1], [0, 0, 1, 1], [], []>} : vector<8x8xf32>, vector<8x8xf32>, vector<8x8xf32> -> vector<8x8xf32>
    %cst_137 = arith.constant 5.000000e-01 : f32
    %236 = vector.broadcast %cst_137 : f32 to vector<8x8xf32>
    %237 = arith.mulf %236, %235 : vector<8x8xf32>
    %238 = arith.subf %234, %237 : vector<8x8xf32>
    %cst_138 = arith.constant dense<0.000000e+00> : vector<8x8xf32>
    %239 = tpu.matmul %232, %238, %cst_138 {dimension_numbers = #tpu.dot_dimension_numbers<[1], [0], [0], [1], [0, 0, 1, 1], [], []>} : vector<8x8xf32>, vector<8x8xf32>, vector<8x8xf32> -> vector<8x8xf32>
    %cst_139 = arith.constant dense<0.000000e+00> : vector<8x8xf32>
    %240 = tpu.matmul %238, %9, %cst_139 {dimension_numbers = #tpu.dot_dimension_numbers<[1], [0], [0], [1], [0, 0, 1, 1], [], []>} : vector<8x8xf32>, vector<8x8xf32>, vector<8x8xf32> -> vector<8x8xf32>
    %cst_140 = arith.constant 1.500000e+00 : f32
    %241 = vector.broadcast %cst_140 : f32 to vector<8x8xf32>
    %242 = arith.mulf %241, %9 : vector<8x8xf32>
    %cst_141 = arith.constant dense<0.000000e+00> : vector<8x8xf32>
    %243 = tpu.matmul %240, %239, %cst_141 {dimension_numbers = #tpu.dot_dimension_numbers<[1], [0], [0], [1], [0, 0, 1, 1], [], []>} : vector<8x8xf32>, vector<8x8xf32>, vector<8x8xf32> -> vector<8x8xf32>
    %cst_142 = arith.constant 5.000000e-01 : f32
    %244 = vector.broadcast %cst_142 : f32 to vector<8x8xf32>
    %245 = arith.mulf %244, %243 : vector<8x8xf32>
    %246 = arith.subf %242, %245 : vector<8x8xf32>
    %cst_143 = arith.constant dense<0.000000e+00> : vector<8x8xf32>
    %247 = tpu.matmul %239, %246, %cst_143 {dimension_numbers = #tpu.dot_dimension_numbers<[1], [0], [0], [1], [0, 0, 1, 1], [], []>} : vector<8x8xf32>, vector<8x8xf32>, vector<8x8xf32> -> vector<8x8xf32>
    %cst_144 = arith.constant dense<0.000000e+00> : vector<8x8xf32>
    %248 = tpu.matmul %246, %240, %cst_144 {dimension_numbers = #tpu.dot_dimension_numbers<[1], [0], [0], [1], [0, 0, 1, 1], [], []>} : vector<8x8xf32>, vector<8x8xf32>, vector<8x8xf32> -> vector<8x8xf32>
    %cst_145 = arith.constant 1.500000e+00 : f32
    %249 = vector.broadcast %cst_145 : f32 to vector<8x8xf32>
    %250 = arith.mulf %249, %9 : vector<8x8xf32>
    %cst_146 = arith.constant dense<0.000000e+00> : vector<8x8xf32>
    %251 = tpu.matmul %248, %247, %cst_146 {dimension_numbers = #tpu.dot_dimension_numbers<[1], [0], [0], [1], [0, 0, 1, 1], [], []>} : vector<8x8xf32>, vector<8x8xf32>, vector<8x8xf32> -> vector<8x8xf32>
    %cst_147 = arith.constant 5.000000e-01 : f32
    %252 = vector.broadcast %cst_147 : f32 to vector<8x8xf32>
    %253 = arith.mulf %252, %251 : vector<8x8xf32>
    %254 = arith.subf %250, %253 : vector<8x8xf32>
    %cst_148 = arith.constant dense<0.000000e+00> : vector<8x8xf32>
    %255 = tpu.matmul %247, %254, %cst_148 {dimension_numbers = #tpu.dot_dimension_numbers<[1], [0], [0], [1], [0, 0, 1, 1], [], []>} : vector<8x8xf32>, vector<8x8xf32>, vector<8x8xf32> -> vector<8x8xf32>
    %cst_149 = arith.constant dense<0.000000e+00> : vector<8x8xf32>
    %256 = tpu.matmul %254, %248, %cst_149 {dimension_numbers = #tpu.dot_dimension_numbers<[1], [0], [0], [1], [0, 0, 1, 1], [], []>} : vector<8x8xf32>, vector<8x8xf32>, vector<8x8xf32> -> vector<8x8xf32>
    %cst_150 = arith.constant 1.500000e+00 : f32
    %257 = vector.broadcast %cst_150 : f32 to vector<8x8xf32>
    %258 = arith.mulf %257, %9 : vector<8x8xf32>
    %cst_151 = arith.constant dense<0.000000e+00> : vector<8x8xf32>
    %259 = tpu.matmul %256, %255, %cst_151 {dimension_numbers = #tpu.dot_dimension_numbers<[1], [0], [0], [1], [0, 0, 1, 1], [], []>} : vector<8x8xf32>, vector<8x8xf32>, vector<8x8xf32> -> vector<8x8xf32>
    %cst_152 = arith.constant 5.000000e-01 : f32
    %260 = vector.broadcast %cst_152 : f32 to vector<8x8xf32>
    %261 = arith.mulf %260, %259 : vector<8x8xf32>
    %262 = arith.subf %258, %261 : vector<8x8xf32>
    %cst_153 = arith.constant dense<0.000000e+00> : vector<8x8xf32>
    %263 = tpu.matmul %255, %262, %cst_153 {dimension_numbers = #tpu.dot_dimension_numbers<[1], [0], [0], [1], [0, 0, 1, 1], [], []>} : vector<8x8xf32>, vector<8x8xf32>, vector<8x8xf32> -> vector<8x8xf32>
    %cst_154 = arith.constant dense<0.000000e+00> : vector<8x8xf32>
    %264 = tpu.matmul %262, %256, %cst_154 {dimension_numbers = #tpu.dot_dimension_numbers<[1], [0], [0], [1], [0, 0, 1, 1], [], []>} : vector<8x8xf32>, vector<8x8xf32>, vector<8x8xf32> -> vector<8x8xf32>
    %cst_155 = arith.constant 1.500000e+00 : f32
    %265 = vector.broadcast %cst_155 : f32 to vector<8x8xf32>
    %266 = arith.mulf %265, %9 : vector<8x8xf32>
    %cst_156 = arith.constant dense<0.000000e+00> : vector<8x8xf32>
    %267 = tpu.matmul %264, %263, %cst_156 {dimension_numbers = #tpu.dot_dimension_numbers<[1], [0], [0], [1], [0, 0, 1, 1], [], []>} : vector<8x8xf32>, vector<8x8xf32>, vector<8x8xf32> -> vector<8x8xf32>
    %cst_157 = arith.constant 5.000000e-01 : f32
    %268 = vector.broadcast %cst_157 : f32 to vector<8x8xf32>
    %269 = arith.mulf %268, %267 : vector<8x8xf32>
    %270 = arith.subf %266, %269 : vector<8x8xf32>
    %cst_158 = arith.constant dense<0.000000e+00> : vector<8x8xf32>
    %271 = tpu.matmul %263, %270, %cst_158 {dimension_numbers = #tpu.dot_dimension_numbers<[1], [0], [0], [1], [0, 0, 1, 1], [], []>} : vector<8x8xf32>, vector<8x8xf32>, vector<8x8xf32> -> vector<8x8xf32>
    %cst_159 = arith.constant dense<0.000000e+00> : vector<8x8xf32>
    %272 = tpu.matmul %270, %264, %cst_159 {dimension_numbers = #tpu.dot_dimension_numbers<[1], [0], [0], [1], [0, 0, 1, 1], [], []>} : vector<8x8xf32>, vector<8x8xf32>, vector<8x8xf32> -> vector<8x8xf32>
    %cst_160 = arith.constant 1.500000e+00 : f32
    %273 = vector.broadcast %cst_160 : f32 to vector<8x8xf32>
    %274 = arith.mulf %273, %9 : vector<8x8xf32>
    %cst_161 = arith.constant dense<0.000000e+00> : vector<8x8xf32>
    %275 = tpu.matmul %272, %271, %cst_161 {dimension_numbers = #tpu.dot_dimension_numbers<[1], [0], [0], [1], [0, 0, 1, 1], [], []>} : vector<8x8xf32>, vector<8x8xf32>, vector<8x8xf32> -> vector<8x8xf32>
    %cst_162 = arith.constant 5.000000e-01 : f32
    %276 = vector.broadcast %cst_162 : f32 to vector<8x8xf32>
    %277 = arith.mulf %276, %275 : vector<8x8xf32>
    %278 = arith.subf %274, %277 : vector<8x8xf32>
    %cst_163 = arith.constant dense<0.000000e+00> : vector<8x8xf32>
    %279 = tpu.matmul %271, %278, %cst_163 {dimension_numbers = #tpu.dot_dimension_numbers<[1], [0], [0], [1], [0, 0, 1, 1], [], []>} : vector<8x8xf32>, vector<8x8xf32>, vector<8x8xf32> -> vector<8x8xf32>
    %cst_164 = arith.constant dense<0.000000e+00> : vector<8x8xf32>
    %280 = tpu.matmul %278, %272, %cst_164 {dimension_numbers = #tpu.dot_dimension_numbers<[1], [0], [0], [1], [0, 0, 1, 1], [], []>} : vector<8x8xf32>, vector<8x8xf32>, vector<8x8xf32> -> vector<8x8xf32>
    %cst_165 = arith.constant 1.500000e+00 : f32
    %281 = vector.broadcast %cst_165 : f32 to vector<8x8xf32>
    %282 = arith.mulf %281, %9 : vector<8x8xf32>
    %cst_166 = arith.constant dense<0.000000e+00> : vector<8x8xf32>
    %283 = tpu.matmul %280, %279, %cst_166 {dimension_numbers = #tpu.dot_dimension_numbers<[1], [0], [0], [1], [0, 0, 1, 1], [], []>} : vector<8x8xf32>, vector<8x8xf32>, vector<8x8xf32> -> vector<8x8xf32>
    %cst_167 = arith.constant 5.000000e-01 : f32
    %284 = vector.broadcast %cst_167 : f32 to vector<8x8xf32>
    %285 = arith.mulf %284, %283 : vector<8x8xf32>
    %286 = arith.subf %282, %285 : vector<8x8xf32>
    %cst_168 = arith.constant dense<0.000000e+00> : vector<8x8xf32>
    %287 = tpu.matmul %279, %286, %cst_168 {dimension_numbers = #tpu.dot_dimension_numbers<[1], [0], [0], [1], [0, 0, 1, 1], [], []>} : vector<8x8xf32>, vector<8x8xf32>, vector<8x8xf32> -> vector<8x8xf32>
    %cst_169 = arith.constant dense<0.000000e+00> : vector<8x8xf32>
    %288 = tpu.matmul %286, %280, %cst_169 {dimension_numbers = #tpu.dot_dimension_numbers<[1], [0], [0], [1], [0, 0, 1, 1], [], []>} : vector<8x8xf32>, vector<8x8xf32>, vector<8x8xf32> -> vector<8x8xf32>
    %cst_170 = arith.constant 1.500000e+00 : f32
    %289 = vector.broadcast %cst_170 : f32 to vector<8x8xf32>
    %290 = arith.mulf %289, %9 : vector<8x8xf32>
    %cst_171 = arith.constant dense<0.000000e+00> : vector<8x8xf32>
    %291 = tpu.matmul %288, %287, %cst_171 {dimension_numbers = #tpu.dot_dimension_numbers<[1], [0], [0], [1], [0, 0, 1, 1], [], []>} : vector<8x8xf32>, vector<8x8xf32>, vector<8x8xf32> -> vector<8x8xf32>
    %cst_172 = arith.constant 5.000000e-01 : f32
    %292 = vector.broadcast %cst_172 : f32 to vector<8x8xf32>
    %293 = arith.mulf %292, %291 : vector<8x8xf32>
    %294 = arith.subf %290, %293 : vector<8x8xf32>
    %cst_173 = arith.constant dense<0.000000e+00> : vector<8x8xf32>
    %295 = tpu.matmul %287, %294, %cst_173 {dimension_numbers = #tpu.dot_dimension_numbers<[1], [0], [0], [1], [0, 0, 1, 1], [], []>} : vector<8x8xf32>, vector<8x8xf32>, vector<8x8xf32> -> vector<8x8xf32>
    %cst_174 = arith.constant dense<0.000000e+00> : vector<8x8xf32>
    %296 = tpu.matmul %294, %288, %cst_174 {dimension_numbers = #tpu.dot_dimension_numbers<[1], [0], [0], [1], [0, 0, 1, 1], [], []>} : vector<8x8xf32>, vector<8x8xf32>, vector<8x8xf32> -> vector<8x8xf32>
    %cst_175 = arith.constant 1.500000e+00 : f32
    %297 = vector.broadcast %cst_175 : f32 to vector<8x8xf32>
    %298 = arith.mulf %297, %9 : vector<8x8xf32>
    %cst_176 = arith.constant dense<0.000000e+00> : vector<8x8xf32>
    %299 = tpu.matmul %296, %295, %cst_176 {dimension_numbers = #tpu.dot_dimension_numbers<[1], [0], [0], [1], [0, 0, 1, 1], [], []>} : vector<8x8xf32>, vector<8x8xf32>, vector<8x8xf32> -> vector<8x8xf32>
    %cst_177 = arith.constant 5.000000e-01 : f32
    %300 = vector.broadcast %cst_177 : f32 to vector<8x8xf32>
    %301 = arith.mulf %300, %299 : vector<8x8xf32>
    %302 = arith.subf %298, %301 : vector<8x8xf32>
    %cst_178 = arith.constant dense<0.000000e+00> : vector<8x8xf32>
    %303 = tpu.matmul %295, %302, %cst_178 {dimension_numbers = #tpu.dot_dimension_numbers<[1], [0], [0], [1], [0, 0, 1, 1], [], []>} : vector<8x8xf32>, vector<8x8xf32>, vector<8x8xf32> -> vector<8x8xf32>
    %cst_179 = arith.constant dense<0.000000e+00> : vector<8x8xf32>
    %304 = tpu.matmul %302, %296, %cst_179 {dimension_numbers = #tpu.dot_dimension_numbers<[1], [0], [0], [1], [0, 0, 1, 1], [], []>} : vector<8x8xf32>, vector<8x8xf32>, vector<8x8xf32> -> vector<8x8xf32>
    %cst_180 = arith.constant 1.500000e+00 : f32
    %305 = vector.broadcast %cst_180 : f32 to vector<8x8xf32>
    %306 = arith.mulf %305, %9 : vector<8x8xf32>
    %cst_181 = arith.constant dense<0.000000e+00> : vector<8x8xf32>
    %307 = tpu.matmul %304, %303, %cst_181 {dimension_numbers = #tpu.dot_dimension_numbers<[1], [0], [0], [1], [0, 0, 1, 1], [], []>} : vector<8x8xf32>, vector<8x8xf32>, vector<8x8xf32> -> vector<8x8xf32>
    %cst_182 = arith.constant 5.000000e-01 : f32
    %308 = vector.broadcast %cst_182 : f32 to vector<8x8xf32>
    %309 = arith.mulf %308, %307 : vector<8x8xf32>
    %310 = arith.subf %306, %309 : vector<8x8xf32>
    %cst_183 = arith.constant dense<0.000000e+00> : vector<8x8xf32>
    %311 = tpu.matmul %303, %310, %cst_183 {dimension_numbers = #tpu.dot_dimension_numbers<[1], [0], [0], [1], [0, 0, 1, 1], [], []>} : vector<8x8xf32>, vector<8x8xf32>, vector<8x8xf32> -> vector<8x8xf32>
    %cst_184 = arith.constant dense<0.000000e+00> : vector<8x8xf32>
    %312 = tpu.matmul %310, %304, %cst_184 {dimension_numbers = #tpu.dot_dimension_numbers<[1], [0], [0], [1], [0, 0, 1, 1], [], []>} : vector<8x8xf32>, vector<8x8xf32>, vector<8x8xf32> -> vector<8x8xf32>
    %cst_185 = arith.constant 1.500000e+00 : f32
    %313 = vector.broadcast %cst_185 : f32 to vector<8x8xf32>
    %314 = arith.mulf %313, %9 : vector<8x8xf32>
    %cst_186 = arith.constant dense<0.000000e+00> : vector<8x8xf32>
    %315 = tpu.matmul %312, %311, %cst_186 {dimension_numbers = #tpu.dot_dimension_numbers<[1], [0], [0], [1], [0, 0, 1, 1], [], []>} : vector<8x8xf32>, vector<8x8xf32>, vector<8x8xf32> -> vector<8x8xf32>
    %cst_187 = arith.constant 5.000000e-01 : f32
    %316 = vector.broadcast %cst_187 : f32 to vector<8x8xf32>
    %317 = arith.mulf %316, %315 : vector<8x8xf32>
    %318 = arith.subf %314, %317 : vector<8x8xf32>
    %cst_188 = arith.constant dense<0.000000e+00> : vector<8x8xf32>
    %319 = tpu.matmul %311, %318, %cst_188 {dimension_numbers = #tpu.dot_dimension_numbers<[1], [0], [0], [1], [0, 0, 1, 1], [], []>} : vector<8x8xf32>, vector<8x8xf32>, vector<8x8xf32> -> vector<8x8xf32>
    %cst_189 = arith.constant dense<0.000000e+00> : vector<8x8xf32>
    %320 = tpu.matmul %318, %312, %cst_189 {dimension_numbers = #tpu.dot_dimension_numbers<[1], [0], [0], [1], [0, 0, 1, 1], [], []>} : vector<8x8xf32>, vector<8x8xf32>, vector<8x8xf32> -> vector<8x8xf32>
    %cst_190 = arith.constant 1.500000e+00 : f32
    %321 = vector.broadcast %cst_190 : f32 to vector<8x8xf32>
    %322 = arith.mulf %321, %9 : vector<8x8xf32>
    %cst_191 = arith.constant dense<0.000000e+00> : vector<8x8xf32>
    %323 = tpu.matmul %320, %319, %cst_191 {dimension_numbers = #tpu.dot_dimension_numbers<[1], [0], [0], [1], [0, 0, 1, 1], [], []>} : vector<8x8xf32>, vector<8x8xf32>, vector<8x8xf32> -> vector<8x8xf32>
    %cst_192 = arith.constant 5.000000e-01 : f32
    %324 = vector.broadcast %cst_192 : f32 to vector<8x8xf32>
    %325 = arith.mulf %324, %323 : vector<8x8xf32>
    %326 = arith.subf %322, %325 : vector<8x8xf32>
    %cst_193 = arith.constant dense<0.000000e+00> : vector<8x8xf32>
    %327 = tpu.matmul %319, %326, %cst_193 {dimension_numbers = #tpu.dot_dimension_numbers<[1], [0], [0], [1], [0, 0, 1, 1], [], []>} : vector<8x8xf32>, vector<8x8xf32>, vector<8x8xf32> -> vector<8x8xf32>
    %cst_194 = arith.constant dense<0.000000e+00> : vector<8x8xf32>
    %328 = tpu.matmul %326, %320, %cst_194 {dimension_numbers = #tpu.dot_dimension_numbers<[1], [0], [0], [1], [0, 0, 1, 1], [], []>} : vector<8x8xf32>, vector<8x8xf32>, vector<8x8xf32> -> vector<8x8xf32>
    %cst_195 = arith.constant 1.500000e+00 : f32
    %329 = vector.broadcast %cst_195 : f32 to vector<8x8xf32>
    %330 = arith.mulf %329, %9 : vector<8x8xf32>
    %cst_196 = arith.constant dense<0.000000e+00> : vector<8x8xf32>
    %331 = tpu.matmul %328, %327, %cst_196 {dimension_numbers = #tpu.dot_dimension_numbers<[1], [0], [0], [1], [0, 0, 1, 1], [], []>} : vector<8x8xf32>, vector<8x8xf32>, vector<8x8xf32> -> vector<8x8xf32>
    %cst_197 = arith.constant 5.000000e-01 : f32
    %332 = vector.broadcast %cst_197 : f32 to vector<8x8xf32>
    %333 = arith.mulf %332, %331 : vector<8x8xf32>
    %334 = arith.subf %330, %333 : vector<8x8xf32>
    %cst_198 = arith.constant dense<0.000000e+00> : vector<8x8xf32>
    %335 = tpu.matmul %327, %334, %cst_198 {dimension_numbers = #tpu.dot_dimension_numbers<[1], [0], [0], [1], [0, 0, 1, 1], [], []>} : vector<8x8xf32>, vector<8x8xf32>, vector<8x8xf32> -> vector<8x8xf32>
    %cst_199 = arith.constant dense<0.000000e+00> : vector<8x8xf32>
    %336 = tpu.matmul %334, %328, %cst_199 {dimension_numbers = #tpu.dot_dimension_numbers<[1], [0], [0], [1], [0, 0, 1, 1], [], []>} : vector<8x8xf32>, vector<8x8xf32>, vector<8x8xf32> -> vector<8x8xf32>
    %cst_200 = arith.constant 1.500000e+00 : f32
    %337 = vector.broadcast %cst_200 : f32 to vector<8x8xf32>
    %338 = arith.mulf %337, %9 : vector<8x8xf32>
    %cst_201 = arith.constant dense<0.000000e+00> : vector<8x8xf32>
    %339 = tpu.matmul %336, %335, %cst_201 {dimension_numbers = #tpu.dot_dimension_numbers<[1], [0], [0], [1], [0, 0, 1, 1], [], []>} : vector<8x8xf32>, vector<8x8xf32>, vector<8x8xf32> -> vector<8x8xf32>
    %cst_202 = arith.constant 5.000000e-01 : f32
    %340 = vector.broadcast %cst_202 : f32 to vector<8x8xf32>
    %341 = arith.mulf %340, %339 : vector<8x8xf32>
    %342 = arith.subf %338, %341 : vector<8x8xf32>
    %cst_203 = arith.constant dense<0.000000e+00> : vector<8x8xf32>
    %343 = tpu.matmul %335, %342, %cst_203 {dimension_numbers = #tpu.dot_dimension_numbers<[1], [0], [0], [1], [0, 0, 1, 1], [], []>} : vector<8x8xf32>, vector<8x8xf32>, vector<8x8xf32> -> vector<8x8xf32>
    %cst_204 = arith.constant dense<0.000000e+00> : vector<8x8xf32>
    %344 = tpu.matmul %342, %336, %cst_204 {dimension_numbers = #tpu.dot_dimension_numbers<[1], [0], [0], [1], [0, 0, 1, 1], [], []>} : vector<8x8xf32>, vector<8x8xf32>, vector<8x8xf32> -> vector<8x8xf32>
    %cst_205 = arith.constant 1.500000e+00 : f32
    %345 = vector.broadcast %cst_205 : f32 to vector<8x8xf32>
    %346 = arith.mulf %345, %9 : vector<8x8xf32>
    %cst_206 = arith.constant dense<0.000000e+00> : vector<8x8xf32>
    %347 = tpu.matmul %344, %343, %cst_206 {dimension_numbers = #tpu.dot_dimension_numbers<[1], [0], [0], [1], [0, 0, 1, 1], [], []>} : vector<8x8xf32>, vector<8x8xf32>, vector<8x8xf32> -> vector<8x8xf32>
    %cst_207 = arith.constant 5.000000e-01 : f32
    %348 = vector.broadcast %cst_207 : f32 to vector<8x8xf32>
    %349 = arith.mulf %348, %347 : vector<8x8xf32>
    %350 = arith.subf %346, %349 : vector<8x8xf32>
    %cst_208 = arith.constant dense<0.000000e+00> : vector<8x8xf32>
    %351 = tpu.matmul %343, %350, %cst_208 {dimension_numbers = #tpu.dot_dimension_numbers<[1], [0], [0], [1], [0, 0, 1, 1], [], []>} : vector<8x8xf32>, vector<8x8xf32>, vector<8x8xf32> -> vector<8x8xf32>
    %cst_209 = arith.constant dense<0.000000e+00> : vector<8x8xf32>
    %352 = tpu.matmul %350, %344, %cst_209 {dimension_numbers = #tpu.dot_dimension_numbers<[1], [0], [0], [1], [0, 0, 1, 1], [], []>} : vector<8x8xf32>, vector<8x8xf32>, vector<8x8xf32> -> vector<8x8xf32>
    %cst_210 = arith.constant 1.500000e+00 : f32
    %353 = vector.broadcast %cst_210 : f32 to vector<8x8xf32>
    %354 = arith.mulf %353, %9 : vector<8x8xf32>
    %cst_211 = arith.constant dense<0.000000e+00> : vector<8x8xf32>
    %355 = tpu.matmul %352, %351, %cst_211 {dimension_numbers = #tpu.dot_dimension_numbers<[1], [0], [0], [1], [0, 0, 1, 1], [], []>} : vector<8x8xf32>, vector<8x8xf32>, vector<8x8xf32> -> vector<8x8xf32>
    %cst_212 = arith.constant 5.000000e-01 : f32
    %356 = vector.broadcast %cst_212 : f32 to vector<8x8xf32>
    %357 = arith.mulf %356, %355 : vector<8x8xf32>
    %358 = arith.subf %354, %357 : vector<8x8xf32>
    %cst_213 = arith.constant dense<0.000000e+00> : vector<8x8xf32>
    %359 = tpu.matmul %351, %358, %cst_213 {dimension_numbers = #tpu.dot_dimension_numbers<[1], [0], [0], [1], [0, 0, 1, 1], [], []>} : vector<8x8xf32>, vector<8x8xf32>, vector<8x8xf32> -> vector<8x8xf32>
    %cst_214 = arith.constant dense<0.000000e+00> : vector<8x8xf32>
    %360 = tpu.matmul %358, %352, %cst_214 {dimension_numbers = #tpu.dot_dimension_numbers<[1], [0], [0], [1], [0, 0, 1, 1], [], []>} : vector<8x8xf32>, vector<8x8xf32>, vector<8x8xf32> -> vector<8x8xf32>
    %cst_215 = arith.constant 1.500000e+00 : f32
    %361 = vector.broadcast %cst_215 : f32 to vector<8x8xf32>
    %362 = arith.mulf %361, %9 : vector<8x8xf32>
    %cst_216 = arith.constant dense<0.000000e+00> : vector<8x8xf32>
    %363 = tpu.matmul %360, %359, %cst_216 {dimension_numbers = #tpu.dot_dimension_numbers<[1], [0], [0], [1], [0, 0, 1, 1], [], []>} : vector<8x8xf32>, vector<8x8xf32>, vector<8x8xf32> -> vector<8x8xf32>
    %cst_217 = arith.constant 5.000000e-01 : f32
    %364 = vector.broadcast %cst_217 : f32 to vector<8x8xf32>
    %365 = arith.mulf %364, %363 : vector<8x8xf32>
    %366 = arith.subf %362, %365 : vector<8x8xf32>
    %cst_218 = arith.constant dense<0.000000e+00> : vector<8x8xf32>
    %367 = tpu.matmul %359, %366, %cst_218 {dimension_numbers = #tpu.dot_dimension_numbers<[1], [0], [0], [1], [0, 0, 1, 1], [], []>} : vector<8x8xf32>, vector<8x8xf32>, vector<8x8xf32> -> vector<8x8xf32>
    %cst_219 = arith.constant dense<0.000000e+00> : vector<8x8xf32>
    %368 = tpu.matmul %366, %360, %cst_219 {dimension_numbers = #tpu.dot_dimension_numbers<[1], [0], [0], [1], [0, 0, 1, 1], [], []>} : vector<8x8xf32>, vector<8x8xf32>, vector<8x8xf32> -> vector<8x8xf32>
    %cst_220 = arith.constant 1.500000e+00 : f32
    %369 = vector.broadcast %cst_220 : f32 to vector<8x8xf32>
    %370 = arith.mulf %369, %9 : vector<8x8xf32>
    %cst_221 = arith.constant dense<0.000000e+00> : vector<8x8xf32>
    %371 = tpu.matmul %368, %367, %cst_221 {dimension_numbers = #tpu.dot_dimension_numbers<[1], [0], [0], [1], [0, 0, 1, 1], [], []>} : vector<8x8xf32>, vector<8x8xf32>, vector<8x8xf32> -> vector<8x8xf32>
    %cst_222 = arith.constant 5.000000e-01 : f32
    %372 = vector.broadcast %cst_222 : f32 to vector<8x8xf32>
    %373 = arith.mulf %372, %371 : vector<8x8xf32>
    %374 = arith.subf %370, %373 : vector<8x8xf32>
    %cst_223 = arith.constant dense<0.000000e+00> : vector<8x8xf32>
    %375 = tpu.matmul %367, %374, %cst_223 {dimension_numbers = #tpu.dot_dimension_numbers<[1], [0], [0], [1], [0, 0, 1, 1], [], []>} : vector<8x8xf32>, vector<8x8xf32>, vector<8x8xf32> -> vector<8x8xf32>
    %cst_224 = arith.constant dense<0.000000e+00> : vector<8x8xf32>
    %376 = tpu.matmul %374, %368, %cst_224 {dimension_numbers = #tpu.dot_dimension_numbers<[1], [0], [0], [1], [0, 0, 1, 1], [], []>} : vector<8x8xf32>, vector<8x8xf32>, vector<8x8xf32> -> vector<8x8xf32>
    %cst_225 = arith.constant 1.500000e+00 : f32
    %377 = vector.broadcast %cst_225 : f32 to vector<8x8xf32>
    %378 = arith.mulf %377, %9 : vector<8x8xf32>
    %cst_226 = arith.constant dense<0.000000e+00> : vector<8x8xf32>
    %379 = tpu.matmul %376, %375, %cst_226 {dimension_numbers = #tpu.dot_dimension_numbers<[1], [0], [0], [1], [0, 0, 1, 1], [], []>} : vector<8x8xf32>, vector<8x8xf32>, vector<8x8xf32> -> vector<8x8xf32>
    %cst_227 = arith.constant 5.000000e-01 : f32
    %380 = vector.broadcast %cst_227 : f32 to vector<8x8xf32>
    %381 = arith.mulf %380, %379 : vector<8x8xf32>
    %382 = arith.subf %378, %381 : vector<8x8xf32>
    %cst_228 = arith.constant dense<0.000000e+00> : vector<8x8xf32>
    %383 = tpu.matmul %375, %382, %cst_228 {dimension_numbers = #tpu.dot_dimension_numbers<[1], [0], [0], [1], [0, 0, 1, 1], [], []>} : vector<8x8xf32>, vector<8x8xf32>, vector<8x8xf32> -> vector<8x8xf32>
    %cst_229 = arith.constant dense<0.000000e+00> : vector<8x8xf32>
    %384 = tpu.matmul %382, %376, %cst_229 {dimension_numbers = #tpu.dot_dimension_numbers<[1], [0], [0], [1], [0, 0, 1, 1], [], []>} : vector<8x8xf32>, vector<8x8xf32>, vector<8x8xf32> -> vector<8x8xf32>
    %cst_230 = arith.constant 1.500000e+00 : f32
    %385 = vector.broadcast %cst_230 : f32 to vector<8x8xf32>
    %386 = arith.mulf %385, %9 : vector<8x8xf32>
    %cst_231 = arith.constant dense<0.000000e+00> : vector<8x8xf32>
    %387 = tpu.matmul %384, %383, %cst_231 {dimension_numbers = #tpu.dot_dimension_numbers<[1], [0], [0], [1], [0, 0, 1, 1], [], []>} : vector<8x8xf32>, vector<8x8xf32>, vector<8x8xf32> -> vector<8x8xf32>
    %cst_232 = arith.constant 5.000000e-01 : f32
    %388 = vector.broadcast %cst_232 : f32 to vector<8x8xf32>
    %389 = arith.mulf %388, %387 : vector<8x8xf32>
    %390 = arith.subf %386, %389 : vector<8x8xf32>
    %cst_233 = arith.constant dense<0.000000e+00> : vector<8x8xf32>
    %391 = tpu.matmul %383, %390, %cst_233 {dimension_numbers = #tpu.dot_dimension_numbers<[1], [0], [0], [1], [0, 0, 1, 1], [], []>} : vector<8x8xf32>, vector<8x8xf32>, vector<8x8xf32> -> vector<8x8xf32>
    %cst_234 = arith.constant dense<0.000000e+00> : vector<8x8xf32>
    %392 = tpu.matmul %390, %384, %cst_234 {dimension_numbers = #tpu.dot_dimension_numbers<[1], [0], [0], [1], [0, 0, 1, 1], [], []>} : vector<8x8xf32>, vector<8x8xf32>, vector<8x8xf32> -> vector<8x8xf32>
    %cst_235 = arith.constant 1.500000e+00 : f32
    %393 = vector.broadcast %cst_235 : f32 to vector<8x8xf32>
    %394 = arith.mulf %393, %9 : vector<8x8xf32>
    %cst_236 = arith.constant dense<0.000000e+00> : vector<8x8xf32>
    %395 = tpu.matmul %392, %391, %cst_236 {dimension_numbers = #tpu.dot_dimension_numbers<[1], [0], [0], [1], [0, 0, 1, 1], [], []>} : vector<8x8xf32>, vector<8x8xf32>, vector<8x8xf32> -> vector<8x8xf32>
    %cst_237 = arith.constant 5.000000e-01 : f32
    %396 = vector.broadcast %cst_237 : f32 to vector<8x8xf32>
    %397 = arith.mulf %396, %395 : vector<8x8xf32>
    %398 = arith.subf %394, %397 : vector<8x8xf32>
    %cst_238 = arith.constant dense<0.000000e+00> : vector<8x8xf32>
    %399 = tpu.matmul %391, %398, %cst_238 {dimension_numbers = #tpu.dot_dimension_numbers<[1], [0], [0], [1], [0, 0, 1, 1], [], []>} : vector<8x8xf32>, vector<8x8xf32>, vector<8x8xf32> -> vector<8x8xf32>
    %cst_239 = arith.constant dense<0.000000e+00> : vector<8x8xf32>
    %400 = tpu.matmul %398, %392, %cst_239 {dimension_numbers = #tpu.dot_dimension_numbers<[1], [0], [0], [1], [0, 0, 1, 1], [], []>} : vector<8x8xf32>, vector<8x8xf32>, vector<8x8xf32> -> vector<8x8xf32>
    %cst_240 = arith.constant 1.500000e+00 : f32
    %401 = vector.broadcast %cst_240 : f32 to vector<8x8xf32>
    %402 = arith.mulf %401, %9 : vector<8x8xf32>
    %cst_241 = arith.constant dense<0.000000e+00> : vector<8x8xf32>
    %403 = tpu.matmul %400, %399, %cst_241 {dimension_numbers = #tpu.dot_dimension_numbers<[1], [0], [0], [1], [0, 0, 1, 1], [], []>} : vector<8x8xf32>, vector<8x8xf32>, vector<8x8xf32> -> vector<8x8xf32>
    %cst_242 = arith.constant 5.000000e-01 : f32
    %404 = vector.broadcast %cst_242 : f32 to vector<8x8xf32>
    %405 = arith.mulf %404, %403 : vector<8x8xf32>
    %406 = arith.subf %402, %405 : vector<8x8xf32>
    %cst_243 = arith.constant dense<0.000000e+00> : vector<8x8xf32>
    %407 = tpu.matmul %399, %406, %cst_243 {dimension_numbers = #tpu.dot_dimension_numbers<[1], [0], [0], [1], [0, 0, 1, 1], [], []>} : vector<8x8xf32>, vector<8x8xf32>, vector<8x8xf32> -> vector<8x8xf32>
    %cst_244 = arith.constant dense<0.000000e+00> : vector<8x8xf32>
    %408 = tpu.matmul %406, %400, %cst_244 {dimension_numbers = #tpu.dot_dimension_numbers<[1], [0], [0], [1], [0, 0, 1, 1], [], []>} : vector<8x8xf32>, vector<8x8xf32>, vector<8x8xf32> -> vector<8x8xf32>
    %cst_245 = arith.constant 1.500000e+00 : f32
    %409 = vector.broadcast %cst_245 : f32 to vector<8x8xf32>
    %410 = arith.mulf %409, %9 : vector<8x8xf32>
    %cst_246 = arith.constant dense<0.000000e+00> : vector<8x8xf32>
    %411 = tpu.matmul %408, %407, %cst_246 {dimension_numbers = #tpu.dot_dimension_numbers<[1], [0], [0], [1], [0, 0, 1, 1], [], []>} : vector<8x8xf32>, vector<8x8xf32>, vector<8x8xf32> -> vector<8x8xf32>
    %cst_247 = arith.constant 5.000000e-01 : f32
    %412 = vector.broadcast %cst_247 : f32 to vector<8x8xf32>
    %413 = arith.mulf %412, %411 : vector<8x8xf32>
    %414 = arith.subf %410, %413 : vector<8x8xf32>
    %cst_248 = arith.constant dense<0.000000e+00> : vector<8x8xf32>
    %415 = tpu.matmul %407, %414, %cst_248 {dimension_numbers = #tpu.dot_dimension_numbers<[1], [0], [0], [1], [0, 0, 1, 1], [], []>} : vector<8x8xf32>, vector<8x8xf32>, vector<8x8xf32> -> vector<8x8xf32>
    %cst_249 = arith.constant dense<0.000000e+00> : vector<8x8xf32>
    %416 = tpu.matmul %414, %408, %cst_249 {dimension_numbers = #tpu.dot_dimension_numbers<[1], [0], [0], [1], [0, 0, 1, 1], [], []>} : vector<8x8xf32>, vector<8x8xf32>, vector<8x8xf32> -> vector<8x8xf32>
    %cst_250 = arith.constant 1.500000e+00 : f32
    %417 = vector.broadcast %cst_250 : f32 to vector<8x8xf32>
    %418 = arith.mulf %417, %9 : vector<8x8xf32>
    %cst_251 = arith.constant dense<0.000000e+00> : vector<8x8xf32>
    %419 = tpu.matmul %416, %415, %cst_251 {dimension_numbers = #tpu.dot_dimension_numbers<[1], [0], [0], [1], [0, 0, 1, 1], [], []>} : vector<8x8xf32>, vector<8x8xf32>, vector<8x8xf32> -> vector<8x8xf32>
    %cst_252 = arith.constant 5.000000e-01 : f32
    %420 = vector.broadcast %cst_252 : f32 to vector<8x8xf32>
    %421 = arith.mulf %420, %419 : vector<8x8xf32>
    %422 = arith.subf %418, %421 : vector<8x8xf32>
    %cst_253 = arith.constant dense<0.000000e+00> : vector<8x8xf32>
    %423 = tpu.matmul %422, %416, %cst_253 {dimension_numbers = #tpu.dot_dimension_numbers<[1], [0], [0], [1], [0, 0, 1, 1], [], []>} : vector<8x8xf32>, vector<8x8xf32>, vector<8x8xf32> -> vector<8x8xf32>
    %424 = math.sqrt %31 : f32
    %425 = vector.broadcast %424 : f32 to vector<8x8xf32>
    %426 = arith.mulf %425, %224 : vector<8x8xf32>
    %427 = math.sqrt %230 : f32
    %428 = vector.broadcast %427 : f32 to vector<8x8xf32>
    %429 = arith.divf %423, %428 : vector<8x8xf32>
    %cst_254 = arith.constant dense<0.000000e+00> : vector<8x8xf32>
    %430 = tpu.matmul %426, %4, %cst_254 {dimension_numbers = #tpu.dot_dimension_numbers<[1], [0], [0], [1], [0, 0, 1, 1], [], []>} : vector<8x8xf32>, vector<8x8xf32>, vector<8x8xf32> -> vector<8x8xf32>
    %cst_255 = arith.constant dense<0.000000e+00> : vector<8x8xf32>
    %431 = tpu.matmul %430, %429, %cst_255 {dimension_numbers = #tpu.dot_dimension_numbers<[1], [0], [0], [1], [0, 0, 1, 1], [], []>} : vector<8x8xf32>, vector<8x8xf32>, vector<8x8xf32> -> vector<8x8xf32>
    %432 = tpu.iota {dimensions = array<i32: 0>} : vector<7x8xi32>
    %433 = tpu.iota {dimensions = array<i32: 1>} : vector<7x8xi32>
    %c1_i32 = arith.constant 1 : i32
    %434 = vector.broadcast %c1_i32 : i32 to vector<7x8xi32>
    %435 = arith.addi %432, %434 : vector<7x8xi32>
    %436 = arith.cmpi eq, %433, %435 : vector<7x8xi32>
    %437 = arith.extui %436 : vector<7x8xi1> to vector<7x8xi32>
    %438 = arith.sitofp %437 : vector<7x8xi32> to vector<7x8xf32>
    %439 = tpu.iota {dimensions = array<i32: 1>} : vector<1x8xi32>
    %c0_i32 = arith.constant 0 : i32
    %440 = vector.broadcast %c0_i32 : i32 to vector<1x8xi32>
    %441 = arith.cmpi eq, %439, %440 : vector<1x8xi32>
    %442 = arith.extui %441 : vector<1x8xi1> to vector<1x8xi32>
    %443 = arith.sitofp %442 : vector<1x8xi32> to vector<1x8xf32>
    %cst_256 = arith.constant dense<0.000000e+00> : vector<16x8xf32>
    %444 = tpu.matmul %1, %438, %cst_256 {dimension_numbers = #tpu.dot_dimension_numbers<[1], [0], [0], [1], [0, 0, 1, 1], [], []>} : vector<16x7xf32>, vector<7x8xf32>, vector<16x8xf32> -> vector<16x8xf32>
    %445 = vector.broadcast %443 : vector<1x8xf32> to vector<16x8xf32>
    %446 = arith.addf %444, %445 : vector<16x8xf32>
    %cst_257 = arith.constant dense<0.000000e+00> : vector<16x8xf32>
    %447 = tpu.matmul %446, %431, %cst_257 {dimension_numbers = #tpu.dot_dimension_numbers<[1], [1], [0], [0], [0, 0, 1, 0], [], []>} : vector<16x8xf32>, vector<8x8xf32>, vector<16x8xf32> -> vector<16x8xf32>
    %448 = arith.mulf %447, %447 : vector<16x8xf32>
    %449 = vector.shape_cast %448 : vector<16x8xf32> to vector<1x16x8xf32>
    %cst_258 = arith.constant dense<0.000000e+00> : vector<1xf32>
    %450 = vector.multi_reduction <add>, %449, %cst_258 [1, 2] : vector<1x16x8xf32> to vector<1xf32>
    %451 = vector.shape_cast %450 : vector<1xf32> to vector<1x1x1xf32>
    %452 = vector.extract %451[0, 0, 0] : f32 from vector<1x1x1xf32>
    %cst_259 = arith.constant dense<0.000000e+00> : vector<8x8xf32>
    %453 = tpu.matmul %4, %4, %cst_259 {dimension_numbers = #tpu.dot_dimension_numbers<[1], [1], [0], [0], [0, 0, 1, 0], [], []>} : vector<8x8xf32>, vector<8x8xf32>, vector<8x8xf32> -> vector<8x8xf32>
    %454 = arith.subf %453, %9 : vector<8x8xf32>
    %455 = arith.mulf %454, %454 : vector<8x8xf32>
    %456 = vector.shape_cast %455 : vector<8x8xf32> to vector<1x8x8xf32>
    %cst_260 = arith.constant dense<0.000000e+00> : vector<1xf32>
    %457 = vector.multi_reduction <add>, %456, %cst_260 [1, 2] : vector<1x8x8xf32> to vector<1xf32>
    %458 = vector.shape_cast %457 : vector<1xf32> to vector<1x1x1xf32>
    %459 = vector.extract %458[0, 0, 0] : f32 from vector<1x1x1xf32>
    %cst_261 = arith.constant 1.000000e+00 : f32
    %460 = arith.subf %cst_261, %19 : f32
    %461 = arith.mulf %460, %452 : f32
    %462 = arith.addf %461, %459 : f32
    %c0_262 = arith.constant 0 : index
    %463 = memref.load %arg5[%c0_262] : memref<2xf32, #tpu.memory_space<smem>>
    memref.store %462, %arg5[%c0_262] : memref<2xf32, #tpu.memory_space<smem>>
    %cst_263 = arith.constant 1.000000e+00 : f32
    %464 = arith.subf %cst_263, %19 : f32
    %465 = arith.mulf %464, %25 : f32
    %c1 = arith.constant 1 : index
    %466 = memref.load %arg5[%c1] : memref<2xf32, #tpu.memory_space<smem>>
    memref.store %465, %arg5[%c1] : memref<2xf32, #tpu.memory_space<smem>>
    return
  }
}

</mosaic_0001>

<llo_original>
// kernel: tpu_custom_call.1
$region0: #{tpu_custom_call.1}
  #allocation0 [shape = 'u32[]', space=smem, size = 0x4, offset = 0x4, fixed_abs, tag = 'smem constant byte address 0x4 - core index']
  #allocation1 [shape = 'u32[144,128]{1,0:T(1,128)}', space=vmem, size = 0x12000, scoped, tag = 'internal scratch']
  %s0 = inlined_call_operand.vmem [shape: f32[16,7], index: 0, kind: input, shape index: {}]
  %s1 = inlined_call_operand.vmem [shape: f32[16,7], index: 1, kind: input, shape index: {}]
  %s2 = inlined_call_operand.vmem [shape: f32[8,8], index: 2, kind: input, shape index: {}]
  %s3 = inlined_call_operand.vmem [shape: f32[8,8], index: 3, kind: input, shape index: {}]
  %s4 = inlined_call_operand.vmem [shape: f32[8,8], index: 4, kind: input, shape index: {}]
  %s5 = inlined_call_operand.hbm [shape: f32[2], index: 5, kind: output, shape index: {}]
  %s6 = sld [smem:[#allocation0]]
  $region30: #{tpu_custom_call.1} parent=0
    _
  %s8 = ssub.s32 1, %s6
  %s9 = scalar_select 0, %s8, %s6
  $region1: #{tpu_custom_call.1} parent=0
    #allocation2 [shape = 'u8[512]{0}', space=smem, size = 0x200, scoped, tag = 'output window, operand 0, single buffered']
    #allocation3 [shape = 's32[1]{0}', space=sflag, size = 0x4, scoped, tag = 'scoped memory for tpu_custom_call.1']
    %10 = vsyncpa [#allocation3], 0
    // Predicated region
    $region2: #{tpu_custom_call.1} parent=1 // pred_check
      _
    $region3: #{tpu_custom_call.1} parent=1 // pred_check_branch
      %12 = sbr.rel (0) target = $region5
    $region4: #{tpu_custom_call.1} parent=1 // pred_region
      _
    $region5: #{tpu_custom_call.1} parent=1 // pred_fallthru
      _
    // Predicated region
    $region6: #{tpu_custom_call.1} parent=1 // pred_check
      _
    $region7: #{tpu_custom_call.1} parent=1 // pred_check_branch
      %14 = sbr.rel (0) target = $region9
    $region8: #{tpu_custom_call.1} parent=1 // pred_region
      _
    $region9: #{tpu_custom_call.1} parent=1 // pred_fallthru
      _
    // Predicated region
    $region10: #{tpu_custom_call.1} parent=1 // pred_check
      _
    $region11: #{tpu_custom_call.1} parent=1 // pred_check_branch
      %16 = sbr.rel (0) target = $region13
    $region12: #{tpu_custom_call.1} parent=1 // pred_region
      _
    $region13: #{tpu_custom_call.1} parent=1 // pred_fallthru
      _
    // Predicated region
    $region14: #{tpu_custom_call.1} parent=1 // pred_check
      _
    $region15: #{tpu_custom_call.1} parent=1 // pred_check_branch
      %18 = sbr.rel (0) target = $region17
    $region16: #{tpu_custom_call.1} parent=1 // pred_region
      _
    $region17: #{tpu_custom_call.1} parent=1 // pred_fallthru
      _
    // Predicated region
    $region18: #{tpu_custom_call.1} parent=1 // pred_check
      _
    $region19: #{tpu_custom_call.1} parent=1 // pred_check_branch
      %20 = sbr.rel (0) target = $region21
    $region20: #{tpu_custom_call.1} parent=1 // pred_region
      _
    $region21: #{tpu_custom_call.1} parent=1 // pred_fallthru
      _
    %v21 = vld [vmem:[%s0] sm:$0xff]
    %v22 = vld [vmem:[%s0 + $0x8] sm:$0xff]
    %v23 = vld [vmem:[%s1] sm:$0xff]
    %v24 = vld [vmem:[%s1 + $0x8] sm:$0xff]
    %v25 = vld [vmem:[%s2] sm:$0xff]
    %v26 = vld [vmem:[%s3] sm:$0xff]
    %v27 = vld [vmem:[%s4] sm:$0xff]
    %v28 = vlaneseq
    %v29 = vshrl.u32 %v28, 7
    %v30 = vlaneseq
    %v31 = vand.u32 %v30, 127
    %vm32 = vcmp.eq.s32.totalorder %v29, %v31
    %v33 = vsel %vm32, 1, 0
    %v34 = vcvt.s32.f32 %v33
    %vm35 = vcmask 56320
    %v37 = vsel %vm35, %v21, 0
    %v40 = vsel %vm35, %v22, 0
    %42 = vmatprep.subr.mxu0 0.0
    %43 = vmatpush1.xpose.msra.mxu0 0.0
    %44 = vmatprep.subr.mxu0 0.0
    %45 = vmatpush1.xpose.msra.mxu0 0.0
    %46 = vmatprep.subr.mxu0 0.0
    %47 = vmatpush1.xpose.msra.mxu0 0.0
    %48 = vmatprep.subr.mxu0 0.0
    %49 = vmatpush1.xpose.msra.mxu0 0.0
    %50 = vmatprep.subr.mxu0 0.0
    %51 = vmatpush1.xpose.msra.mxu0 0.0
    %52 = vmatprep.subr.mxu0 0.0
    %53 = vmatpush1.xpose.msra.mxu0 0.0
    %54 = vmatprep.subr.mxu0 0.0
    %55 = vmatpush1.xpose.msra.mxu0 0.0
    %56 = vmatprep.subr.mxu0 0.0
    %57 = vmatpush1.xpose.msra.mxu0 0.0
    %58 = vmatprep.subr.mxu0 0.0
    %59 = vmatpush1.xpose.msra.mxu0 0.0
    %60 = vmatprep.subr.mxu0 0.0
    %61 = vmatpush1.xpose.msra.mxu0 0.0
    %62 = vmatprep.subr.mxu0 0.0
    %63 = vmatpush1.xpose.msra.mxu0 0.0
    %64 = vmatprep.subr.mxu0 0.0
    %65 = vmatpush1.xpose.msra.mxu0 0.0
    %66 = vmatprep.subr.mxu0 0.0
    %67 = vmatpush1.xpose.msra.mxu0 0.0
    %68 = vmatprep.subr.mxu0 0.0
    %69 = vmatpush1.xpose.msra.mxu0 0.0
    %70 = vmatprep.subr.mxu0 0.0
    %71 = vmatpush1.xpose.msra.mxu0 %v40
    %72 = vmatprep.subr.mxu0 0.0
    %73 = vmatpush1.xpose.msra.mxu0 %v37
    %74 = vmatprep.subr.mxu0 0.0
    %75 = vmatpush2.xpose.msra.mxu0 0.0
    %76 = vmatprep.subr.mxu0 0.0
    %77 = vmatpush2.xpose.msra.mxu0 0.0
    %78 = vmatprep.subr.mxu0 0.0
    %79 = vmatpush2.xpose.msra.mxu0 0.0
    %80 = vmatprep.subr.mxu0 0.0
    %81 = vmatpush2.xpose.msra.mxu0 0.0
    %82 = vmatprep.subr.mxu0 0.0
    %83 = vmatpush2.xpose.msra.mxu0 0.0
    %84 = vmatprep.subr.mxu0 0.0
    %85 = vmatpush2.xpose.msra.mxu0 0.0
    %86 = vmatprep.subr.mxu0 0.0
    %87 = vmatpush2.xpose.msra.mxu0 0.0
    %88 = vmatprep.subr.mxu0 0.0
    %89 = vmatpush2.xpose.msra.mxu0 0.0
    %90 = vmatprep.subr.mxu0 0.0
    %91 = vmatpush2.xpose.msra.mxu0 0.0
    %92 = vmatprep.subr.mxu0 0.0
    %93 = vmatpush2.xpose.msra.mxu0 0.0
    %94 = vmatprep.subr.mxu0 0.0
    %95 = vmatpush2.xpose.msra.mxu0 0.0
    %96 = vmatprep.subr.mxu0 0.0
    %97 = vmatpush2.xpose.msra.mxu0 0.0
    %98 = vmatprep.subr.mxu0 0.0
    %99 = vmatpush2.xpose.msra.mxu0 0.0
    %100 = vmatprep.subr.mxu0 0.0
    %101 = vmatpush2.xpose.msra.mxu0 0.0
    %102 = vmatprep.subr.mxu0 0.0
    %103 = vmatpush2.xpose.msra.mxu0 0.0
    %104 = vmatprep.subr.mxu0 0.0
    %105 = vmatpush2.xpose.msra.mxu0 0.0
    %106 = vmatprep.mubr.f32.mxu0 0.0
    %107 = vmatmul.mubr.f32.gmra.mxu0 %v37
    %v108 = vpop.f32.mrf.mxu0
    %v109 = vadd.f32 1.0, %v108
    %v110 = vpop.f32.mrf.mxu0
    %111 = vmatprep.mubr.f32.mxu0 0.0
    %112 = vmatmul.mubr.f32.gmra.mxu0 %v40
    %v113 = vpop.f32.mrf.mxu0
    %v114 = vadd.f32 1.0, %v113
    %v115 = vpop.f32.mrf.mxu0
    %116 = vdwg.mxu0
    %v117 = vmul.f32 %v109, %v109
    %v118 = vmul.f32 %v114, %v114
    %vm119 = vcmask 130048
    %v120 = vsel %vm119, %v117, 0.0
    %v121 = vsel %vm119, %v118, 0.0
    %v122 = vadd.f32 %v120, %v121
    %123 = vadd.xlane.f32.xlu0 %v122
    %v124 = vpop.xlane.xlu0 %123
    %v125 = vrot.slane %v124, 4
    %v126 = vadd.f32 %v124, %v125
    %v127 = vrot.slane %v126, 2
    %v128 = vadd.f32 %v126, %v127
    %v129 = vrot.slane %v128, 1
    %v130 = vadd.f32 %v128, %v129
    %s131 = vtos %v130
    %v132 = vstv %s131
    %v133 = vrsqrt.pop %v132
    %v134 = vmul.f32 %v132, %v133
    %vm135 = vcmp.eq.f32.partialorder %v132, inf
    %v136 = vsel %vm135, %v132, %v134
    %vm137 = vcmp.eq.f32.partialorder %v132, 0.0
    %v138 = vand.u32 %v132, 2147483648
    %v139 = vsel %vm137, %v138, %v136
    %s140 = vtos %v139
    %v141 = vrcp.pop 2000.0
    %s142 = vtos %v141
    %s143 = smul.f32 %s140, %s142
    %v144 = vmul.f32 %v21, %v21
    %v145 = vmul.f32 %v22, %v22
    %v146 = vsel %vm35, %v144, 0.0
    %v147 = vsel %vm35, %v145, 0.0
    %v148 = vadd.f32 %v146, %v147
    %149 = vadd.xlane.f32.xlu0 %v148
    %v150 = vpop.xlane.xlu0 %149
    %v151 = vrot.slane %v150, 4
    %v152 = vadd.f32 %v150, %v151
    %v153 = vrot.slane %v152, 2
    %v154 = vadd.f32 %v152, %v153
    %v155 = vrot.slane %v154, 1
    %v156 = vadd.f32 %v154, %v155
    %s157 = vtos %v156
    %s158 = sadd.f32 %s157, 16.0
    %v159 = vmul.f32 %v25, %v25
    %vm160 = vcmask 64512
    %v161 = vsel %vm160, %v159, 0.0
    %162 = vadd.xlane.f32.xlu0 %v161
    %v163 = vpop.xlane.xlu0 %162
    %v164 = vrot.slane %v163, 4
    %v165 = vadd.f32 %v163, %v164
    %v166 = vrot.slane %v165, 2
    %v167 = vadd.f32 %v165, %v166
    %v168 = vrot.slane %v167, 1
    %v169 = vadd.f32 %v167, %v168
    %s170 = vtos %v169
    %v171 = vstv %s170
    %v172 = vrsqrt.pop %v171
    %v173 = vmul.f32 %v171, %v172
    %vm174 = vcmp.eq.f32.partialorder %v171, inf
    %v175 = vsel %vm174, %v171, %v173
    %vm176 = vcmp.eq.f32.partialorder %v171, 0.0
    %v177 = vand.u32 %v171, 2147483648
    %v178 = vsel %vm176, %v177, %v175
    %s179 = vtos %v178
    %v180 = vstv %s179
    %v181 = vrcp.pop %v180
    %v182 = vmul.f32 %v25, %v181
    %v183 = vmul.f32 %v34, 1.5
    %v185 = vsel %vm160, %v34, 0
    %187 = vmatprep.subr.mxu0 0.0
    %188 = vmatpush1.msra.mxu0 0.0
    %189 = vmatprep.subr.mxu0 0.0
    %190 = vmatpush1.msra.mxu0 0.0
    %191 = vmatprep.subr.mxu0 0.0
    %192 = vmatpush1.msra.mxu0 0.0
    %193 = vmatprep.subr.mxu0 0.0
    %194 = vmatpush1.msra.mxu0 0.0
    %195 = vmatprep.subr.mxu0 0.0
    %196 = vmatpush1.msra.mxu0 0.0
    %197 = vmatprep.subr.mxu0 0.0
    %198 = vmatpush1.msra.mxu0 0.0
    %199 = vmatprep.subr.mxu0 0.0
    %200 = vmatpush1.msra.mxu0 0.0
    %201 = vmatprep.subr.mxu0 0.0
    %202 = vmatpush1.msra.mxu0 0.0
    %203 = vmatprep.subr.mxu0 0.0
    %204 = vmatpush1.msra.mxu0 0.0
    %205 = vmatprep.subr.mxu0 0.0
    %206 = vmatpush1.msra.mxu0 0.0
    %207 = vmatprep.subr.mxu0 0.0
    %208 = vmatpush1.msra.mxu0 0.0
    %209 = vmatprep.subr.mxu0 0.0
    %210 = vmatpush1.msra.mxu0 0.0
    %211 = vmatprep.subr.mxu0 0.0
    %212 = vmatpush1.msra.mxu0 0.0
    %213 = vmatprep.subr.mxu0 0.0
    %214 = vmatpush1.msra.mxu0 0.0
    %215 = vmatprep.subr.mxu0 0.0
    %216 = vmatpush1.msra.mxu0 0.0
    %217 = vmatprep.subr.mxu0 0.0
    %218 = vmatpush1.msra.mxu0 %v182
    %219 = vmatprep.subr.mxu0 0.0
    %220 = vmatpush2.msra.mxu0 0.0
    %221 = vmatprep.subr.mxu0 0.0
    %222 = vmatpush2.msra.mxu0 0.0
    %223 = vmatprep.subr.mxu0 0.0
    %224 = vmatpush2.msra.mxu0 0.0
    %225 = vmatprep.subr.mxu0 0.0
    %226 = vmatpush2.msra.mxu0 0.0
    %227 = vmatprep.subr.mxu0 0.0
    %228 = vmatpush2.msra.mxu0 0.0
    %229 = vmatprep.subr.mxu0 0.0
    %230 = vmatpush2.msra.mxu0 0.0
    %231 = vmatprep.subr.mxu0 0.0
    %232 = vmatpush2.msra.mxu0 0.0
    %233 = vmatprep.subr.mxu0 0.0
    %234 = vmatpush2.msra.mxu0 0.0
    %235 = vmatprep.subr.mxu0 0.0
    %236 = vmatpush2.msra.mxu0 0.0
    %237 = vmatprep.subr.mxu0 0.0
    %238 = vmatpush2.msra.mxu0 0.0
    %239 = vmatprep.subr.mxu0 0.0
    %240 = vmatpush2.msra.mxu0 0.0
    %241 = vmatprep.subr.mxu0 0.0
    %242 = vmatpush2.msra.mxu0 0.0
    %243 = vmatprep.subr.mxu0 0.0
    %244 = vmatpush2.msra.mxu0 0.0
    %245 = vmatprep.subr.mxu0 0.0
    %246 = vmatpush2.msra.mxu0 0.0
    %247 = vmatprep.subr.mxu0 0.0
    %248 = vmatpush2.msra.mxu0 0.0
    %249 = vmatprep.subr.mxu0 0.0
    %250 = vmatpush2.msra.mxu0 0.0
    %251 = vmatprep.mubr.f32.mxu0 0.0
    %252 = vmatmul.mubr.f32.gmra.mxu0 %v185
    %v253 = vpop.f32.mrf.mxu0
    %v254 = vadd.f32 0.0, %v253
    %v255 = vpop.f32.mrf.mxu0
    %256 = vdwg.mxu0
    %v257 = vmul.f32 %v254, 0.5
    %v258 = vsub.f32 %v183, %v257
    %v260 = vsel %vm160, %v182, 0
    %262 = vmatprep.subr.mxu0 0.0
    %263 = vmatpush1.msra.mxu0 0.0
    %264 = vmatprep.subr.mxu0 0.0
    %265 = vmatpush1.msra.mxu0 0.0
    %266 = vmatprep.subr.mxu0 0.0
    %267 = vmatpush1.msra.mxu0 0.0
    %268 = vmatprep.subr.mxu0 0.0
    %269 = vmatpush1.msra.mxu0 0.0
    %270 = vmatprep.subr.mxu0 0.0
    %271 = vmatpush1.msra.mxu0 0.0
    %272 = vmatprep.subr.mxu0 0.0
    %273 = vmatpush1.msra.mxu0 0.0
    %274 = vmatprep.subr.mxu0 0.0
    %275 = vmatpush1.msra.mxu0 0.0
    %276 = vmatprep.subr.mxu0 0.0
    %277 = vmatpush1.msra.mxu0 0.0
    %278 = vmatprep.subr.mxu0 0.0
    %279 = vmatpush1.msra.mxu0 0.0
    %280 = vmatprep.subr.mxu0 0.0
    %281 = vmatpush1.msra.mxu0 0.0
    %282 = vmatprep.subr.mxu0 0.0
    %283 = vmatpush1.msra.mxu0 0.0
    %284 = vmatprep.subr.mxu0 0.0
    %285 = vmatpush1.msra.mxu0 0.0
    %286 = vmatprep.subr.mxu0 0.0
    %287 = vmatpush1.msra.mxu0 0.0
    %288 = vmatprep.subr.mxu0 0.0
    %289 = vmatpush1.msra.mxu0 0.0
    %290 = vmatprep.subr.mxu0 0.0
    %291 = vmatpush1.msra.mxu0 0.0
    %292 = vmatprep.subr.mxu0 0.0
    %293 = vmatpush1.msra.mxu0 %v258
    %294 = vmatprep.subr.mxu0 0.0
    %295 = vmatpush2.msra.mxu0 0.0
    %296 = vmatprep.subr.mxu0 0.0
    %297 = vmatpush2.msra.mxu0 0.0
    %298 = vmatprep.subr.mxu0 0.0
    %299 = vmatpush2.msra.mxu0 0.0
    %300 = vmatprep.subr.mxu0 0.0
    %301 = vmatpush2.msra.mxu0 0.0
    %302 = vmatprep.subr.mxu0 0.0
    %303 = vmatpush2.msra.mxu0 0.0
    %304 = vmatprep.subr.mxu0 0.0
    %305 = vmatpush2.msra.mxu0 0.0
    %306 = vmatprep.subr.mxu0 0.0
    %307 = vmatpush2.msra.mxu0 0.0
    %308 = vmatprep.subr.mxu0 0.0
    %309 = vmatpush2.msra.mxu0 0.0
    %310 = vmatprep.subr.mxu0 0.0
    %311 = vmatpush2.msra.mxu0 0.0
    %312 = vmatprep.subr.mxu0 0.0
    %313 = vmatpush2.msra.mxu0 0.0
    %314 = vmatprep.subr.mxu0 0.0
    %315 = vmatpush2.msra.mxu0 0.0
    %316 = vmatprep.subr.mxu0 0.0
    %317 = vmatpush2.msra.mxu0 0.0
    %318 = vmatprep.subr.mxu0 0.0
    %319 = vmatpush2.msra.mxu0 0.0
    %320 = vmatprep.subr.mxu0 0.0
    %321 = vmatpush2.msra.mxu0 0.0
    %322 = vmatprep.subr.mxu0 0.0
    %323 = vmatpush2.msra.mxu0 0.0
    %324 = vmatprep.subr.mxu0 0.0
    %325 = vmatpush2.msra.mxu0 0.0
    %326 = vmatprep.mubr.f32.mxu0 0.0
    %327 = vmatmul.mubr.f32.gmra.mxu0 %v260
    %v328 = vpop.f32.mrf.mxu0
    %v329 = vadd.f32 0.0, %v328
    %v330 = vpop.f32.mrf.mxu0
    %331 = vdwg.mxu0
    %v333 = vsel %vm160, %v258, 0
    %335 = vmatprep.subr.mxu0 0.0
    %336 = vmatpush1.msra.mxu0 0.0
    %337 = vmatprep.subr.mxu0 0.0
    %338 = vmatpush1.msra.mxu0 0.0
    %339 = vmatprep.subr.mxu0 0.0
    %340 = vmatpush1.msra.mxu0 0.0
    %341 = vmatprep.subr.mxu0 0.0
    %342 = vmatpush1.msra.mxu0 0.0
    %343 = vmatprep.subr.mxu0 0.0
    %344 = vmatpush1.msra.mxu0 0.0
    %345 = vmatprep.subr.mxu0 0.0
    %346 = vmatpush1.msra.mxu0 0.0
    %347 = vmatprep.subr.mxu0 0.0
    %348 = vmatpush1.msra.mxu0 0.0
    %349 = vmatprep.subr.mxu0 0.0
    %350 = vmatpush1.msra.mxu0 0.0
    %351 = vmatprep.subr.mxu0 0.0
    %352 = vmatpush1.msra.mxu0 0.0
    %353 = vmatprep.subr.mxu0 0.0
    %354 = vmatpush1.msra.mxu0 0.0
    %355 = vmatprep.subr.mxu0 0.0
    %356 = vmatpush1.msra.mxu0 0.0
    %357 = vmatprep.subr.mxu0 0.0
    %358 = vmatpush1.msra.mxu0 0.0
    %359 = vmatprep.subr.mxu0 0.0
    %360 = vmatpush1.msra.mxu0 0.0
    %361 = vmatprep.subr.mxu0 0.0
    %362 = vmatpush1.msra.mxu0 0.0
    %363 = vmatprep.subr.mxu0 0.0
    %364 = vmatpush1.msra.mxu0 0.0
    %365 = vmatprep.subr.mxu0 0.0
    %366 = vmatpush1.msra.mxu0 %v34
    %367 = vmatprep.subr.mxu0 0.0
    %368 = vmatpush2.msra.mxu0 0.0
    %369 = vmatprep.subr.mxu0 0.0
    %370 = vmatpush2.msra.mxu0 0.0
    %371 = vmatprep.subr.mxu0 0.0
    %372 = vmatpush2.msra.mxu0 0.0
    %373 = vmatprep.subr.mxu0 0.0
    %374 = vmatpush2.msra.mxu0 0.0
    %375 = vmatprep.subr.mxu0 0.0
    %376 = vmatpush2.msra.mxu0 0.0
    %377 = vmatprep.subr.mxu0 0.0
    %378 = vmatpush2.msra.mxu0 0.0
    %379 = vmatprep.subr.mxu0 0.0
    %380 = vmatpush2.msra.mxu0 0.0
    %381 = vmatprep.subr.mxu0 0.0
    %382 = vmatpush2.msra.mxu0 0.0
    %383 = vmatprep.subr.mxu0 0.0
    %384 = vmatpush2.msra.mxu0 0.0
    %385 = vmatprep.subr.mxu0 0.0
    %386 = vmatpush2.msra.mxu0 0.0
    %387 = vmatprep.subr.mxu0 0.0
    %388 = vmatpush2.msra.mxu0 0.0
    %389 = vmatprep.subr.mxu0 0.0
    %390 = vmatpush2.msra.mxu0 0.0
    %391 = vmatprep.subr.mxu0 0.0
    %392 = vmatpush2.msra.mxu0 0.0
    %393 = vmatprep.subr.mxu0 0.0
    %394 = vmatpush2.msra.mxu0 0.0
    %395 = vmatprep.subr.mxu0 0.0
    %396 = vmatpush2.msra.mxu0 0.0
    %397 = vmatprep.subr.mxu0 0.0
    %398 = vmatpush2.msra.mxu0 0.0
    %399 = vmatprep.mubr.f32.mxu0 0.0
    %400 = vmatmul.mubr.f32.gmra.mxu0 %v333
    %v401 = vpop.f32.mrf.mxu0
    %v402 = vadd.f32 0.0, %v401
    %v403 = vpop.f32.mrf.mxu0
    %404 = vdwg.mxu0
    %v406 = vsel %vm160, %v402, 0
    %408 = vmatprep.subr.mxu0 0.0
    %409 = vmatpush1.msra.mxu0 0.0
    %410 = vmatprep.subr.mxu0 0.0
    %411 = vmatpush1.msra.mxu0 0.0
    %412 = vmatprep.subr.mxu0 0.0
    %413 = vmatpush1.msra.mxu0 0.0
    %414 = vmatprep.subr.mxu0 0.0
    %415 = vmatpush1.msra.mxu0 0.0
    %416 = vmatprep.subr.mxu0 0.0
    %417 = vmatpush1.msra.mxu0 0.0
    %418 = vmatprep.subr.mxu0 0.0
    %419 = vmatpush1.msra.mxu0 0.0
    %420 = vmatprep.subr.mxu0 0.0
    %421 = vmatpush1.msra.mxu0 0.0
    %422 = vmatprep.subr.mxu0 0.0
    %423 = vmatpush1.msra.mxu0 0.0
    %424 = vmatprep.subr.mxu0 0.0
    %425 = vmatpush1.msra.mxu0 0.0
    %426 = vmatprep.subr.mxu0 0.0
    %427 = vmatpush1.msra.mxu0 0.0
    %428 = vmatprep.subr.mxu0 0.0
    %429 = vmatpush1.msra.mxu0 0.0
    %430 = vmatprep.subr.mxu0 0.0
    %431 = vmatpush1.msra.mxu0 0.0
    %432 = vmatprep.subr.mxu0 0.0
    %433 = vmatpush1.msra.mxu0 0.0
    %434 = vmatprep.subr.mxu0 0.0
    %435 = vmatpush1.msra.mxu0 0.0
    %436 = vmatprep.subr.mxu0 0.0
    %437 = vmatpush1.msra.mxu0 0.0
    %438 = vmatprep.subr.mxu0 0.0
    %439 = vmatpush1.msra.mxu0 %v329
    %440 = vmatprep.subr.mxu0 0.0
    %441 = vmatpush2.msra.mxu0 0.0
    %442 = vmatprep.subr.mxu0 0.0
    %443 = vmatpush2.msra.mxu0 0.0
    %444 = vmatprep.subr.mxu0 0.0
    %445 = vmatpush2.msra.mxu0 0.0
    %446 = vmatprep.subr.mxu0 0.0
    %447 = vmatpush2.msra.mxu0 0.0
    %448 = vmatprep.subr.mxu0 0.0
    %449 = vmatpush2.msra.mxu0 0.0
    %450 = vmatprep.subr.mxu0 0.0
    %451 = vmatpush2.msra.mxu0 0.0
    %452 = vmatprep.subr.mxu0 0.0
    %453 = vmatpush2.msra.mxu0 0.0
    %454 = vmatprep.subr.mxu0 0.0
    %455 = vmatpush2.msra.mxu0 0.0
    %456 = vmatprep.subr.mxu0 0.0
    %457 = vmatpush2.msra.mxu0 0.0
    %458 = vmatprep.subr.mxu0 0.0
    %459 = vmatpush2.msra.mxu0 0.0
    %460 = vmatprep.subr.mxu0 0.0
    %461 = vmatpush2.msra.mxu0 0.0
    %462 = vmatprep.subr.mxu0 0.0
    %463 = vmatpush2.msra.mxu0 0.0
    %464 = vmatprep.subr.mxu0 0.0
    %465 = vmatpush2.msra.mxu0 0.0
    %466 = vmatprep.subr.mxu0 0.0
    %467 = vmatpush2.msra.mxu0 0.0
    %468 = vmatprep.subr.mxu0 0.0
    %469 = vmatpush2.msra.mxu0 0.0
    %470 = vmatprep.subr.mxu0 0.0
    %471 = vmatpush2.msra.mxu0 0.0
    %472 = vmatprep.mubr.f32.mxu0 0.0
    %473 = vmatmul.mubr.f32.gmra.mxu0 %v406
    %v474 = vpop.f32.mrf.mxu0
    %v475 = vadd.f32 0.0, %v474
    %v476 = vpop.f32.mrf.mxu0
    %477 = vdwg.mxu0
    %v478 = vmul.f32 %v475, 0.5
    %v479 = vsub.f32 %v183, %v478
    %v481 = vsel %vm160, %v329, 0
    %483 = vmatprep.subr.mxu0 0.0
    %484 = vmatpush1.msra.mxu0 0.0
    %485 = vmatprep.subr.mxu0 0.0
    %486 = vmatpush1.msra.mxu0 0.0
    %487 = vmatprep.subr.mxu0 0.0
    %488 = vmatpush1.msra.mxu0 0.0
    %489 = vmatprep.subr.mxu0 0.0
    %490 = vmatpush1.msra.mxu0 0.0
    %491 = vmatprep.subr.mxu0 0.0
    %492 = vmatpush1.msra.mxu0 0.0
    %493 = vmatprep.subr.mxu0 0.0
    %494 = vmatpush1.msra.mxu0 0.0
    %495 = vmatprep.subr.mxu0 0.0
    %496 = vmatpush1.msra.mxu0 0.0
    %497 = vmatprep.subr.mxu0 0.0
    %498 = vmatpush1.msra.mxu0 0.0
    %499 = vmatprep.subr.mxu0 0.0
    %500 = vmatpush1.msra.mxu0 0.0
    %501 = vmatprep.subr.mxu0 0.0
    %502 = vmatpush1.msra.mxu0 0.0
    %503 = vmatprep.subr.mxu0 0.0
    %504 = vmatpush1.msra.mxu0 0.0
    %505 = vmatprep.subr.mxu0 0.0
    %506 = vmatpush1.msra.mxu0 0.0
    %507 = vmatprep.subr.mxu0 0.0
    %508 = vmatpush1.msra.mxu0 0.0
    %509 = vmatprep.subr.mxu0 0.0
    %510 = vmatpush1.msra.mxu0 0.0
    %511 = vmatprep.subr.mxu0 0.0
    %512 = vmatpush1.msra.mxu0 0.0
    %513 = vmatprep.subr.mxu0 0.0
    %514 = vmatpush1.msra.mxu0 %v479
    %515 = vmatprep.subr.mxu0 0.0
    %516 = vmatpush2.msra.mxu0 0.0
    %517 = vmatprep.subr.mxu0 0.0
    %518 = vmatpush2.msra.mxu0 0.0
    %519 = vmatprep.subr.mxu0 0.0
    %520 = vmatpush2.msra.mxu0 0.0
    %521 = vmatprep.subr.mxu0 0.0
    %522 = vmatpush2.msra.mxu0 0.0
    %523 = vmatprep.subr.mxu0 0.0
    %524 = vmatpush2.msra.mxu0 0.0
    %525 = vmatprep.subr.mxu0 0.0
    %526 = vmatpush2.msra.mxu0 0.0
    %527 = vmatprep.subr.mxu0 0.0
    %528 = vmatpush2.msra.mxu0 0.0
    %529 = vmatprep.subr.mxu0 0.0
    %530 = vmatpush2.msra.mxu0 0.0
    %531 = vmatprep.subr.mxu0 0.0
    %532 = vmatpush2.msra.mxu0 0.0
    %533 = vmatprep.subr.mxu0 0.0
    %534 = vmatpush2.msra.mxu0 0.0
    %535 = vmatprep.subr.mxu0 0.0
    %536 = vmatpush2.msra.mxu0 0.0
    %537 = vmatprep.subr.mxu0 0.0
    %538 = vmatpush2.msra.mxu0 0.0
    %539 = vmatprep.subr.mxu0 0.0
    %540 = vmatpush2.msra.mxu0 0.0
    %541 = vmatprep.subr.mxu0 0.0
    %542 = vmatpush2.msra.mxu0 0.0
    %543 = vmatprep.subr.mxu0 0.0
    %544 = vmatpush2.msra.mxu0 0.0
    %545 = vmatprep.subr.mxu0 0.0
    %546 = vmatpush2.msra.mxu0 0.0
    %547 = vmatprep.mubr.f32.mxu0 0.0
    %548 = vmatmul.mubr.f32.gmra.mxu0 %v481
    %v549 = vpop.f32.mrf.mxu0
    %v550 = vadd.f32 0.0, %v549
    %v551 = vpop.f32.mrf.mxu0
    %552 = vdwg.mxu0
    %v554 = vsel %vm160, %v479, 0
    %556 = vmatprep.subr.mxu0 0.0
    %557 = vmatpush1.msra.mxu0 0.0
    %558 = vmatprep.subr.mxu0 0.0
    %559 = vmatpush1.msra.mxu0 0.0
    %560 = vmatprep.subr.mxu0 0.0
    %561 = vmatpush1.msra.mxu0 0.0
    %562 = vmatprep.subr.mxu0 0.0
    %563 = vmatpush1.msra.mxu0 0.0
    %564 = vmatprep.subr.mxu0 0.0
    %565 = vmatpush1.msra.mxu0 0.0
    %566 = vmatprep.subr.mxu0 0.0
    %567 = vmatpush1.msra.mxu0 0.0
    %568 = vmatprep.subr.mxu0 0.0
    %569 = vmatpush1.msra.mxu0 0.0
    %570 = vmatprep.subr.mxu0 0.0
    %571 = vmatpush1.msra.mxu0 0.0
    %572 = vmatprep.subr.mxu0 0.0
    %573 = vmatpush1.msra.mxu0 0.0
    %574 = vmatprep.subr.mxu0 0.0
    %575 = vmatpush1.msra.mxu0 0.0
    %576 = vmatprep.subr.mxu0 0.0
    %577 = vmatpush1.msra.mxu0 0.0
    %578 = vmatprep.subr.mxu0 0.0
    %579 = vmatpush1.msra.mxu0 0.0
    %580 = vmatprep.subr.mxu0 0.0
    %581 = vmatpush1.msra.mxu0 0.0
    %582 = vmatprep.subr.mxu0 0.0
    %583 = vmatpush1.msra.mxu0 0.0
    %584 = vmatprep.subr.mxu0 0.0
    %585 = vmatpush1.msra.mxu0 0.0
    %586 = vmatprep.subr.mxu0 0.0
    %587 = vmatpush1.msra.mxu0 %v402
    %588 = vmatprep.subr.mxu0 0.0
    %589 = vmatpush2.msra.mxu0 0.0
    %590 = vmatprep.subr.mxu0 0.0
    %591 = vmatpush2.msra.mxu0 0.0
    %592 = vmatprep.subr.mxu0 0.0
    %593 = vmatpush2.msra.mxu0 0.0
    %594 = vmatprep.subr.mxu0 0.0
    %595 = vmatpush2.msra.mxu0 0.0
    %596 = vmatprep.subr.mxu0 0.0
    %597 = vmatpush2.msra.mxu0 0.0
    %598 = vmatprep.subr.mxu0 0.0
    %599 = vmatpush2.msra.mxu0 0.0
    %600 = vmatprep.subr.mxu0 0.0
    %601 = vmatpush2.msra.mxu0 0.0
    %602 = vmatprep.subr.mxu0 0.0
    %603 = vmatpush2.msra.mxu0 0.0
    %604 = vmatprep.subr.mxu0 0.0
    %605 = vmatpush2.msra.mxu0 0.0
    %606 = vmatprep.subr.mxu0 0.0
    %607 = vmatpush2.msra.mxu0 0.0
    %608 = vmatprep.subr.mxu0 0.0
    %609 = vmatpush2.msra.mxu0 0.0
    %610 = vmatprep.subr.mxu0 0.0
    %611 = vmatpush2.msra.mxu0 0.0
    %612 = vmatprep.subr.mxu0 0.0
    %613 = vmatpush2.msra.mxu0 0.0
    %614 = vmatprep.subr.mxu0 0.0
    %615 = vmatpush2.msra.mxu0 0.0
    %616 = vmatprep.subr.mxu0 0.0
    %617 = vmatpush2.msra.mxu0 0.0
    %618 = vmatprep.subr.mxu0 0.0
    %619 = vmatpush2.msra.mxu0 0.0
    %620 = vmatprep.mubr.f32.mxu0 0.0
    %621 = vmatmul.mubr.f32.gmra.mxu0 %v554
    %v622 = vpop.f32.mrf.mxu0
    %v623 = vadd.f32 0.0, %v622
    %v624 = vpop.f32.mrf.mxu0
    %625 = vdwg.mxu0
    %v627 = vsel %vm160, %v623, 0
    %629 = vmatprep.subr.mxu0 0.0
    %630 = vmatpush1.msra.mxu0 0.0
    %631 = vmatprep.subr.mxu0 0.0
    %632 = vmatpush1.msra.mxu0 0.0
    %633 = vmatprep.subr.mxu0 0.0
    %634 = vmatpush1.msra.mxu0 0.0
    %635 = vmatprep.subr.mxu0 0.0
    %636 = vmatpush1.msra.mxu0 0.0
    %637 = vmatprep.subr.mxu0 0.0
    %638 = vmatpush1.msra.mxu0 0.0
    %639 = vmatprep.subr.mxu0 0.0
    %640 = vmatpush1.msra.mxu0 0.0
    %641 = vmatprep.subr.mxu0 0.0
    %642 = vmatpush1.msra.mxu0 0.0
    %643 = vmatprep.subr.mxu0 0.0
    %644 = vmatpush1.msra.mxu0 0.0
    %645 = vmatprep.subr.mxu0 0.0
    %646 = vmatpush1.msra.mxu0 0.0
    %647 = vmatprep.subr.mxu0 0.0
    %648 = vmatpush1.msra.mxu0 0.0
    %649 = vmatprep.subr.mxu0 0.0
    %650 = vmatpush1.msra.mxu0 0.0
    %651 = vmatprep.subr.mxu0 0.0
    %652 = vmatpush1.msra.mxu0 0.0
    %653 = vmatprep.subr.mxu0 0.0
    %654 = vmatpush1.msra.mxu0 0.0
    %655 = vmatprep.subr.mxu0 0.0
    %656 = vmatpush1.msra.mxu0 0.0
    %657 = vmatprep.subr.mxu0 0.0
    %658 = vmatpush1.msra.mxu0 0.0
    %659 = vmatprep.subr.mxu0 0.0
    %660 = vmatpush1.msra.mxu0 %v550
    %661 = vmatprep.subr.mxu0 0.0
    %662 = vmatpush2.msra.mxu0 0.0
    %663 = vmatprep.subr.mxu0 0.0
    %664 = vmatpush2.msra.mxu0 0.0
    %665 = vmatprep.subr.mxu0 0.0
    %666 = vmatpush2.msra.mxu0 0.0
    %667 = vmatprep.subr.mxu0 0.0
    %668 = vmatpush2.msra.mxu0 0.0
    %669 = vmatprep.subr.mxu0 0.0
    %670 = vmatpush2.msra.mxu0 0.0
    %671 = vmatprep.subr.mxu0 0.0
    %672 = vmatpush2.msra.mxu0 0.0
    %673 = vmatprep.subr.mxu0 0.0
    %674 = vmatpush2.msra.mxu0 0.0
    %675 = vmatprep.subr.mxu0 0.0
    %676 = vmatpush2.msra.mxu0 0.0
    %677 = vmatprep.subr.mxu0 0.0
    %678 = vmatpush2.msra.mxu0 0.0
    %679 = vmatprep.subr.mxu0 0.0
    %680 = vmatpush2.msra.mxu0 0.0
    %681 = vmatprep.subr.mxu0 0.0
    %682 = vmatpush2.msra.mxu0 0.0
    %683 = vmatprep.subr.mxu0 0.0
    %684 = vmatpush2.msra.mxu0 0.0
    %685 = vmatprep.subr.mxu0 0.0
    %686 = vmatpush2.msra.mxu0 0.0
    %687 = vmatprep.subr.mxu0 0.0
    %688 = vmatpush2.msra.mxu0 0.0
    %689 = vmatprep.subr.mxu0 0.0
    %690 = vmatpush2.msra.mxu0 0.0
    %691 = vmatprep.subr.mxu0 0.0
    %692 = vmatpush2.msra.mxu0 0.0
    %693 = vmatprep.mubr.f32.mxu0 0.0
    %694 = vmatmul.mubr.f32.gmra.mxu0 %v627
    %v695 = vpop.f32.mrf.mxu0
    %v696 = vadd.f32 0.0, %v695
    %v697 = vpop.f32.mrf.mxu0
    %698 = vdwg.mxu0
    %v699 = vmul.f32 %v696, 0.5
    %v700 = vsub.f32 %v183, %v699
    %v702 = vsel %vm160, %v550, 0
    %704 = vmatprep.subr.mxu0 0.0
    %705 = vmatpush1.msra.mxu0 0.0
    %706 = vmatprep.subr.mxu0 0.0
    %707 = vmatpush1.msra.mxu0 0.0
    %708 = vmatprep.subr.mxu0 0.0
    %709 = vmatpush1.msra.mxu0 0.0
    %710 = vmatprep.subr.mxu0 0.0
    %711 = vmatpush1.msra.mxu0 0.0
    %712 = vmatprep.subr.mxu0 0.0
    %713 = vmatpush1.msra.mxu0 0.0
    %714 = vmatprep.subr.mxu0 0.0
    %715 = vmatpush1.msra.mxu0 0.0
    %716 = vmatprep.subr.mxu0 0.0
    %717 = vmatpush1.msra.mxu0 0.0
    %718 = vmatprep.subr.mxu0 0.0
    %719 = vmatpush1.msra.mxu0 0.0
    %720 = vmatprep.subr.mxu0 0.0
    %721 = vmatpush1.msra.mxu0 0.0
    %722 = vmatprep.subr.mxu0 0.0
    %723 = vmatpush1.msra.mxu0 0.0
    %724 = vmatprep.subr.mxu0 0.0
    %725 = vmatpush1.msra.mxu0 0.0
    %726 = vmatprep.subr.mxu0 0.0
    %727 = vmatpush1.msra.mxu0 0.0
    %728 = vmatprep.subr.mxu0 0.0
    %729 = vmatpush1.msra.mxu0 0.0
    %730 = vmatprep.subr.mxu0 0.0
    %731 = vmatpush1.msra.mxu0 0.0
    %732 = vmatprep.subr.mxu0 0.0
    %733 = vmatpush1.msra.mxu0 0.0
    %734 = vmatprep.subr.mxu0 0.0
    %735 = vmatpush1.msra.mxu0 %v700
    %736 = vmatprep.subr.mxu0 0.0
    %737 = vmatpush2.msra.mxu0 0.0
    %738 = vmatprep.subr.mxu0 0.0
    %739 = vmatpush2.msra.mxu0 0.0
    %740 = vmatprep.subr.mxu0 0.0
    %741 = vmatpush2.msra.mxu0 0.0
    %742 = vmatprep.subr.mxu0 0.0
    %743 = vmatpush2.msra.mxu0 0.0
    %744 = vmatprep.subr.mxu0 0.0
    %745 = vmatpush2.msra.mxu0 0.0
    %746 = vmatprep.subr.mxu0 0.0
    %747 = vmatpush2.msra.mxu0 0.0
    %748 = vmatprep.subr.mxu0 0.0
    %749 = vmatpush2.msra.mxu0 0.0
    %750 = vmatprep.subr.mxu0 0.0
    %751 = vmatpush2.msra.mxu0 0.0
    %752 = vmatprep.subr.mxu0 0.0
    %753 = vmatpush2.msra.mxu0 0.0
    %754 = vmatprep.subr.mxu0 0.0
    %755 = vmatpush2.msra.mxu0 0.0
    %756 = vmatprep.subr.mxu0 0.0
    %757 = vmatpush2.msra.mxu0 0.0
    %758 = vmatprep.subr.mxu0 0.0
    %759 = vmatpush2.msra.mxu0 0.0
    %760 = vmatprep.subr.mxu0 0.0
    %761 = vmatpush2.msra.mxu0 0.0
    %762 = vmatprep.subr.mxu0 0.0
    %763 = vmatpush2.msra.mxu0 0.0
    %764 = vmatprep.subr.mxu0 0.0
    %765 = vmatpush2.msra.mxu0 0.0
    %766 = vmatprep.subr.mxu0 0.0
    %767 = vmatpush2.msra.mxu0 0.0
    %768 = vmatprep.mubr.f32.mxu0 0.0
    %769 = vmatmul.mubr.f32.gmra.mxu0 %v702
    %v770 = vpop.f32.mrf.mxu0
    %v771 = vadd.f32 0.0, %v770
    %v772 = vpop.f32.mrf.mxu0
    %773 = vdwg.mxu0
    %v775 = vsel %vm160, %v700, 0
    %777 = vmatprep.subr.mxu0 0.0
    %778 = vmatpush1.msra.mxu0 0.0
    %779 = vmatprep.subr.mxu0 0.0
    %780 = vmatpush1.msra.mxu0 0.0
    %781 = vmatprep.subr.mxu0 0.0
    %782 = vmatpush1.msra.mxu0 0.0
    %783 = vmatprep.subr.mxu0 0.0
    %784 = vmatpush1.msra.mxu0 0.0
    %785 = vmatprep.subr.mxu0 0.0
    %786 = vmatpush1.msra.mxu0 0.0
    %787 = vmatprep.subr.mxu0 0.0
    %788 = vmatpush1.msra.mxu0 0.0
    %789 = vmatprep.subr.mxu0 0.0
    %790 = vmatpush1.msra.mxu0 0.0
    %791 = vmatprep.subr.mxu0 0.0
    %792 = vmatpush1.msra.mxu0 0.0
    %793 = vmatprep.subr.mxu0 0.0
    %794 = vmatpush1.msra.mxu0 0.0
    %795 = vmatprep.subr.mxu0 0.0
    %796 = vmatpush1.msra.mxu0 0.0
    %797 = vmatprep.subr.mxu0 0.0
    %798 = vmatpush1.msra.mxu0 0.0
    %799 = vmatprep.subr.mxu0 0.0
    %800 = vmatpush1.msra.mxu0 0.0
    %801 = vmatprep.subr.mxu0 0.0
    %802 = vmatpush1.msra.mxu0 0.0
    %803 = vmatprep.subr.mxu0 0.0
    %804 = vmatpush1.msra.mxu0 0.0
    %805 = vmatprep.subr.mxu0 0.0
    %806 = vmatpush1.msra.mxu0 0.0
    %807 = vmatprep.subr.mxu0 0.0
    %808 = vmatpush1.msra.mxu0 %v623
    %809 = vmatprep.subr.mxu0 0.0
    %810 = vmatpush2.msra.mxu0 0.0
    %811 = vmatprep.subr.mxu0 0.0
    %812 = vmatpush2.msra.mxu0 0.0
    %813 = vmatprep.subr.mxu0 0.0
    %814 = vmatpush2.msra.mxu0 0.0
    %815 = vmatprep.subr.mxu0 0.0
    %816 = vmatpush2.msra.mxu0 0.0
    %817 = vmatprep.subr.mxu0 0.0
    %818 = vmatpush2.msra.mxu0 0.0
    %819 = vmatprep.subr.mxu0 0.0
    %820 = vmatpush2.msra.mxu0 0.0
    %821 = vmatprep.subr.mxu0 0.0
    %822 = vmatpush2.msra.mxu0 0.0
    %823 = vmatprep.subr.mxu0 0.0
    %824 = vmatpush2.msra.mxu0 0.0
    %825 = vmatprep.subr.mxu0 0.0
    %826 = vmatpush2.msra.mxu0 0.0
    %827 = vmatprep.subr.mxu0 0.0
    %828 = vmatpush2.msra.mxu0 0.0
    %829 = vmatprep.subr.mxu0 0.0
    %830 = vmatpush2.msra.mxu0 0.0
    %831 = vmatprep.subr.mxu0 0.0
    %832 = vmatpush2.msra.mxu0 0.0
    %833 = vmatprep.subr.mxu0 0.0
    %834 = vmatpush2.msra.mxu0 0.0
    %835 = vmatprep.subr.mxu0 0.0
    %836 = vmatpush2.msra.mxu0 0.0
    %837 = vmatprep.subr.mxu0 0.0
    %838 = vmatpush2.msra.mxu0 0.0
    %839 = vmatprep.subr.mxu0 0.0
    %840 = vmatpush2.msra.mxu0 0.0
    %841 = vmatprep.mubr.f32.mxu0 0.0
    %842 = vmatmul.mubr.f32.gmra.mxu0 %v775
    %v843 = vpop.f32.mrf.mxu0
    %v844 = vadd.f32 0.0, %v843
    %v845 = vpop.f32.mrf.mxu0
    %846 = vdwg.mxu0
    %v848 = vsel %vm160, %v844, 0
    %850 = vmatprep.subr.mxu0 0.0
    %851 = vmatpush1.msra.mxu0 0.0
    %852 = vmatprep.subr.mxu0 0.0
    %853 = vmatpush1.msra.mxu0 0.0
    %854 = vmatprep.subr.mxu0 0.0
    %855 = vmatpush1.msra.mxu0 0.0
    %856 = vmatprep.subr.mxu0 0.0
    %857 = vmatpush1.msra.mxu0 0.0
    %858 = vmatprep.subr.mxu0 0.0
    %859 = vmatpush1.msra.mxu0 0.0
    %860 = vmatprep.subr.mxu0 0.0
    %861 = vmatpush1.msra.mxu0 0.0
    %862 = vmatprep.subr.mxu0 0.0
    %863 = vmatpush1.msra.mxu0 0.0
    %864 = vmatprep.subr.mxu0 0.0
    %865 = vmatpush1.msra.mxu0 0.0
    %866 = vmatprep.subr.mxu0 0.0
    %867 = vmatpush1.msra.mxu0 0.0
    %868 = vmatprep.subr.mxu0 0.0
    %869 = vmatpush1.msra.mxu0 0.0
    %870 = vmatprep.subr.mxu0 0.0
    %871 = vmatpush1.msra.mxu0 0.0
    %872 = vmatprep.subr.mxu0 0.0
    %873 = vmatpush1.msra.mxu0 0.0
    %874 = vmatprep.subr.mxu0 0.0
    %875 = vmatpush1.msra.mxu0 0.0
    %876 = vmatprep.subr.mxu0 0.0
    %877 = vmatpush1.msra.mxu0 0.0
    %878 = vmatprep.subr.mxu0 0.0
    %879 = vmatpush1.msra.mxu0 0.0
    %880 = vmatprep.subr.mxu0 0.0
    %881 = vmatpush1.msra.mxu0 %v771
    %882 = vmatprep.subr.mxu0 0.0
    %883 = vmatpush2.msra.mxu0 0.0
    %884 = vmatprep.subr.mxu0 0.0
    %885 = vmatpush2.msra.mxu0 0.0
    %886 = vmatprep.subr.mxu0 0.0
    %887 = vmatpush2.msra.mxu0 0.0
    %888 = vmatprep.subr.mxu0 0.0
    %889 = vmatpush2.msra.mxu0 0.0
    %890 = vmatprep.subr.mxu0 0.0
    %891 = vmatpush2.msra.mxu0 0.0
    %892 = vmatprep.subr.mxu0 0.0
    %893 = vmatpush2.msra.mxu0 0.0
    %894 = vmatprep.subr.mxu0 0.0
    %895 = vmatpush2.msra.mxu0 0.0
    %896 = vmatprep.subr.mxu0 0.0
    %897 = vmatpush2.msra.mxu0 0.0
    %898 = vmatprep.subr.mxu0 0.0
    %899 = vmatpush2.msra.mxu0 0.0
    %900 = vmatprep.subr.mxu0 0.0
    %901 = vmatpush2.msra.mxu0 0.0
    %902 = vmatprep.subr.mxu0 0.0
    %903 = vmatpush2.msra.mxu0 0.0
    %904 = vmatprep.subr.mxu0 0.0
    %905 = vmatpush2.msra.mxu0 0.0
    %906 = vmatprep.subr.mxu0 0.0
    %907 = vmatpush2.msra.mxu0 0.0
    %908 = vmatprep.subr.mxu0 0.0
    %909 = vmatpush2.msra.mxu0 0.0
    %910 = vmatprep.subr.mxu0 0.0
    %911 = vmatpush2.msra.mxu0 0.0
    %912 = vmatprep.subr.mxu0 0.0
    %913 = vmatpush2.msra.mxu0 0.0
    %914 = vmatprep.mubr.f32.mxu0 0.0
    %915 = vmatmul.mubr.f32.gmra.mxu0 %v848
    %v916 = vpop.f32.mrf.mxu0
    %v917 = vadd.f32 0.0, %v916
    %v918 = vpop.f32.mrf.mxu0
    %919 = vdwg.mxu0
    %v920 = vmul.f32 %v917, 0.5
    %v921 = vsub.f32 %v183, %v920
    %v923 = vsel %vm160, %v771, 0
    %925 = vmatprep.subr.mxu0 0.0
    %926 = vmatpush1.msra.mxu0 0.0
    %927 = vmatprep.subr.mxu0 0.0
    %928 = vmatpush1.msra.mxu0 0.0
    %929 = vmatprep.subr.mxu0 0.0
    %930 = vmatpush1.msra.mxu0 0.0
    %931 = vmatprep.subr.mxu0 0.0
    %932 = vmatpush1.msra.mxu0 0.0
    %933 = vmatprep.subr.mxu0 0.0
    %934 = vmatpush1.msra.mxu0 0.0
    %935 = vmatprep.subr.mxu0 0.0
    %936 = vmatpush1.msra.mxu0 0.0
    %937 = vmatprep.subr.mxu0 0.0
    %938 = vmatpush1.msra.mxu0 0.0
    %939 = vmatprep.subr.mxu0 0.0
    %940 = vmatpush1.msra.mxu0 0.0
    %941 = vmatprep.subr.mxu0 0.0
    %942 = vmatpush1.msra.mxu0 0.0
    %943 = vmatprep.subr.mxu0 0.0
    %944 = vmatpush1.msra.mxu0 0.0
    %945 = vmatprep.subr.mxu0 0.0
    %946 = vmatpush1.msra.mxu0 0.0
    %947 = vmatprep.subr.mxu0 0.0
    %948 = vmatpush1.msra.mxu0 0.0
    %949 = vmatprep.subr.mxu0 0.0
    %950 = vmatpush1.msra.mxu0 0.0
    %951 = vmatprep.subr.mxu0 0.0
    %952 = vmatpush1.msra.mxu0 0.0
    %953 = vmatprep.subr.mxu0 0.0
    %954 = vmatpush1.msra.mxu0 0.0
    %955 = vmatprep.subr.mxu0 0.0
    %956 = vmatpush1.msra.mxu0 %v921
    %957 = vmatprep.subr.mxu0 0.0
    %958 = vmatpush2.msra.mxu0 0.0
    %959 = vmatprep.subr.mxu0 0.0
    %960 = vmatpush2.msra.mxu0 0.0
    %961 = vmatprep.subr.mxu0 0.0
    %962 = vmatpush2.msra.mxu0 0.0
    %963 = vmatprep.subr.mxu0 0.0
    %964 = vmatpush2.msra.mxu0 0.0
    %965 = vmatprep.subr.mxu0 0.0
    %966 = vmatpush2.msra.mxu0 0.0
    %967 = vmatprep.subr.mxu0 0.0
    %968 = vmatpush2.msra.mxu0 0.0
    %969 = vmatprep.subr.mxu0 0.0
    %970 = vmatpush2.msra.mxu0 0.0
    %971 = vmatprep.subr.mxu0 0.0
    %972 = vmatpush2.msra.mxu0 0.0
    %973 = vmatprep.subr.mxu0 0.0
    %974 = vmatpush2.msra.mxu0 0.0
    %975 = vmatprep.subr.mxu0 0.0
    %976 = vmatpush2.msra.mxu0 0.0
    %977 = vmatprep.subr.mxu0 0.0
    %978 = vmatpush2.msra.mxu0 0.0
    %979 = vmatprep.subr.mxu0 0.0
    %980 = vmatpush2.msra.mxu0 0.0
    %981 = vmatprep.subr.mxu0 0.0
    %982 = vmatpush2.msra.mxu0 0.0
    %983 = vmatprep.subr.mxu0 0.0
    %984 = vmatpush2.msra.mxu0 0.0
    %985 = vmatprep.subr.mxu0 0.0
    %986 = vmatpush2.msra.mxu0 0.0
    %987 = vmatprep.subr.mxu0 0.0
    %988 = vmatpush2.msra.mxu0 0.0
    %989 = vmatprep.mubr.f32.mxu0 0.0
    %990 = vmatmul.mubr.f32.gmra.mxu0 %v923
    %v991 = vpop.f32.mrf.mxu0
    %v992 = vadd.f32 0.0, %v991
    %v993 = vpop.f32.mrf.mxu0
    %994 = vdwg.mxu0
    %v996 = vsel %vm160, %v921, 0
    %998 = vmatprep.subr.mxu0 0.0
    %999 = vmatpush1.msra.mxu0 0.0
    %1000 = vmatprep.subr.mxu0 0.0
    %1001 = vmatpush1.msra.mxu0 0.0
    %1002 = vmatprep.subr.mxu0 0.0
    %1003 = vmatpush1.msra.mxu0 0.0
    %1004 = vmatprep.subr.mxu0 0.0
    %1005 = vmatpush1.msra.mxu0 0.0
    %1006 = vmatprep.subr.mxu0 0.0
    %1007 = vmatpush1.msra.mxu0 0.0
    %1008 = vmatprep.subr.mxu0 0.0
    %1009 = vmatpush1.msra.mxu0 0.0
    %1010 = vmatprep.subr.mxu0 0.0
    %1011 = vmatpush1.msra.mxu0 0.0
    %1012 = vmatprep.subr.mxu0 0.0
    %1013 = vmatpush1.msra.mxu0 0.0
    %1014 = vmatprep.subr.mxu0 0.0
    %1015 = vmatpush1.msra.mxu0 0.0
    %1016 = vmatprep.subr.mxu0 0.0
    %1017 = vmatpush1.msra.mxu0 0.0
    %1018 = vmatprep.subr.mxu0 0.0
    %1019 = vmatpush1.msra.mxu0 0.0
    %1020 = vmatprep.subr.mxu0 0.0
    %1021 = vmatpush1.msra.mxu0 0.0
    %1022 = vmatprep.subr.mxu0 0.0
    %1023 = vmatpush1.msra.mxu0 0.0
    %1024 = vmatprep.subr.mxu0 0.0
    %1025 = vmatpush1.msra.mxu0 0.0
    %1026 = vmatprep.subr.mxu0 0.0
    %1027 = vmatpush1.msra.mxu0 0.0
    %1028 = vmatprep.subr.mxu0 0.0
    %1029 = vmatpush1.msra.mxu0 %v844
    %1030 = vmatprep.subr.mxu0 0.0
    %1031 = vmatpush2.msra.mxu0 0.0
    %1032 = vmatprep.subr.mxu0 0.0
    %1033 = vmatpush2.msra.mxu0 0.0
    %1034 = vmatprep.subr.mxu0 0.0
    %1035 = vmatpush2.msra.mxu0 0.0
    %1036 = vmatprep.subr.mxu0 0.0
    %1037 = vmatpush2.msra.mxu0 0.0
    %1038 = vmatprep.subr.mxu0 0.0
    %1039 = vmatpush2.msra.mxu0 0.0
    %1040 = vmatprep.subr.mxu0 0.0
    %1041 = vmatpush2.msra.mxu0 0.0
    %1042 = vmatprep.subr.mxu0 0.0
    %1043 = vmatpush2.msra.mxu0 0.0
    %1044 = vmatprep.subr.mxu0 0.0
    %1045 = vmatpush2.msra.mxu0 0.0
    %1046 = vmatprep.subr.mxu0 0.0
    %1047 = vmatpush2.msra.mxu0 0.0
    %1048 = vmatprep.subr.mxu0 0.0
    %1049 = vmatpush2.msra.mxu0 0.0
    %1050 = vmatprep.subr.mxu0 0.0
    %1051 = vmatpush2.msra.mxu0 0.0
    %1052 = vmatprep.subr.mxu0 0.0
    %1053 = vmatpush2.msra.mxu0 0.0
    %1054 = vmatprep.subr.mxu0 0.0
    %1055 = vmatpush2.msra.mxu0 0.0
    %1056 = vmatprep.subr.mxu0 0.0
    %1057 = vmatpush2.msra.mxu0 0.0
    %1058 = vmatprep.subr.mxu0 0.0
    %1059 = vmatpush2.msra.mxu0 0.0
    %1060 = vmatprep.subr.mxu0 0.0
    %1061 = vmatpush2.msra.mxu0 0.0
    %1062 = vmatprep.mubr.f32.mxu0 0.0
    %1063 = vmatmul.mubr.f32.gmra.mxu0 %v996
    %v1064 = vpop.f32.mrf.mxu0
    %v1065 = vadd.f32 0.0, %v1064
    %v1066 = vpop.f32.mrf.mxu0
    %1067 = vdwg.mxu0
    %v1069 = vsel %vm160, %v1065, 0
    %1071 = vmatprep.subr.mxu0 0.0
    %1072 = vmatpush1.msra.mxu0 0.0
    %1073 = vmatprep.subr.mxu0 0.0
    %1074 = vmatpush1.msra.mxu0 0.0
    %1075 = vmatprep.subr.mxu0 0.0
    %1076 = vmatpush1.msra.mxu0 0.0
    %1077 = vmatprep.subr.mxu0 0.0
    %1078 = vmatpush1.msra.mxu0 0.0
    %1079 = vmatprep.subr.mxu0 0.0
    %1080 = vmatpush1.msra.mxu0 0.0
    %1081 = vmatprep.subr.mxu0 0.0
    %1082 = vmatpush1.msra.mxu0 0.0
    %1083 = vmatprep.subr.mxu0 0.0
    %1084 = vmatpush1.msra.mxu0 0.0
    %1085 = vmatprep.subr.mxu0 0.0
    %1086 = vmatpush1.msra.mxu0 0.0
    %1087 = vmatprep.subr.mxu0 0.0
    %1088 = vmatpush1.msra.mxu0 0.0
    %1089 = vmatprep.subr.mxu0 0.0
    %1090 = vmatpush1.msra.mxu0 0.0
    %1091 = vmatprep.subr.mxu0 0.0
    %1092 = vmatpush1.msra.mxu0 0.0
    %1093 = vmatprep.subr.mxu0 0.0
    %1094 = vmatpush1.msra.mxu0 0.0
    %1095 = vmatprep.subr.mxu0 0.0
    %1096 = vmatpush1.msra.mxu0 0.0
    %1097 = vmatprep.subr.mxu0 0.0
    %1098 = vmatpush1.msra.mxu0 0.0
    %1099 = vmatprep.subr.mxu0 0.0
    %1100 = vmatpush1.msra.mxu0 0.0
    %1101 = vmatprep.subr.mxu0 0.0
    %1102 = vmatpush1.msra.mxu0 %v992
    %1103 = vmatprep.subr.mxu0 0.0
    %1104 = vmatpush2.msra.mxu0 0.0
    %1105 = vmatprep.subr.mxu0 0.0
    %1106 = vmatpush2.msra.mxu0 0.0
    %1107 = vmatprep.subr.mxu0 0.0
    %1108 = vmatpush2.msra.mxu0 0.0
    %1109 = vmatprep.subr.mxu0 0.0
    %1110 = vmatpush2.msra.mxu0 0.0
    %1111 = vmatprep.subr.mxu0 0.0
    %1112 = vmatpush2.msra.mxu0 0.0
    %1113 = vmatprep.subr.mxu0 0.0
    %1114 = vmatpush2.msra.mxu0 0.0
    %1115 = vmatprep.subr.mxu0 0.0
    %1116 = vmatpush2.msra.mxu0 0.0
    %1117 = vmatprep.subr.mxu0 0.0
    %1118 = vmatpush2.msra.mxu0 0.0
    %1119 = vmatprep.subr.mxu0 0.0
    %1120 = vmatpush2.msra.mxu0 0.0
    %1121 = vmatprep.subr.mxu0 0.0
    %1122 = vmatpush2.msra.mxu0 0.0
    %1123 = vmatprep.subr.mxu0 0.0
    %1124 = vmatpush2.msra.mxu0 0.0
    %1125 = vmatprep.subr.mxu0 0.0
    %1126 = vmatpush2.msra.mxu0 0.0
    %1127 = vmatprep.subr.mxu0 0.0
    %1128 = vmatpush2.msra.mxu0 0.0
    %1129 = vmatprep.subr.mxu0 0.0
    %1130 = vmatpush2.msra.mxu0 0.0
    %1131 = vmatprep.subr.mxu0 0.0
    %1132 = vmatpush2.msra.mxu0 0.0
    %1133 = vmatprep.subr.mxu0 0.0
    %1134 = vmatpush2.msra.mxu0 0.0
    %1135 = vmatprep.mubr.f32.mxu0 0.0
    %1136 = vmatmul.mubr.f32.gmra.mxu0 %v1069
    %v1137 = vpop.f32.mrf.mxu0
    %v1138 = vadd.f32 0.0, %v1137
    %v1139 = vpop.f32.mrf.mxu0
    %1140 = vdwg.mxu0
    %v1141 = vmul.f32 %v1138, 0.5
    %v1142 = vsub.f32 %v183, %v1141
    %v1144 = vsel %vm160, %v992, 0
    %1146 = vmatprep.subr.mxu0 0.0
    %1147 = vmatpush1.msra.mxu0 0.0
    %1148 = vmatprep.subr.mxu0 0.0
    %1149 = vmatpush1.msra.mxu0 0.0
    %1150 = vmatprep.subr.mxu0 0.0
    %1151 = vmatpush1.msra.mxu0 0.0
    %1152 = vmatprep.subr.mxu0 0.0
    %1153 = vmatpush1.msra.mxu0 0.0
    %1154 = vmatprep.subr.mxu0 0.0
    %1155 = vmatpush1.msra.mxu0 0.0
    %1156 = vmatprep.subr.mxu0 0.0
    %1157 = vmatpush1.msra.mxu0 0.0
    %1158 = vmatprep.subr.mxu0 0.0
    %1159 = vmatpush1.msra.mxu0 0.0
    %1160 = vmatprep.subr.mxu0 0.0
    %1161 = vmatpush1.msra.mxu0 0.0
    %1162 = vmatprep.subr.mxu0 0.0
    %1163 = vmatpush1.msra.mxu0 0.0
    %1164 = vmatprep.subr.mxu0 0.0
    %1165 = vmatpush1.msra.mxu0 0.0
    %1166 = vmatprep.subr.mxu0 0.0
    %1167 = vmatpush1.msra.mxu0 0.0
    %1168 = vmatprep.subr.mxu0 0.0
    %1169 = vmatpush1.msra.mxu0 0.0
    %1170 = vmatprep.subr.mxu0 0.0
    %1171 = vmatpush1.msra.mxu0 0.0
    %1172 = vmatprep.subr.mxu0 0.0
    %1173 = vmatpush1.msra.mxu0 0.0
    %1174 = vmatprep.subr.mxu0 0.0
    %1175 = vmatpush1.msra.mxu0 0.0
    %1176 = vmatprep.subr.mxu0 0.0
    %1177 = vmatpush1.msra.mxu0 %v1142
    %1178 = vmatprep.subr.mxu0 0.0
    %1179 = vmatpush2.msra.mxu0 0.0
    %1180 = vmatprep.subr.mxu0 0.0
    %1181 = vmatpush2.msra.mxu0 0.0
    %1182 = vmatprep.subr.mxu0 0.0
    %1183 = vmatpush2.msra.mxu0 0.0
    %1184 = vmatprep.subr.mxu0 0.0
    %1185 = vmatpush2.msra.mxu0 0.0
    %1186 = vmatprep.subr.mxu0 0.0
    %1187 = vmatpush2.msra.mxu0 0.0
    %1188 = vmatprep.subr.mxu0 0.0
    %1189 = vmatpush2.msra.mxu0 0.0
    %1190 = vmatprep.subr.mxu0 0.0
    %1191 = vmatpush2.msra.mxu0 0.0
    %1192 = vmatprep.subr.mxu0 0.0
    %1193 = vmatpush2.msra.mxu0 0.0
    %1194 = vmatprep.subr.mxu0 0.0
    %1195 = vmatpush2.msra.mxu0 0.0
    %1196 = vmatprep.subr.mxu0 0.0
    %1197 = vmatpush2.msra.mxu0 0.0
    %1198 = vmatprep.subr.mxu0 0.0
    %1199 = vmatpush2.msra.mxu0 0.0
    %1200 = vmatprep.subr.mxu0 0.0
    %1201 = vmatpush2.msra.mxu0 0.0
    %1202 = vmatprep.subr.mxu0 0.0
    %1203 = vmatpush2.msra.mxu0 0.0
    %1204 = vmatprep.subr.mxu0 0.0
    %1205 = vmatpush2.msra.mxu0 0.0
    %1206 = vmatprep.subr.mxu0 0.0
    %1207 = vmatpush2.msra.mxu0 0.0
    %1208 = vmatprep.subr.mxu0 0.0
    %1209 = vmatpush2.msra.mxu0 0.0
    %1210 = vmatprep.mubr.f32.mxu0 0.0
    %1211 = vmatmul.mubr.f32.gmra.mxu0 %v1144
    %v1212 = vpop.f32.mrf.mxu0
    %v1213 = vadd.f32 0.0, %v1212
    %v1214 = vpop.f32.mrf.mxu0
    %1215 = vdwg.mxu0
    %v1217 = vsel %vm160, %v1142, 0
    %1219 = vmatprep.subr.mxu0 0.0
    %1220 = vmatpush1.msra.mxu0 0.0
    %1221 = vmatprep.subr.mxu0 0.0
    %1222 = vmatpush1.msra.mxu0 0.0
    %1223 = vmatprep.subr.mxu0 0.0
    %1224 = vmatpush1.msra.mxu0 0.0
    %1225 = vmatprep.subr.mxu0 0.0
    %1226 = vmatpush1.msra.mxu0 0.0
    %1227 = vmatprep.subr.mxu0 0.0
    %1228 = vmatpush1.msra.mxu0 0.0
    %1229 = vmatprep.subr.mxu0 0.0
    %1230 = vmatpush1.msra.mxu0 0.0
    %1231 = vmatprep.subr.mxu0 0.0
    %1232 = vmatpush1.msra.mxu0 0.0
    %1233 = vmatprep.subr.mxu0 0.0
    %1234 = vmatpush1.msra.mxu0 0.0
    %1235 = vmatprep.subr.mxu0 0.0
    %1236 = vmatpush1.msra.mxu0 0.0
    %1237 = vmatprep.subr.mxu0 0.0
    %1238 = vmatpush1.msra.mxu0 0.0
    %1239 = vmatprep.subr.mxu0 0.0
    %1240 = vmatpush1.msra.mxu0 0.0
    %1241 = vmatprep.subr.mxu0 0.0
    %1242 = vmatpush1.msra.mxu0 0.0
    %1243 = vmatprep.subr.mxu0 0.0
    %1244 = vmatpush1.msra.mxu0 0.0
    %1245 = vmatprep.subr.mxu0 0.0
    %1246 = vmatpush1.msra.mxu0 0.0
    %1247 = vmatprep.subr.mxu0 0.0
    %1248 = vmatpush1.msra.mxu0 0.0
    %1249 = vmatprep.subr.mxu0 0.0
    %1250 = vmatpush1.msra.mxu0 %v1065
    %1251 = vmatprep.subr.mxu0 0.0
    %1252 = vmatpush2.msra.mxu0 0.0
    %1253 = vmatprep.subr.mxu0 0.0
    %1254 = vmatpush2.msra.mxu0 0.0
    %1255 = vmatprep.subr.mxu0 0.0
    %1256 = vmatpush2.msra.mxu0 0.0
    %1257 = vmatprep.subr.mxu0 0.0
    %1258 = vmatpush2.msra.mxu0 0.0
    %1259 = vmatprep.subr.mxu0 0.0
    %1260 = vmatpush2.msra.mxu0 0.0
    %1261 = vmatprep.subr.mxu0 0.0
    %1262 = vmatpush2.msra.mxu0 0.0
    %1263 = vmatprep.subr.mxu0 0.0
    %1264 = vmatpush2.msra.mxu0 0.0
    %1265 = vmatprep.subr.mxu0 0.0
    %1266 = vmatpush2.msra.mxu0 0.0
    %1267 = vmatprep.subr.mxu0 0.0
    %1268 = vmatpush2.msra.mxu0 0.0
    %1269 = vmatprep.subr.mxu0 0.0
    %1270 = vmatpush2.msra.mxu0 0.0
    %1271 = vmatprep.subr.mxu0 0.0
    %1272 = vmatpush2.msra.mxu0 0.0
    %1273 = vmatprep.subr.mxu0 0.0
    %1274 = vmatpush2.msra.mxu0 0.0
    %1275 = vmatprep.subr.mxu0 0.0
    %1276 = vmatpush2.msra.mxu0 0.0
    %1277 = vmatprep.subr.mxu0 0.0
    %1278 = vmatpush2.msra.mxu0 0.0
    %1279 = vmatprep.subr.mxu0 0.0
    %1280 = vmatpush2.msra.mxu0 0.0
    %1281 = vmatprep.subr.mxu0 0.0
    %1282 = vmatpush2.msra.mxu0 0.0
    %1283 = vmatprep.mubr.f32.mxu0 0.0
    %1284 = vmatmul.mubr.f32.gmra.mxu0 %v1217
    %v1285 = vpop.f32.mrf.mxu0
    %v1286 = vadd.f32 0.0, %v1285
    %v1287 = vpop.f32.mrf.mxu0
    %1288 = vdwg.mxu0
    %v1290 = vsel %vm160, %v1286, 0
    %1292 = vmatprep.subr.mxu0 0.0
    %1293 = vmatpush1.msra.mxu0 0.0
    %1294 = vmatprep.subr.mxu0 0.0
    %1295 = vmatpush1.msra.mxu0 0.0
    %1296 = vmatprep.subr.mxu0 0.0
    %1297 = vmatpush1.msra.mxu0 0.0
    %1298 = vmatprep.subr.mxu0 0.0
    %1299 = vmatpush1.msra.mxu0 0.0
    %1300 = vmatprep.subr.mxu0 0.0
    %1301 = vmatpush1.msra.mxu0 0.0
    %1302 = vmatprep.subr.mxu0 0.0
    %1303 = vmatpush1.msra.mxu0 0.0
    %1304 = vmatprep.subr.mxu0 0.0
    %1305 = vmatpush1.msra.mxu0 0.0
    %1306 = vmatprep.subr.mxu0 0.0
    %1307 = vmatpush1.msra.mxu0 0.0
    %1308 = vmatprep.subr.mxu0 0.0
    %1309 = vmatpush1.msra.mxu0 0.0
    %1310 = vmatprep.subr.mxu0 0.0
    %1311 = vmatpush1.msra.mxu0 0.0
    %1312 = vmatprep.subr.mxu0 0.0
    %1313 = vmatpush1.msra.mxu0 0.0
    %1314 = vmatprep.subr.mxu0 0.0
    %1315 = vmatpush1.msra.mxu0 0.0
    %1316 = vmatprep.subr.mxu0 0.0
    %1317 = vmatpush1.msra.mxu0 0.0
    %1318 = vmatprep.subr.mxu0 0.0
    %1319 = vmatpush1.msra.mxu0 0.0
    %1320 = vmatprep.subr.mxu0 0.0
    %1321 = vmatpush1.msra.mxu0 0.0
    %1322 = vmatprep.subr.mxu0 0.0
    %1323 = vmatpush1.msra.mxu0 %v1213
    %1324 = vmatprep.subr.mxu0 0.0
    %1325 = vmatpush2.msra.mxu0 0.0
    %1326 = vmatprep.subr.mxu0 0.0
    %1327 = vmatpush2.msra.mxu0 0.0
    %1328 = vmatprep.subr.mxu0 0.0
    %1329 = vmatpush2.msra.mxu0 0.0
    %1330 = vmatprep.subr.mxu0 0.0
    %1331 = vmatpush2.msra.mxu0 0.0
    %1332 = vmatprep.subr.mxu0 0.0
    %1333 = vmatpush2.msra.mxu0 0.0
    %1334 = vmatprep.subr.mxu0 0.0
    %1335 = vmatpush2.msra.mxu0 0.0
    %1336 = vmatprep.subr.mxu0 0.0
    %1337 = vmatpush2.msra.mxu0 0.0
    %1338 = vmatprep.subr.mxu0 0.0
    %1339 = vmatpush2.msra.mxu0 0.0
    %1340 = vmatprep.subr.mxu0 0.0
    %1341 = vmatpush2.msra.mxu0 0.0
    %1342 = vmatprep.subr.mxu0 0.0
    %1343 = vmatpush2.msra.mxu0 0.0
    %1344 = vmatprep.subr.mxu0 0.0
    %1345 = vmatpush2.msra.mxu0 0.0
    %1346 = vmatprep.subr.mxu0 0.0
    %1347 = vmatpush2.msra.mxu0 0.0
    %1348 = vmatprep.subr.mxu0 0.0
    %1349 = vmatpush2.msra.mxu0 0.0
    %1350 = vmatprep.subr.mxu0 0.0
    %1351 = vmatpush2.msra.mxu0 0.0
    %1352 = vmatprep.subr.mxu0 0.0
    %1353 = vmatpush2.msra.mxu0 0.0
    %1354 = vmatprep.subr.mxu0 0.0
    %1355 = vmatpush2.msra.mxu0 0.0
    %1356 = vmatprep.mubr.f32.mxu0 0.0
    %1357 = vmatmul.mubr.f32.gmra.mxu0 %v1290
    %v1358 = vpop.f32.mrf.mxu0
    %v1359 = vadd.f32 0.0, %v1358
    %v1360 = vpop.f32.mrf.mxu0
    %1361 = vdwg.mxu0
    %v1362 = vmul.f32 %v1359, 0.5
    %v1363 = vsub.f32 %v183, %v1362
    %v1365 = vsel %vm160, %v1213, 0
    %1367 = vmatprep.subr.mxu0 0.0
    %1368 = vmatpush1.msra.mxu0 0.0
    %1369 = vmatprep.subr.mxu0 0.0
    %1370 = vmatpush1.msra.mxu0 0.0
    %1371 = vmatprep.subr.mxu0 0.0
    %1372 = vmatpush1.msra.mxu0 0.0
    %1373 = vmatprep.subr.mxu0 0.0
    %1374 = vmatpush1.msra.mxu0 0.0
    %1375 = vmatprep.subr.mxu0 0.0
    %1376 = vmatpush1.msra.mxu0 0.0
    %1377 = vmatprep.subr.mxu0 0.0
    %1378 = vmatpush1.msra.mxu0 0.0
    %1379 = vmatprep.subr.mxu0 0.0
    %1380 = vmatpush1.msra.mxu0 0.0
    %1381 = vmatprep.subr.mxu0 0.0
    %1382 = vmatpush1.msra.mxu0 0.0
    %1383 = vmatprep.subr.mxu0 0.0
    %1384 = vmatpush1.msra.mxu0 0.0
    %1385 = vmatprep.subr.mxu0 0.0
    %1386 = vmatpush1.msra.mxu0 0.0
    %1387 = vmatprep.subr.mxu0 0.0
    %1388 = vmatpush1.msra.mxu0 0.0
    %1389 = vmatprep.subr.mxu0 0.0
    %1390 = vmatpush1.msra.mxu0 0.0
    %1391 = vmatprep.subr.mxu0 0.0
    %1392 = vmatpush1.msra.mxu0 0.0
    %1393 = vmatprep.subr.mxu0 0.0
    %1394 = vmatpush1.msra.mxu0 0.0
    %1395 = vmatprep.subr.mxu0 0.0
    %1396 = vmatpush1.msra.mxu0 0.0
    %1397 = vmatprep.subr.mxu0 0.0
    %1398 = vmatpush1.msra.mxu0 %v1363
    %1399 = vmatprep.subr.mxu0 0.0
    %1400 = vmatpush2.msra.mxu0 0.0
    %1401 = vmatprep.subr.mxu0 0.0
    %1402 = vmatpush2.msra.mxu0 0.0
    %1403 = vmatprep.subr.mxu0 0.0
    %1404 = vmatpush2.msra.mxu0 0.0
    %1405 = vmatprep.subr.mxu0 0.0
    %1406 = vmatpush2.msra.mxu0 0.0
    %1407 = vmatprep.subr.mxu0 0.0
    %1408 = vmatpush2.msra.mxu0 0.0
    %1409 = vmatprep.subr.mxu0 0.0
    %1410 = vmatpush2.msra.mxu0 0.0
    %1411 = vmatprep.subr.mxu0 0.0
    %1412 = vmatpush2.msra.mxu0 0.0
    %1413 = vmatprep.subr.mxu0 0.0
    %1414 = vmatpush2.msra.mxu0 0.0
    %1415 = vmatprep.subr.mxu0 0.0
    %1416 = vmatpush2.msra.mxu0 0.0
    %1417 = vmatprep.subr.mxu0 0.0
    %1418 = vmatpush2.msra.mxu0 0.0
    %1419 = vmatprep.subr.mxu0 0.0
    %1420 = vmatpush2.msra.mxu0 0.0
    %1421 = vmatprep.subr.mxu0 0.0
    %1422 = vmatpush2.msra.mxu0 0.0
    %1423 = vmatprep.subr.mxu0 0.0
    %1424 = vmatpush2.msra.mxu0 0.0
    %1425 = vmatprep.subr.mxu0 0.0
    %1426 = vmatpush2.msra.mxu0 0.0
    %1427 = vmatprep.subr.mxu0 0.0
    %1428 = vmatpush2.msra.mxu0 0.0
    %1429 = vmatprep.subr.mxu0 0.0
    %1430 = vmatpush2.msra.mxu0 0.0
    %1431 = vmatprep.mubr.f32.mxu0 0.0
    %1432 = vmatmul.mubr.f32.gmra.mxu0 %v1365
    %v1433 = vpop.f32.mrf.mxu0
    %v1434 = vadd.f32 0.0, %v1433
    %v1435 = vpop.f32.mrf.mxu0
    %1436 = vdwg.mxu0
    %v1438 = vsel %vm160, %v1363, 0
    %1440 = vmatprep.subr.mxu0 0.0
    %1441 = vmatpush1.msra.mxu0 0.0
    %1442 = vmatprep.subr.mxu0 0.0
    %1443 = vmatpush1.msra.mxu0 0.0
    %1444 = vmatprep.subr.mxu0 0.0
    %1445 = vmatpush1.msra.mxu0 0.0
    %1446 = vmatprep.subr.mxu0 0.0
    %1447 = vmatpush1.msra.mxu0 0.0
    %1448 = vmatprep.subr.mxu0 0.0
    %1449 = vmatpush1.msra.mxu0 0.0
    %1450 = vmatprep.subr.mxu0 0.0
    %1451 = vmatpush1.msra.mxu0 0.0
    %1452 = vmatprep.subr.mxu0 0.0
    %1453 = vmatpush1.msra.mxu0 0.0
    %1454 = vmatprep.subr.mxu0 0.0
    %1455 = vmatpush1.msra.mxu0 0.0
    %1456 = vmatprep.subr.mxu0 0.0
    %1457 = vmatpush1.msra.mxu0 0.0
    %1458 = vmatprep.subr.mxu0 0.0
    %1459 = vmatpush1.msra.mxu0 0.0
    %1460 = vmatprep.subr.mxu0 0.0
    %1461 = vmatpush1.msra.mxu0 0.0
    %1462 = vmatprep.subr.mxu0 0.0
    %1463 = vmatpush1.msra.mxu0 0.0
    %1464 = vmatprep.subr.mxu0 0.0
    %1465 = vmatpush1.msra.mxu0 0.0
    %1466 = vmatprep.subr.mxu0 0.0
    %1467 = vmatpush1.msra.mxu0 0.0
    %1468 = vmatprep.subr.mxu0 0.0
    %1469 = vmatpush1.msra.mxu0 0.0
    %1470 = vmatprep.subr.mxu0 0.0
    %1471 = vmatpush1.msra.mxu0 %v1286
    %1472 = vmatprep.subr.mxu0 0.0
    %1473 = vmatpush2.msra.mxu0 0.0
    %1474 = vmatprep.subr.mxu0 0.0
    %1475 = vmatpush2.msra.mxu0 0.0
    %1476 = vmatprep.subr.mxu0 0.0
    %1477 = vmatpush2.msra.mxu0 0.0
    %1478 = vmatprep.subr.mxu0 0.0
    %1479 = vmatpush2.msra.mxu0 0.0
    %1480 = vmatprep.subr.mxu0 0.0
    %1481 = vmatpush2.msra.mxu0 0.0
    %1482 = vmatprep.subr.mxu0 0.0
    %1483 = vmatpush2.msra.mxu0 0.0
    %1484 = vmatprep.subr.mxu0 0.0
    %1485 = vmatpush2.msra.mxu0 0.0
    %1486 = vmatprep.subr.mxu0 0.0
    %1487 = vmatpush2.msra.mxu0 0.0
    %1488 = vmatprep.subr.mxu0 0.0
    %1489 = vmatpush2.msra.mxu0 0.0
    %1490 = vmatprep.subr.mxu0 0.0
    %1491 = vmatpush2.msra.mxu0 0.0
    %1492 = vmatprep.subr.mxu0 0.0
    %1493 = vmatpush2.msra.mxu0 0.0
    %1494 = vmatprep.subr.mxu0 0.0
    %1495 = vmatpush2.msra.mxu0 0.0
    %1496 = vmatprep.subr.mxu0 0.0
    %1497 = vmatpush2.msra.mxu0 0.0
    %1498 = vmatprep.subr.mxu0 0.0
    %1499 = vmatpush2.msra.mxu0 0.0
    %1500 = vmatprep.subr.mxu0 0.0
    %1501 = vmatpush2.msra.mxu0 0.0
    %1502 = vmatprep.subr.mxu0 0.0
    %1503 = vmatpush2.msra.mxu0 0.0
    %1504 = vmatprep.mubr.f32.mxu0 0.0
    %1505 = vmatmul.mubr.f32.gmra.mxu0 %v1438
    %v1506 = vpop.f32.mrf.mxu0
    %v1507 = vadd.f32 0.0, %v1506
    %v1508 = vpop.f32.mrf.mxu0
    %1509 = vdwg.mxu0
    %v1511 = vsel %vm160, %v1507, 0
    %1513 = vmatprep.subr.mxu0 0.0
    %1514 = vmatpush1.msra.mxu0 0.0
    %1515 = vmatprep.subr.mxu0 0.0
    %1516 = vmatpush1.msra.mxu0 0.0
    %1517 = vmatprep.subr.mxu0 0.0
    %1518 = vmatpush1.msra.mxu0 0.0
    %1519 = vmatprep.subr.mxu0 0.0
    %1520 = vmatpush1.msra.mxu0 0.0
    %1521 = vmatprep.subr.mxu0 0.0
    %1522 = vmatpush1.msra.mxu0 0.0
    %1523 = vmatprep.subr.mxu0 0.0
    %1524 = vmatpush1.msra.mxu0 0.0
    %1525 = vmatprep.subr.mxu0 0.0
    %1526 = vmatpush1.msra.mxu0 0.0
    %1527 = vmatprep.subr.mxu0 0.0
    %1528 = vmatpush1.msra.mxu0 0.0
    %1529 = vmatprep.subr.mxu0 0.0
    %1530 = vmatpush1.msra.mxu0 0.0
    %1531 = vmatprep.subr.mxu0 0.0
    %1532 = vmatpush1.msra.mxu0 0.0
    %1533 = vmatprep.subr.mxu0 0.0
    %1534 = vmatpush1.msra.mxu0 0.0
    %1535 = vmatprep.subr.mxu0 0.0
    %1536 = vmatpush1.msra.mxu0 0.0
    %1537 = vmatprep.subr.mxu0 0.0
    %1538 = vmatpush1.msra.mxu0 0.0
    %1539 = vmatprep.subr.mxu0 0.0
    %1540 = vmatpush1.msra.mxu0 0.0
    %1541 = vmatprep.subr.mxu0 0.0
    %1542 = vmatpush1.msra.mxu0 0.0
    %1543 = vmatprep.subr.mxu0 0.0
    %1544 = vmatpush1.msra.mxu0 %v1434
    %1545 = vmatprep.subr.mxu0 0.0
    %1546 = vmatpush2.msra.mxu0 0.0
    %1547 = vmatprep.subr.mxu0 0.0
    %1548 = vmatpush2.msra.mxu0 0.0
    %1549 = vmatprep.subr.mxu0 0.0
    %1550 = vmatpush2.msra.mxu0 0.0
    %1551 = vmatprep.subr.mxu0 0.0
    %1552 = vmatpush2.msra.mxu0 0.0
    %1553 = vmatprep.subr.mxu0 0.0
    %1554 = vmatpush2.msra.mxu0 0.0
    %1555 = vmatprep.subr.mxu0 0.0
    %1556 = vmatpush2.msra.mxu0 0.0
    %1557 = vmatprep.subr.mxu0 0.0
    %1558 = vmatpush2.msra.mxu0 0.0
    %1559 = vmatprep.subr.mxu0 0.0
    %1560 = vmatpush2.msra.mxu0 0.0
    %1561 = vmatprep.subr.mxu0 0.0
    %1562 = vmatpush2.msra.mxu0 0.0
    %1563 = vmatprep.subr.mxu0 0.0
    %1564 = vmatpush2.msra.mxu0 0.0
    %1565 = vmatprep.subr.mxu0 0.0
    %1566 = vmatpush2.msra.mxu0 0.0
    %1567 = vmatprep.subr.mxu0 0.0
    %1568 = vmatpush2.msra.mxu0 0.0
    %1569 = vmatprep.subr.mxu0 0.0
    %1570 = vmatpush2.msra.mxu0 0.0
    %1571 = vmatprep.subr.mxu0 0.0
    %1572 = vmatpush2.msra.mxu0 0.0
    %1573 = vmatprep.subr.mxu0 0.0
    %1574 = vmatpush2.msra.mxu0 0.0
    %1575 = vmatprep.subr.mxu0 0.0
    %1576 = vmatpush2.msra.mxu0 0.0
    %1577 = vmatprep.mubr.f32.mxu0 0.0
    %1578 = vmatmul.mubr.f32.gmra.mxu0 %v1511
    %v1579 = vpop.f32.mrf.mxu0
    %v1580 = vadd.f32 0.0, %v1579
    %v1581 = vpop.f32.mrf.mxu0
    %1582 = vdwg.mxu0
    %v1583 = vmul.f32 %v1580, 0.5
    %v1584 = vsub.f32 %v183, %v1583
    %v1586 = vsel %vm160, %v1434, 0
    %1588 = vmatprep.subr.mxu0 0.0
    %1589 = vmatpush1.msra.mxu0 0.0
    %1590 = vmatprep.subr.mxu0 0.0
    %1591 = vmatpush1.msra.mxu0 0.0
    %1592 = vmatprep.subr.mxu0 0.0
    %1593 = vmatpush1.msra.mxu0 0.0
    %1594 = vmatprep.subr.mxu0 0.0
    %1595 = vmatpush1.msra.mxu0 0.0
    %1596 = vmatprep.subr.mxu0 0.0
    %1597 = vmatpush1.msra.mxu0 0.0
    %1598 = vmatprep.subr.mxu0 0.0
    %1599 = vmatpush1.msra.mxu0 0.0
    %1600 = vmatprep.subr.mxu0 0.0
    %1601 = vmatpush1.msra.mxu0 0.0
    %1602 = vmatprep.subr.mxu0 0.0
    %1603 = vmatpush1.msra.mxu0 0.0
    %1604 = vmatprep.subr.mxu0 0.0
    %1605 = vmatpush1.msra.mxu0 0.0
    %1606 = vmatprep.subr.mxu0 0.0
    %1607 = vmatpush1.msra.mxu0 0.0
    %1608 = vmatprep.subr.mxu0 0.0
    %1609 = vmatpush1.msra.mxu0 0.0
    %1610 = vmatprep.subr.mxu0 0.0
    %1611 = vmatpush1.msra.mxu0 0.0
    %1612 = vmatprep.subr.mxu0 0.0
    %1613 = vmatpush1.msra.mxu0 0.0
    %1614 = vmatprep.subr.mxu0 0.0
    %1615 = vmatpush1.msra.mxu0 0.0
    %1616 = vmatprep.subr.mxu0 0.0
    %1617 = vmatpush1.msra.mxu0 0.0
    %1618 = vmatprep.subr.mxu0 0.0
    %1619 = vmatpush1.msra.mxu0 %v1584
    %1620 = vmatprep.subr.mxu0 0.0
    %1621 = vmatpush2.msra.mxu0 0.0
    %1622 = vmatprep.subr.mxu0 0.0
    %1623 = vmatpush2.msra.mxu0 0.0
    %1624 = vmatprep.subr.mxu0 0.0
    %1625 = vmatpush2.msra.mxu0 0.0
    %1626 = vmatprep.subr.mxu0 0.0
    %1627 = vmatpush2.msra.mxu0 0.0
    %1628 = vmatprep.subr.mxu0 0.0
    %1629 = vmatpush2.msra.mxu0 0.0
    %1630 = vmatprep.subr.mxu0 0.0
    %1631 = vmatpush2.msra.mxu0 0.0
    %1632 = vmatprep.subr.mxu0 0.0
    %1633 = vmatpush2.msra.mxu0 0.0
    %1634 = vmatprep.subr.mxu0 0.0
    %1635 = vmatpush2.msra.mxu0 0.0
    %1636 = vmatprep.subr.mxu0 0.0
    %1637 = vmatpush2.msra.mxu0 0.0
    %1638 = vmatprep.subr.mxu0 0.0
    %1639 = vmatpush2.msra.mxu0 0.0
    %1640 = vmatprep.subr.mxu0 0.0
    %1641 = vmatpush2.msra.mxu0 0.0
    %1642 = vmatprep.subr.mxu0 0.0
    %1643 = vmatpush2.msra.mxu0 0.0
    %1644 = vmatprep.subr.mxu0 0.0
    %1645 = vmatpush2.msra.mxu0 0.0
    %1646 = vmatprep.subr.mxu0 0.0
    %1647 = vmatpush2.msra.mxu0 0.0
    %1648 = vmatprep.subr.mxu0 0.0
    %1649 = vmatpush2.msra.mxu0 0.0
    %1650 = vmatprep.subr.mxu0 0.0
    %1651 = vmatpush2.msra.mxu0 0.0
    %1652 = vmatprep.mubr.f32.mxu0 0.0
    %1653 = vmatmul.mubr.f32.gmra.mxu0 %v1586
    %v1654 = vpop.f32.mrf.mxu0
    %v1655 = vadd.f32 0.0, %v1654
    %v1656 = vpop.f32.mrf.mxu0
    %1657 = vdwg.mxu0
    %v1659 = vsel %vm160, %v1584, 0
    %1661 = vmatprep.subr.mxu0 0.0
    %1662 = vmatpush1.msra.mxu0 0.0
    %1663 = vmatprep.subr.mxu0 0.0
    %1664 = vmatpush1.msra.mxu0 0.0
    %1665 = vmatprep.subr.mxu0 0.0
    %1666 = vmatpush1.msra.mxu0 0.0
    %1667 = vmatprep.subr.mxu0 0.0
    %1668 = vmatpush1.msra.mxu0 0.0
    %1669 = vmatprep.subr.mxu0 0.0
    %1670 = vmatpush1.msra.mxu0 0.0
    %1671 = vmatprep.subr.mxu0 0.0
    %1672 = vmatpush1.msra.mxu0 0.0
    %1673 = vmatprep.subr.mxu0 0.0
    %1674 = vmatpush1.msra.mxu0 0.0
    %1675 = vmatprep.subr.mxu0 0.0
    %1676 = vmatpush1.msra.mxu0 0.0
    %1677 = vmatprep.subr.mxu0 0.0
    %1678 = vmatpush1.msra.mxu0 0.0
    %1679 = vmatprep.subr.mxu0 0.0
    %1680 = vmatpush1.msra.mxu0 0.0
    %1681 = vmatprep.subr.mxu0 0.0
    %1682 = vmatpush1.msra.mxu0 0.0
    %1683 = vmatprep.subr.mxu0 0.0
    %1684 = vmatpush1.msra.mxu0 0.0
    %1685 = vmatprep.subr.mxu0 0.0
    %1686 = vmatpush1.msra.mxu0 0.0
    %1687 = vmatprep.subr.mxu0 0.0
    %1688 = vmatpush1.msra.mxu0 0.0
    %1689 = vmatprep.subr.mxu0 0.0
    %1690 = vmatpush1.msra.mxu0 0.0
    %1691 = vmatprep.subr.mxu0 0.0
    %1692 = vmatpush1.msra.mxu0 %v1507
    %1693 = vmatprep.subr.mxu0 0.0
    %1694 = vmatpush2.msra.mxu0 0.0
    %1695 = vmatprep.subr.mxu0 0.0
    %1696 = vmatpush2.msra.mxu0 0.0
    %1697 = vmatprep.subr.mxu0 0.0
    %1698 = vmatpush2.msra.mxu0 0.0
    %1699 = vmatprep.subr.mxu0 0.0
    %1700 = vmatpush2.msra.mxu0 0.0
    %1701 = vmatprep.subr.mxu0 0.0
    %1702 = vmatpush2.msra.mxu0 0.0
    %1703 = vmatprep.subr.mxu0 0.0
    %1704 = vmatpush2.msra.mxu0 0.0
    %1705 = vmatprep.subr.mxu0 0.0
    %1706 = vmatpush2.msra.mxu0 0.0
    %1707 = vmatprep.subr.mxu0 0.0
    %1708 = vmatpush2.msra.mxu0 0.0
    %1709 = vmatprep.subr.mxu0 0.0
    %1710 = vmatpush2.msra.mxu0 0.0
    %1711 = vmatprep.subr.mxu0 0.0
    %1712 = vmatpush2.msra.mxu0 0.0
    %1713 = vmatprep.subr.mxu0 0.0
    %1714 = vmatpush2.msra.mxu0 0.0
    %1715 = vmatprep.subr.mxu0 0.0
    %1716 = vmatpush2.msra.mxu0 0.0
    %1717 = vmatprep.subr.mxu0 0.0
    %1718 = vmatpush2.msra.mxu0 0.0
    %1719 = vmatprep.subr.mxu0 0.0
    %1720 = vmatpush2.msra.mxu0 0.0
    %1721 = vmatprep.subr.mxu0 0.0
    %1722 = vmatpush2.msra.mxu0 0.0
    %1723 = vmatprep.subr.mxu0 0.0
    %1724 = vmatpush2.msra.mxu0 0.0
    %1725 = vmatprep.mubr.f32.mxu0 0.0
    %1726 = vmatmul.mubr.f32.gmra.mxu0 %v1659
    %v1727 = vpop.f32.mrf.mxu0
    %v1728 = vadd.f32 0.0, %v1727
    %v1729 = vpop.f32.mrf.mxu0
    %1730 = vdwg.mxu0
    %v1732 = vsel %vm160, %v1728, 0
    %1734 = vmatprep.subr.mxu0 0.0
    %1735 = vmatpush1.msra.mxu0 0.0
    %1736 = vmatprep.subr.mxu0 0.0
    %1737 = vmatpush1.msra.mxu0 0.0
    %1738 = vmatprep.subr.mxu0 0.0
    %1739 = vmatpush1.msra.mxu0 0.0
    %1740 = vmatprep.subr.mxu0 0.0
    %1741 = vmatpush1.msra.mxu0 0.0
    %1742 = vmatprep.subr.mxu0 0.0
    %1743 = vmatpush1.msra.mxu0 0.0
    %1744 = vmatprep.subr.mxu0 0.0
    %1745 = vmatpush1.msra.mxu0 0.0
    %1746 = vmatprep.subr.mxu0 0.0
    %1747 = vmatpush1.msra.mxu0 0.0
    %1748 = vmatprep.subr.mxu0 0.0
    %1749 = vmatpush1.msra.mxu0 0.0
    %1750 = vmatprep.subr.mxu0 0.0
    %1751 = vmatpush1.msra.mxu0 0.0
    %1752 = vmatprep.subr.mxu0 0.0
    %1753 = vmatpush1.msra.mxu0 0.0
    %1754 = vmatprep.subr.mxu0 0.0
    %1755 = vmatpush1.msra.mxu0 0.0
    %1756 = vmatprep.subr.mxu0 0.0
    %1757 = vmatpush1.msra.mxu0 0.0
    %1758 = vmatprep.subr.mxu0 0.0
    %1759 = vmatpush1.msra.mxu0 0.0
    %1760 = vmatprep.subr.mxu0 0.0
    %1761 = vmatpush1.msra.mxu0 0.0
    %1762 = vmatprep.subr.mxu0 0.0
    %1763 = vmatpush1.msra.mxu0 0.0
    %1764 = vmatprep.subr.mxu0 0.0
    %1765 = vmatpush1.msra.mxu0 %v1655
    %1766 = vmatprep.subr.mxu0 0.0
    %1767 = vmatpush2.msra.mxu0 0.0
    %1768 = vmatprep.subr.mxu0 0.0
    %1769 = vmatpush2.msra.mxu0 0.0
    %1770 = vmatprep.subr.mxu0 0.0
    %1771 = vmatpush2.msra.mxu0 0.0
    %1772 = vmatprep.subr.mxu0 0.0
    %1773 = vmatpush2.msra.mxu0 0.0
    %1774 = vmatprep.subr.mxu0 0.0
    %1775 = vmatpush2.msra.mxu0 0.0
    %1776 = vmatprep.subr.mxu0 0.0
    %1777 = vmatpush2.msra.mxu0 0.0
    %1778 = vmatprep.subr.mxu0 0.0
    %1779 = vmatpush2.msra.mxu0 0.0
    %1780 = vmatprep.subr.mxu0 0.0
    %1781 = vmatpush2.msra.mxu0 0.0
    %1782 = vmatprep.subr.mxu0 0.0
    %1783 = vmatpush2.msra.mxu0 0.0
    %1784 = vmatprep.subr.mxu0 0.0
    %1785 = vmatpush2.msra.mxu0 0.0
    %1786 = vmatprep.subr.mxu0 0.0
    %1787 = vmatpush2.msra.mxu0 0.0
    %1788 = vmatprep.subr.mxu0 0.0
    %1789 = vmatpush2.msra.mxu0 0.0
    %1790 = vmatprep.subr.mxu0 0.0
    %1791 = vmatpush2.msra.mxu0 0.0
    %1792 = vmatprep.subr.mxu0 0.0
    %1793 = vmatpush2.msra.mxu0 0.0
    %1794 = vmatprep.subr.mxu0 0.0
    %1795 = vmatpush2.msra.mxu0 0.0
    %1796 = vmatprep.subr.mxu0 0.0
    %1797 = vmatpush2.msra.mxu0 0.0
    %1798 = vmatprep.mubr.f32.mxu0 0.0
    %1799 = vmatmul.mubr.f32.gmra.mxu0 %v1732
    %v1800 = vpop.f32.mrf.mxu0
    %v1801 = vadd.f32 0.0, %v1800
    %v1802 = vpop.f32.mrf.mxu0
    %1803 = vdwg.mxu0
    %v1804 = vmul.f32 %v1801, 0.5
    %v1805 = vsub.f32 %v183, %v1804
    %v1807 = vsel %vm160, %v1655, 0
    %1809 = vmatprep.subr.mxu0 0.0
    %1810 = vmatpush1.msra.mxu0 0.0
    %1811 = vmatprep.subr.mxu0 0.0
    %1812 = vmatpush1.msra.mxu0 0.0
    %1813 = vmatprep.subr.mxu0 0.0
    %1814 = vmatpush1.msra.mxu0 0.0
    %1815 = vmatprep.subr.mxu0 0.0
    %1816 = vmatpush1.msra.mxu0 0.0
    %1817 = vmatprep.subr.mxu0 0.0
    %1818 = vmatpush1.msra.mxu0 0.0
    %1819 = vmatprep.subr.mxu0 0.0
    %1820 = vmatpush1.msra.mxu0 0.0
    %1821 = vmatprep.subr.mxu0 0.0
    %1822 = vmatpush1.msra.mxu0 0.0
    %1823 = vmatprep.subr.mxu0 0.0
    %1824 = vmatpush1.msra.mxu0 0.0
    %1825 = vmatprep.subr.mxu0 0.0
    %1826 = vmatpush1.msra.mxu0 0.0
    %1827 = vmatprep.subr.mxu0 0.0
    %1828 = vmatpush1.msra.mxu0 0.0
    %1829 = vmatprep.subr.mxu0 0.0
    %1830 = vmatpush1.msra.mxu0 0.0
    %1831 = vmatprep.subr.mxu0 0.0
    %1832 = vmatpush1.msra.mxu0 0.0
    %1833 = vmatprep.subr.mxu0 0.0
    %1834 = vmatpush1.msra.mxu0 0.0
    %1835 = vmatprep.subr.mxu0 0.0
    %1836 = vmatpush1.msra.mxu0 0.0
    %1837 = vmatprep.subr.mxu0 0.0
    %1838 = vmatpush1.msra.mxu0 0.0
    %1839 = vmatprep.subr.mxu0 0.0
    %1840 = vmatpush1.msra.mxu0 %v1805
    %1841 = vmatprep.subr.mxu0 0.0
    %1842 = vmatpush2.msra.mxu0 0.0
    %1843 = vmatprep.subr.mxu0 0.0
    %1844 = vmatpush2.msra.mxu0 0.0
    %1845 = vmatprep.subr.mxu0 0.0
    %1846 = vmatpush2.msra.mxu0 0.0
    %1847 = vmatprep.subr.mxu0 0.0
    %1848 = vmatpush2.msra.mxu0 0.0
    %1849 = vmatprep.subr.mxu0 0.0
    %1850 = vmatpush2.msra.mxu0 0.0
    %1851 = vmatprep.subr.mxu0 0.0
    %1852 = vmatpush2.msra.mxu0 0.0
    %1853 = vmatprep.subr.mxu0 0.0
    %1854 = vmatpush2.msra.mxu0 0.0
    %1855 = vmatprep.subr.mxu0 0.0
    %1856 = vmatpush2.msra.mxu0 0.0
    %1857 = vmatprep.subr.mxu0 0.0
    %1858 = vmatpush2.msra.mxu0 0.0
    %1859 = vmatprep.subr.mxu0 0.0
    %1860 = vmatpush2.msra.mxu0 0.0
    %1861 = vmatprep.subr.mxu0 0.0
    %1862 = vmatpush2.msra.mxu0 0.0
    %1863 = vmatprep.subr.mxu0 0.0
    %1864 = vmatpush2.msra.mxu0 0.0
    %1865 = vmatprep.subr.mxu0 0.0
    %1866 = vmatpush2.msra.mxu0 0.0
    %1867 = vmatprep.subr.mxu0 0.0
    %1868 = vmatpush2.msra.mxu0 0.0
    %1869 = vmatprep.subr.mxu0 0.0
    %1870 = vmatpush2.msra.mxu0 0.0
    %1871 = vmatprep.subr.mxu0 0.0
    %1872 = vmatpush2.msra.mxu0 0.0
    %1873 = vmatprep.mubr.f32.mxu0 0.0
    %1874 = vmatmul.mubr.f32.gmra.mxu0 %v1807
    %v1875 = vpop.f32.mrf.mxu0
    %v1876 = vadd.f32 0.0, %v1875
    %v1877 = vpop.f32.mrf.mxu0
    %1878 = vdwg.mxu0
    %v1880 = vsel %vm160, %v1805, 0
    %1882 = vmatprep.subr.mxu0 0.0
    %1883 = vmatpush1.msra.mxu0 0.0
    %1884 = vmatprep.subr.mxu0 0.0
    %1885 = vmatpush1.msra.mxu0 0.0
    %1886 = vmatprep.subr.mxu0 0.0
    %1887 = vmatpush1.msra.mxu0 0.0
    %1888 = vmatprep.subr.mxu0 0.0
    %1889 = vmatpush1.msra.mxu0 0.0
    %1890 = vmatprep.subr.mxu0 0.0
    %1891 = vmatpush1.msra.mxu0 0.0
    %1892 = vmatprep.subr.mxu0 0.0
    %1893 = vmatpush1.msra.mxu0 0.0
    %1894 = vmatprep.subr.mxu0 0.0
    %1895 = vmatpush1.msra.mxu0 0.0
    %1896 = vmatprep.subr.mxu0 0.0
    %1897 = vmatpush1.msra.mxu0 0.0
    %1898 = vmatprep.subr.mxu0 0.0
    %1899 = vmatpush1.msra.mxu0 0.0
    %1900 = vmatprep.subr.mxu0 0.0
    %1901 = vmatpush1.msra.mxu0 0.0
    %1902 = vmatprep.subr.mxu0 0.0
    %1903 = vmatpush1.msra.mxu0 0.0
    %1904 = vmatprep.subr.mxu0 0.0
    %1905 = vmatpush1.msra.mxu0 0.0
    %1906 = vmatprep.subr.mxu0 0.0
    %1907 = vmatpush1.msra.mxu0 0.0
    %1908 = vmatprep.subr.mxu0 0.0
    %1909 = vmatpush1.msra.mxu0 0.0
    %1910 = vmatprep.subr.mxu0 0.0
    %1911 = vmatpush1.msra.mxu0 0.0
    %1912 = vmatprep.subr.mxu0 0.0
    %1913 = vmatpush1.msra.mxu0 %v1728
    %1914 = vmatprep.subr.mxu0 0.0
    %1915 = vmatpush2.msra.mxu0 0.0
    %1916 = vmatprep.subr.mxu0 0.0
    %1917 = vmatpush2.msra.mxu0 0.0
    %1918 = vmatprep.subr.mxu0 0.0
    %1919 = vmatpush2.msra.mxu0 0.0
    %1920 = vmatprep.subr.mxu0 0.0
    %1921 = vmatpush2.msra.mxu0 0.0
    %1922 = vmatprep.subr.mxu0 0.0
    %1923 = vmatpush2.msra.mxu0 0.0
    %1924 = vmatprep.subr.mxu0 0.0
    %1925 = vmatpush2.msra.mxu0 0.0
    %1926 = vmatprep.subr.mxu0 0.0
    %1927 = vmatpush2.msra.mxu0 0.0
    %1928 = vmatprep.subr.mxu0 0.0
    %1929 = vmatpush2.msra.mxu0 0.0
    %1930 = vmatprep.subr.mxu0 0.0
    %1931 = vmatpush2.msra.mxu0 0.0
    %1932 = vmatprep.subr.mxu0 0.0
    %1933 = vmatpush2.msra.mxu0 0.0
    %1934 = vmatprep.subr.mxu0 0.0
    %1935 = vmatpush2.msra.mxu0 0.0
    %1936 = vmatprep.subr.mxu0 0.0
    %1937 = vmatpush2.msra.mxu0 0.0
    %1938 = vmatprep.subr.mxu0 0.0
    %1939 = vmatpush2.msra.mxu0 0.0
    %1940 = vmatprep.subr.mxu0 0.0
    %1941 = vmatpush2.msra.mxu0 0.0
    %1942 = vmatprep.subr.mxu0 0.0
    %1943 = vmatpush2.msra.mxu0 0.0
    %1944 = vmatprep.subr.mxu0 0.0
    %1945 = vmatpush2.msra.mxu0 0.0
    %1946 = vmatprep.mubr.f32.mxu0 0.0
    %1947 = vmatmul.mubr.f32.gmra.mxu0 %v1880
    %v1948 = vpop.f32.mrf.mxu0
    %v1949 = vadd.f32 0.0, %v1948
    %v1950 = vpop.f32.mrf.mxu0
    %1951 = vdwg.mxu0
    %v1953 = vsel %vm160, %v1949, 0
    %1955 = vmatprep.subr.mxu0 0.0
    %1956 = vmatpush1.msra.mxu0 0.0
    %1957 = vmatprep.subr.mxu0 0.0
    %1958 = vmatpush1.msra.mxu0 0.0
    %1959 = vmatprep.subr.mxu0 0.0
    %1960 = vmatpush1.msra.mxu0 0.0
    %1961 = vmatprep.subr.mxu0 0.0
    %1962 = vmatpush1.msra.mxu0 0.0
    %1963 = vmatprep.subr.mxu0 0.0
    %1964 = vmatpush1.msra.mxu0 0.0
    %1965 = vmatprep.subr.mxu0 0.0
    %1966 = vmatpush1.msra.mxu0 0.0
    %1967 = vmatprep.subr.mxu0 0.0
    %1968 = vmatpush1.msra.mxu0 0.0
    %1969 = vmatprep.subr.mxu0 0.0
    %1970 = vmatpush1.msra.mxu0 0.0
    %1971 = vmatprep.subr.mxu0 0.0
    %1972 = vmatpush1.msra.mxu0 0.0
    %1973 = vmatprep.subr.mxu0 0.0
    %1974 = vmatpush1.msra.mxu0 0.0
    %1975 = vmatprep.subr.mxu0 0.0
    %1976 = vmatpush1.msra.mxu0 0.0
    %1977 = vmatprep.subr.mxu0 0.0
    %1978 = vmatpush1.msra.mxu0 0.0
    %1979 = vmatprep.subr.mxu0 0.0
    %1980 = vmatpush1.msra.mxu0 0.0
    %1981 = vmatprep.subr.mxu0 0.0
    %1982 = vmatpush1.msra.mxu0 0.0
    %1983 = vmatprep.subr.mxu0 0.0
    %1984 = vmatpush1.msra.mxu0 0.0
    %1985 = vmatprep.subr.mxu0 0.0
    %1986 = vmatpush1.msra.mxu0 %v1876
    %1987 = vmatprep.subr.mxu0 0.0
    %1988 = vmatpush2.msra.mxu0 0.0
    %1989 = vmatprep.subr.mxu0 0.0
    %1990 = vmatpush2.msra.mxu0 0.0
    %1991 = vmatprep.subr.mxu0 0.0
    %1992 = vmatpush2.msra.mxu0 0.0
    %1993 = vmatprep.subr.mxu0 0.0
    %1994 = vmatpush2.msra.mxu0 0.0
    %1995 = vmatprep.subr.mxu0 0.0
    %1996 = vmatpush2.msra.mxu0 0.0
    %1997 = vmatprep.subr.mxu0 0.0
    %1998 = vmatpush2.msra.mxu0 0.0
    %1999 = vmatprep.subr.mxu0 0.0
    %2000 = vmatpush2.msra.mxu0 0.0
    %2001 = vmatprep.subr.mxu0 0.0
    %2002 = vmatpush2.msra.mxu0 0.0
    %2003 = vmatprep.subr.mxu0 0.0
    %2004 = vmatpush2.msra.mxu0 0.0
    %2005 = vmatprep.subr.mxu0 0.0
    %2006 = vmatpush2.msra.mxu0 0.0
    %2007 = vmatprep.subr.mxu0 0.0
    %2008 = vmatpush2.msra.mxu0 0.0
    %2009 = vmatprep.subr.mxu0 0.0
    %2010 = vmatpush2.msra.mxu0 0.0
    %2011 = vmatprep.subr.mxu0 0.0
    %2012 = vmatpush2.msra.mxu0 0.0
    %2013 = vmatprep.subr.mxu0 0.0
    %2014 = vmatpush2.msra.mxu0 0.0
    %2015 = vmatprep.subr.mxu0 0.0
    %2016 = vmatpush2.msra.mxu0 0.0
    %2017 = vmatprep.subr.mxu0 0.0
    %2018 = vmatpush2.msra.mxu0 0.0
    %2019 = vmatprep.mubr.f32.mxu0 0.0
    %2020 = vmatmul.mubr.f32.gmra.mxu0 %v1953
    %v2021 = vpop.f32.mrf.mxu0
    %v2022 = vadd.f32 0.0, %v2021
    %v2023 = vpop.f32.mrf.mxu0
    %2024 = vdwg.mxu0
    %v2025 = vmul.f32 %v2022, 0.5
    %v2026 = vsub.f32 %v183, %v2025
    %v2028 = vsel %vm160, %v1876, 0
    %2030 = vmatprep.subr.mxu0 0.0
    %2031 = vmatpush1.msra.mxu0 0.0
    %2032 = vmatprep.subr.mxu0 0.0
    %2033 = vmatpush1.msra.mxu0 0.0
    %2034 = vmatprep.subr.mxu0 0.0
    %2035 = vmatpush1.msra.mxu0 0.0
    %2036 = vmatprep.subr.mxu0 0.0
    %2037 = vmatpush1.msra.mxu0 0.0
    %2038 = vmatprep.subr.mxu0 0.0
    %2039 = vmatpush1.msra.mxu0 0.0
    %2040 = vmatprep.subr.mxu0 0.0
    %2041 = vmatpush1.msra.mxu0 0.0
    %2042 = vmatprep.subr.mxu0 0.0
    %2043 = vmatpush1.msra.mxu0 0.0
    %2044 = vmatprep.subr.mxu0 0.0
    %2045 = vmatpush1.msra.mxu0 0.0
    %2046 = vmatprep.subr.mxu0 0.0
    %2047 = vmatpush1.msra.mxu0 0.0
    %2048 = vmatprep.subr.mxu0 0.0
    %2049 = vmatpush1.msra.mxu0 0.0
    %2050 = vmatprep.subr.mxu0 0.0
    %2051 = vmatpush1.msra.mxu0 0.0
    %2052 = vmatprep.subr.mxu0 0.0
    %2053 = vmatpush1.msra.mxu0 0.0
    %2054 = vmatprep.subr.mxu0 0.0
    %2055 = vmatpush1.msra.mxu0 0.0
    %2056 = vmatprep.subr.mxu0 0.0
    %2057 = vmatpush1.msra.mxu0 0.0
    %2058 = vmatprep.subr.mxu0 0.0
    %2059 = vmatpush1.msra.mxu0 0.0
    %2060 = vmatprep.subr.mxu0 0.0
    %2061 = vmatpush1.msra.mxu0 %v2026
    %2062 = vmatprep.subr.mxu0 0.0
    %2063 = vmatpush2.msra.mxu0 0.0
    %2064 = vmatprep.subr.mxu0 0.0
    %2065 = vmatpush2.msra.mxu0 0.0
    %2066 = vmatprep.subr.mxu0 0.0
    %2067 = vmatpush2.msra.mxu0 0.0
    %2068 = vmatprep.subr.mxu0 0.0
    %2069 = vmatpush2.msra.mxu0 0.0
    %2070 = vmatprep.subr.mxu0 0.0
    %2071 = vmatpush2.msra.mxu0 0.0
    %2072 = vmatprep.subr.mxu0 0.0
    %2073 = vmatpush2.msra.mxu0 0.0
    %2074 = vmatprep.subr.mxu0 0.0
    %2075 = vmatpush2.msra.mxu0 0.0
    %2076 = vmatprep.subr.mxu0 0.0
    %2077 = vmatpush2.msra.mxu0 0.0
    %2078 = vmatprep.subr.mxu0 0.0
    %2079 = vmatpush2.msra.mxu0 0.0
    %2080 = vmatprep.subr.mxu0 0.0
    %2081 = vmatpush2.msra.mxu0 0.0
    %2082 = vmatprep.subr.mxu0 0.0
    %2083 = vmatpush2.msra.mxu0 0.0
    %2084 = vmatprep.subr.mxu0 0.0
    %2085 = vmatpush2.msra.mxu0 0.0
    %2086 = vmatprep.subr.mxu0 0.0
    %2087 = vmatpush2.msra.mxu0 0.0
    %2088 = vmatprep.subr.mxu0 0.0
    %2089 = vmatpush2.msra.mxu0 0.0
    %2090 = vmatprep.subr.mxu0 0.0
    %2091 = vmatpush2.msra.mxu0 0.0
    %2092 = vmatprep.subr.mxu0 0.0
    %2093 = vmatpush2.msra.mxu0 0.0
    %2094 = vmatprep.mubr.f32.mxu0 0.0
    %2095 = vmatmul.mubr.f32.gmra.mxu0 %v2028
    %v2096 = vpop.f32.mrf.mxu0
    %v2097 = vadd.f32 0.0, %v2096
    %v2098 = vpop.f32.mrf.mxu0
    %2099 = vdwg.mxu0
    %v2101 = vsel %vm160, %v2026, 0
    %2103 = vmatprep.subr.mxu0 0.0
    %2104 = vmatpush1.msra.mxu0 0.0
    %2105 = vmatprep.subr.mxu0 0.0
    %2106 = vmatpush1.msra.mxu0 0.0
    %2107 = vmatprep.subr.mxu0 0.0
    %2108 = vmatpush1.msra.mxu0 0.0
    %2109 = vmatprep.subr.mxu0 0.0
    %2110 = vmatpush1.msra.mxu0 0.0
    %2111 = vmatprep.subr.mxu0 0.0
    %2112 = vmatpush1.msra.mxu0 0.0
    %2113 = vmatprep.subr.mxu0 0.0
    %2114 = vmatpush1.msra.mxu0 0.0
    %2115 = vmatprep.subr.mxu0 0.0
    %2116 = vmatpush1.msra.mxu0 0.0
    %2117 = vmatprep.subr.mxu0 0.0
    %2118 = vmatpush1.msra.mxu0 0.0
    %2119 = vmatprep.subr.mxu0 0.0
    %2120 = vmatpush1.msra.mxu0 0.0
    %2121 = vmatprep.subr.mxu0 0.0
    %2122 = vmatpush1.msra.mxu0 0.0
    %2123 = vmatprep.subr.mxu0 0.0
    %2124 = vmatpush1.msra.mxu0 0.0
    %2125 = vmatprep.subr.mxu0 0.0
    %2126 = vmatpush1.msra.mxu0 0.0
    %2127 = vmatprep.subr.mxu0 0.0
    %2128 = vmatpush1.msra.mxu0 0.0
    %2129 = vmatprep.subr.mxu0 0.0
    %2130 = vmatpush1.msra.mxu0 0.0
    %2131 = vmatprep.subr.mxu0 0.0
    %2132 = vmatpush1.msra.mxu0 0.0
    %2133 = vmatprep.subr.mxu0 0.0
    %2134 = vmatpush1.msra.mxu0 %v1949
    %2135 = vmatprep.subr.mxu0 0.0
    %2136 = vmatpush2.msra.mxu0 0.0
    %2137 = vmatprep.subr.mxu0 0.0
    %2138 = vmatpush2.msra.mxu0 0.0
    %2139 = vmatprep.subr.mxu0 0.0
    %2140 = vmatpush2.msra.mxu0 0.0
    %2141 = vmatprep.subr.mxu0 0.0
    %2142 = vmatpush2.msra.mxu0 0.0
    %2143 = vmatprep.subr.mxu0 0.0
    %2144 = vmatpush2.msra.mxu0 0.0
    %2145 = vmatprep.subr.mxu0 0.0
    %2146 = vmatpush2.msra.mxu0 0.0
    %2147 = vmatprep.subr.mxu0 0.0
    %2148 = vmatpush2.msra.mxu0 0.0
    %2149 = vmatprep.subr.mxu0 0.0
    %2150 = vmatpush2.msra.mxu0 0.0
    %2151 = vmatprep.subr.mxu0 0.0
    %2152 = vmatpush2.msra.mxu0 0.0
    %2153 = vmatprep.subr.mxu0 0.0
    %2154 = vmatpush2.msra.mxu0 0.0
    %2155 = vmatprep.subr.mxu0 0.0
    %2156 = vmatpush2.msra.mxu0 0.0
    %2157 = vmatprep.subr.mxu0 0.0
    %2158 = vmatpush2.msra.mxu0 0.0
    %2159 = vmatprep.subr.mxu0 0.0
    %2160 = vmatpush2.msra.mxu0 0.0
    %2161 = vmatprep.subr.mxu0 0.0
    %2162 = vmatpush2.msra.mxu0 0.0
    %2163 = vmatprep.subr.mxu0 0.0
    %2164 = vmatpush2.msra.mxu0 0.0
    %2165 = vmatprep.subr.mxu0 0.0
    %2166 = vmatpush2.msra.mxu0 0.0
    %2167 = vmatprep.mubr.f32.mxu0 0.0
    %2168 = vmatmul.mubr.f32.gmra.mxu0 %v2101
    %v2169 = vpop.f32.mrf.mxu0
    %v2170 = vadd.f32 0.0, %v2169
    %v2171 = vpop.f32.mrf.mxu0
    %2172 = vdwg.mxu0
    %v2174 = vsel %vm160, %v2170, 0
    %2176 = vmatprep.subr.mxu0 0.0
    %2177 = vmatpush1.msra.mxu0 0.0
    %2178 = vmatprep.subr.mxu0 0.0
    %2179 = vmatpush1.msra.mxu0 0.0
    %2180 = vmatprep.subr.mxu0 0.0
    %2181 = vmatpush1.msra.mxu0 0.0
    %2182 = vmatprep.subr.mxu0 0.0
    %2183 = vmatpush1.msra.mxu0 0.0
    %2184 = vmatprep.subr.mxu0 0.0
    %2185 = vmatpush1.msra.mxu0 0.0
    %2186 = vmatprep.subr.mxu0 0.0
    %2187 = vmatpush1.msra.mxu0 0.0
    %2188 = vmatprep.subr.mxu0 0.0
    %2189 = vmatpush1.msra.mxu0 0.0
    %2190 = vmatprep.subr.mxu0 0.0
    %2191 = vmatpush1.msra.mxu0 0.0
    %2192 = vmatprep.subr.mxu0 0.0
    %2193 = vmatpush1.msra.mxu0 0.0
    %2194 = vmatprep.subr.mxu0 0.0
    %2195 = vmatpush1.msra.mxu0 0.0
    %2196 = vmatprep.subr.mxu0 0.0
    %2197 = vmatpush1.msra.mxu0 0.0
    %2198 = vmatprep.subr.mxu0 0.0
    %2199 = vmatpush1.msra.mxu0 0.0
    %2200 = vmatprep.subr.mxu0 0.0
    %2201 = vmatpush1.msra.mxu0 0.0
    %2202 = vmatprep.subr.mxu0 0.0
    %2203 = vmatpush1.msra.mxu0 0.0
    %2204 = vmatprep.subr.mxu0 0.0
    %2205 = vmatpush1.msra.mxu0 0.0
    %2206 = vmatprep.subr.mxu0 0.0
    %2207 = vmatpush1.msra.mxu0 %v2097
    %2208 = vmatprep.subr.mxu0 0.0
    %2209 = vmatpush2.msra.mxu0 0.0
    %2210 = vmatprep.subr.mxu0 0.0
    %2211 = vmatpush2.msra.mxu0 0.0
    %2212 = vmatprep.subr.mxu0 0.0
    %2213 = vmatpush2.msra.mxu0 0.0
    %2214 = vmatprep.subr.mxu0 0.0
    %2215 = vmatpush2.msra.mxu0 0.0
    %2216 = vmatprep.subr.mxu0 0.0
    %2217 = vmatpush2.msra.mxu0 0.0
    %2218 = vmatprep.subr.mxu0 0.0
    %2219 = vmatpush2.msra.mxu0 0.0
    %2220 = vmatprep.subr.mxu0 0.0
    %2221 = vmatpush2.msra.mxu0 0.0
    %2222 = vmatprep.subr.mxu0 0.0
    %2223 = vmatpush2.msra.mxu0 0.0
    %2224 = vmatprep.subr.mxu0 0.0
    %2225 = vmatpush2.msra.mxu0 0.0
    %2226 = vmatprep.subr.mxu0 0.0
    %2227 = vmatpush2.msra.mxu0 0.0
    %2228 = vmatprep.subr.mxu0 0.0
    %2229 = vmatpush2.msra.mxu0 0.0
    %2230 = vmatprep.subr.mxu0 0.0
    %2231 = vmatpush2.msra.mxu0 0.0
    %2232 = vmatprep.subr.mxu0 0.0
    %2233 = vmatpush2.msra.mxu0 0.0
    %2234 = vmatprep.subr.mxu0 0.0
    %2235 = vmatpush2.msra.mxu0 0.0
    %2236 = vmatprep.subr.mxu0 0.0
    %2237 = vmatpush2.msra.mxu0 0.0
    %2238 = vmatprep.subr.mxu0 0.0
    %2239 = vmatpush2.msra.mxu0 0.0
    %2240 = vmatprep.mubr.f32.mxu0 0.0
    %2241 = vmatmul.mubr.f32.gmra.mxu0 %v2174
    %v2242 = vpop.f32.mrf.mxu0
    %v2243 = vadd.f32 0.0, %v2242
    %v2244 = vpop.f32.mrf.mxu0
    %2245 = vdwg.mxu0
    %v2246 = vmul.f32 %v2243, 0.5
    %v2247 = vsub.f32 %v183, %v2246
    %v2249 = vsel %vm160, %v2097, 0
    %2251 = vmatprep.subr.mxu0 0.0
    %2252 = vmatpush1.msra.mxu0 0.0
    %2253 = vmatprep.subr.mxu0 0.0
    %2254 = vmatpush1.msra.mxu0 0.0
    %2255 = vmatprep.subr.mxu0 0.0
    %2256 = vmatpush1.msra.mxu0 0.0
    %2257 = vmatprep.subr.mxu0 0.0
    %2258 = vmatpush1.msra.mxu0 0.0
    %2259 = vmatprep.subr.mxu0 0.0
    %2260 = vmatpush1.msra.mxu0 0.0
    %2261 = vmatprep.subr.mxu0 0.0
    %2262 = vmatpush1.msra.mxu0 0.0
    %2263 = vmatprep.subr.mxu0 0.0
    %2264 = vmatpush1.msra.mxu0 0.0
    %2265 = vmatprep.subr.mxu0 0.0
    %2266 = vmatpush1.msra.mxu0 0.0
    %2267 = vmatprep.subr.mxu0 0.0
    %2268 = vmatpush1.msra.mxu0 0.0
    %2269 = vmatprep.subr.mxu0 0.0
    %2270 = vmatpush1.msra.mxu0 0.0
    %2271 = vmatprep.subr.mxu0 0.0
    %2272 = vmatpush1.msra.mxu0 0.0
    %2273 = vmatprep.subr.mxu0 0.0
    %2274 = vmatpush1.msra.mxu0 0.0
    %2275 = vmatprep.subr.mxu0 0.0
    %2276 = vmatpush1.msra.mxu0 0.0
    %2277 = vmatprep.subr.mxu0 0.0
    %2278 = vmatpush1.msra.mxu0 0.0
    %2279 = vmatprep.subr.mxu0 0.0
    %2280 = vmatpush1.msra.mxu0 0.0
    %2281 = vmatprep.subr.mxu0 0.0
    %2282 = vmatpush1.msra.mxu0 %v2247
    %2283 = vmatprep.subr.mxu0 0.0
    %2284 = vmatpush2.msra.mxu0 0.0
    %2285 = vmatprep.subr.mxu0 0.0
    %2286 = vmatpush2.msra.mxu0 0.0
    %2287 = vmatprep.subr.mxu0 0.0
    %2288 = vmatpush2.msra.mxu0 0.0
    %2289 = vmatprep.subr.mxu0 0.0
    %2290 = vmatpush2.msra.mxu0 0.0
    %2291 = vmatprep.subr.mxu0 0.0
    %2292 = vmatpush2.msra.mxu0 0.0
    %2293 = vmatprep.subr.mxu0 0.0
    %2294 = vmatpush2.msra.mxu0 0.0
    %2295 = vmatprep.subr.mxu0 0.0
    %2296 = vmatpush2.msra.mxu0 0.0
    %2297 = vmatprep.subr.mxu0 0.0
    %2298 = vmatpush2.msra.mxu0 0.0
    %2299 = vmatprep.subr.mxu0 0.0
    %2300 = vmatpush2.msra.mxu0 0.0
    %2301 = vmatprep.subr.mxu0 0.0
    %2302 = vmatpush2.msra.mxu0 0.0
    %2303 = vmatprep.subr.mxu0 0.0
    %2304 = vmatpush2.msra.mxu0 0.0
    %2305 = vmatprep.subr.mxu0 0.0
    %2306 = vmatpush2.msra.mxu0 0.0
    %2307 = vmatprep.subr.mxu0 0.0
    %2308 = vmatpush2.msra.mxu0 0.0
    %2309 = vmatprep.subr.mxu0 0.0
    %2310 = vmatpush2.msra.mxu0 0.0
    %2311 = vmatprep.subr.mxu0 0.0
    %2312 = vmatpush2.msra.mxu0 0.0
    %2313 = vmatprep.subr.mxu0 0.0
    %2314 = vmatpush2.msra.mxu0 0.0
    %2315 = vmatprep.mubr.f32.mxu0 0.0
    %2316 = vmatmul.mubr.f32.gmra.mxu0 %v2249
    %v2317 = vpop.f32.mrf.mxu0
    %v2318 = vadd.f32 0.0, %v2317
    %v2319 = vpop.f32.mrf.mxu0
    %2320 = vdwg.mxu0
    %v2322 = vsel %vm160, %v2247, 0
    %2324 = vmatprep.subr.mxu0 0.0
    %2325 = vmatpush1.msra.mxu0 0.0
    %2326 = vmatprep.subr.mxu0 0.0
    %2327 = vmatpush1.msra.mxu0 0.0
    %2328 = vmatprep.subr.mxu0 0.0
    %2329 = vmatpush1.msra.mxu0 0.0
    %2330 = vmatprep.subr.mxu0 0.0
    %2331 = vmatpush1.msra.mxu0 0.0
    %2332 = vmatprep.subr.mxu0 0.0
    %2333 = vmatpush1.msra.mxu0 0.0
    %2334 = vmatprep.subr.mxu0 0.0
    %2335 = vmatpush1.msra.mxu0 0.0
    %2336 = vmatprep.subr.mxu0 0.0
    %2337 = vmatpush1.msra.mxu0 0.0
    %2338 = vmatprep.subr.mxu0 0.0
    %2339 = vmatpush1.msra.mxu0 0.0
    %2340 = vmatprep.subr.mxu0 0.0
    %2341 = vmatpush1.msra.mxu0 0.0
    %2342 = vmatprep.subr.mxu0 0.0
    %2343 = vmatpush1.msra.mxu0 0.0
    %2344 = vmatprep.subr.mxu0 0.0
    %2345 = vmatpush1.msra.mxu0 0.0
    %2346 = vmatprep.subr.mxu0 0.0
    %2347 = vmatpush1.msra.mxu0 0.0
    %2348 = vmatprep.subr.mxu0 0.0
    %2349 = vmatpush1.msra.mxu0 0.0
    %2350 = vmatprep.subr.mxu0 0.0
    %2351 = vmatpush1.msra.mxu0 0.0
    %2352 = vmatprep.subr.mxu0 0.0
    %2353 = vmatpush1.msra.mxu0 0.0
    %2354 = vmatprep.subr.mxu0 0.0
    %2355 = vmatpush1.msra.mxu0 %v2170
    %2356 = vmatprep.subr.mxu0 0.0
    %2357 = vmatpush2.msra.mxu0 0.0
    %2358 = vmatprep.subr.mxu0 0.0
    %2359 = vmatpush2.msra.mxu0 0.0
    %2360 = vmatprep.subr.mxu0 0.0
    %2361 = vmatpush2.msra.mxu0 0.0
    %2362 = vmatprep.subr.mxu0 0.0
    %2363 = vmatpush2.msra.mxu0 0.0
    %2364 = vmatprep.subr.mxu0 0.0
    %2365 = vmatpush2.msra.mxu0 0.0
    %2366 = vmatprep.subr.mxu0 0.0
    %2367 = vmatpush2.msra.mxu0 0.0
    %2368 = vmatprep.subr.mxu0 0.0
    %2369 = vmatpush2.msra.mxu0 0.0
    %2370 = vmatprep.subr.mxu0 0.0
    %2371 = vmatpush2.msra.mxu0 0.0
    %2372 = vmatprep.subr.mxu0 0.0
    %2373 = vmatpush2.msra.mxu0 0.0
    %2374 = vmatprep.subr.mxu0 0.0
    %2375 = vmatpush2.msra.mxu0 0.0
    %2376 = vmatprep.subr.mxu0 0.0
    %2377 = vmatpush2.msra.mxu0 0.0
    %2378 = vmatprep.subr.mxu0 0.0
    %2379 = vmatpush2.msra.mxu0 0.0
    %2380 = vmatprep.subr.mxu0 0.0
    %2381 = vmatpush2.msra.mxu0 0.0
    %2382 = vmatprep.subr.mxu0 0.0
    %2383 = vmatpush2.msra.mxu0 0.0
    %2384 = vmatprep.subr.mxu0 0.0
    %2385 = vmatpush2.msra.mxu0 0.0
    %2386 = vmatprep.subr.mxu0 0.0
    %2387 = vmatpush2.msra.mxu0 0.0
    %2388 = vmatprep.mubr.f32.mxu0 0.0
    %2389 = vmatmul.mubr.f32.gmra.mxu0 %v2322
    %v2390 = vpop.f32.mrf.mxu0
    %v2391 = vadd.f32 0.0, %v2390
    %v2392 = vpop.f32.mrf.mxu0
    %2393 = vdwg.mxu0
    %v2395 = vsel %vm160, %v2391, 0
    %2397 = vmatprep.subr.mxu0 0.0
    %2398 = vmatpush1.msra.mxu0 0.0
    %2399 = vmatprep.subr.mxu0 0.0
    %2400 = vmatpush1.msra.mxu0 0.0
    %2401 = vmatprep.subr.mxu0 0.0
    %2402 = vmatpush1.msra.mxu0 0.0
    %2403 = vmatprep.subr.mxu0 0.0
    %2404 = vmatpush1.msra.mxu0 0.0
    %2405 = vmatprep.subr.mxu0 0.0
    %2406 = vmatpush1.msra.mxu0 0.0
    %2407 = vmatprep.subr.mxu0 0.0
    %2408 = vmatpush1.msra.mxu0 0.0
    %2409 = vmatprep.subr.mxu0 0.0
    %2410 = vmatpush1.msra.mxu0 0.0
    %2411 = vmatprep.subr.mxu0 0.0
    %2412 = vmatpush1.msra.mxu0 0.0
    %2413 = vmatprep.subr.mxu0 0.0
    %2414 = vmatpush1.msra.mxu0 0.0
    %2415 = vmatprep.subr.mxu0 0.0
    %2416 = vmatpush1.msra.mxu0 0.0
    %2417 = vmatprep.subr.mxu0 0.0
    %2418 = vmatpush1.msra.mxu0 0.0
    %2419 = vmatprep.subr.mxu0 0.0
    %2420 = vmatpush1.msra.mxu0 0.0
    %2421 = vmatprep.subr.mxu0 0.0
    %2422 = vmatpush1.msra.mxu0 0.0
    %2423 = vmatprep.subr.mxu0 0.0
    %2424 = vmatpush1.msra.mxu0 0.0
    %2425 = vmatprep.subr.mxu0 0.0
    %2426 = vmatpush1.msra.mxu0 0.0
    %2427 = vmatprep.subr.mxu0 0.0
    %2428 = vmatpush1.msra.mxu0 %v2318
    %2429 = vmatprep.subr.mxu0 0.0
    %2430 = vmatpush2.msra.mxu0 0.0
    %2431 = vmatprep.subr.mxu0 0.0
    %2432 = vmatpush2.msra.mxu0 0.0
    %2433 = vmatprep.subr.mxu0 0.0
    %2434 = vmatpush2.msra.mxu0 0.0
    %2435 = vmatprep.subr.mxu0 0.0
    %2436 = vmatpush2.msra.mxu0 0.0
    %2437 = vmatprep.subr.mxu0 0.0
    %2438 = vmatpush2.msra.mxu0 0.0
    %2439 = vmatprep.subr.mxu0 0.0
    %2440 = vmatpush2.msra.mxu0 0.0
    %2441 = vmatprep.subr.mxu0 0.0
    %2442 = vmatpush2.msra.mxu0 0.0
    %2443 = vmatprep.subr.mxu0 0.0
    %2444 = vmatpush2.msra.mxu0 0.0
    %2445 = vmatprep.subr.mxu0 0.0
    %2446 = vmatpush2.msra.mxu0 0.0
    %2447 = vmatprep.subr.mxu0 0.0
    %2448 = vmatpush2.msra.mxu0 0.0
    %2449 = vmatprep.subr.mxu0 0.0
    %2450 = vmatpush2.msra.mxu0 0.0
    %2451 = vmatprep.subr.mxu0 0.0
    %2452 = vmatpush2.msra.mxu0 0.0
    %2453 = vmatprep.subr.mxu0 0.0
    %2454 = vmatpush2.msra.mxu0 0.0
    %2455 = vmatprep.subr.mxu0 0.0
    %2456 = vmatpush2.msra.mxu0 0.0
    %2457 = vmatprep.subr.mxu0 0.0
    %2458 = vmatpush2.msra.mxu0 0.0
    %2459 = vmatprep.subr.mxu0 0.0
    %2460 = vmatpush2.msra.mxu0 0.0
    %2461 = vmatprep.mubr.f32.mxu0 0.0
    %2462 = vmatmul.mubr.f32.gmra.mxu0 %v2395
    %v2463 = vpop.f32.mrf.mxu0
    %v2464 = vadd.f32 0.0, %v2463
    %v2465 = vpop.f32.mrf.mxu0
    %2466 = vdwg.mxu0
    %v2467 = vmul.f32 %v2464, 0.5
    %v2468 = vsub.f32 %v183, %v2467
    %v2470 = vsel %vm160, %v2318, 0
    %2472 = vmatprep.subr.mxu0 0.0
    %2473 = vmatpush1.msra.mxu0 0.0
    %2474 = vmatprep.subr.mxu0 0.0
    %2475 = vmatpush1.msra.mxu0 0.0
    %2476 = vmatprep.subr.mxu0 0.0
    %2477 = vmatpush1.msra.mxu0 0.0
    %2478 = vmatprep.subr.mxu0 0.0
    %2479 = vmatpush1.msra.mxu0 0.0
    %2480 = vmatprep.subr.mxu0 0.0
    %2481 = vmatpush1.msra.mxu0 0.0
    %2482 = vmatprep.subr.mxu0 0.0
    %2483 = vmatpush1.msra.mxu0 0.0
    %2484 = vmatprep.subr.mxu0 0.0
    %2485 = vmatpush1.msra.mxu0 0.0
    %2486 = vmatprep.subr.mxu0 0.0
    %2487 = vmatpush1.msra.mxu0 0.0
    %2488 = vmatprep.subr.mxu0 0.0
    %2489 = vmatpush1.msra.mxu0 0.0
    %2490 = vmatprep.subr.mxu0 0.0
    %2491 = vmatpush1.msra.mxu0 0.0
    %2492 = vmatprep.subr.mxu0 0.0
    %2493 = vmatpush1.msra.mxu0 0.0
    %2494 = vmatprep.subr.mxu0 0.0
    %2495 = vmatpush1.msra.mxu0 0.0
    %2496 = vmatprep.subr.mxu0 0.0
    %2497 = vmatpush1.msra.mxu0 0.0
    %2498 = vmatprep.subr.mxu0 0.0
    %2499 = vmatpush1.msra.mxu0 0.0
    %2500 = vmatprep.subr.mxu0 0.0
    %2501 = vmatpush1.msra.mxu0 0.0
    %2502 = vmatprep.subr.mxu0 0.0
    %2503 = vmatpush1.msra.mxu0 %v2468
    %2504 = vmatprep.subr.mxu0 0.0
    %2505 = vmatpush2.msra.mxu0 0.0
    %2506 = vmatprep.subr.mxu0 0.0
    %2507 = vmatpush2.msra.mxu0 0.0
    %2508 = vmatprep.subr.mxu0 0.0
    %2509 = vmatpush2.msra.mxu0 0.0
    %2510 = vmatprep.subr.mxu0 0.0
    %2511 = vmatpush2.msra.mxu0 0.0
    %2512 = vmatprep.subr.mxu0 0.0
    %2513 = vmatpush2.msra.mxu0 0.0
    %2514 = vmatprep.subr.mxu0 0.0
    %2515 = vmatpush2.msra.mxu0 0.0
    %2516 = vmatprep.subr.mxu0 0.0
    %2517 = vmatpush2.msra.mxu0 0.0
    %2518 = vmatprep.subr.mxu0 0.0
    %2519 = vmatpush2.msra.mxu0 0.0
    %2520 = vmatprep.subr.mxu0 0.0
    %2521 = vmatpush2.msra.mxu0 0.0
    %2522 = vmatprep.subr.mxu0 0.0
    %2523 = vmatpush2.msra.mxu0 0.0
    %2524 = vmatprep.subr.mxu0 0.0
    %2525 = vmatpush2.msra.mxu0 0.0
    %2526 = vmatprep.subr.mxu0 0.0
    %2527 = vmatpush2.msra.mxu0 0.0
    %2528 = vmatprep.subr.mxu0 0.0
    %2529 = vmatpush2.msra.mxu0 0.0
    %2530 = vmatprep.subr.mxu0 0.0
    %2531 = vmatpush2.msra.mxu0 0.0
    %2532 = vmatprep.subr.mxu0 0.0
    %2533 = vmatpush2.msra.mxu0 0.0
    %2534 = vmatprep.subr.mxu0 0.0
    %2535 = vmatpush2.msra.mxu0 0.0
    %2536 = vmatprep.mubr.f32.mxu0 0.0
    %2537 = vmatmul.mubr.f32.gmra.mxu0 %v2470
    %v2538 = vpop.f32.mrf.mxu0
    %v2539 = vadd.f32 0.0, %v2538
    %v2540 = vpop.f32.mrf.mxu0
    %2541 = vdwg.mxu0
    %v2543 = vsel %vm160, %v2468, 0
    %2545 = vmatprep.subr.mxu0 0.0
    %2546 = vmatpush1.msra.mxu0 0.0
    %2547 = vmatprep.subr.mxu0 0.0
    %2548 = vmatpush1.msra.mxu0 0.0
    %2549 = vmatprep.subr.mxu0 0.0
    %2550 = vmatpush1.msra.mxu0 0.0
    %2551 = vmatprep.subr.mxu0 0.0
    %2552 = vmatpush1.msra.mxu0 0.0
    %2553 = vmatprep.subr.mxu0 0.0
    %2554 = vmatpush1.msra.mxu0 0.0
    %2555 = vmatprep.subr.mxu0 0.0
    %2556 = vmatpush1.msra.mxu0 0.0
    %2557 = vmatprep.subr.mxu0 0.0
    %2558 = vmatpush1.msra.mxu0 0.0
    %2559 = vmatprep.subr.mxu0 0.0
    %2560 = vmatpush1.msra.mxu0 0.0
    %2561 = vmatprep.subr.mxu0 0.0
    %2562 = vmatpush1.msra.mxu0 0.0
    %2563 = vmatprep.subr.mxu0 0.0
    %2564 = vmatpush1.msra.mxu0 0.0
    %2565 = vmatprep.subr.mxu0 0.0
    %2566 = vmatpush1.msra.mxu0 0.0
    %2567 = vmatprep.subr.mxu0 0.0
    %2568 = vmatpush1.msra.mxu0 0.0
    %2569 = vmatprep.subr.mxu0 0.0
    %2570 = vmatpush1.msra.mxu0 0.0
    %2571 = vmatprep.subr.mxu0 0.0
    %2572 = vmatpush1.msra.mxu0 0.0
    %2573 = vmatprep.subr.mxu0 0.0
    %2574 = vmatpush1.msra.mxu0 0.0
    %2575 = vmatprep.subr.mxu0 0.0
    %2576 = vmatpush1.msra.mxu0 %v2391
    %2577 = vmatprep.subr.mxu0 0.0
    %2578 = vmatpush2.msra.mxu0 0.0
    %2579 = vmatprep.subr.mxu0 0.0
    %2580 = vmatpush2.msra.mxu0 0.0
    %2581 = vmatprep.subr.mxu0 0.0
    %2582 = vmatpush2.msra.mxu0 0.0
    %2583 = vmatprep.subr.mxu0 0.0
    %2584 = vmatpush2.msra.mxu0 0.0
    %2585 = vmatprep.subr.mxu0 0.0
    %2586 = vmatpush2.msra.mxu0 0.0
    %2587 = vmatprep.subr.mxu0 0.0
    %2588 = vmatpush2.msra.mxu0 0.0
    %2589 = vmatprep.subr.mxu0 0.0
    %2590 = vmatpush2.msra.mxu0 0.0
    %2591 = vmatprep.subr.mxu0 0.0
    %2592 = vmatpush2.msra.mxu0 0.0
    %2593 = vmatprep.subr.mxu0 0.0
    %2594 = vmatpush2.msra.mxu0 0.0
    %2595 = vmatprep.subr.mxu0 0.0
    %2596 = vmatpush2.msra.mxu0 0.0
    %2597 = vmatprep.subr.mxu0 0.0
    %2598 = vmatpush2.msra.mxu0 0.0
    %2599 = vmatprep.subr.mxu0 0.0
    %2600 = vmatpush2.msra.mxu0 0.0
    %2601 = vmatprep.subr.mxu0 0.0
    %2602 = vmatpush2.msra.mxu0 0.0
    %2603 = vmatprep.subr.mxu0 0.0
    %2604 = vmatpush2.msra.mxu0 0.0
    %2605 = vmatprep.subr.mxu0 0.0
    %2606 = vmatpush2.msra.mxu0 0.0
    %2607 = vmatprep.subr.mxu0 0.0
    %2608 = vmatpush2.msra.mxu0 0.0
    %2609 = vmatprep.mubr.f32.mxu0 0.0
    %2610 = vmatmul.mubr.f32.gmra.mxu0 %v2543
    %v2611 = vpop.f32.mrf.mxu0
    %v2612 = vadd.f32 0.0, %v2611
    %v2613 = vpop.f32.mrf.mxu0
    %2614 = vdwg.mxu0
    %v2616 = vsel %vm160, %v2612, 0
    %2618 = vmatprep.subr.mxu0 0.0
    %2619 = vmatpush1.msra.mxu0 0.0
    %2620 = vmatprep.subr.mxu0 0.0
    %2621 = vmatpush1.msra.mxu0 0.0
    %2622 = vmatprep.subr.mxu0 0.0
    %2623 = vmatpush1.msra.mxu0 0.0
    %2624 = vmatprep.subr.mxu0 0.0
    %2625 = vmatpush1.msra.mxu0 0.0
    %2626 = vmatprep.subr.mxu0 0.0
    %2627 = vmatpush1.msra.mxu0 0.0
    %2628 = vmatprep.subr.mxu0 0.0
    %2629 = vmatpush1.msra.mxu0 0.0
    %2630 = vmatprep.subr.mxu0 0.0
    %2631 = vmatpush1.msra.mxu0 0.0
    %2632 = vmatprep.subr.mxu0 0.0
    %2633 = vmatpush1.msra.mxu0 0.0
    %2634 = vmatprep.subr.mxu0 0.0
    %2635 = vmatpush1.msra.mxu0 0.0
    %2636 = vmatprep.subr.mxu0 0.0
    %2637 = vmatpush1.msra.mxu0 0.0
    %2638 = vmatprep.subr.mxu0 0.0
    %2639 = vmatpush1.msra.mxu0 0.0
    %2640 = vmatprep.subr.mxu0 0.0
    %2641 = vmatpush1.msra.mxu0 0.0
    %2642 = vmatprep.subr.mxu0 0.0
    %2643 = vmatpush1.msra.mxu0 0.0
    %2644 = vmatprep.subr.mxu0 0.0
    %2645 = vmatpush1.msra.mxu0 0.0
    %2646 = vmatprep.subr.mxu0 0.0
    %2647 = vmatpush1.msra.mxu0 0.0
    %2648 = vmatprep.subr.mxu0 0.0
    %2649 = vmatpush1.msra.mxu0 %v2539
    %2650 = vmatprep.subr.mxu0 0.0
    %2651 = vmatpush2.msra.mxu0 0.0
    %2652 = vmatprep.subr.mxu0 0.0
    %2653 = vmatpush2.msra.mxu0 0.0
    %2654 = vmatprep.subr.mxu0 0.0
    %2655 = vmatpush2.msra.mxu0 0.0
    %2656 = vmatprep.subr.mxu0 0.0
    %2657 = vmatpush2.msra.mxu0 0.0
    %2658 = vmatprep.subr.mxu0 0.0
    %2659 = vmatpush2.msra.mxu0 0.0
    %2660 = vmatprep.subr.mxu0 0.0
    %2661 = vmatpush2.msra.mxu0 0.0
    %2662 = vmatprep.subr.mxu0 0.0
    %2663 = vmatpush2.msra.mxu0 0.0
    %2664 = vmatprep.subr.mxu0 0.0
    %2665 = vmatpush2.msra.mxu0 0.0
    %2666 = vmatprep.subr.mxu0 0.0
    %2667 = vmatpush2.msra.mxu0 0.0
    %2668 = vmatprep.subr.mxu0 0.0
    %2669 = vmatpush2.msra.mxu0 0.0
    %2670 = vmatprep.subr.mxu0 0.0
    %2671 = vmatpush2.msra.mxu0 0.0
    %2672 = vmatprep.subr.mxu0 0.0
    %2673 = vmatpush2.msra.mxu0 0.0
    %2674 = vmatprep.subr.mxu0 0.0
    %2675 = vmatpush2.msra.mxu0 0.0
    %2676 = vmatprep.subr.mxu0 0.0
    %2677 = vmatpush2.msra.mxu0 0.0
    %2678 = vmatprep.subr.mxu0 0.0
    %2679 = vmatpush2.msra.mxu0 0.0
    %2680 = vmatprep.subr.mxu0 0.0
    %2681 = vmatpush2.msra.mxu0 0.0
    %2682 = vmatprep.mubr.f32.mxu0 0.0
    %2683 = vmatmul.mubr.f32.gmra.mxu0 %v2616
    %v2684 = vpop.f32.mrf.mxu0
    %v2685 = vadd.f32 0.0, %v2684
    %v2686 = vpop.f32.mrf.mxu0
    %2687 = vdwg.mxu0
    %v2688 = vmul.f32 %v2685, 0.5
    %v2689 = vsub.f32 %v183, %v2688
    %v2691 = vsel %vm160, %v2539, 0
    %2693 = vmatprep.subr.mxu0 0.0
    %2694 = vmatpush1.msra.mxu0 0.0
    %2695 = vmatprep.subr.mxu0 0.0
    %2696 = vmatpush1.msra.mxu0 0.0
    %2697 = vmatprep.subr.mxu0 0.0
    %2698 = vmatpush1.msra.mxu0 0.0
    %2699 = vmatprep.subr.mxu0 0.0
    %2700 = vmatpush1.msra.mxu0 0.0
    %2701 = vmatprep.subr.mxu0 0.0
    %2702 = vmatpush1.msra.mxu0 0.0
    %2703 = vmatprep.subr.mxu0 0.0
    %2704 = vmatpush1.msra.mxu0 0.0
    %2705 = vmatprep.subr.mxu0 0.0
    %2706 = vmatpush1.msra.mxu0 0.0
    %2707 = vmatprep.subr.mxu0 0.0
    %2708 = vmatpush1.msra.mxu0 0.0
    %2709 = vmatprep.subr.mxu0 0.0
    %2710 = vmatpush1.msra.mxu0 0.0
    %2711 = vmatprep.subr.mxu0 0.0
    %2712 = vmatpush1.msra.mxu0 0.0
    %2713 = vmatprep.subr.mxu0 0.0
    %2714 = vmatpush1.msra.mxu0 0.0
    %2715 = vmatprep.subr.mxu0 0.0
    %2716 = vmatpush1.msra.mxu0 0.0
    %2717 = vmatprep.subr.mxu0 0.0
    %2718 = vmatpush1.msra.mxu0 0.0
    %2719 = vmatprep.subr.mxu0 0.0
    %2720 = vmatpush1.msra.mxu0 0.0
    %2721 = vmatprep.subr.mxu0 0.0
    %2722 = vmatpush1.msra.mxu0 0.0
    %2723 = vmatprep.subr.mxu0 0.0
    %2724 = vmatpush1.msra.mxu0 %v2689
    %2725 = vmatprep.subr.mxu0 0.0
    %2726 = vmatpush2.msra.mxu0 0.0
    %2727 = vmatprep.subr.mxu0 0.0
    %2728 = vmatpush2.msra.mxu0 0.0
    %2729 = vmatprep.subr.mxu0 0.0
    %2730 = vmatpush2.msra.mxu0 0.0
    %2731 = vmatprep.subr.mxu0 0.0
    %2732 = vmatpush2.msra.mxu0 0.0
    %2733 = vmatprep.subr.mxu0 0.0
    %2734 = vmatpush2.msra.mxu0 0.0
    %2735 = vmatprep.subr.mxu0 0.0
    %2736 = vmatpush2.msra.mxu0 0.0
    %2737 = vmatprep.subr.mxu0 0.0
    %2738 = vmatpush2.msra.mxu0 0.0
    %2739 = vmatprep.subr.mxu0 0.0
    %2740 = vmatpush2.msra.mxu0 0.0
    %2741 = vmatprep.subr.mxu0 0.0
    %2742 = vmatpush2.msra.mxu0 0.0
    %2743 = vmatprep.subr.mxu0 0.0
    %2744 = vmatpush2.msra.mxu0 0.0
    %2745 = vmatprep.subr.mxu0 0.0
    %2746 = vmatpush2.msra.mxu0 0.0
    %2747 = vmatprep.subr.mxu0 0.0
    %2748 = vmatpush2.msra.mxu0 0.0
    %2749 = vmatprep.subr.mxu0 0.0
    %2750 = vmatpush2.msra.mxu0 0.0
    %2751 = vmatprep.subr.mxu0 0.0
    %2752 = vmatpush2.msra.mxu0 0.0
    %2753 = vmatprep.subr.mxu0 0.0
    %2754 = vmatpush2.msra.mxu0 0.0
    %2755 = vmatprep.subr.mxu0 0.0
    %2756 = vmatpush2.msra.mxu0 0.0
    %2757 = vmatprep.mubr.f32.mxu0 0.0
    %2758 = vmatmul.mubr.f32.gmra.mxu0 %v2691
    %v2759 = vpop.f32.mrf.mxu0
    %v2760 = vadd.f32 0.0, %v2759
    %v2761 = vpop.f32.mrf.mxu0
    %2762 = vdwg.mxu0
    %v2764 = vsel %vm160, %v2689, 0
    %2766 = vmatprep.subr.mxu0 0.0
    %2767 = vmatpush1.msra.mxu0 0.0
    %2768 = vmatprep.subr.mxu0 0.0
    %2769 = vmatpush1.msra.mxu0 0.0
    %2770 = vmatprep.subr.mxu0 0.0
    %2771 = vmatpush1.msra.mxu0 0.0
    %2772 = vmatprep.subr.mxu0 0.0
    %2773 = vmatpush1.msra.mxu0 0.0
    %2774 = vmatprep.subr.mxu0 0.0
    %2775 = vmatpush1.msra.mxu0 0.0
    %2776 = vmatprep.subr.mxu0 0.0
    %2777 = vmatpush1.msra.mxu0 0.0
    %2778 = vmatprep.subr.mxu0 0.0
    %2779 = vmatpush1.msra.mxu0 0.0
    %2780 = vmatprep.subr.mxu0 0.0
    %2781 = vmatpush1.msra.mxu0 0.0
    %2782 = vmatprep.subr.mxu0 0.0
    %2783 = vmatpush1.msra.mxu0 0.0
    %2784 = vmatprep.subr.mxu0 0.0
    %2785 = vmatpush1.msra.mxu0 0.0
    %2786 = vmatprep.subr.mxu0 0.0
    %2787 = vmatpush1.msra.mxu0 0.0
    %2788 = vmatprep.subr.mxu0 0.0
    %2789 = vmatpush1.msra.mxu0 0.0
    %2790 = vmatprep.subr.mxu0 0.0
    %2791 = vmatpush1.msra.mxu0 0.0
    %2792 = vmatprep.subr.mxu0 0.0
    %2793 = vmatpush1.msra.mxu0 0.0
    %2794 = vmatprep.subr.mxu0 0.0
    %2795 = vmatpush1.msra.mxu0 0.0
    %2796 = vmatprep.subr.mxu0 0.0
    %2797 = vmatpush1.msra.mxu0 %v2612
    %2798 = vmatprep.subr.mxu0 0.0
    %2799 = vmatpush2.msra.mxu0 0.0
    %2800 = vmatprep.subr.mxu0 0.0
    %2801 = vmatpush2.msra.mxu0 0.0
    %2802 = vmatprep.subr.mxu0 0.0
    %2803 = vmatpush2.msra.mxu0 0.0
    %2804 = vmatprep.subr.mxu0 0.0
    %2805 = vmatpush2.msra.mxu0 0.0
    %2806 = vmatprep.subr.mxu0 0.0
    %2807 = vmatpush2.msra.mxu0 0.0
    %2808 = vmatprep.subr.mxu0 0.0
    %2809 = vmatpush2.msra.mxu0 0.0
    %2810 = vmatprep.subr.mxu0 0.0
    %2811 = vmatpush2.msra.mxu0 0.0
    %2812 = vmatprep.subr.mxu0 0.0
    %2813 = vmatpush2.msra.mxu0 0.0
    %2814 = vmatprep.subr.mxu0 0.0
    %2815 = vmatpush2.msra.mxu0 0.0
    %2816 = vmatprep.subr.mxu0 0.0
    %2817 = vmatpush2.msra.mxu0 0.0
    %2818 = vmatprep.subr.mxu0 0.0
    %2819 = vmatpush2.msra.mxu0 0.0
    %2820 = vmatprep.subr.mxu0 0.0
    %2821 = vmatpush2.msra.mxu0 0.0
    %2822 = vmatprep.subr.mxu0 0.0
    %2823 = vmatpush2.msra.mxu0 0.0
    %2824 = vmatprep.subr.mxu0 0.0
    %2825 = vmatpush2.msra.mxu0 0.0
    %2826 = vmatprep.subr.mxu0 0.0
    %2827 = vmatpush2.msra.mxu0 0.0
    %2828 = vmatprep.subr.mxu0 0.0
    %2829 = vmatpush2.msra.mxu0 0.0
    %2830 = vmatprep.mubr.f32.mxu0 0.0
    %2831 = vmatmul.mubr.f32.gmra.mxu0 %v2764
    %v2832 = vpop.f32.mrf.mxu0
    %v2833 = vadd.f32 0.0, %v2832
    %v2834 = vpop.f32.mrf.mxu0
    %2835 = vdwg.mxu0
    %v2837 = vsel %vm160, %v2833, 0
    %2839 = vmatprep.subr.mxu0 0.0
    %2840 = vmatpush1.msra.mxu0 0.0
    %2841 = vmatprep.subr.mxu0 0.0
    %2842 = vmatpush1.msra.mxu0 0.0
    %2843 = vmatprep.subr.mxu0 0.0
    %2844 = vmatpush1.msra.mxu0 0.0
    %2845 = vmatprep.subr.mxu0 0.0
    %2846 = vmatpush1.msra.mxu0 0.0
    %2847 = vmatprep.subr.mxu0 0.0
    %2848 = vmatpush1.msra.mxu0 0.0
    %2849 = vmatprep.subr.mxu0 0.0
    %2850 = vmatpush1.msra.mxu0 0.0
    %2851 = vmatprep.subr.mxu0 0.0
    %2852 = vmatpush1.msra.mxu0 0.0
    %2853 = vmatprep.subr.mxu0 0.0
    %2854 = vmatpush1.msra.mxu0 0.0
    %2855 = vmatprep.subr.mxu0 0.0
    %2856 = vmatpush1.msra.mxu0 0.0
    %2857 = vmatprep.subr.mxu0 0.0
    %2858 = vmatpush1.msra.mxu0 0.0
    %2859 = vmatprep.subr.mxu0 0.0
    %2860 = vmatpush1.msra.mxu0 0.0
    %2861 = vmatprep.subr.mxu0 0.0
    %2862 = vmatpush1.msra.mxu0 0.0
    %2863 = vmatprep.subr.mxu0 0.0
    %2864 = vmatpush1.msra.mxu0 0.0
    %2865 = vmatprep.subr.mxu0 0.0
    %2866 = vmatpush1.msra.mxu0 0.0
    %2867 = vmatprep.subr.mxu0 0.0
    %2868 = vmatpush1.msra.mxu0 0.0
    %2869 = vmatprep.subr.mxu0 0.0
    %2870 = vmatpush1.msra.mxu0 %v2760
    %2871 = vmatprep.subr.mxu0 0.0
    %2872 = vmatpush2.msra.mxu0 0.0
    %2873 = vmatprep.subr.mxu0 0.0
    %2874 = vmatpush2.msra.mxu0 0.0
    %2875 = vmatprep.subr.mxu0 0.0
    %2876 = vmatpush2.msra.mxu0 0.0
    %2877 = vmatprep.subr.mxu0 0.0
    %2878 = vmatpush2.msra.mxu0 0.0
    %2879 = vmatprep.subr.mxu0 0.0
    %2880 = vmatpush2.msra.mxu0 0.0
    %2881 = vmatprep.subr.mxu0 0.0
    %2882 = vmatpush2.msra.mxu0 0.0
    %2883 = vmatprep.subr.mxu0 0.0
    %2884 = vmatpush2.msra.mxu0 0.0
    %2885 = vmatprep.subr.mxu0 0.0
    %2886 = vmatpush2.msra.mxu0 0.0
    %2887 = vmatprep.subr.mxu0 0.0
    %2888 = vmatpush2.msra.mxu0 0.0
    %2889 = vmatprep.subr.mxu0 0.0
    %2890 = vmatpush2.msra.mxu0 0.0
    %2891 = vmatprep.subr.mxu0 0.0
    %2892 = vmatpush2.msra.mxu0 0.0
    %2893 = vmatprep.subr.mxu0 0.0
    %2894 = vmatpush2.msra.mxu0 0.0
    %2895 = vmatprep.subr.mxu0 0.0
    %2896 = vmatpush2.msra.mxu0 0.0
    %2897 = vmatprep.subr.mxu0 0.0
    %2898 = vmatpush2.msra.mxu0 0.0
    %2899 = vmatprep.subr.mxu0 0.0
    %2900 = vmatpush2.msra.mxu0 0.0
    %2901 = vmatprep.subr.mxu0 0.0
    %2902 = vmatpush2.msra.mxu0 0.0
    %2903 = vmatprep.mubr.f32.mxu0 0.0
    %2904 = vmatmul.mubr.f32.gmra.mxu0 %v2837
    %v2905 = vpop.f32.mrf.mxu0
    %v2906 = vadd.f32 0.0, %v2905
    %v2907 = vpop.f32.mrf.mxu0
    %2908 = vdwg.mxu0
    %v2909 = vmul.f32 %v2906, 0.5
    %v2910 = vsub.f32 %v183, %v2909
    %v2912 = vsel %vm160, %v2760, 0
    %2914 = vmatprep.subr.mxu0 0.0
    %2915 = vmatpush1.msra.mxu0 0.0
    %2916 = vmatprep.subr.mxu0 0.0
    %2917 = vmatpush1.msra.mxu0 0.0
    %2918 = vmatprep.subr.mxu0 0.0
    %2919 = vmatpush1.msra.mxu0 0.0
    %2920 = vmatprep.subr.mxu0 0.0
    %2921 = vmatpush1.msra.mxu0 0.0
    %2922 = vmatprep.subr.mxu0 0.0
    %2923 = vmatpush1.msra.mxu0 0.0
    %2924 = vmatprep.subr.mxu0 0.0
    %2925 = vmatpush1.msra.mxu0 0.0
    %2926 = vmatprep.subr.mxu0 0.0
    %2927 = vmatpush1.msra.mxu0 0.0
    %2928 = vmatprep.subr.mxu0 0.0
    %2929 = vmatpush1.msra.mxu0 0.0
    %2930 = vmatprep.subr.mxu0 0.0
    %2931 = vmatpush1.msra.mxu0 0.0
    %2932 = vmatprep.subr.mxu0 0.0
    %2933 = vmatpush1.msra.mxu0 0.0
    %2934 = vmatprep.subr.mxu0 0.0
    %2935 = vmatpush1.msra.mxu0 0.0
    %2936 = vmatprep.subr.mxu0 0.0
    %2937 = vmatpush1.msra.mxu0 0.0
    %2938 = vmatprep.subr.mxu0 0.0
    %2939 = vmatpush1.msra.mxu0 0.0
    %2940 = vmatprep.subr.mxu0 0.0
    %2941 = vmatpush1.msra.mxu0 0.0
    %2942 = vmatprep.subr.mxu0 0.0
    %2943 = vmatpush1.msra.mxu0 0.0
    %2944 = vmatprep.subr.mxu0 0.0
    %2945 = vmatpush1.msra.mxu0 %v2910
    %2946 = vmatprep.subr.mxu0 0.0
    %2947 = vmatpush2.msra.mxu0 0.0
    %2948 = vmatprep.subr.mxu0 0.0
    %2949 = vmatpush2.msra.mxu0 0.0
    %2950 = vmatprep.subr.mxu0 0.0
    %2951 = vmatpush2.msra.mxu0 0.0
    %2952 = vmatprep.subr.mxu0 0.0
    %2953 = vmatpush2.msra.mxu0 0.0
    %2954 = vmatprep.subr.mxu0 0.0
    %2955 = vmatpush2.msra.mxu0 0.0
    %2956 = vmatprep.subr.mxu0 0.0
    %2957 = vmatpush2.msra.mxu0 0.0
    %2958 = vmatprep.subr.mxu0 0.0
    %2959 = vmatpush2.msra.mxu0 0.0
    %2960 = vmatprep.subr.mxu0 0.0
    %2961 = vmatpush2.msra.mxu0 0.0
    %2962 = vmatprep.subr.mxu0 0.0
    %2963 = vmatpush2.msra.mxu0 0.0
    %2964 = vmatprep.subr.mxu0 0.0
    %2965 = vmatpush2.msra.mxu0 0.0
    %2966 = vmatprep.subr.mxu0 0.0
    %2967 = vmatpush2.msra.mxu0 0.0
    %2968 = vmatprep.subr.mxu0 0.0
    %2969 = vmatpush2.msra.mxu0 0.0
    %2970 = vmatprep.subr.mxu0 0.0
    %2971 = vmatpush2.msra.mxu0 0.0
    %2972 = vmatprep.subr.mxu0 0.0
    %2973 = vmatpush2.msra.mxu0 0.0
    %2974 = vmatprep.subr.mxu0 0.0
    %2975 = vmatpush2.msra.mxu0 0.0
    %2976 = vmatprep.subr.mxu0 0.0
    %2977 = vmatpush2.msra.mxu0 0.0
    %2978 = vmatprep.mubr.f32.mxu0 0.0
    %2979 = vmatmul.mubr.f32.gmra.mxu0 %v2912
    %v2980 = vpop.f32.mrf.mxu0
    %v2981 = vadd.f32 0.0, %v2980
    %v2982 = vpop.f32.mrf.mxu0
    %2983 = vdwg.mxu0
    %v2985 = vsel %vm160, %v2910, 0
    %2987 = vmatprep.subr.mxu0 0.0
    %2988 = vmatpush1.msra.mxu0 0.0
    %2989 = vmatprep.subr.mxu0 0.0
    %2990 = vmatpush1.msra.mxu0 0.0
    %2991 = vmatprep.subr.mxu0 0.0
    %2992 = vmatpush1.msra.mxu0 0.0
    %2993 = vmatprep.subr.mxu0 0.0
    %2994 = vmatpush1.msra.mxu0 0.0
    %2995 = vmatprep.subr.mxu0 0.0
    %2996 = vmatpush1.msra.mxu0 0.0
    %2997 = vmatprep.subr.mxu0 0.0
    %2998 = vmatpush1.msra.mxu0 0.0
    %2999 = vmatprep.subr.mxu0 0.0
    %3000 = vmatpush1.msra.mxu0 0.0
    %3001 = vmatprep.subr.mxu0 0.0
    %3002 = vmatpush1.msra.mxu0 0.0
    %3003 = vmatprep.subr.mxu0 0.0
    %3004 = vmatpush1.msra.mxu0 0.0
    %3005 = vmatprep.subr.mxu0 0.0
    %3006 = vmatpush1.msra.mxu0 0.0
    %3007 = vmatprep.subr.mxu0 0.0
    %3008 = vmatpush1.msra.mxu0 0.0
    %3009 = vmatprep.subr.mxu0 0.0
    %3010 = vmatpush1.msra.mxu0 0.0
    %3011 = vmatprep.subr.mxu0 0.0
    %3012 = vmatpush1.msra.mxu0 0.0
    %3013 = vmatprep.subr.mxu0 0.0
    %3014 = vmatpush1.msra.mxu0 0.0
    %3015 = vmatprep.subr.mxu0 0.0
    %3016 = vmatpush1.msra.mxu0 0.0
    %3017 = vmatprep.subr.mxu0 0.0
    %3018 = vmatpush1.msra.mxu0 %v2833
    %3019 = vmatprep.subr.mxu0 0.0
    %3020 = vmatpush2.msra.mxu0 0.0
    %3021 = vmatprep.subr.mxu0 0.0
    %3022 = vmatpush2.msra.mxu0 0.0
    %3023 = vmatprep.subr.mxu0 0.0
    %3024 = vmatpush2.msra.mxu0 0.0
    %3025 = vmatprep.subr.mxu0 0.0
    %3026 = vmatpush2.msra.mxu0 0.0
    %3027 = vmatprep.subr.mxu0 0.0
    %3028 = vmatpush2.msra.mxu0 0.0
    %3029 = vmatprep.subr.mxu0 0.0
    %3030 = vmatpush2.msra.mxu0 0.0
    %3031 = vmatprep.subr.mxu0 0.0
    %3032 = vmatpush2.msra.mxu0 0.0
    %3033 = vmatprep.subr.mxu0 0.0
    %3034 = vmatpush2.msra.mxu0 0.0
    %3035 = vmatprep.subr.mxu0 0.0
    %3036 = vmatpush2.msra.mxu0 0.0
    %3037 = vmatprep.subr.mxu0 0.0
    %3038 = vmatpush2.msra.mxu0 0.0
    %3039 = vmatprep.subr.mxu0 0.0
    %3040 = vmatpush2.msra.mxu0 0.0
    %3041 = vmatprep.subr.mxu0 0.0
    %3042 = vmatpush2.msra.mxu0 0.0
    %3043 = vmatprep.subr.mxu0 0.0
    %3044 = vmatpush2.msra.mxu0 0.0
    %3045 = vmatprep.subr.mxu0 0.0
    %3046 = vmatpush2.msra.mxu0 0.0
    %3047 = vmatprep.subr.mxu0 0.0
    %3048 = vmatpush2.msra.mxu0 0.0
    %3049 = vmatprep.subr.mxu0 0.0
    %3050 = vmatpush2.msra.mxu0 0.0
    %3051 = vmatprep.mubr.f32.mxu0 0.0
    %3052 = vmatmul.mubr.f32.gmra.mxu0 %v2985
    %v3053 = vpop.f32.mrf.mxu0
    %v3054 = vadd.f32 0.0, %v3053
    %v3055 = vpop.f32.mrf.mxu0
    %3056 = vdwg.mxu0
    %v3058 = vsel %vm160, %v3054, 0
    %3060 = vmatprep.subr.mxu0 0.0
    %3061 = vmatpush1.msra.mxu0 0.0
    %3062 = vmatprep.subr.mxu0 0.0
    %3063 = vmatpush1.msra.mxu0 0.0
    %3064 = vmatprep.subr.mxu0 0.0
    %3065 = vmatpush1.msra.mxu0 0.0
    %3066 = vmatprep.subr.mxu0 0.0
    %3067 = vmatpush1.msra.mxu0 0.0
    %3068 = vmatprep.subr.mxu0 0.0
    %3069 = vmatpush1.msra.mxu0 0.0
    %3070 = vmatprep.subr.mxu0 0.0
    %3071 = vmatpush1.msra.mxu0 0.0
    %3072 = vmatprep.subr.mxu0 0.0
    %3073 = vmatpush1.msra.mxu0 0.0
    %3074 = vmatprep.subr.mxu0 0.0
    %3075 = vmatpush1.msra.mxu0 0.0
    %3076 = vmatprep.subr.mxu0 0.0
    %3077 = vmatpush1.msra.mxu0 0.0
    %3078 = vmatprep.subr.mxu0 0.0
    %3079 = vmatpush1.msra.mxu0 0.0
    %3080 = vmatprep.subr.mxu0 0.0
    %3081 = vmatpush1.msra.mxu0 0.0
    %3082 = vmatprep.subr.mxu0 0.0
    %3083 = vmatpush1.msra.mxu0 0.0
    %3084 = vmatprep.subr.mxu0 0.0
    %3085 = vmatpush1.msra.mxu0 0.0
    %3086 = vmatprep.subr.mxu0 0.0
    %3087 = vmatpush1.msra.mxu0 0.0
    %3088 = vmatprep.subr.mxu0 0.0
    %3089 = vmatpush1.msra.mxu0 0.0
    %3090 = vmatprep.subr.mxu0 0.0
    %3091 = vmatpush1.msra.mxu0 %v2981
    %3092 = vmatprep.subr.mxu0 0.0
    %3093 = vmatpush2.msra.mxu0 0.0
    %3094 = vmatprep.subr.mxu0 0.0
    %3095 = vmatpush2.msra.mxu0 0.0
    %3096 = vmatprep.subr.mxu0 0.0
    %3097 = vmatpush2.msra.mxu0 0.0
    %3098 = vmatprep.subr.mxu0 0.0
    %3099 = vmatpush2.msra.mxu0 0.0
    %3100 = vmatprep.subr.mxu0 0.0
    %3101 = vmatpush2.msra.mxu0 0.0
    %3102 = vmatprep.subr.mxu0 0.0
    %3103 = vmatpush2.msra.mxu0 0.0
    %3104 = vmatprep.subr.mxu0 0.0
    %3105 = vmatpush2.msra.mxu0 0.0
    %3106 = vmatprep.subr.mxu0 0.0
    %3107 = vmatpush2.msra.mxu0 0.0
    %3108 = vmatprep.subr.mxu0 0.0
    %3109 = vmatpush2.msra.mxu0 0.0
    %3110 = vmatprep.subr.mxu0 0.0
    %3111 = vmatpush2.msra.mxu0 0.0
    %3112 = vmatprep.subr.mxu0 0.0
    %3113 = vmatpush2.msra.mxu0 0.0
    %3114 = vmatprep.subr.mxu0 0.0
    %3115 = vmatpush2.msra.mxu0 0.0
    %3116 = vmatprep.subr.mxu0 0.0
    %3117 = vmatpush2.msra.mxu0 0.0
    %3118 = vmatprep.subr.mxu0 0.0
    %3119 = vmatpush2.msra.mxu0 0.0
    %3120 = vmatprep.subr.mxu0 0.0
    %3121 = vmatpush2.msra.mxu0 0.0
    %3122 = vmatprep.subr.mxu0 0.0
    %3123 = vmatpush2.msra.mxu0 0.0
    %3124 = vmatprep.mubr.f32.mxu0 0.0
    %3125 = vmatmul.mubr.f32.gmra.mxu0 %v3058
    %v3126 = vpop.f32.mrf.mxu0
    %v3127 = vadd.f32 0.0, %v3126
    %v3128 = vpop.f32.mrf.mxu0
    %3129 = vdwg.mxu0
    %v3130 = vmul.f32 %v3127, 0.5
    %v3131 = vsub.f32 %v183, %v3130
    %v3133 = vsel %vm160, %v2981, 0
    %3135 = vmatprep.subr.mxu0 0.0
    %3136 = vmatpush1.msra.mxu0 0.0
    %3137 = vmatprep.subr.mxu0 0.0
    %3138 = vmatpush1.msra.mxu0 0.0
    %3139 = vmatprep.subr.mxu0 0.0
    %3140 = vmatpush1.msra.mxu0 0.0
    %3141 = vmatprep.subr.mxu0 0.0
    %3142 = vmatpush1.msra.mxu0 0.0
    %3143 = vmatprep.subr.mxu0 0.0
    %3144 = vmatpush1.msra.mxu0 0.0
    %3145 = vmatprep.subr.mxu0 0.0
    %3146 = vmatpush1.msra.mxu0 0.0
    %3147 = vmatprep.subr.mxu0 0.0
    %3148 = vmatpush1.msra.mxu0 0.0
    %3149 = vmatprep.subr.mxu0 0.0
    %3150 = vmatpush1.msra.mxu0 0.0
    %3151 = vmatprep.subr.mxu0 0.0
    %3152 = vmatpush1.msra.mxu0 0.0
    %3153 = vmatprep.subr.mxu0 0.0
    %3154 = vmatpush1.msra.mxu0 0.0
    %3155 = vmatprep.subr.mxu0 0.0
    %3156 = vmatpush1.msra.mxu0 0.0
    %3157 = vmatprep.subr.mxu0 0.0
    %3158 = vmatpush1.msra.mxu0 0.0
    %3159 = vmatprep.subr.mxu0 0.0
    %3160 = vmatpush1.msra.mxu0 0.0
    %3161 = vmatprep.subr.mxu0 0.0
    %3162 = vmatpush1.msra.mxu0 0.0
    %3163 = vmatprep.subr.mxu0 0.0
    %3164 = vmatpush1.msra.mxu0 0.0
    %3165 = vmatprep.subr.mxu0 0.0
    %3166 = vmatpush1.msra.mxu0 %v3131
    %3167 = vmatprep.subr.mxu0 0.0
    %3168 = vmatpush2.msra.mxu0 0.0
    %3169 = vmatprep.subr.mxu0 0.0
    %3170 = vmatpush2.msra.mxu0 0.0
    %3171 = vmatprep.subr.mxu0 0.0
    %3172 = vmatpush2.msra.mxu0 0.0
    %3173 = vmatprep.subr.mxu0 0.0
    %3174 = vmatpush2.msra.mxu0 0.0
    %3175 = vmatprep.subr.mxu0 0.0
    %3176 = vmatpush2.msra.mxu0 0.0
    %3177 = vmatprep.subr.mxu0 0.0
    %3178 = vmatpush2.msra.mxu0 0.0
    %3179 = vmatprep.subr.mxu0 0.0
    %3180 = vmatpush2.msra.mxu0 0.0
    %3181 = vmatprep.subr.mxu0 0.0
    %3182 = vmatpush2.msra.mxu0 0.0
    %3183 = vmatprep.subr.mxu0 0.0
    %3184 = vmatpush2.msra.mxu0 0.0
    %3185 = vmatprep.subr.mxu0 0.0
    %3186 = vmatpush2.msra.mxu0 0.0
    %3187 = vmatprep.subr.mxu0 0.0
    %3188 = vmatpush2.msra.mxu0 0.0
    %3189 = vmatprep.subr.mxu0 0.0
    %3190 = vmatpush2.msra.mxu0 0.0
    %3191 = vmatprep.subr.mxu0 0.0
    %3192 = vmatpush2.msra.mxu0 0.0
    %3193 = vmatprep.subr.mxu0 0.0
    %3194 = vmatpush2.msra.mxu0 0.0
    %3195 = vmatprep.subr.mxu0 0.0
    %3196 = vmatpush2.msra.mxu0 0.0
    %3197 = vmatprep.subr.mxu0 0.0
    %3198 = vmatpush2.msra.mxu0 0.0
    %3199 = vmatprep.mubr.f32.mxu0 0.0
    %3200 = vmatmul.mubr.f32.gmra.mxu0 %v3133
    %v3201 = vpop.f32.mrf.mxu0
    %v3202 = vadd.f32 0.0, %v3201
    %v3203 = vpop.f32.mrf.mxu0
    %3204 = vdwg.mxu0
    %v3206 = vsel %vm160, %v3131, 0
    %3208 = vmatprep.subr.mxu0 0.0
    %3209 = vmatpush1.msra.mxu0 0.0
    %3210 = vmatprep.subr.mxu0 0.0
    %3211 = vmatpush1.msra.mxu0 0.0
    %3212 = vmatprep.subr.mxu0 0.0
    %3213 = vmatpush1.msra.mxu0 0.0
    %3214 = vmatprep.subr.mxu0 0.0
    %3215 = vmatpush1.msra.mxu0 0.0
    %3216 = vmatprep.subr.mxu0 0.0
    %3217 = vmatpush1.msra.mxu0 0.0
    %3218 = vmatprep.subr.mxu0 0.0
    %3219 = vmatpush1.msra.mxu0 0.0
    %3220 = vmatprep.subr.mxu0 0.0
    %3221 = vmatpush1.msra.mxu0 0.0
    %3222 = vmatprep.subr.mxu0 0.0
    %3223 = vmatpush1.msra.mxu0 0.0
    %3224 = vmatprep.subr.mxu0 0.0
    %3225 = vmatpush1.msra.mxu0 0.0
    %3226 = vmatprep.subr.mxu0 0.0
    %3227 = vmatpush1.msra.mxu0 0.0
    %3228 = vmatprep.subr.mxu0 0.0
    %3229 = vmatpush1.msra.mxu0 0.0
    %3230 = vmatprep.subr.mxu0 0.0
    %3231 = vmatpush1.msra.mxu0 0.0
    %3232 = vmatprep.subr.mxu0 0.0
    %3233 = vmatpush1.msra.mxu0 0.0
    %3234 = vmatprep.subr.mxu0 0.0
    %3235 = vmatpush1.msra.mxu0 0.0
    %3236 = vmatprep.subr.mxu0 0.0
    %3237 = vmatpush1.msra.mxu0 0.0
    %3238 = vmatprep.subr.mxu0 0.0
    %3239 = vmatpush1.msra.mxu0 %v3054
    %3240 = vmatprep.subr.mxu0 0.0
    %3241 = vmatpush2.msra.mxu0 0.0
    %3242 = vmatprep.subr.mxu0 0.0
    %3243 = vmatpush2.msra.mxu0 0.0
    %3244 = vmatprep.subr.mxu0 0.0
    %3245 = vmatpush2.msra.mxu0 0.0
    %3246 = vmatprep.subr.mxu0 0.0
    %3247 = vmatpush2.msra.mxu0 0.0
    %3248 = vmatprep.subr.mxu0 0.0
    %3249 = vmatpush2.msra.mxu0 0.0
    %3250 = vmatprep.subr.mxu0 0.0
    %3251 = vmatpush2.msra.mxu0 0.0
    %3252 = vmatprep.subr.mxu0 0.0
    %3253 = vmatpush2.msra.mxu0 0.0
    %3254 = vmatprep.subr.mxu0 0.0
    %3255 = vmatpush2.msra.mxu0 0.0
    %3256 = vmatprep.subr.mxu0 0.0
    %3257 = vmatpush2.msra.mxu0 0.0
    %3258 = vmatprep.subr.mxu0 0.0
    %3259 = vmatpush2.msra.mxu0 0.0
    %3260 = vmatprep.subr.mxu0 0.0
    %3261 = vmatpush2.msra.mxu0 0.0
    %3262 = vmatprep.subr.mxu0 0.0
    %3263 = vmatpush2.msra.mxu0 0.0
    %3264 = vmatprep.subr.mxu0 0.0
    %3265 = vmatpush2.msra.mxu0 0.0
    %3266 = vmatprep.subr.mxu0 0.0
    %3267 = vmatpush2.msra.mxu0 0.0
    %3268 = vmatprep.subr.mxu0 0.0
    %3269 = vmatpush2.msra.mxu0 0.0
    %3270 = vmatprep.subr.mxu0 0.0
    %3271 = vmatpush2.msra.mxu0 0.0
    %3272 = vmatprep.mubr.f32.mxu0 0.0
    %3273 = vmatmul.mubr.f32.gmra.mxu0 %v3206
    %v3274 = vpop.f32.mrf.mxu0
    %v3275 = vadd.f32 0.0, %v3274
    %v3276 = vpop.f32.mrf.mxu0
    %3277 = vdwg.mxu0
    %v3279 = vsel %vm160, %v3275, 0
    %3281 = vmatprep.subr.mxu0 0.0
    %3282 = vmatpush1.msra.mxu0 0.0
    %3283 = vmatprep.subr.mxu0 0.0
    %3284 = vmatpush1.msra.mxu0 0.0
    %3285 = vmatprep.subr.mxu0 0.0
    %3286 = vmatpush1.msra.mxu0 0.0
    %3287 = vmatprep.subr.mxu0 0.0
    %3288 = vmatpush1.msra.mxu0 0.0
    %3289 = vmatprep.subr.mxu0 0.0
    %3290 = vmatpush1.msra.mxu0 0.0
    %3291 = vmatprep.subr.mxu0 0.0
    %3292 = vmatpush1.msra.mxu0 0.0
    %3293 = vmatprep.subr.mxu0 0.0
    %3294 = vmatpush1.msra.mxu0 0.0
    %3295 = vmatprep.subr.mxu0 0.0
    %3296 = vmatpush1.msra.mxu0 0.0
    %3297 = vmatprep.subr.mxu0 0.0
    %3298 = vmatpush1.msra.mxu0 0.0
    %3299 = vmatprep.subr.mxu0 0.0
    %3300 = vmatpush1.msra.mxu0 0.0
    %3301 = vmatprep.subr.mxu0 0.0
    %3302 = vmatpush1.msra.mxu0 0.0
    %3303 = vmatprep.subr.mxu0 0.0
    %3304 = vmatpush1.msra.mxu0 0.0
    %3305 = vmatprep.subr.mxu0 0.0
    %3306 = vmatpush1.msra.mxu0 0.0
    %3307 = vmatprep.subr.mxu0 0.0
    %3308 = vmatpush1.msra.mxu0 0.0
    %3309 = vmatprep.subr.mxu0 0.0
    %3310 = vmatpush1.msra.mxu0 0.0
    %3311 = vmatprep.subr.mxu0 0.0
    %3312 = vmatpush1.msra.mxu0 %v3202
    %3313 = vmatprep.subr.mxu0 0.0
    %3314 = vmatpush2.msra.mxu0 0.0
    %3315 = vmatprep.subr.mxu0 0.0
    %3316 = vmatpush2.msra.mxu0 0.0
    %3317 = vmatprep.subr.mxu0 0.0
    %3318 = vmatpush2.msra.mxu0 0.0
    %3319 = vmatprep.subr.mxu0 0.0
    %3320 = vmatpush2.msra.mxu0 0.0
    %3321 = vmatprep.subr.mxu0 0.0
    %3322 = vmatpush2.msra.mxu0 0.0
    %3323 = vmatprep.subr.mxu0 0.0
    %3324 = vmatpush2.msra.mxu0 0.0
    %3325 = vmatprep.subr.mxu0 0.0
    %3326 = vmatpush2.msra.mxu0 0.0
    %3327 = vmatprep.subr.mxu0 0.0
    %3328 = vmatpush2.msra.mxu0 0.0
    %3329 = vmatprep.subr.mxu0 0.0
    %3330 = vmatpush2.msra.mxu0 0.0
    %3331 = vmatprep.subr.mxu0 0.0
    %3332 = vmatpush2.msra.mxu0 0.0
    %3333 = vmatprep.subr.mxu0 0.0
    %3334 = vmatpush2.msra.mxu0 0.0
    %3335 = vmatprep.subr.mxu0 0.0
    %3336 = vmatpush2.msra.mxu0 0.0
    %3337 = vmatprep.subr.mxu0 0.0
    %3338 = vmatpush2.msra.mxu0 0.0
    %3339 = vmatprep.subr.mxu0 0.0
    %3340 = vmatpush2.msra.mxu0 0.0
    %3341 = vmatprep.subr.mxu0 0.0
    %3342 = vmatpush2.msra.mxu0 0.0
    %3343 = vmatprep.subr.mxu0 0.0
    %3344 = vmatpush2.msra.mxu0 0.0
    %3345 = vmatprep.mubr.f32.mxu0 0.0
    %3346 = vmatmul.mubr.f32.gmra.mxu0 %v3279
    %v3347 = vpop.f32.mrf.mxu0
    %v3348 = vadd.f32 0.0, %v3347
    %v3349 = vpop.f32.mrf.mxu0
    %3350 = vdwg.mxu0
    %v3351 = vmul.f32 %v3348, 0.5
    %v3352 = vsub.f32 %v183, %v3351
    %v3354 = vsel %vm160, %v3202, 0
    %3356 = vmatprep.subr.mxu0 0.0
    %3357 = vmatpush1.msra.mxu0 0.0
    %3358 = vmatprep.subr.mxu0 0.0
    %3359 = vmatpush1.msra.mxu0 0.0
    %3360 = vmatprep.subr.mxu0 0.0
    %3361 = vmatpush1.msra.mxu0 0.0
    %3362 = vmatprep.subr.mxu0 0.0
    %3363 = vmatpush1.msra.mxu0 0.0
    %3364 = vmatprep.subr.mxu0 0.0
    %3365 = vmatpush1.msra.mxu0 0.0
    %3366 = vmatprep.subr.mxu0 0.0
    %3367 = vmatpush1.msra.mxu0 0.0
    %3368 = vmatprep.subr.mxu0 0.0
    %3369 = vmatpush1.msra.mxu0 0.0
    %3370 = vmatprep.subr.mxu0 0.0
    %3371 = vmatpush1.msra.mxu0 0.0
    %3372 = vmatprep.subr.mxu0 0.0
    %3373 = vmatpush1.msra.mxu0 0.0
    %3374 = vmatprep.subr.mxu0 0.0
    %3375 = vmatpush1.msra.mxu0 0.0
    %3376 = vmatprep.subr.mxu0 0.0
    %3377 = vmatpush1.msra.mxu0 0.0
    %3378 = vmatprep.subr.mxu0 0.0
    %3379 = vmatpush1.msra.mxu0 0.0
    %3380 = vmatprep.subr.mxu0 0.0
    %3381 = vmatpush1.msra.mxu0 0.0
    %3382 = vmatprep.subr.mxu0 0.0
    %3383 = vmatpush1.msra.mxu0 0.0
    %3384 = vmatprep.subr.mxu0 0.0
    %3385 = vmatpush1.msra.mxu0 0.0
    %3386 = vmatprep.subr.mxu0 0.0
    %3387 = vmatpush1.msra.mxu0 %v3352
    %3388 = vmatprep.subr.mxu0 0.0
    %3389 = vmatpush2.msra.mxu0 0.0
    %3390 = vmatprep.subr.mxu0 0.0
    %3391 = vmatpush2.msra.mxu0 0.0
    %3392 = vmatprep.subr.mxu0 0.0
    %3393 = vmatpush2.msra.mxu0 0.0
    %3394 = vmatprep.subr.mxu0 0.0
    %3395 = vmatpush2.msra.mxu0 0.0
    %3396 = vmatprep.subr.mxu0 0.0
    %3397 = vmatpush2.msra.mxu0 0.0
    %3398 = vmatprep.subr.mxu0 0.0
    %3399 = vmatpush2.msra.mxu0 0.0
    %3400 = vmatprep.subr.mxu0 0.0
    %3401 = vmatpush2.msra.mxu0 0.0
    %3402 = vmatprep.subr.mxu0 0.0
    %3403 = vmatpush2.msra.mxu0 0.0
    %3404 = vmatprep.subr.mxu0 0.0
    %3405 = vmatpush2.msra.mxu0 0.0
    %3406 = vmatprep.subr.mxu0 0.0
    %3407 = vmatpush2.msra.mxu0 0.0
    %3408 = vmatprep.subr.mxu0 0.0
    %3409 = vmatpush2.msra.mxu0 0.0
    %3410 = vmatprep.subr.mxu0 0.0
    %3411 = vmatpush2.msra.mxu0 0.0
    %3412 = vmatprep.subr.mxu0 0.0
    %3413 = vmatpush2.msra.mxu0 0.0
    %3414 = vmatprep.subr.mxu0 0.0
    %3415 = vmatpush2.msra.mxu0 0.0
    %3416 = vmatprep.subr.mxu0 0.0
    %3417 = vmatpush2.msra.mxu0 0.0
    %3418 = vmatprep.subr.mxu0 0.0
    %3419 = vmatpush2.msra.mxu0 0.0
    %3420 = vmatprep.mubr.f32.mxu0 0.0
    %3421 = vmatmul.mubr.f32.gmra.mxu0 %v3354
    %v3422 = vpop.f32.mrf.mxu0
    %v3423 = vadd.f32 0.0, %v3422
    %v3424 = vpop.f32.mrf.mxu0
    %3425 = vdwg.mxu0
    %v3427 = vsel %vm160, %v3352, 0
    %3429 = vmatprep.subr.mxu0 0.0
    %3430 = vmatpush1.msra.mxu0 0.0
    %3431 = vmatprep.subr.mxu0 0.0
    %3432 = vmatpush1.msra.mxu0 0.0
    %3433 = vmatprep.subr.mxu0 0.0
    %3434 = vmatpush1.msra.mxu0 0.0
    %3435 = vmatprep.subr.mxu0 0.0
    %3436 = vmatpush1.msra.mxu0 0.0
    %3437 = vmatprep.subr.mxu0 0.0
    %3438 = vmatpush1.msra.mxu0 0.0
    %3439 = vmatprep.subr.mxu0 0.0
    %3440 = vmatpush1.msra.mxu0 0.0
    %3441 = vmatprep.subr.mxu0 0.0
    %3442 = vmatpush1.msra.mxu0 0.0
    %3443 = vmatprep.subr.mxu0 0.0
    %3444 = vmatpush1.msra.mxu0 0.0
    %3445 = vmatprep.subr.mxu0 0.0
    %3446 = vmatpush1.msra.mxu0 0.0
    %3447 = vmatprep.subr.mxu0 0.0
    %3448 = vmatpush1.msra.mxu0 0.0
    %3449 = vmatprep.subr.mxu0 0.0
    %3450 = vmatpush1.msra.mxu0 0.0
    %3451 = vmatprep.subr.mxu0 0.0
    %3452 = vmatpush1.msra.mxu0 0.0
    %3453 = vmatprep.subr.mxu0 0.0
    %3454 = vmatpush1.msra.mxu0 0.0
    %3455 = vmatprep.subr.mxu0 0.0
    %3456 = vmatpush1.msra.mxu0 0.0
    %3457 = vmatprep.subr.mxu0 0.0
    %3458 = vmatpush1.msra.mxu0 0.0
    %3459 = vmatprep.subr.mxu0 0.0
    %3460 = vmatpush1.msra.mxu0 %v3275
    %3461 = vmatprep.subr.mxu0 0.0
    %3462 = vmatpush2.msra.mxu0 0.0
    %3463 = vmatprep.subr.mxu0 0.0
    %3464 = vmatpush2.msra.mxu0 0.0
    %3465 = vmatprep.subr.mxu0 0.0
    %3466 = vmatpush2.msra.mxu0 0.0
    %3467 = vmatprep.subr.mxu0 0.0
    %3468 = vmatpush2.msra.mxu0 0.0
    %3469 = vmatprep.subr.mxu0 0.0
    %3470 = vmatpush2.msra.mxu0 0.0
    %3471 = vmatprep.subr.mxu0 0.0
    %3472 = vmatpush2.msra.mxu0 0.0
    %3473 = vmatprep.subr.mxu0 0.0
    %3474 = vmatpush2.msra.mxu0 0.0
    %3475 = vmatprep.subr.mxu0 0.0
    %3476 = vmatpush2.msra.mxu0 0.0
    %3477 = vmatprep.subr.mxu0 0.0
    %3478 = vmatpush2.msra.mxu0 0.0
    %3479 = vmatprep.subr.mxu0 0.0
    %3480 = vmatpush2.msra.mxu0 0.0
    %3481 = vmatprep.subr.mxu0 0.0
    %3482 = vmatpush2.msra.mxu0 0.0
    %3483 = vmatprep.subr.mxu0 0.0
    %3484 = vmatpush2.msra.mxu0 0.0
    %3485 = vmatprep.subr.mxu0 0.0
    %3486 = vmatpush2.msra.mxu0 0.0
    %3487 = vmatprep.subr.mxu0 0.0
    %3488 = vmatpush2.msra.mxu0 0.0
    %3489 = vmatprep.subr.mxu0 0.0
    %3490 = vmatpush2.msra.mxu0 0.0
    %3491 = vmatprep.subr.mxu0 0.0
    %3492 = vmatpush2.msra.mxu0 0.0
    %3493 = vmatprep.mubr.f32.mxu0 0.0
    %3494 = vmatmul.mubr.f32.gmra.mxu0 %v3427
    %v3495 = vpop.f32.mrf.mxu0
    %v3496 = vadd.f32 0.0, %v3495
    %v3497 = vpop.f32.mrf.mxu0
    %3498 = vdwg.mxu0
    %v3500 = vsel %vm160, %v3496, 0
    %3502 = vmatprep.subr.mxu0 0.0
    %3503 = vmatpush1.msra.mxu0 0.0
    %3504 = vmatprep.subr.mxu0 0.0
    %3505 = vmatpush1.msra.mxu0 0.0
    %3506 = vmatprep.subr.mxu0 0.0
    %3507 = vmatpush1.msra.mxu0 0.0
    %3508 = vmatprep.subr.mxu0 0.0
    %3509 = vmatpush1.msra.mxu0 0.0
    %3510 = vmatprep.subr.mxu0 0.0
    %3511 = vmatpush1.msra.mxu0 0.0
    %3512 = vmatprep.subr.mxu0 0.0
    %3513 = vmatpush1.msra.mxu0 0.0
    %3514 = vmatprep.subr.mxu0 0.0
    %3515 = vmatpush1.msra.mxu0 0.0
    %3516 = vmatprep.subr.mxu0 0.0
    %3517 = vmatpush1.msra.mxu0 0.0
    %3518 = vmatprep.subr.mxu0 0.0
    %3519 = vmatpush1.msra.mxu0 0.0
    %3520 = vmatprep.subr.mxu0 0.0
    %3521 = vmatpush1.msra.mxu0 0.0
    %3522 = vmatprep.subr.mxu0 0.0
    %3523 = vmatpush1.msra.mxu0 0.0
    %3524 = vmatprep.subr.mxu0 0.0
    %3525 = vmatpush1.msra.mxu0 0.0
    %3526 = vmatprep.subr.mxu0 0.0
    %3527 = vmatpush1.msra.mxu0 0.0
    %3528 = vmatprep.subr.mxu0 0.0
    %3529 = vmatpush1.msra.mxu0 0.0
    %3530 = vmatprep.subr.mxu0 0.0
    %3531 = vmatpush1.msra.mxu0 0.0
    %3532 = vmatprep.subr.mxu0 0.0
    %3533 = vmatpush1.msra.mxu0 %v3423
    %3534 = vmatprep.subr.mxu0 0.0
    %3535 = vmatpush2.msra.mxu0 0.0
    %3536 = vmatprep.subr.mxu0 0.0
    %3537 = vmatpush2.msra.mxu0 0.0
    %3538 = vmatprep.subr.mxu0 0.0
    %3539 = vmatpush2.msra.mxu0 0.0
    %3540 = vmatprep.subr.mxu0 0.0
    %3541 = vmatpush2.msra.mxu0 0.0
    %3542 = vmatprep.subr.mxu0 0.0
    %3543 = vmatpush2.msra.mxu0 0.0
    %3544 = vmatprep.subr.mxu0 0.0
    %3545 = vmatpush2.msra.mxu0 0.0
    %3546 = vmatprep.subr.mxu0 0.0
    %3547 = vmatpush2.msra.mxu0 0.0
    %3548 = vmatprep.subr.mxu0 0.0
    %3549 = vmatpush2.msra.mxu0 0.0
    %3550 = vmatprep.subr.mxu0 0.0
    %3551 = vmatpush2.msra.mxu0 0.0
    %3552 = vmatprep.subr.mxu0 0.0
    %3553 = vmatpush2.msra.mxu0 0.0
    %3554 = vmatprep.subr.mxu0 0.0
    %3555 = vmatpush2.msra.mxu0 0.0
    %3556 = vmatprep.subr.mxu0 0.0
    %3557 = vmatpush2.msra.mxu0 0.0
    %3558 = vmatprep.subr.mxu0 0.0
    %3559 = vmatpush2.msra.mxu0 0.0
    %3560 = vmatprep.subr.mxu0 0.0
    %3561 = vmatpush2.msra.mxu0 0.0
    %3562 = vmatprep.subr.mxu0 0.0
    %3563 = vmatpush2.msra.mxu0 0.0
    %3564 = vmatprep.subr.mxu0 0.0
    %3565 = vmatpush2.msra.mxu0 0.0
    %3566 = vmatprep.mubr.f32.mxu0 0.0
    %3567 = vmatmul.mubr.f32.gmra.mxu0 %v3500
    %v3568 = vpop.f32.mrf.mxu0
    %v3569 = vadd.f32 0.0, %v3568
    %v3570 = vpop.f32.mrf.mxu0
    %3571 = vdwg.mxu0
    %v3572 = vmul.f32 %v3569, 0.5
    %v3573 = vsub.f32 %v183, %v3572
    %v3575 = vsel %vm160, %v3423, 0
    %3577 = vmatprep.subr.mxu0 0.0
    %3578 = vmatpush1.msra.mxu0 0.0
    %3579 = vmatprep.subr.mxu0 0.0
    %3580 = vmatpush1.msra.mxu0 0.0
    %3581 = vmatprep.subr.mxu0 0.0
    %3582 = vmatpush1.msra.mxu0 0.0
    %3583 = vmatprep.subr.mxu0 0.0
    %3584 = vmatpush1.msra.mxu0 0.0
    %3585 = vmatprep.subr.mxu0 0.0
    %3586 = vmatpush1.msra.mxu0 0.0
    %3587 = vmatprep.subr.mxu0 0.0
    %3588 = vmatpush1.msra.mxu0 0.0
    %3589 = vmatprep.subr.mxu0 0.0
    %3590 = vmatpush1.msra.mxu0 0.0
    %3591 = vmatprep.subr.mxu0 0.0
    %3592 = vmatpush1.msra.mxu0 0.0
    %3593 = vmatprep.subr.mxu0 0.0
    %3594 = vmatpush1.msra.mxu0 0.0
    %3595 = vmatprep.subr.mxu0 0.0
    %3596 = vmatpush1.msra.mxu0 0.0
    %3597 = vmatprep.subr.mxu0 0.0
    %3598 = vmatpush1.msra.mxu0 0.0
    %3599 = vmatprep.subr.mxu0 0.0
    %3600 = vmatpush1.msra.mxu0 0.0
    %3601 = vmatprep.subr.mxu0 0.0
    %3602 = vmatpush1.msra.mxu0 0.0
    %3603 = vmatprep.subr.mxu0 0.0
    %3604 = vmatpush1.msra.mxu0 0.0
    %3605 = vmatprep.subr.mxu0 0.0
    %3606 = vmatpush1.msra.mxu0 0.0
    %3607 = vmatprep.subr.mxu0 0.0
    %3608 = vmatpush1.msra.mxu0 %v3573
    %3609 = vmatprep.subr.mxu0 0.0
    %3610 = vmatpush2.msra.mxu0 0.0
    %3611 = vmatprep.subr.mxu0 0.0
    %3612 = vmatpush2.msra.mxu0 0.0
    %3613 = vmatprep.subr.mxu0 0.0
    %3614 = vmatpush2.msra.mxu0 0.0
    %3615 = vmatprep.subr.mxu0 0.0
    %3616 = vmatpush2.msra.mxu0 0.0
    %3617 = vmatprep.subr.mxu0 0.0
    %3618 = vmatpush2.msra.mxu0 0.0
    %3619 = vmatprep.subr.mxu0 0.0
    %3620 = vmatpush2.msra.mxu0 0.0
    %3621 = vmatprep.subr.mxu0 0.0
    %3622 = vmatpush2.msra.mxu0 0.0
    %3623 = vmatprep.subr.mxu0 0.0
    %3624 = vmatpush2.msra.mxu0 0.0
    %3625 = vmatprep.subr.mxu0 0.0
    %3626 = vmatpush2.msra.mxu0 0.0
    %3627 = vmatprep.subr.mxu0 0.0
    %3628 = vmatpush2.msra.mxu0 0.0
    %3629 = vmatprep.subr.mxu0 0.0
    %3630 = vmatpush2.msra.mxu0 0.0
    %3631 = vmatprep.subr.mxu0 0.0
    %3632 = vmatpush2.msra.mxu0 0.0
    %3633 = vmatprep.subr.mxu0 0.0
    %3634 = vmatpush2.msra.mxu0 0.0
    %3635 = vmatprep.subr.mxu0 0.0
    %3636 = vmatpush2.msra.mxu0 0.0
    %3637 = vmatprep.subr.mxu0 0.0
    %3638 = vmatpush2.msra.mxu0 0.0
    %3639 = vmatprep.subr.mxu0 0.0
    %3640 = vmatpush2.msra.mxu0 0.0
    %3641 = vmatprep.mubr.f32.mxu0 0.0
    %3642 = vmatmul.mubr.f32.gmra.mxu0 %v3575
    %v3643 = vpop.f32.mrf.mxu0
    %v3644 = vadd.f32 0.0, %v3643
    %v3645 = vpop.f32.mrf.mxu0
    %3646 = vdwg.mxu0
    %v3648 = vsel %vm160, %v3573, 0
    %3650 = vmatprep.subr.mxu0 0.0
    %3651 = vmatpush1.msra.mxu0 0.0
    %3652 = vmatprep.subr.mxu0 0.0
    %3653 = vmatpush1.msra.mxu0 0.0
    %3654 = vmatprep.subr.mxu0 0.0
    %3655 = vmatpush1.msra.mxu0 0.0
    %3656 = vmatprep.subr.mxu0 0.0
    %3657 = vmatpush1.msra.mxu0 0.0
    %3658 = vmatprep.subr.mxu0 0.0
    %3659 = vmatpush1.msra.mxu0 0.0
    %3660 = vmatprep.subr.mxu0 0.0
    %3661 = vmatpush1.msra.mxu0 0.0
    %3662 = vmatprep.subr.mxu0 0.0
    %3663 = vmatpush1.msra.mxu0 0.0
    %3664 = vmatprep.subr.mxu0 0.0
    %3665 = vmatpush1.msra.mxu0 0.0
    %3666 = vmatprep.subr.mxu0 0.0
    %3667 = vmatpush1.msra.mxu0 0.0
    %3668 = vmatprep.subr.mxu0 0.0
    %3669 = vmatpush1.msra.mxu0 0.0
    %3670 = vmatprep.subr.mxu0 0.0
    %3671 = vmatpush1.msra.mxu0 0.0
    %3672 = vmatprep.subr.mxu0 0.0
    %3673 = vmatpush1.msra.mxu0 0.0
    %3674 = vmatprep.subr.mxu0 0.0
    %3675 = vmatpush1.msra.mxu0 0.0
    %3676 = vmatprep.subr.mxu0 0.0
    %3677 = vmatpush1.msra.mxu0 0.0
    %3678 = vmatprep.subr.mxu0 0.0
    %3679 = vmatpush1.msra.mxu0 0.0
    %3680 = vmatprep.subr.mxu0 0.0
    %3681 = vmatpush1.msra.mxu0 %v3496
    %3682 = vmatprep.subr.mxu0 0.0
    %3683 = vmatpush2.msra.mxu0 0.0
    %3684 = vmatprep.subr.mxu0 0.0
    %3685 = vmatpush2.msra.mxu0 0.0
    %3686 = vmatprep.subr.mxu0 0.0
    %3687 = vmatpush2.msra.mxu0 0.0
    %3688 = vmatprep.subr.mxu0 0.0
    %3689 = vmatpush2.msra.mxu0 0.0
    %3690 = vmatprep.subr.mxu0 0.0
    %3691 = vmatpush2.msra.mxu0 0.0
    %3692 = vmatprep.subr.mxu0 0.0
    %3693 = vmatpush2.msra.mxu0 0.0
    %3694 = vmatprep.subr.mxu0 0.0
    %3695 = vmatpush2.msra.mxu0 0.0
    %3696 = vmatprep.subr.mxu0 0.0
    %3697 = vmatpush2.msra.mxu0 0.0
    %3698 = vmatprep.subr.mxu0 0.0
    %3699 = vmatpush2.msra.mxu0 0.0
    %3700 = vmatprep.subr.mxu0 0.0
    %3701 = vmatpush2.msra.mxu0 0.0
    %3702 = vmatprep.subr.mxu0 0.0
    %3703 = vmatpush2.msra.mxu0 0.0
    %3704 = vmatprep.subr.mxu0 0.0
    %3705 = vmatpush2.msra.mxu0 0.0
    %3706 = vmatprep.subr.mxu0 0.0
    %3707 = vmatpush2.msra.mxu0 0.0
    %3708 = vmatprep.subr.mxu0 0.0
    %3709 = vmatpush2.msra.mxu0 0.0
    %3710 = vmatprep.subr.mxu0 0.0
    %3711 = vmatpush2.msra.mxu0 0.0
    %3712 = vmatprep.subr.mxu0 0.0
    %3713 = vmatpush2.msra.mxu0 0.0
    %3714 = vmatprep.mubr.f32.mxu0 0.0
    %3715 = vmatmul.mubr.f32.gmra.mxu0 %v3648
    %v3716 = vpop.f32.mrf.mxu0
    %v3717 = vadd.f32 0.0, %v3716
    %v3718 = vpop.f32.mrf.mxu0
    %3719 = vdwg.mxu0
    %v3721 = vsel %vm160, %v3717, 0
    %3723 = vmatprep.subr.mxu0 0.0
    %3724 = vmatpush1.msra.mxu0 0.0
    %3725 = vmatprep.subr.mxu0 0.0
    %3726 = vmatpush1.msra.mxu0 0.0
    %3727 = vmatprep.subr.mxu0 0.0
    %3728 = vmatpush1.msra.mxu0 0.0
    %3729 = vmatprep.subr.mxu0 0.0
    %3730 = vmatpush1.msra.mxu0 0.0
    %3731 = vmatprep.subr.mxu0 0.0
    %3732 = vmatpush1.msra.mxu0 0.0
    %3733 = vmatprep.subr.mxu0 0.0
    %3734 = vmatpush1.msra.mxu0 0.0
    %3735 = vmatprep.subr.mxu0 0.0
    %3736 = vmatpush1.msra.mxu0 0.0
    %3737 = vmatprep.subr.mxu0 0.0
    %3738 = vmatpush1.msra.mxu0 0.0
    %3739 = vmatprep.subr.mxu0 0.0
    %3740 = vmatpush1.msra.mxu0 0.0
    %3741 = vmatprep.subr.mxu0 0.0
    %3742 = vmatpush1.msra.mxu0 0.0
    %3743 = vmatprep.subr.mxu0 0.0
    %3744 = vmatpush1.msra.mxu0 0.0
    %3745 = vmatprep.subr.mxu0 0.0
    %3746 = vmatpush1.msra.mxu0 0.0
    %3747 = vmatprep.subr.mxu0 0.0
    %3748 = vmatpush1.msra.mxu0 0.0
    %3749 = vmatprep.subr.mxu0 0.0
    %3750 = vmatpush1.msra.mxu0 0.0
    %3751 = vmatprep.subr.mxu0 0.0
    %3752 = vmatpush1.msra.mxu0 0.0
    %3753 = vmatprep.subr.mxu0 0.0
    %3754 = vmatpush1.msra.mxu0 %v3644
    %3755 = vmatprep.subr.mxu0 0.0
    %3756 = vmatpush2.msra.mxu0 0.0
    %3757 = vmatprep.subr.mxu0 0.0
    %3758 = vmatpush2.msra.mxu0 0.0
    %3759 = vmatprep.subr.mxu0 0.0
    %3760 = vmatpush2.msra.mxu0 0.0
    %3761 = vmatprep.subr.mxu0 0.0
    %3762 = vmatpush2.msra.mxu0 0.0
    %3763 = vmatprep.subr.mxu0 0.0
    %3764 = vmatpush2.msra.mxu0 0.0
    %3765 = vmatprep.subr.mxu0 0.0
    %3766 = vmatpush2.msra.mxu0 0.0
    %3767 = vmatprep.subr.mxu0 0.0
    %3768 = vmatpush2.msra.mxu0 0.0
    %3769 = vmatprep.subr.mxu0 0.0
    %3770 = vmatpush2.msra.mxu0 0.0
    %3771 = vmatprep.subr.mxu0 0.0
    %3772 = vmatpush2.msra.mxu0 0.0
    %3773 = vmatprep.subr.mxu0 0.0
    %3774 = vmatpush2.msra.mxu0 0.0
    %3775 = vmatprep.subr.mxu0 0.0
    %3776 = vmatpush2.msra.mxu0 0.0
    %3777 = vmatprep.subr.mxu0 0.0
    %3778 = vmatpush2.msra.mxu0 0.0
    %3779 = vmatprep.subr.mxu0 0.0
    %3780 = vmatpush2.msra.mxu0 0.0
    %3781 = vmatprep.subr.mxu0 0.0
    %3782 = vmatpush2.msra.mxu0 0.0
    %3783 = vmatprep.subr.mxu0 0.0
    %3784 = vmatpush2.msra.mxu0 0.0
    %3785 = vmatprep.subr.mxu0 0.0
    %3786 = vmatpush2.msra.mxu0 0.0
    %3787 = vmatprep.mubr.f32.mxu0 0.0
    %3788 = vmatmul.mubr.f32.gmra.mxu0 %v3721
    %v3789 = vpop.f32.mrf.mxu0
    %v3790 = vadd.f32 0.0, %v3789
    %v3791 = vpop.f32.mrf.mxu0
    %3792 = vdwg.mxu0
    %v3793 = vmul.f32 %v3790, 0.5
    %v3794 = vsub.f32 %v183, %v3793
    %v3796 = vsel %vm160, %v3644, 0
    %3798 = vmatprep.subr.mxu0 0.0
    %3799 = vmatpush1.msra.mxu0 0.0
    %3800 = vmatprep.subr.mxu0 0.0
    %3801 = vmatpush1.msra.mxu0 0.0
    %3802 = vmatprep.subr.mxu0 0.0
    %3803 = vmatpush1.msra.mxu0 0.0
    %3804 = vmatprep.subr.mxu0 0.0
    %3805 = vmatpush1.msra.mxu0 0.0
    %3806 = vmatprep.subr.mxu0 0.0
    %3807 = vmatpush1.msra.mxu0 0.0
    %3808 = vmatprep.subr.mxu0 0.0
    %3809 = vmatpush1.msra.mxu0 0.0
    %3810 = vmatprep.subr.mxu0 0.0
    %3811 = vmatpush1.msra.mxu0 0.0
    %3812 = vmatprep.subr.mxu0 0.0
    %3813 = vmatpush1.msra.mxu0 0.0
    %3814 = vmatprep.subr.mxu0 0.0
    %3815 = vmatpush1.msra.mxu0 0.0
    %3816 = vmatprep.subr.mxu0 0.0
    %3817 = vmatpush1.msra.mxu0 0.0
    %3818 = vmatprep.subr.mxu0 0.0
    %3819 = vmatpush1.msra.mxu0 0.0
    %3820 = vmatprep.subr.mxu0 0.0
    %3821 = vmatpush1.msra.mxu0 0.0
    %3822 = vmatprep.subr.mxu0 0.0
    %3823 = vmatpush1.msra.mxu0 0.0
    %3824 = vmatprep.subr.mxu0 0.0
    %3825 = vmatpush1.msra.mxu0 0.0
    %3826 = vmatprep.subr.mxu0 0.0
    %3827 = vmatpush1.msra.mxu0 0.0
    %3828 = vmatprep.subr.mxu0 0.0
    %3829 = vmatpush1.msra.mxu0 %v3794
    %3830 = vmatprep.subr.mxu0 0.0
    %3831 = vmatpush2.msra.mxu0 0.0
    %3832 = vmatprep.subr.mxu0 0.0
    %3833 = vmatpush2.msra.mxu0 0.0
    %3834 = vmatprep.subr.mxu0 0.0
    %3835 = vmatpush2.msra.mxu0 0.0
    %3836 = vmatprep.subr.mxu0 0.0
    %3837 = vmatpush2.msra.mxu0 0.0
    %3838 = vmatprep.subr.mxu0 0.0
    %3839 = vmatpush2.msra.mxu0 0.0
    %3840 = vmatprep.subr.mxu0 0.0
    %3841 = vmatpush2.msra.mxu0 0.0
    %3842 = vmatprep.subr.mxu0 0.0
    %3843 = vmatpush2.msra.mxu0 0.0
    %3844 = vmatprep.subr.mxu0 0.0
    %3845 = vmatpush2.msra.mxu0 0.0
    %3846 = vmatprep.subr.mxu0 0.0
    %3847 = vmatpush2.msra.mxu0 0.0
    %3848 = vmatprep.subr.mxu0 0.0
    %3849 = vmatpush2.msra.mxu0 0.0
    %3850 = vmatprep.subr.mxu0 0.0
    %3851 = vmatpush2.msra.mxu0 0.0
    %3852 = vmatprep.subr.mxu0 0.0
    %3853 = vmatpush2.msra.mxu0 0.0
    %3854 = vmatprep.subr.mxu0 0.0
    %3855 = vmatpush2.msra.mxu0 0.0
    %3856 = vmatprep.subr.mxu0 0.0
    %3857 = vmatpush2.msra.mxu0 0.0
    %3858 = vmatprep.subr.mxu0 0.0
    %3859 = vmatpush2.msra.mxu0 0.0
    %3860 = vmatprep.subr.mxu0 0.0
    %3861 = vmatpush2.msra.mxu0 0.0
    %3862 = vmatprep.mubr.f32.mxu0 0.0
    %3863 = vmatmul.mubr.f32.gmra.mxu0 %v3796
    %v3864 = vpop.f32.mrf.mxu0
    %v3865 = vadd.f32 0.0, %v3864
    %v3866 = vpop.f32.mrf.mxu0
    %3867 = vdwg.mxu0
    %v3869 = vsel %vm160, %v3794, 0
    %3871 = vmatprep.subr.mxu0 0.0
    %3872 = vmatpush1.msra.mxu0 0.0
    %3873 = vmatprep.subr.mxu0 0.0
    %3874 = vmatpush1.msra.mxu0 0.0
    %3875 = vmatprep.subr.mxu0 0.0
    %3876 = vmatpush1.msra.mxu0 0.0
    %3877 = vmatprep.subr.mxu0 0.0
    %3878 = vmatpush1.msra.mxu0 0.0
    %3879 = vmatprep.subr.mxu0 0.0
    %3880 = vmatpush1.msra.mxu0 0.0
    %3881 = vmatprep.subr.mxu0 0.0
    %3882 = vmatpush1.msra.mxu0 0.0
    %3883 = vmatprep.subr.mxu0 0.0
    %3884 = vmatpush1.msra.mxu0 0.0
    %3885 = vmatprep.subr.mxu0 0.0
    %3886 = vmatpush1.msra.mxu0 0.0
    %3887 = vmatprep.subr.mxu0 0.0
    %3888 = vmatpush1.msra.mxu0 0.0
    %3889 = vmatprep.subr.mxu0 0.0
    %3890 = vmatpush1.msra.mxu0 0.0
    %3891 = vmatprep.subr.mxu0 0.0
    %3892 = vmatpush1.msra.mxu0 0.0
    %3893 = vmatprep.subr.mxu0 0.0
    %3894 = vmatpush1.msra.mxu0 0.0
    %3895 = vmatprep.subr.mxu0 0.0
    %3896 = vmatpush1.msra.mxu0 0.0
    %3897 = vmatprep.subr.mxu0 0.0
    %3898 = vmatpush1.msra.mxu0 0.0
    %3899 = vmatprep.subr.mxu0 0.0
    %3900 = vmatpush1.msra.mxu0 0.0
    %3901 = vmatprep.subr.mxu0 0.0
    %3902 = vmatpush1.msra.mxu0 %v3717
    %3903 = vmatprep.subr.mxu0 0.0
    %3904 = vmatpush2.msra.mxu0 0.0
    %3905 = vmatprep.subr.mxu0 0.0
    %3906 = vmatpush2.msra.mxu0 0.0
    %3907 = vmatprep.subr.mxu0 0.0
    %3908 = vmatpush2.msra.mxu0 0.0
    %3909 = vmatprep.subr.mxu0 0.0
    %3910 = vmatpush2.msra.mxu0 0.0
    %3911 = vmatprep.subr.mxu0 0.0
    %3912 = vmatpush2.msra.mxu0 0.0
    %3913 = vmatprep.subr.mxu0 0.0
    %3914 = vmatpush2.msra.mxu0 0.0
    %3915 = vmatprep.subr.mxu0 0.0
    %3916 = vmatpush2.msra.mxu0 0.0
    %3917 = vmatprep.subr.mxu0 0.0
    %3918 = vmatpush2.msra.mxu0 0.0
    %3919 = vmatprep.subr.mxu0 0.0
    %3920 = vmatpush2.msra.mxu0 0.0
    %3921 = vmatprep.subr.mxu0 0.0
    %3922 = vmatpush2.msra.mxu0 0.0
    %3923 = vmatprep.subr.mxu0 0.0
    %3924 = vmatpush2.msra.mxu0 0.0
    %3925 = vmatprep.subr.mxu0 0.0
    %3926 = vmatpush2.msra.mxu0 0.0
    %3927 = vmatprep.subr.mxu0 0.0
    %3928 = vmatpush2.msra.mxu0 0.0
    %3929 = vmatprep.subr.mxu0 0.0
    %3930 = vmatpush2.msra.mxu0 0.0
    %3931 = vmatprep.subr.mxu0 0.0
    %3932 = vmatpush2.msra.mxu0 0.0
    %3933 = vmatprep.subr.mxu0 0.0
    %3934 = vmatpush2.msra.mxu0 0.0
    %3935 = vmatprep.mubr.f32.mxu0 0.0
    %3936 = vmatmul.mubr.f32.gmra.mxu0 %v3869
    %v3937 = vpop.f32.mrf.mxu0
    %v3938 = vadd.f32 0.0, %v3937
    %v3939 = vpop.f32.mrf.mxu0
    %3940 = vdwg.mxu0
    %v3942 = vsel %vm160, %v3938, 0
    %3944 = vmatprep.subr.mxu0 0.0
    %3945 = vmatpush1.msra.mxu0 0.0
    %3946 = vmatprep.subr.mxu0 0.0
    %3947 = vmatpush1.msra.mxu0 0.0
    %3948 = vmatprep.subr.mxu0 0.0
    %3949 = vmatpush1.msra.mxu0 0.0
    %3950 = vmatprep.subr.mxu0 0.0
    %3951 = vmatpush1.msra.mxu0 0.0
    %3952 = vmatprep.subr.mxu0 0.0
    %3953 = vmatpush1.msra.mxu0 0.0
    %3954 = vmatprep.subr.mxu0 0.0
    %3955 = vmatpush1.msra.mxu0 0.0
    %3956 = vmatprep.subr.mxu0 0.0
    %3957 = vmatpush1.msra.mxu0 0.0
    %3958 = vmatprep.subr.mxu0 0.0
    %3959 = vmatpush1.msra.mxu0 0.0
    %3960 = vmatprep.subr.mxu0 0.0
    %3961 = vmatpush1.msra.mxu0 0.0
    %3962 = vmatprep.subr.mxu0 0.0
    %3963 = vmatpush1.msra.mxu0 0.0
    %3964 = vmatprep.subr.mxu0 0.0
    %3965 = vmatpush1.msra.mxu0 0.0
    %3966 = vmatprep.subr.mxu0 0.0
    %3967 = vmatpush1.msra.mxu0 0.0
    %3968 = vmatprep.subr.mxu0 0.0
    %3969 = vmatpush1.msra.mxu0 0.0
    %3970 = vmatprep.subr.mxu0 0.0
    %3971 = vmatpush1.msra.mxu0 0.0
    %3972 = vmatprep.subr.mxu0 0.0
    %3973 = vmatpush1.msra.mxu0 0.0
    %3974 = vmatprep.subr.mxu0 0.0
    %3975 = vmatpush1.msra.mxu0 %v3865
    %3976 = vmatprep.subr.mxu0 0.0
    %3977 = vmatpush2.msra.mxu0 0.0
    %3978 = vmatprep.subr.mxu0 0.0
    %3979 = vmatpush2.msra.mxu0 0.0
    %3980 = vmatprep.subr.mxu0 0.0
    %3981 = vmatpush2.msra.mxu0 0.0
    %3982 = vmatprep.subr.mxu0 0.0
    %3983 = vmatpush2.msra.mxu0 0.0
    %3984 = vmatprep.subr.mxu0 0.0
    %3985 = vmatpush2.msra.mxu0 0.0
    %3986 = vmatprep.subr.mxu0 0.0
    %3987 = vmatpush2.msra.mxu0 0.0
    %3988 = vmatprep.subr.mxu0 0.0
    %3989 = vmatpush2.msra.mxu0 0.0
    %3990 = vmatprep.subr.mxu0 0.0
    %3991 = vmatpush2.msra.mxu0 0.0
    %3992 = vmatprep.subr.mxu0 0.0
    %3993 = vmatpush2.msra.mxu0 0.0
    %3994 = vmatprep.subr.mxu0 0.0
    %3995 = vmatpush2.msra.mxu0 0.0
    %3996 = vmatprep.subr.mxu0 0.0
    %3997 = vmatpush2.msra.mxu0 0.0
    %3998 = vmatprep.subr.mxu0 0.0
    %3999 = vmatpush2.msra.mxu0 0.0
    %4000 = vmatprep.subr.mxu0 0.0
    %4001 = vmatpush2.msra.mxu0 0.0
    %4002 = vmatprep.subr.mxu0 0.0
    %4003 = vmatpush2.msra.mxu0 0.0
    %4004 = vmatprep.subr.mxu0 0.0
    %4005 = vmatpush2.msra.mxu0 0.0
    %4006 = vmatprep.subr.mxu0 0.0
    %4007 = vmatpush2.msra.mxu0 0.0
    %4008 = vmatprep.mubr.f32.mxu0 0.0
    %4009 = vmatmul.mubr.f32.gmra.mxu0 %v3942
    %v4010 = vpop.f32.mrf.mxu0
    %v4011 = vadd.f32 0.0, %v4010
    %v4012 = vpop.f32.mrf.mxu0
    %4013 = vdwg.mxu0
    %v4014 = vmul.f32 %v4011, 0.5
    %v4015 = vsub.f32 %v183, %v4014
    %v4017 = vsel %vm160, %v3865, 0
    %4019 = vmatprep.subr.mxu0 0.0
    %4020 = vmatpush1.msra.mxu0 0.0
    %4021 = vmatprep.subr.mxu0 0.0
    %4022 = vmatpush1.msra.mxu0 0.0
    %4023 = vmatprep.subr.mxu0 0.0
    %4024 = vmatpush1.msra.mxu0 0.0
    %4025 = vmatprep.subr.mxu0 0.0
    %4026 = vmatpush1.msra.mxu0 0.0
    %4027 = vmatprep.subr.mxu0 0.0
    %4028 = vmatpush1.msra.mxu0 0.0
    %4029 = vmatprep.subr.mxu0 0.0
    %4030 = vmatpush1.msra.mxu0 0.0
    %4031 = vmatprep.subr.mxu0 0.0
    %4032 = vmatpush1.msra.mxu0 0.0
    %4033 = vmatprep.subr.mxu0 0.0
    %4034 = vmatpush1.msra.mxu0 0.0
    %4035 = vmatprep.subr.mxu0 0.0
    %4036 = vmatpush1.msra.mxu0 0.0
    %4037 = vmatprep.subr.mxu0 0.0
    %4038 = vmatpush1.msra.mxu0 0.0
    %4039 = vmatprep.subr.mxu0 0.0
    %4040 = vmatpush1.msra.mxu0 0.0
    %4041 = vmatprep.subr.mxu0 0.0
    %4042 = vmatpush1.msra.mxu0 0.0
    %4043 = vmatprep.subr.mxu0 0.0
    %4044 = vmatpush1.msra.mxu0 0.0
    %4045 = vmatprep.subr.mxu0 0.0
    %4046 = vmatpush1.msra.mxu0 0.0
    %4047 = vmatprep.subr.mxu0 0.0
    %4048 = vmatpush1.msra.mxu0 0.0
    %4049 = vmatprep.subr.mxu0 0.0
    %4050 = vmatpush1.msra.mxu0 %v4015
    %4051 = vmatprep.subr.mxu0 0.0
    %4052 = vmatpush2.msra.mxu0 0.0
    %4053 = vmatprep.subr.mxu0 0.0
    %4054 = vmatpush2.msra.mxu0 0.0
    %4055 = vmatprep.subr.mxu0 0.0
    %4056 = vmatpush2.msra.mxu0 0.0
    %4057 = vmatprep.subr.mxu0 0.0
    %4058 = vmatpush2.msra.mxu0 0.0
    %4059 = vmatprep.subr.mxu0 0.0
    %4060 = vmatpush2.msra.mxu0 0.0
    %4061 = vmatprep.subr.mxu0 0.0
    %4062 = vmatpush2.msra.mxu0 0.0
    %4063 = vmatprep.subr.mxu0 0.0
    %4064 = vmatpush2.msra.mxu0 0.0
    %4065 = vmatprep.subr.mxu0 0.0
    %4066 = vmatpush2.msra.mxu0 0.0
    %4067 = vmatprep.subr.mxu0 0.0
    %4068 = vmatpush2.msra.mxu0 0.0
    %4069 = vmatprep.subr.mxu0 0.0
    %4070 = vmatpush2.msra.mxu0 0.0
    %4071 = vmatprep.subr.mxu0 0.0
    %4072 = vmatpush2.msra.mxu0 0.0
    %4073 = vmatprep.subr.mxu0 0.0
    %4074 = vmatpush2.msra.mxu0 0.0
    %4075 = vmatprep.subr.mxu0 0.0
    %4076 = vmatpush2.msra.mxu0 0.0
    %4077 = vmatprep.subr.mxu0 0.0
    %4078 = vmatpush2.msra.mxu0 0.0
    %4079 = vmatprep.subr.mxu0 0.0
    %4080 = vmatpush2.msra.mxu0 0.0
    %4081 = vmatprep.subr.mxu0 0.0
    %4082 = vmatpush2.msra.mxu0 0.0
    %4083 = vmatprep.mubr.f32.mxu0 0.0
    %4084 = vmatmul.mubr.f32.gmra.mxu0 %v4017
    %v4085 = vpop.f32.mrf.mxu0
    %v4086 = vadd.f32 0.0, %v4085
    %v4087 = vpop.f32.mrf.mxu0
    %4088 = vdwg.mxu0
    %v4090 = vsel %vm160, %v4015, 0
    %4092 = vmatprep.subr.mxu0 0.0
    %4093 = vmatpush1.msra.mxu0 0.0
    %4094 = vmatprep.subr.mxu0 0.0
    %4095 = vmatpush1.msra.mxu0 0.0
    %4096 = vmatprep.subr.mxu0 0.0
    %4097 = vmatpush1.msra.mxu0 0.0
    %4098 = vmatprep.subr.mxu0 0.0
    %4099 = vmatpush1.msra.mxu0 0.0
    %4100 = vmatprep.subr.mxu0 0.0
    %4101 = vmatpush1.msra.mxu0 0.0
    %4102 = vmatprep.subr.mxu0 0.0
    %4103 = vmatpush1.msra.mxu0 0.0
    %4104 = vmatprep.subr.mxu0 0.0
    %4105 = vmatpush1.msra.mxu0 0.0
    %4106 = vmatprep.subr.mxu0 0.0
    %4107 = vmatpush1.msra.mxu0 0.0
    %4108 = vmatprep.subr.mxu0 0.0
    %4109 = vmatpush1.msra.mxu0 0.0
    %4110 = vmatprep.subr.mxu0 0.0
    %4111 = vmatpush1.msra.mxu0 0.0
    %4112 = vmatprep.subr.mxu0 0.0
    %4113 = vmatpush1.msra.mxu0 0.0
    %4114 = vmatprep.subr.mxu0 0.0
    %4115 = vmatpush1.msra.mxu0 0.0
    %4116 = vmatprep.subr.mxu0 0.0
    %4117 = vmatpush1.msra.mxu0 0.0
    %4118 = vmatprep.subr.mxu0 0.0
    %4119 = vmatpush1.msra.mxu0 0.0
    %4120 = vmatprep.subr.mxu0 0.0
    %4121 = vmatpush1.msra.mxu0 0.0
    %4122 = vmatprep.subr.mxu0 0.0
    %4123 = vmatpush1.msra.mxu0 %v3938
    %4124 = vmatprep.subr.mxu0 0.0
    %4125 = vmatpush2.msra.mxu0 0.0
    %4126 = vmatprep.subr.mxu0 0.0
    %4127 = vmatpush2.msra.mxu0 0.0
    %4128 = vmatprep.subr.mxu0 0.0
    %4129 = vmatpush2.msra.mxu0 0.0
    %4130 = vmatprep.subr.mxu0 0.0
    %4131 = vmatpush2.msra.mxu0 0.0
    %4132 = vmatprep.subr.mxu0 0.0
    %4133 = vmatpush2.msra.mxu0 0.0
    %4134 = vmatprep.subr.mxu0 0.0
    %4135 = vmatpush2.msra.mxu0 0.0
    %4136 = vmatprep.subr.mxu0 0.0
    %4137 = vmatpush2.msra.mxu0 0.0
    %4138 = vmatprep.subr.mxu0 0.0
    %4139 = vmatpush2.msra.mxu0 0.0
    %4140 = vmatprep.subr.mxu0 0.0
    %4141 = vmatpush2.msra.mxu0 0.0
    %4142 = vmatprep.subr.mxu0 0.0
    %4143 = vmatpush2.msra.mxu0 0.0
    %4144 = vmatprep.subr.mxu0 0.0
    %4145 = vmatpush2.msra.mxu0 0.0
    %4146 = vmatprep.subr.mxu0 0.0
    %4147 = vmatpush2.msra.mxu0 0.0
    %4148 = vmatprep.subr.mxu0 0.0
    %4149 = vmatpush2.msra.mxu0 0.0
    %4150 = vmatprep.subr.mxu0 0.0
    %4151 = vmatpush2.msra.mxu0 0.0
    %4152 = vmatprep.subr.mxu0 0.0
    %4153 = vmatpush2.msra.mxu0 0.0
    %4154 = vmatprep.subr.mxu0 0.0
    %4155 = vmatpush2.msra.mxu0 0.0
    %4156 = vmatprep.mubr.f32.mxu0 0.0
    %4157 = vmatmul.mubr.f32.gmra.mxu0 %v4090
    %v4158 = vpop.f32.mrf.mxu0
    %v4159 = vadd.f32 0.0, %v4158
    %v4160 = vpop.f32.mrf.mxu0
    %4161 = vdwg.mxu0
    %v4163 = vsel %vm160, %v4159, 0
    %4165 = vmatprep.subr.mxu0 0.0
    %4166 = vmatpush1.msra.mxu0 0.0
    %4167 = vmatprep.subr.mxu0 0.0
    %4168 = vmatpush1.msra.mxu0 0.0
    %4169 = vmatprep.subr.mxu0 0.0
    %4170 = vmatpush1.msra.mxu0 0.0
    %4171 = vmatprep.subr.mxu0 0.0
    %4172 = vmatpush1.msra.mxu0 0.0
    %4173 = vmatprep.subr.mxu0 0.0
    %4174 = vmatpush1.msra.mxu0 0.0
    %4175 = vmatprep.subr.mxu0 0.0
    %4176 = vmatpush1.msra.mxu0 0.0
    %4177 = vmatprep.subr.mxu0 0.0
    %4178 = vmatpush1.msra.mxu0 0.0
    %4179 = vmatprep.subr.mxu0 0.0
    %4180 = vmatpush1.msra.mxu0 0.0
    %4181 = vmatprep.subr.mxu0 0.0
    %4182 = vmatpush1.msra.mxu0 0.0
    %4183 = vmatprep.subr.mxu0 0.0
    %4184 = vmatpush1.msra.mxu0 0.0
    %4185 = vmatprep.subr.mxu0 0.0
    %4186 = vmatpush1.msra.mxu0 0.0
    %4187 = vmatprep.subr.mxu0 0.0
    %4188 = vmatpush1.msra.mxu0 0.0
    %4189 = vmatprep.subr.mxu0 0.0
    %4190 = vmatpush1.msra.mxu0 0.0
    %4191 = vmatprep.subr.mxu0 0.0
    %4192 = vmatpush1.msra.mxu0 0.0
    %4193 = vmatprep.subr.mxu0 0.0
    %4194 = vmatpush1.msra.mxu0 0.0
    %4195 = vmatprep.subr.mxu0 0.0
    %4196 = vmatpush1.msra.mxu0 %v4086
    %4197 = vmatprep.subr.mxu0 0.0
    %4198 = vmatpush2.msra.mxu0 0.0
    %4199 = vmatprep.subr.mxu0 0.0
    %4200 = vmatpush2.msra.mxu0 0.0
    %4201 = vmatprep.subr.mxu0 0.0
    %4202 = vmatpush2.msra.mxu0 0.0
    %4203 = vmatprep.subr.mxu0 0.0
    %4204 = vmatpush2.msra.mxu0 0.0
    %4205 = vmatprep.subr.mxu0 0.0
    %4206 = vmatpush2.msra.mxu0 0.0
    %4207 = vmatprep.subr.mxu0 0.0
    %4208 = vmatpush2.msra.mxu0 0.0
    %4209 = vmatprep.subr.mxu0 0.0
    %4210 = vmatpush2.msra.mxu0 0.0
    %4211 = vmatprep.subr.mxu0 0.0
    %4212 = vmatpush2.msra.mxu0 0.0
    %4213 = vmatprep.subr.mxu0 0.0
    %4214 = vmatpush2.msra.mxu0 0.0
    %4215 = vmatprep.subr.mxu0 0.0
    %4216 = vmatpush2.msra.mxu0 0.0
    %4217 = vmatprep.subr.mxu0 0.0
    %4218 = vmatpush2.msra.mxu0 0.0
    %4219 = vmatprep.subr.mxu0 0.0
    %4220 = vmatpush2.msra.mxu0 0.0
    %4221 = vmatprep.subr.mxu0 0.0
    %4222 = vmatpush2.msra.mxu0 0.0
    %4223 = vmatprep.subr.mxu0 0.0
    %4224 = vmatpush2.msra.mxu0 0.0
    %4225 = vmatprep.subr.mxu0 0.0
    %4226 = vmatpush2.msra.mxu0 0.0
    %4227 = vmatprep.subr.mxu0 0.0
    %4228 = vmatpush2.msra.mxu0 0.0
    %4229 = vmatprep.mubr.f32.mxu0 0.0
    %4230 = vmatmul.mubr.f32.gmra.mxu0 %v4163
    %v4231 = vpop.f32.mrf.mxu0
    %v4232 = vadd.f32 0.0, %v4231
    %v4233 = vpop.f32.mrf.mxu0
    %4234 = vdwg.mxu0
    %v4235 = vmul.f32 %v4232, 0.5
    %v4236 = vsub.f32 %v183, %v4235
    %v4238 = vsel %vm160, %v4086, 0
    %4240 = vmatprep.subr.mxu0 0.0
    %4241 = vmatpush1.msra.mxu0 0.0
    %4242 = vmatprep.subr.mxu0 0.0
    %4243 = vmatpush1.msra.mxu0 0.0
    %4244 = vmatprep.subr.mxu0 0.0
    %4245 = vmatpush1.msra.mxu0 0.0
    %4246 = vmatprep.subr.mxu0 0.0
    %4247 = vmatpush1.msra.mxu0 0.0
    %4248 = vmatprep.subr.mxu0 0.0
    %4249 = vmatpush1.msra.mxu0 0.0
    %4250 = vmatprep.subr.mxu0 0.0
    %4251 = vmatpush1.msra.mxu0 0.0
    %4252 = vmatprep.subr.mxu0 0.0
    %4253 = vmatpush1.msra.mxu0 0.0
    %4254 = vmatprep.subr.mxu0 0.0
    %4255 = vmatpush1.msra.mxu0 0.0
    %4256 = vmatprep.subr.mxu0 0.0
    %4257 = vmatpush1.msra.mxu0 0.0
    %4258 = vmatprep.subr.mxu0 0.0
    %4259 = vmatpush1.msra.mxu0 0.0
    %4260 = vmatprep.subr.mxu0 0.0
    %4261 = vmatpush1.msra.mxu0 0.0
    %4262 = vmatprep.subr.mxu0 0.0
    %4263 = vmatpush1.msra.mxu0 0.0
    %4264 = vmatprep.subr.mxu0 0.0
    %4265 = vmatpush1.msra.mxu0 0.0
    %4266 = vmatprep.subr.mxu0 0.0
    %4267 = vmatpush1.msra.mxu0 0.0
    %4268 = vmatprep.subr.mxu0 0.0
    %4269 = vmatpush1.msra.mxu0 0.0
    %4270 = vmatprep.subr.mxu0 0.0
    %4271 = vmatpush1.msra.mxu0 %v4236
    %4272 = vmatprep.subr.mxu0 0.0
    %4273 = vmatpush2.msra.mxu0 0.0
    %4274 = vmatprep.subr.mxu0 0.0
    %4275 = vmatpush2.msra.mxu0 0.0
    %4276 = vmatprep.subr.mxu0 0.0
    %4277 = vmatpush2.msra.mxu0 0.0
    %4278 = vmatprep.subr.mxu0 0.0
    %4279 = vmatpush2.msra.mxu0 0.0
    %4280 = vmatprep.subr.mxu0 0.0
    %4281 = vmatpush2.msra.mxu0 0.0
    %4282 = vmatprep.subr.mxu0 0.0
    %4283 = vmatpush2.msra.mxu0 0.0
    %4284 = vmatprep.subr.mxu0 0.0
    %4285 = vmatpush2.msra.mxu0 0.0
    %4286 = vmatprep.subr.mxu0 0.0
    %4287 = vmatpush2.msra.mxu0 0.0
    %4288 = vmatprep.subr.mxu0 0.0
    %4289 = vmatpush2.msra.mxu0 0.0
    %4290 = vmatprep.subr.mxu0 0.0
    %4291 = vmatpush2.msra.mxu0 0.0
    %4292 = vmatprep.subr.mxu0 0.0
    %4293 = vmatpush2.msra.mxu0 0.0
    %4294 = vmatprep.subr.mxu0 0.0
    %4295 = vmatpush2.msra.mxu0 0.0
    %4296 = vmatprep.subr.mxu0 0.0
    %4297 = vmatpush2.msra.mxu0 0.0
    %4298 = vmatprep.subr.mxu0 0.0
    %4299 = vmatpush2.msra.mxu0 0.0
    %4300 = vmatprep.subr.mxu0 0.0
    %4301 = vmatpush2.msra.mxu0 0.0
    %4302 = vmatprep.subr.mxu0 0.0
    %4303 = vmatpush2.msra.mxu0 0.0
    %4304 = vmatprep.mubr.f32.mxu0 0.0
    %4305 = vmatmul.mubr.f32.gmra.mxu0 %v4238
    %v4306 = vpop.f32.mrf.mxu0
    %v4307 = vadd.f32 0.0, %v4306
    %v4308 = vpop.f32.mrf.mxu0
    %4309 = vdwg.mxu0
    %v4311 = vsel %vm160, %v4236, 0
    %4313 = vmatprep.subr.mxu0 0.0
    %4314 = vmatpush1.msra.mxu0 0.0
    %4315 = vmatprep.subr.mxu0 0.0
    %4316 = vmatpush1.msra.mxu0 0.0
    %4317 = vmatprep.subr.mxu0 0.0
    %4318 = vmatpush1.msra.mxu0 0.0
    %4319 = vmatprep.subr.mxu0 0.0
    %4320 = vmatpush1.msra.mxu0 0.0
    %4321 = vmatprep.subr.mxu0 0.0
    %4322 = vmatpush1.msra.mxu0 0.0
    %4323 = vmatprep.subr.mxu0 0.0
    %4324 = vmatpush1.msra.mxu0 0.0
    %4325 = vmatprep.subr.mxu0 0.0
    %4326 = vmatpush1.msra.mxu0 0.0
    %4327 = vmatprep.subr.mxu0 0.0
    %4328 = vmatpush1.msra.mxu0 0.0
    %4329 = vmatprep.subr.mxu0 0.0
    %4330 = vmatpush1.msra.mxu0 0.0
    %4331 = vmatprep.subr.mxu0 0.0
    %4332 = vmatpush1.msra.mxu0 0.0
    %4333 = vmatprep.subr.mxu0 0.0
    %4334 = vmatpush1.msra.mxu0 0.0
    %4335 = vmatprep.subr.mxu0 0.0
    %4336 = vmatpush1.msra.mxu0 0.0
    %4337 = vmatprep.subr.mxu0 0.0
    %4338 = vmatpush1.msra.mxu0 0.0
    %4339 = vmatprep.subr.mxu0 0.0
    %4340 = vmatpush1.msra.mxu0 0.0
    %4341 = vmatprep.subr.mxu0 0.0
    %4342 = vmatpush1.msra.mxu0 0.0
    %4343 = vmatprep.subr.mxu0 0.0
    %4344 = vmatpush1.msra.mxu0 %v4159
    %4345 = vmatprep.subr.mxu0 0.0
    %4346 = vmatpush2.msra.mxu0 0.0
    %4347 = vmatprep.subr.mxu0 0.0
    %4348 = vmatpush2.msra.mxu0 0.0
    %4349 = vmatprep.subr.mxu0 0.0
    %4350 = vmatpush2.msra.mxu0 0.0
    %4351 = vmatprep.subr.mxu0 0.0
    %4352 = vmatpush2.msra.mxu0 0.0
    %4353 = vmatprep.subr.mxu0 0.0
    %4354 = vmatpush2.msra.mxu0 0.0
    %4355 = vmatprep.subr.mxu0 0.0
    %4356 = vmatpush2.msra.mxu0 0.0
    %4357 = vmatprep.subr.mxu0 0.0
    %4358 = vmatpush2.msra.mxu0 0.0
    %4359 = vmatprep.subr.mxu0 0.0
    %4360 = vmatpush2.msra.mxu0 0.0
    %4361 = vmatprep.subr.mxu0 0.0
    %4362 = vmatpush2.msra.mxu0 0.0
    %4363 = vmatprep.subr.mxu0 0.0
    %4364 = vmatpush2.msra.mxu0 0.0
    %4365 = vmatprep.subr.mxu0 0.0
    %4366 = vmatpush2.msra.mxu0 0.0
    %4367 = vmatprep.subr.mxu0 0.0
    %4368 = vmatpush2.msra.mxu0 0.0
    %4369 = vmatprep.subr.mxu0 0.0
    %4370 = vmatpush2.msra.mxu0 0.0
    %4371 = vmatprep.subr.mxu0 0.0
    %4372 = vmatpush2.msra.mxu0 0.0
    %4373 = vmatprep.subr.mxu0 0.0
    %4374 = vmatpush2.msra.mxu0 0.0
    %4375 = vmatprep.subr.mxu0 0.0
    %4376 = vmatpush2.msra.mxu0 0.0
    %4377 = vmatprep.mubr.f32.mxu0 0.0
    %4378 = vmatmul.mubr.f32.gmra.mxu0 %v4311
    %v4379 = vpop.f32.mrf.mxu0
    %v4380 = vadd.f32 0.0, %v4379
    %v4381 = vpop.f32.mrf.mxu0
    %4382 = vdwg.mxu0
    %v4384 = vsel %vm160, %v4380, 0
    %4386 = vmatprep.subr.mxu0 0.0
    %4387 = vmatpush1.msra.mxu0 0.0
    %4388 = vmatprep.subr.mxu0 0.0
    %4389 = vmatpush1.msra.mxu0 0.0
    %4390 = vmatprep.subr.mxu0 0.0
    %4391 = vmatpush1.msra.mxu0 0.0
    %4392 = vmatprep.subr.mxu0 0.0
    %4393 = vmatpush1.msra.mxu0 0.0
    %4394 = vmatprep.subr.mxu0 0.0
    %4395 = vmatpush1.msra.mxu0 0.0
    %4396 = vmatprep.subr.mxu0 0.0
    %4397 = vmatpush1.msra.mxu0 0.0
    %4398 = vmatprep.subr.mxu0 0.0
    %4399 = vmatpush1.msra.mxu0 0.0
    %4400 = vmatprep.subr.mxu0 0.0
    %4401 = vmatpush1.msra.mxu0 0.0
    %4402 = vmatprep.subr.mxu0 0.0
    %4403 = vmatpush1.msra.mxu0 0.0
    %4404 = vmatprep.subr.mxu0 0.0
    %4405 = vmatpush1.msra.mxu0 0.0
    %4406 = vmatprep.subr.mxu0 0.0
    %4407 = vmatpush1.msra.mxu0 0.0
    %4408 = vmatprep.subr.mxu0 0.0
    %4409 = vmatpush1.msra.mxu0 0.0
    %4410 = vmatprep.subr.mxu0 0.0
    %4411 = vmatpush1.msra.mxu0 0.0
    %4412 = vmatprep.subr.mxu0 0.0
    %4413 = vmatpush1.msra.mxu0 0.0
    %4414 = vmatprep.subr.mxu0 0.0
    %4415 = vmatpush1.msra.mxu0 0.0
    %4416 = vmatprep.subr.mxu0 0.0
    %4417 = vmatpush1.msra.mxu0 %v4307
    %4418 = vmatprep.subr.mxu0 0.0
    %4419 = vmatpush2.msra.mxu0 0.0
    %4420 = vmatprep.subr.mxu0 0.0
    %4421 = vmatpush2.msra.mxu0 0.0
    %4422 = vmatprep.subr.mxu0 0.0
    %4423 = vmatpush2.msra.mxu0 0.0
    %4424 = vmatprep.subr.mxu0 0.0
    %4425 = vmatpush2.msra.mxu0 0.0
    %4426 = vmatprep.subr.mxu0 0.0
    %4427 = vmatpush2.msra.mxu0 0.0
    %4428 = vmatprep.subr.mxu0 0.0
    %4429 = vmatpush2.msra.mxu0 0.0
    %4430 = vmatprep.subr.mxu0 0.0
    %4431 = vmatpush2.msra.mxu0 0.0
    %4432 = vmatprep.subr.mxu0 0.0
    %4433 = vmatpush2.msra.mxu0 0.0
    %4434 = vmatprep.subr.mxu0 0.0
    %4435 = vmatpush2.msra.mxu0 0.0
    %4436 = vmatprep.subr.mxu0 0.0
    %4437 = vmatpush2.msra.mxu0 0.0
    %4438 = vmatprep.subr.mxu0 0.0
    %4439 = vmatpush2.msra.mxu0 0.0
    %4440 = vmatprep.subr.mxu0 0.0
    %4441 = vmatpush2.msra.mxu0 0.0
    %4442 = vmatprep.subr.mxu0 0.0
    %4443 = vmatpush2.msra.mxu0 0.0
    %4444 = vmatprep.subr.mxu0 0.0
    %4445 = vmatpush2.msra.mxu0 0.0
    %4446 = vmatprep.subr.mxu0 0.0
    %4447 = vmatpush2.msra.mxu0 0.0
    %4448 = vmatprep.subr.mxu0 0.0
    %4449 = vmatpush2.msra.mxu0 0.0
    %4450 = vmatprep.mubr.f32.mxu0 0.0
    %4451 = vmatmul.mubr.f32.gmra.mxu0 %v4384
    %v4452 = vpop.f32.mrf.mxu0
    %v4453 = vadd.f32 0.0, %v4452
    %v4454 = vpop.f32.mrf.mxu0
    %4455 = vdwg.mxu0
    %v4456 = vmul.f32 %v4453, 0.5
    %v4457 = vsub.f32 %v183, %v4456
    %v4459 = vsel %vm160, %v4307, 0
    %4461 = vmatprep.subr.mxu0 0.0
    %4462 = vmatpush1.msra.mxu0 0.0
    %4463 = vmatprep.subr.mxu0 0.0
    %4464 = vmatpush1.msra.mxu0 0.0
    %4465 = vmatprep.subr.mxu0 0.0
    %4466 = vmatpush1.msra.mxu0 0.0
    %4467 = vmatprep.subr.mxu0 0.0
    %4468 = vmatpush1.msra.mxu0 0.0
    %4469 = vmatprep.subr.mxu0 0.0
    %4470 = vmatpush1.msra.mxu0 0.0
    %4471 = vmatprep.subr.mxu0 0.0
    %4472 = vmatpush1.msra.mxu0 0.0
    %4473 = vmatprep.subr.mxu0 0.0
    %4474 = vmatpush1.msra.mxu0 0.0
    %4475 = vmatprep.subr.mxu0 0.0
    %4476 = vmatpush1.msra.mxu0 0.0
    %4477 = vmatprep.subr.mxu0 0.0
    %4478 = vmatpush1.msra.mxu0 0.0
    %4479 = vmatprep.subr.mxu0 0.0
    %4480 = vmatpush1.msra.mxu0 0.0
    %4481 = vmatprep.subr.mxu0 0.0
    %4482 = vmatpush1.msra.mxu0 0.0
    %4483 = vmatprep.subr.mxu0 0.0
    %4484 = vmatpush1.msra.mxu0 0.0
    %4485 = vmatprep.subr.mxu0 0.0
    %4486 = vmatpush1.msra.mxu0 0.0
    %4487 = vmatprep.subr.mxu0 0.0
    %4488 = vmatpush1.msra.mxu0 0.0
    %4489 = vmatprep.subr.mxu0 0.0
    %4490 = vmatpush1.msra.mxu0 0.0
    %4491 = vmatprep.subr.mxu0 0.0
    %4492 = vmatpush1.msra.mxu0 %v4457
    %4493 = vmatprep.subr.mxu0 0.0
    %4494 = vmatpush2.msra.mxu0 0.0
    %4495 = vmatprep.subr.mxu0 0.0
    %4496 = vmatpush2.msra.mxu0 0.0
    %4497 = vmatprep.subr.mxu0 0.0
    %4498 = vmatpush2.msra.mxu0 0.0
    %4499 = vmatprep.subr.mxu0 0.0
    %4500 = vmatpush2.msra.mxu0 0.0
    %4501 = vmatprep.subr.mxu0 0.0
    %4502 = vmatpush2.msra.mxu0 0.0
    %4503 = vmatprep.subr.mxu0 0.0
    %4504 = vmatpush2.msra.mxu0 0.0
    %4505 = vmatprep.subr.mxu0 0.0
    %4506 = vmatpush2.msra.mxu0 0.0
    %4507 = vmatprep.subr.mxu0 0.0
    %4508 = vmatpush2.msra.mxu0 0.0
    %4509 = vmatprep.subr.mxu0 0.0
    %4510 = vmatpush2.msra.mxu0 0.0
    %4511 = vmatprep.subr.mxu0 0.0
    %4512 = vmatpush2.msra.mxu0 0.0
    %4513 = vmatprep.subr.mxu0 0.0
    %4514 = vmatpush2.msra.mxu0 0.0
    %4515 = vmatprep.subr.mxu0 0.0
    %4516 = vmatpush2.msra.mxu0 0.0
    %4517 = vmatprep.subr.mxu0 0.0
    %4518 = vmatpush2.msra.mxu0 0.0
    %4519 = vmatprep.subr.mxu0 0.0
    %4520 = vmatpush2.msra.mxu0 0.0
    %4521 = vmatprep.subr.mxu0 0.0
    %4522 = vmatpush2.msra.mxu0 0.0
    %4523 = vmatprep.subr.mxu0 0.0
    %4524 = vmatpush2.msra.mxu0 0.0
    %4525 = vmatprep.mubr.f32.mxu0 0.0
    %4526 = vmatmul.mubr.f32.gmra.mxu0 %v4459
    %v4527 = vpop.f32.mrf.mxu0
    %v4528 = vadd.f32 0.0, %v4527
    %v4529 = vpop.f32.mrf.mxu0
    %4530 = vdwg.mxu0
    %v4532 = vsel %vm160, %v4457, 0
    %4534 = vmatprep.subr.mxu0 0.0
    %4535 = vmatpush1.msra.mxu0 0.0
    %4536 = vmatprep.subr.mxu0 0.0
    %4537 = vmatpush1.msra.mxu0 0.0
    %4538 = vmatprep.subr.mxu0 0.0
    %4539 = vmatpush1.msra.mxu0 0.0
    %4540 = vmatprep.subr.mxu0 0.0
    %4541 = vmatpush1.msra.mxu0 0.0
    %4542 = vmatprep.subr.mxu0 0.0
    %4543 = vmatpush1.msra.mxu0 0.0
    %4544 = vmatprep.subr.mxu0 0.0
    %4545 = vmatpush1.msra.mxu0 0.0
    %4546 = vmatprep.subr.mxu0 0.0
    %4547 = vmatpush1.msra.mxu0 0.0
    %4548 = vmatprep.subr.mxu0 0.0
    %4549 = vmatpush1.msra.mxu0 0.0
    %4550 = vmatprep.subr.mxu0 0.0
    %4551 = vmatpush1.msra.mxu0 0.0
    %4552 = vmatprep.subr.mxu0 0.0
    %4553 = vmatpush1.msra.mxu0 0.0
    %4554 = vmatprep.subr.mxu0 0.0
    %4555 = vmatpush1.msra.mxu0 0.0
    %4556 = vmatprep.subr.mxu0 0.0
    %4557 = vmatpush1.msra.mxu0 0.0
    %4558 = vmatprep.subr.mxu0 0.0
    %4559 = vmatpush1.msra.mxu0 0.0
    %4560 = vmatprep.subr.mxu0 0.0
    %4561 = vmatpush1.msra.mxu0 0.0
    %4562 = vmatprep.subr.mxu0 0.0
    %4563 = vmatpush1.msra.mxu0 0.0
    %4564 = vmatprep.subr.mxu0 0.0
    %4565 = vmatpush1.msra.mxu0 %v4380
    %4566 = vmatprep.subr.mxu0 0.0
    %4567 = vmatpush2.msra.mxu0 0.0
    %4568 = vmatprep.subr.mxu0 0.0
    %4569 = vmatpush2.msra.mxu0 0.0
    %4570 = vmatprep.subr.mxu0 0.0
    %4571 = vmatpush2.msra.mxu0 0.0
    %4572 = vmatprep.subr.mxu0 0.0
    %4573 = vmatpush2.msra.mxu0 0.0
    %4574 = vmatprep.subr.mxu0 0.0
    %4575 = vmatpush2.msra.mxu0 0.0
    %4576 = vmatprep.subr.mxu0 0.0
    %4577 = vmatpush2.msra.mxu0 0.0
    %4578 = vmatprep.subr.mxu0 0.0
    %4579 = vmatpush2.msra.mxu0 0.0
    %4580 = vmatprep.subr.mxu0 0.0
    %4581 = vmatpush2.msra.mxu0 0.0
    %4582 = vmatprep.subr.mxu0 0.0
    %4583 = vmatpush2.msra.mxu0 0.0
    %4584 = vmatprep.subr.mxu0 0.0
    %4585 = vmatpush2.msra.mxu0 0.0
    %4586 = vmatprep.subr.mxu0 0.0
    %4587 = vmatpush2.msra.mxu0 0.0
    %4588 = vmatprep.subr.mxu0 0.0
    %4589 = vmatpush2.msra.mxu0 0.0
    %4590 = vmatprep.subr.mxu0 0.0
    %4591 = vmatpush2.msra.mxu0 0.0
    %4592 = vmatprep.subr.mxu0 0.0
    %4593 = vmatpush2.msra.mxu0 0.0
    %4594 = vmatprep.subr.mxu0 0.0
    %4595 = vmatpush2.msra.mxu0 0.0
    %4596 = vmatprep.subr.mxu0 0.0
    %4597 = vmatpush2.msra.mxu0 0.0
    %4598 = vmatprep.mubr.f32.mxu0 0.0
    %4599 = vmatmul.mubr.f32.gmra.mxu0 %v4532
    %v4600 = vpop.f32.mrf.mxu0
    %v4601 = vadd.f32 0.0, %v4600
    %v4602 = vpop.f32.mrf.mxu0
    %4603 = vdwg.mxu0
    %v4605 = vsel %vm160, %v4601, 0
    %4607 = vmatprep.subr.mxu0 0.0
    %4608 = vmatpush1.msra.mxu0 0.0
    %4609 = vmatprep.subr.mxu0 0.0
    %4610 = vmatpush1.msra.mxu0 0.0
    %4611 = vmatprep.subr.mxu0 0.0
    %4612 = vmatpush1.msra.mxu0 0.0
    %4613 = vmatprep.subr.mxu0 0.0
    %4614 = vmatpush1.msra.mxu0 0.0
    %4615 = vmatprep.subr.mxu0 0.0
    %4616 = vmatpush1.msra.mxu0 0.0
    %4617 = vmatprep.subr.mxu0 0.0
    %4618 = vmatpush1.msra.mxu0 0.0
    %4619 = vmatprep.subr.mxu0 0.0
    %4620 = vmatpush1.msra.mxu0 0.0
    %4621 = vmatprep.subr.mxu0 0.0
    %4622 = vmatpush1.msra.mxu0 0.0
    %4623 = vmatprep.subr.mxu0 0.0
    %4624 = vmatpush1.msra.mxu0 0.0
    %4625 = vmatprep.subr.mxu0 0.0
    %4626 = vmatpush1.msra.mxu0 0.0
    %4627 = vmatprep.subr.mxu0 0.0
    %4628 = vmatpush1.msra.mxu0 0.0
    %4629 = vmatprep.subr.mxu0 0.0
    %4630 = vmatpush1.msra.mxu0 0.0
    %4631 = vmatprep.subr.mxu0 0.0
    %4632 = vmatpush1.msra.mxu0 0.0
    %4633 = vmatprep.subr.mxu0 0.0
    %4634 = vmatpush1.msra.mxu0 0.0
    %4635 = vmatprep.subr.mxu0 0.0
    %4636 = vmatpush1.msra.mxu0 0.0
    %4637 = vmatprep.subr.mxu0 0.0
    %4638 = vmatpush1.msra.mxu0 %v4528
    %4639 = vmatprep.subr.mxu0 0.0
    %4640 = vmatpush2.msra.mxu0 0.0
    %4641 = vmatprep.subr.mxu0 0.0
    %4642 = vmatpush2.msra.mxu0 0.0
    %4643 = vmatprep.subr.mxu0 0.0
    %4644 = vmatpush2.msra.mxu0 0.0
    %4645 = vmatprep.subr.mxu0 0.0
    %4646 = vmatpush2.msra.mxu0 0.0
    %4647 = vmatprep.subr.mxu0 0.0
    %4648 = vmatpush2.msra.mxu0 0.0
    %4649 = vmatprep.subr.mxu0 0.0
    %4650 = vmatpush2.msra.mxu0 0.0
    %4651 = vmatprep.subr.mxu0 0.0
    %4652 = vmatpush2.msra.mxu0 0.0
    %4653 = vmatprep.subr.mxu0 0.0
    %4654 = vmatpush2.msra.mxu0 0.0
    %4655 = vmatprep.subr.mxu0 0.0
    %4656 = vmatpush2.msra.mxu0 0.0
    %4657 = vmatprep.subr.mxu0 0.0
    %4658 = vmatpush2.msra.mxu0 0.0
    %4659 = vmatprep.subr.mxu0 0.0
    %4660 = vmatpush2.msra.mxu0 0.0
    %4661 = vmatprep.subr.mxu0 0.0
    %4662 = vmatpush2.msra.mxu0 0.0
    %4663 = vmatprep.subr.mxu0 0.0
    %4664 = vmatpush2.msra.mxu0 0.0
    %4665 = vmatprep.subr.mxu0 0.0
    %4666 = vmatpush2.msra.mxu0 0.0
    %4667 = vmatprep.subr.mxu0 0.0
    %4668 = vmatpush2.msra.mxu0 0.0
    %4669 = vmatprep.subr.mxu0 0.0
    %4670 = vmatpush2.msra.mxu0 0.0
    %4671 = vmatprep.mubr.f32.mxu0 0.0
    %4672 = vmatmul.mubr.f32.gmra.mxu0 %v4605
    %v4673 = vpop.f32.mrf.mxu0
    %v4674 = vadd.f32 0.0, %v4673
    %v4675 = vpop.f32.mrf.mxu0
    %4676 = vdwg.mxu0
    %v4677 = vmul.f32 %v4674, 0.5
    %v4678 = vsub.f32 %v183, %v4677
    %v4680 = vsel %vm160, %v4528, 0
    %4682 = vmatprep.subr.mxu0 0.0
    %4683 = vmatpush1.msra.mxu0 0.0
    %4684 = vmatprep.subr.mxu0 0.0
    %4685 = vmatpush1.msra.mxu0 0.0
    %4686 = vmatprep.subr.mxu0 0.0
    %4687 = vmatpush1.msra.mxu0 0.0
    %4688 = vmatprep.subr.mxu0 0.0
    %4689 = vmatpush1.msra.mxu0 0.0
    %4690 = vmatprep.subr.mxu0 0.0
    %4691 = vmatpush1.msra.mxu0 0.0
    %4692 = vmatprep.subr.mxu0 0.0
    %4693 = vmatpush1.msra.mxu0 0.0
    %4694 = vmatprep.subr.mxu0 0.0
    %4695 = vmatpush1.msra.mxu0 0.0
    %4696 = vmatprep.subr.mxu0 0.0
    %4697 = vmatpush1.msra.mxu0 0.0
    %4698 = vmatprep.subr.mxu0 0.0
    %4699 = vmatpush1.msra.mxu0 0.0
    %4700 = vmatprep.subr.mxu0 0.0
    %4701 = vmatpush1.msra.mxu0 0.0
    %4702 = vmatprep.subr.mxu0 0.0
    %4703 = vmatpush1.msra.mxu0 0.0
    %4704 = vmatprep.subr.mxu0 0.0
    %4705 = vmatpush1.msra.mxu0 0.0
    %4706 = vmatprep.subr.mxu0 0.0
    %4707 = vmatpush1.msra.mxu0 0.0
    %4708 = vmatprep.subr.mxu0 0.0
    %4709 = vmatpush1.msra.mxu0 0.0
    %4710 = vmatprep.subr.mxu0 0.0
    %4711 = vmatpush1.msra.mxu0 0.0
    %4712 = vmatprep.subr.mxu0 0.0
    %4713 = vmatpush1.msra.mxu0 %v4678
    %4714 = vmatprep.subr.mxu0 0.0
    %4715 = vmatpush2.msra.mxu0 0.0
    %4716 = vmatprep.subr.mxu0 0.0
    %4717 = vmatpush2.msra.mxu0 0.0
    %4718 = vmatprep.subr.mxu0 0.0
    %4719 = vmatpush2.msra.mxu0 0.0
    %4720 = vmatprep.subr.mxu0 0.0
    %4721 = vmatpush2.msra.mxu0 0.0
    %4722 = vmatprep.subr.mxu0 0.0
    %4723 = vmatpush2.msra.mxu0 0.0
    %4724 = vmatprep.subr.mxu0 0.0
    %4725 = vmatpush2.msra.mxu0 0.0
    %4726 = vmatprep.subr.mxu0 0.0
    %4727 = vmatpush2.msra.mxu0 0.0
    %4728 = vmatprep.subr.mxu0 0.0
    %4729 = vmatpush2.msra.mxu0 0.0
    %4730 = vmatprep.subr.mxu0 0.0
    %4731 = vmatpush2.msra.mxu0 0.0
    %4732 = vmatprep.subr.mxu0 0.0
    %4733 = vmatpush2.msra.mxu0 0.0
    %4734 = vmatprep.subr.mxu0 0.0
    %4735 = vmatpush2.msra.mxu0 0.0
    %4736 = vmatprep.subr.mxu0 0.0
    %4737 = vmatpush2.msra.mxu0 0.0
    %4738 = vmatprep.subr.mxu0 0.0
    %4739 = vmatpush2.msra.mxu0 0.0
    %4740 = vmatprep.subr.mxu0 0.0
    %4741 = vmatpush2.msra.mxu0 0.0
    %4742 = vmatprep.subr.mxu0 0.0
    %4743 = vmatpush2.msra.mxu0 0.0
    %4744 = vmatprep.subr.mxu0 0.0
    %4745 = vmatpush2.msra.mxu0 0.0
    %4746 = vmatprep.mubr.f32.mxu0 0.0
    %4747 = vmatmul.mubr.f32.gmra.mxu0 %v4680
    %v4748 = vpop.f32.mrf.mxu0
    %v4749 = vadd.f32 0.0, %v4748
    %v4750 = vpop.f32.mrf.mxu0
    %4751 = vdwg.mxu0
    %v4753 = vsel %vm160, %v4678, 0
    %4755 = vmatprep.subr.mxu0 0.0
    %4756 = vmatpush1.msra.mxu0 0.0
    %4757 = vmatprep.subr.mxu0 0.0
    %4758 = vmatpush1.msra.mxu0 0.0
    %4759 = vmatprep.subr.mxu0 0.0
    %4760 = vmatpush1.msra.mxu0 0.0
    %4761 = vmatprep.subr.mxu0 0.0
    %4762 = vmatpush1.msra.mxu0 0.0
    %4763 = vmatprep.subr.mxu0 0.0
    %4764 = vmatpush1.msra.mxu0 0.0
    %4765 = vmatprep.subr.mxu0 0.0
    %4766 = vmatpush1.msra.mxu0 0.0
    %4767 = vmatprep.subr.mxu0 0.0
    %4768 = vmatpush1.msra.mxu0 0.0
    %4769 = vmatprep.subr.mxu0 0.0
    %4770 = vmatpush1.msra.mxu0 0.0
    %4771 = vmatprep.subr.mxu0 0.0
    %4772 = vmatpush1.msra.mxu0 0.0
    %4773 = vmatprep.subr.mxu0 0.0
    %4774 = vmatpush1.msra.mxu0 0.0
    %4775 = vmatprep.subr.mxu0 0.0
    %4776 = vmatpush1.msra.mxu0 0.0
    %4777 = vmatprep.subr.mxu0 0.0
    %4778 = vmatpush1.msra.mxu0 0.0
    %4779 = vmatprep.subr.mxu0 0.0
    %4780 = vmatpush1.msra.mxu0 0.0
    %4781 = vmatprep.subr.mxu0 0.0
    %4782 = vmatpush1.msra.mxu0 0.0
    %4783 = vmatprep.subr.mxu0 0.0
    %4784 = vmatpush1.msra.mxu0 0.0
    %4785 = vmatprep.subr.mxu0 0.0
    %4786 = vmatpush1.msra.mxu0 %v4601
    %4787 = vmatprep.subr.mxu0 0.0
    %4788 = vmatpush2.msra.mxu0 0.0
    %4789 = vmatprep.subr.mxu0 0.0
    %4790 = vmatpush2.msra.mxu0 0.0
    %4791 = vmatprep.subr.mxu0 0.0
    %4792 = vmatpush2.msra.mxu0 0.0
    %4793 = vmatprep.subr.mxu0 0.0
    %4794 = vmatpush2.msra.mxu0 0.0
    %4795 = vmatprep.subr.mxu0 0.0
    %4796 = vmatpush2.msra.mxu0 0.0
    %4797 = vmatprep.subr.mxu0 0.0
    %4798 = vmatpush2.msra.mxu0 0.0
    %4799 = vmatprep.subr.mxu0 0.0
    %4800 = vmatpush2.msra.mxu0 0.0
    %4801 = vmatprep.subr.mxu0 0.0
    %4802 = vmatpush2.msra.mxu0 0.0
    %4803 = vmatprep.subr.mxu0 0.0
    %4804 = vmatpush2.msra.mxu0 0.0
    %4805 = vmatprep.subr.mxu0 0.0
    %4806 = vmatpush2.msra.mxu0 0.0
    %4807 = vmatprep.subr.mxu0 0.0
    %4808 = vmatpush2.msra.mxu0 0.0
    %4809 = vmatprep.subr.mxu0 0.0
    %4810 = vmatpush2.msra.mxu0 0.0
    %4811 = vmatprep.subr.mxu0 0.0
    %4812 = vmatpush2.msra.mxu0 0.0
    %4813 = vmatprep.subr.mxu0 0.0
    %4814 = vmatpush2.msra.mxu0 0.0
    %4815 = vmatprep.subr.mxu0 0.0
    %4816 = vmatpush2.msra.mxu0 0.0
    %4817 = vmatprep.subr.mxu0 0.0
    %4818 = vmatpush2.msra.mxu0 0.0
    %4819 = vmatprep.mubr.f32.mxu0 0.0
    %4820 = vmatmul.mubr.f32.gmra.mxu0 %v4753
    %v4821 = vpop.f32.mrf.mxu0
    %v4822 = vadd.f32 0.0, %v4821
    %v4823 = vpop.f32.mrf.mxu0
    %4824 = vdwg.mxu0
    %v4826 = vsel %vm160, %v4822, 0
    %4828 = vmatprep.subr.mxu0 0.0
    %4829 = vmatpush1.msra.mxu0 0.0
    %4830 = vmatprep.subr.mxu0 0.0
    %4831 = vmatpush1.msra.mxu0 0.0
    %4832 = vmatprep.subr.mxu0 0.0
    %4833 = vmatpush1.msra.mxu0 0.0
    %4834 = vmatprep.subr.mxu0 0.0
    %4835 = vmatpush1.msra.mxu0 0.0
    %4836 = vmatprep.subr.mxu0 0.0
    %4837 = vmatpush1.msra.mxu0 0.0
    %4838 = vmatprep.subr.mxu0 0.0
    %4839 = vmatpush1.msra.mxu0 0.0
    %4840 = vmatprep.subr.mxu0 0.0
    %4841 = vmatpush1.msra.mxu0 0.0
    %4842 = vmatprep.subr.mxu0 0.0
    %4843 = vmatpush1.msra.mxu0 0.0
    %4844 = vmatprep.subr.mxu0 0.0
    %4845 = vmatpush1.msra.mxu0 0.0
    %4846 = vmatprep.subr.mxu0 0.0
    %4847 = vmatpush1.msra.mxu0 0.0
    %4848 = vmatprep.subr.mxu0 0.0
    %4849 = vmatpush1.msra.mxu0 0.0
    %4850 = vmatprep.subr.mxu0 0.0
    %4851 = vmatpush1.msra.mxu0 0.0
    %4852 = vmatprep.subr.mxu0 0.0
    %4853 = vmatpush1.msra.mxu0 0.0
    %4854 = vmatprep.subr.mxu0 0.0
    %4855 = vmatpush1.msra.mxu0 0.0
    %4856 = vmatprep.subr.mxu0 0.0
    %4857 = vmatpush1.msra.mxu0 0.0
    %4858 = vmatprep.subr.mxu0 0.0
    %4859 = vmatpush1.msra.mxu0 %v4749
    %4860 = vmatprep.subr.mxu0 0.0
    %4861 = vmatpush2.msra.mxu0 0.0
    %4862 = vmatprep.subr.mxu0 0.0
    %4863 = vmatpush2.msra.mxu0 0.0
    %4864 = vmatprep.subr.mxu0 0.0
    %4865 = vmatpush2.msra.mxu0 0.0
    %4866 = vmatprep.subr.mxu0 0.0
    %4867 = vmatpush2.msra.mxu0 0.0
    %4868 = vmatprep.subr.mxu0 0.0
    %4869 = vmatpush2.msra.mxu0 0.0
    %4870 = vmatprep.subr.mxu0 0.0
    %4871 = vmatpush2.msra.mxu0 0.0
    %4872 = vmatprep.subr.mxu0 0.0
    %4873 = vmatpush2.msra.mxu0 0.0
    %4874 = vmatprep.subr.mxu0 0.0
    %4875 = vmatpush2.msra.mxu0 0.0
    %4876 = vmatprep.subr.mxu0 0.0
    %4877 = vmatpush2.msra.mxu0 0.0
    %4878 = vmatprep.subr.mxu0 0.0
    %4879 = vmatpush2.msra.mxu0 0.0
    %4880 = vmatprep.subr.mxu0 0.0
    %4881 = vmatpush2.msra.mxu0 0.0
    %4882 = vmatprep.subr.mxu0 0.0
    %4883 = vmatpush2.msra.mxu0 0.0
    %4884 = vmatprep.subr.mxu0 0.0
    %4885 = vmatpush2.msra.mxu0 0.0
    %4886 = vmatprep.subr.mxu0 0.0
    %4887 = vmatpush2.msra.mxu0 0.0
    %4888 = vmatprep.subr.mxu0 0.0
    %4889 = vmatpush2.msra.mxu0 0.0
    %4890 = vmatprep.subr.mxu0 0.0
    %4891 = vmatpush2.msra.mxu0 0.0
    %4892 = vmatprep.mubr.f32.mxu0 0.0
    %4893 = vmatmul.mubr.f32.gmra.mxu0 %v4826
    %v4894 = vpop.f32.mrf.mxu0
    %v4895 = vadd.f32 0.0, %v4894
    %v4896 = vpop.f32.mrf.mxu0
    %4897 = vdwg.mxu0
    %v4898 = vmul.f32 %v4895, 0.5
    %v4899 = vsub.f32 %v183, %v4898
    %v4901 = vsel %vm160, %v4749, 0
    %4903 = vmatprep.subr.mxu0 0.0
    %4904 = vmatpush1.msra.mxu0 0.0
    %4905 = vmatprep.subr.mxu0 0.0
    %4906 = vmatpush1.msra.mxu0 0.0
    %4907 = vmatprep.subr.mxu0 0.0
    %4908 = vmatpush1.msra.mxu0 0.0
    %4909 = vmatprep.subr.mxu0 0.0
    %4910 = vmatpush1.msra.mxu0 0.0
    %4911 = vmatprep.subr.mxu0 0.0
    %4912 = vmatpush1.msra.mxu0 0.0
    %4913 = vmatprep.subr.mxu0 0.0
    %4914 = vmatpush1.msra.mxu0 0.0
    %4915 = vmatprep.subr.mxu0 0.0
    %4916 = vmatpush1.msra.mxu0 0.0
    %4917 = vmatprep.subr.mxu0 0.0
    %4918 = vmatpush1.msra.mxu0 0.0
    %4919 = vmatprep.subr.mxu0 0.0
    %4920 = vmatpush1.msra.mxu0 0.0
    %4921 = vmatprep.subr.mxu0 0.0
    %4922 = vmatpush1.msra.mxu0 0.0
    %4923 = vmatprep.subr.mxu0 0.0
    %4924 = vmatpush1.msra.mxu0 0.0
    %4925 = vmatprep.subr.mxu0 0.0
    %4926 = vmatpush1.msra.mxu0 0.0
    %4927 = vmatprep.subr.mxu0 0.0
    %4928 = vmatpush1.msra.mxu0 0.0
    %4929 = vmatprep.subr.mxu0 0.0
    %4930 = vmatpush1.msra.mxu0 0.0
    %4931 = vmatprep.subr.mxu0 0.0
    %4932 = vmatpush1.msra.mxu0 0.0
    %4933 = vmatprep.subr.mxu0 0.0
    %4934 = vmatpush1.msra.mxu0 %v4899
    %4935 = vmatprep.subr.mxu0 0.0
    %4936 = vmatpush2.msra.mxu0 0.0
    %4937 = vmatprep.subr.mxu0 0.0
    %4938 = vmatpush2.msra.mxu0 0.0
    %4939 = vmatprep.subr.mxu0 0.0
    %4940 = vmatpush2.msra.mxu0 0.0
    %4941 = vmatprep.subr.mxu0 0.0
    %4942 = vmatpush2.msra.mxu0 0.0
    %4943 = vmatprep.subr.mxu0 0.0
    %4944 = vmatpush2.msra.mxu0 0.0
    %4945 = vmatprep.subr.mxu0 0.0
    %4946 = vmatpush2.msra.mxu0 0.0
    %4947 = vmatprep.subr.mxu0 0.0
    %4948 = vmatpush2.msra.mxu0 0.0
    %4949 = vmatprep.subr.mxu0 0.0
    %4950 = vmatpush2.msra.mxu0 0.0
    %4951 = vmatprep.subr.mxu0 0.0
    %4952 = vmatpush2.msra.mxu0 0.0
    %4953 = vmatprep.subr.mxu0 0.0
    %4954 = vmatpush2.msra.mxu0 0.0
    %4955 = vmatprep.subr.mxu0 0.0
    %4956 = vmatpush2.msra.mxu0 0.0
    %4957 = vmatprep.subr.mxu0 0.0
    %4958 = vmatpush2.msra.mxu0 0.0
    %4959 = vmatprep.subr.mxu0 0.0
    %4960 = vmatpush2.msra.mxu0 0.0
    %4961 = vmatprep.subr.mxu0 0.0
    %4962 = vmatpush2.msra.mxu0 0.0
    %4963 = vmatprep.subr.mxu0 0.0
    %4964 = vmatpush2.msra.mxu0 0.0
    %4965 = vmatprep.subr.mxu0 0.0
    %4966 = vmatpush2.msra.mxu0 0.0
    %4967 = vmatprep.mubr.f32.mxu0 0.0
    %4968 = vmatmul.mubr.f32.gmra.mxu0 %v4901
    %v4969 = vpop.f32.mrf.mxu0
    %v4970 = vadd.f32 0.0, %v4969
    %v4971 = vpop.f32.mrf.mxu0
    %4972 = vdwg.mxu0
    %v4974 = vsel %vm160, %v4899, 0
    %4976 = vmatprep.subr.mxu0 0.0
    %4977 = vmatpush1.msra.mxu0 0.0
    %4978 = vmatprep.subr.mxu0 0.0
    %4979 = vmatpush1.msra.mxu0 0.0
    %4980 = vmatprep.subr.mxu0 0.0
    %4981 = vmatpush1.msra.mxu0 0.0
    %4982 = vmatprep.subr.mxu0 0.0
    %4983 = vmatpush1.msra.mxu0 0.0
    %4984 = vmatprep.subr.mxu0 0.0
    %4985 = vmatpush1.msra.mxu0 0.0
    %4986 = vmatprep.subr.mxu0 0.0
    %4987 = vmatpush1.msra.mxu0 0.0
    %4988 = vmatprep.subr.mxu0 0.0
    %4989 = vmatpush1.msra.mxu0 0.0
    %4990 = vmatprep.subr.mxu0 0.0
    %4991 = vmatpush1.msra.mxu0 0.0
    %4992 = vmatprep.subr.mxu0 0.0
    %4993 = vmatpush1.msra.mxu0 0.0
    %4994 = vmatprep.subr.mxu0 0.0
    %4995 = vmatpush1.msra.mxu0 0.0
    %4996 = vmatprep.subr.mxu0 0.0
    %4997 = vmatpush1.msra.mxu0 0.0
    %4998 = vmatprep.subr.mxu0 0.0
    %4999 = vmatpush1.msra.mxu0 0.0
    %5000 = vmatprep.subr.mxu0 0.0
    %5001 = vmatpush1.msra.mxu0 0.0
    %5002 = vmatprep.subr.mxu0 0.0
    %5003 = vmatpush1.msra.mxu0 0.0
    %5004 = vmatprep.subr.mxu0 0.0
    %5005 = vmatpush1.msra.mxu0 0.0
    %5006 = vmatprep.subr.mxu0 0.0
    %5007 = vmatpush1.msra.mxu0 %v4822
    %5008 = vmatprep.subr.mxu0 0.0
    %5009 = vmatpush2.msra.mxu0 0.0
    %5010 = vmatprep.subr.mxu0 0.0
    %5011 = vmatpush2.msra.mxu0 0.0
    %5012 = vmatprep.subr.mxu0 0.0
    %5013 = vmatpush2.msra.mxu0 0.0
    %5014 = vmatprep.subr.mxu0 0.0
    %5015 = vmatpush2.msra.mxu0 0.0
    %5016 = vmatprep.subr.mxu0 0.0
    %5017 = vmatpush2.msra.mxu0 0.0
    %5018 = vmatprep.subr.mxu0 0.0
    %5019 = vmatpush2.msra.mxu0 0.0
    %5020 = vmatprep.subr.mxu0 0.0
    %5021 = vmatpush2.msra.mxu0 0.0
    %5022 = vmatprep.subr.mxu0 0.0
    %5023 = vmatpush2.msra.mxu0 0.0
    %5024 = vmatprep.subr.mxu0 0.0
    %5025 = vmatpush2.msra.mxu0 0.0
    %5026 = vmatprep.subr.mxu0 0.0
    %5027 = vmatpush2.msra.mxu0 0.0
    %5028 = vmatprep.subr.mxu0 0.0
    %5029 = vmatpush2.msra.mxu0 0.0
    %5030 = vmatprep.subr.mxu0 0.0
    %5031 = vmatpush2.msra.mxu0 0.0
    %5032 = vmatprep.subr.mxu0 0.0
    %5033 = vmatpush2.msra.mxu0 0.0
    %5034 = vmatprep.subr.mxu0 0.0
    %5035 = vmatpush2.msra.mxu0 0.0
    %5036 = vmatprep.subr.mxu0 0.0
    %5037 = vmatpush2.msra.mxu0 0.0
    %5038 = vmatprep.subr.mxu0 0.0
    %5039 = vmatpush2.msra.mxu0 0.0
    %5040 = vmatprep.mubr.f32.mxu0 0.0
    %5041 = vmatmul.mubr.f32.gmra.mxu0 %v4974
    %v5042 = vpop.f32.mrf.mxu0
    %v5043 = vadd.f32 0.0, %v5042
    %v5044 = vpop.f32.mrf.mxu0
    %5045 = vdwg.mxu0
    %v5047 = vsel %vm160, %v5043, 0
    %5049 = vmatprep.subr.mxu0 0.0
    %5050 = vmatpush1.msra.mxu0 0.0
    %5051 = vmatprep.subr.mxu0 0.0
    %5052 = vmatpush1.msra.mxu0 0.0
    %5053 = vmatprep.subr.mxu0 0.0
    %5054 = vmatpush1.msra.mxu0 0.0
    %5055 = vmatprep.subr.mxu0 0.0
    %5056 = vmatpush1.msra.mxu0 0.0
    %5057 = vmatprep.subr.mxu0 0.0
    %5058 = vmatpush1.msra.mxu0 0.0
    %5059 = vmatprep.subr.mxu0 0.0
    %5060 = vmatpush1.msra.mxu0 0.0
    %5061 = vmatprep.subr.mxu0 0.0
    %5062 = vmatpush1.msra.mxu0 0.0
    %5063 = vmatprep.subr.mxu0 0.0
    %5064 = vmatpush1.msra.mxu0 0.0
    %5065 = vmatprep.subr.mxu0 0.0
    %5066 = vmatpush1.msra.mxu0 0.0
    %5067 = vmatprep.subr.mxu0 0.0
    %5068 = vmatpush1.msra.mxu0 0.0
    %5069 = vmatprep.subr.mxu0 0.0
    %5070 = vmatpush1.msra.mxu0 0.0
    %5071 = vmatprep.subr.mxu0 0.0
    %5072 = vmatpush1.msra.mxu0 0.0
    %5073 = vmatprep.subr.mxu0 0.0
    %5074 = vmatpush1.msra.mxu0 0.0
    %5075 = vmatprep.subr.mxu0 0.0
    %5076 = vmatpush1.msra.mxu0 0.0
    %5077 = vmatprep.subr.mxu0 0.0
    %5078 = vmatpush1.msra.mxu0 0.0
    %5079 = vmatprep.subr.mxu0 0.0
    %5080 = vmatpush1.msra.mxu0 %v4970
    %5081 = vmatprep.subr.mxu0 0.0
    %5082 = vmatpush2.msra.mxu0 0.0
    %5083 = vmatprep.subr.mxu0 0.0
    %5084 = vmatpush2.msra.mxu0 0.0
    %5085 = vmatprep.subr.mxu0 0.0
    %5086 = vmatpush2.msra.mxu0 0.0
    %5087 = vmatprep.subr.mxu0 0.0
    %5088 = vmatpush2.msra.mxu0 0.0
    %5089 = vmatprep.subr.mxu0 0.0
    %5090 = vmatpush2.msra.mxu0 0.0
    %5091 = vmatprep.subr.mxu0 0.0
    %5092 = vmatpush2.msra.mxu0 0.0
    %5093 = vmatprep.subr.mxu0 0.0
    %5094 = vmatpush2.msra.mxu0 0.0
    %5095 = vmatprep.subr.mxu0 0.0
    %5096 = vmatpush2.msra.mxu0 0.0
    %5097 = vmatprep.subr.mxu0 0.0
    %5098 = vmatpush2.msra.mxu0 0.0
    %5099 = vmatprep.subr.mxu0 0.0
    %5100 = vmatpush2.msra.mxu0 0.0
    %5101 = vmatprep.subr.mxu0 0.0
    %5102 = vmatpush2.msra.mxu0 0.0
    %5103 = vmatprep.subr.mxu0 0.0
    %5104 = vmatpush2.msra.mxu0 0.0
    %5105 = vmatprep.subr.mxu0 0.0
    %5106 = vmatpush2.msra.mxu0 0.0
    %5107 = vmatprep.subr.mxu0 0.0
    %5108 = vmatpush2.msra.mxu0 0.0
    %5109 = vmatprep.subr.mxu0 0.0
    %5110 = vmatpush2.msra.mxu0 0.0
    %5111 = vmatprep.subr.mxu0 0.0
    %5112 = vmatpush2.msra.mxu0 0.0
    %5113 = vmatprep.mubr.f32.mxu0 0.0
    %5114 = vmatmul.mubr.f32.gmra.mxu0 %v5047
    %v5115 = vpop.f32.mrf.mxu0
    %v5116 = vadd.f32 0.0, %v5115
    %v5117 = vpop.f32.mrf.mxu0
    %5118 = vdwg.mxu0
    %v5119 = vmul.f32 %v5116, 0.5
    %v5120 = vsub.f32 %v183, %v5119
    %v5122 = vsel %vm160, %v4970, 0
    %5124 = vmatprep.subr.mxu0 0.0
    %5125 = vmatpush1.msra.mxu0 0.0
    %5126 = vmatprep.subr.mxu0 0.0
    %5127 = vmatpush1.msra.mxu0 0.0
    %5128 = vmatprep.subr.mxu0 0.0
    %5129 = vmatpush1.msra.mxu0 0.0
    %5130 = vmatprep.subr.mxu0 0.0
    %5131 = vmatpush1.msra.mxu0 0.0
    %5132 = vmatprep.subr.mxu0 0.0
    %5133 = vmatpush1.msra.mxu0 0.0
    %5134 = vmatprep.subr.mxu0 0.0
    %5135 = vmatpush1.msra.mxu0 0.0
    %5136 = vmatprep.subr.mxu0 0.0
    %5137 = vmatpush1.msra.mxu0 0.0
    %5138 = vmatprep.subr.mxu0 0.0
    %5139 = vmatpush1.msra.mxu0 0.0
    %5140 = vmatprep.subr.mxu0 0.0
    %5141 = vmatpush1.msra.mxu0 0.0
    %5142 = vmatprep.subr.mxu0 0.0
    %5143 = vmatpush1.msra.mxu0 0.0
    %5144 = vmatprep.subr.mxu0 0.0
    %5145 = vmatpush1.msra.mxu0 0.0
    %5146 = vmatprep.subr.mxu0 0.0
    %5147 = vmatpush1.msra.mxu0 0.0
    %5148 = vmatprep.subr.mxu0 0.0
    %5149 = vmatpush1.msra.mxu0 0.0
    %5150 = vmatprep.subr.mxu0 0.0
    %5151 = vmatpush1.msra.mxu0 0.0
    %5152 = vmatprep.subr.mxu0 0.0
    %5153 = vmatpush1.msra.mxu0 0.0
    %5154 = vmatprep.subr.mxu0 0.0
    %5155 = vmatpush1.msra.mxu0 %v5120
    %5156 = vmatprep.subr.mxu0 0.0
    %5157 = vmatpush2.msra.mxu0 0.0
    %5158 = vmatprep.subr.mxu0 0.0
    %5159 = vmatpush2.msra.mxu0 0.0
    %5160 = vmatprep.subr.mxu0 0.0
    %5161 = vmatpush2.msra.mxu0 0.0
    %5162 = vmatprep.subr.mxu0 0.0
    %5163 = vmatpush2.msra.mxu0 0.0
    %5164 = vmatprep.subr.mxu0 0.0
    %5165 = vmatpush2.msra.mxu0 0.0
    %5166 = vmatprep.subr.mxu0 0.0
    %5167 = vmatpush2.msra.mxu0 0.0
    %5168 = vmatprep.subr.mxu0 0.0
    %5169 = vmatpush2.msra.mxu0 0.0
    %5170 = vmatprep.subr.mxu0 0.0
    %5171 = vmatpush2.msra.mxu0 0.0
    %5172 = vmatprep.subr.mxu0 0.0
    %5173 = vmatpush2.msra.mxu0 0.0
    %5174 = vmatprep.subr.mxu0 0.0
    %5175 = vmatpush2.msra.mxu0 0.0
    %5176 = vmatprep.subr.mxu0 0.0
    %5177 = vmatpush2.msra.mxu0 0.0
    %5178 = vmatprep.subr.mxu0 0.0
    %5179 = vmatpush2.msra.mxu0 0.0
    %5180 = vmatprep.subr.mxu0 0.0
    %5181 = vmatpush2.msra.mxu0 0.0
    %5182 = vmatprep.subr.mxu0 0.0
    %5183 = vmatpush2.msra.mxu0 0.0
    %5184 = vmatprep.subr.mxu0 0.0
    %5185 = vmatpush2.msra.mxu0 0.0
    %5186 = vmatprep.subr.mxu0 0.0
    %5187 = vmatpush2.msra.mxu0 0.0
    %5188 = vmatprep.mubr.f32.mxu0 0.0
    %5189 = vmatmul.mubr.f32.gmra.mxu0 %v5122
    %v5190 = vpop.f32.mrf.mxu0
    %v5191 = vadd.f32 0.0, %v5190
    %v5192 = vpop.f32.mrf.mxu0
    %5193 = vdwg.mxu0
    %v5195 = vsel %vm160, %v5120, 0
    %5197 = vmatprep.subr.mxu0 0.0
    %5198 = vmatpush1.msra.mxu0 0.0
    %5199 = vmatprep.subr.mxu0 0.0
    %5200 = vmatpush1.msra.mxu0 0.0
    %5201 = vmatprep.subr.mxu0 0.0
    %5202 = vmatpush1.msra.mxu0 0.0
    %5203 = vmatprep.subr.mxu0 0.0
    %5204 = vmatpush1.msra.mxu0 0.0
    %5205 = vmatprep.subr.mxu0 0.0
    %5206 = vmatpush1.msra.mxu0 0.0
    %5207 = vmatprep.subr.mxu0 0.0
    %5208 = vmatpush1.msra.mxu0 0.0
    %5209 = vmatprep.subr.mxu0 0.0
    %5210 = vmatpush1.msra.mxu0 0.0
    %5211 = vmatprep.subr.mxu0 0.0
    %5212 = vmatpush1.msra.mxu0 0.0
    %5213 = vmatprep.subr.mxu0 0.0
    %5214 = vmatpush1.msra.mxu0 0.0
    %5215 = vmatprep.subr.mxu0 0.0
    %5216 = vmatpush1.msra.mxu0 0.0
    %5217 = vmatprep.subr.mxu0 0.0
    %5218 = vmatpush1.msra.mxu0 0.0
    %5219 = vmatprep.subr.mxu0 0.0
    %5220 = vmatpush1.msra.mxu0 0.0
    %5221 = vmatprep.subr.mxu0 0.0
    %5222 = vmatpush1.msra.mxu0 0.0
    %5223 = vmatprep.subr.mxu0 0.0
    %5224 = vmatpush1.msra.mxu0 0.0
    %5225 = vmatprep.subr.mxu0 0.0
    %5226 = vmatpush1.msra.mxu0 0.0
    %5227 = vmatprep.subr.mxu0 0.0
    %5228 = vmatpush1.msra.mxu0 %v5043
    %5229 = vmatprep.subr.mxu0 0.0
    %5230 = vmatpush2.msra.mxu0 0.0
    %5231 = vmatprep.subr.mxu0 0.0
    %5232 = vmatpush2.msra.mxu0 0.0
    %5233 = vmatprep.subr.mxu0 0.0
    %5234 = vmatpush2.msra.mxu0 0.0
    %5235 = vmatprep.subr.mxu0 0.0
    %5236 = vmatpush2.msra.mxu0 0.0
    %5237 = vmatprep.subr.mxu0 0.0
    %5238 = vmatpush2.msra.mxu0 0.0
    %5239 = vmatprep.subr.mxu0 0.0
    %5240 = vmatpush2.msra.mxu0 0.0
    %5241 = vmatprep.subr.mxu0 0.0
    %5242 = vmatpush2.msra.mxu0 0.0
    %5243 = vmatprep.subr.mxu0 0.0
    %5244 = vmatpush2.msra.mxu0 0.0
    %5245 = vmatprep.subr.mxu0 0.0
    %5246 = vmatpush2.msra.mxu0 0.0
    %5247 = vmatprep.subr.mxu0 0.0
    %5248 = vmatpush2.msra.mxu0 0.0
    %5249 = vmatprep.subr.mxu0 0.0
    %5250 = vmatpush2.msra.mxu0 0.0
    %5251 = vmatprep.subr.mxu0 0.0
    %5252 = vmatpush2.msra.mxu0 0.0
    %5253 = vmatprep.subr.mxu0 0.0
    %5254 = vmatpush2.msra.mxu0 0.0
    %5255 = vmatprep.subr.mxu0 0.0
    %5256 = vmatpush2.msra.mxu0 0.0
    %5257 = vmatprep.subr.mxu0 0.0
    %5258 = vmatpush2.msra.mxu0 0.0
    %5259 = vmatprep.subr.mxu0 0.0
    %5260 = vmatpush2.msra.mxu0 0.0
    %5261 = vmatprep.mubr.f32.mxu0 0.0
    %5262 = vmatmul.mubr.f32.gmra.mxu0 %v5195
    %v5263 = vpop.f32.mrf.mxu0
    %v5264 = vadd.f32 0.0, %v5263
    %v5265 = vpop.f32.mrf.mxu0
    %5266 = vdwg.mxu0
    %v5268 = vsel %vm160, %v5264, 0
    %5270 = vmatprep.subr.mxu0 0.0
    %5271 = vmatpush1.msra.mxu0 0.0
    %5272 = vmatprep.subr.mxu0 0.0
    %5273 = vmatpush1.msra.mxu0 0.0
    %5274 = vmatprep.subr.mxu0 0.0
    %5275 = vmatpush1.msra.mxu0 0.0
    %5276 = vmatprep.subr.mxu0 0.0
    %5277 = vmatpush1.msra.mxu0 0.0
    %5278 = vmatprep.subr.mxu0 0.0
    %5279 = vmatpush1.msra.mxu0 0.0
    %5280 = vmatprep.subr.mxu0 0.0
    %5281 = vmatpush1.msra.mxu0 0.0
    %5282 = vmatprep.subr.mxu0 0.0
    %5283 = vmatpush1.msra.mxu0 0.0
    %5284 = vmatprep.subr.mxu0 0.0
    %5285 = vmatpush1.msra.mxu0 0.0
    %5286 = vmatprep.subr.mxu0 0.0
    %5287 = vmatpush1.msra.mxu0 0.0
    %5288 = vmatprep.subr.mxu0 0.0
    %5289 = vmatpush1.msra.mxu0 0.0
    %5290 = vmatprep.subr.mxu0 0.0
    %5291 = vmatpush1.msra.mxu0 0.0
    %5292 = vmatprep.subr.mxu0 0.0
    %5293 = vmatpush1.msra.mxu0 0.0
    %5294 = vmatprep.subr.mxu0 0.0
    %5295 = vmatpush1.msra.mxu0 0.0
    %5296 = vmatprep.subr.mxu0 0.0
    %5297 = vmatpush1.msra.mxu0 0.0
    %5298 = vmatprep.subr.mxu0 0.0
    %5299 = vmatpush1.msra.mxu0 0.0
    %5300 = vmatprep.subr.mxu0 0.0
    %5301 = vmatpush1.msra.mxu0 %v5191
    %5302 = vmatprep.subr.mxu0 0.0
    %5303 = vmatpush2.msra.mxu0 0.0
    %5304 = vmatprep.subr.mxu0 0.0
    %5305 = vmatpush2.msra.mxu0 0.0
    %5306 = vmatprep.subr.mxu0 0.0
    %5307 = vmatpush2.msra.mxu0 0.0
    %5308 = vmatprep.subr.mxu0 0.0
    %5309 = vmatpush2.msra.mxu0 0.0
    %5310 = vmatprep.subr.mxu0 0.0
    %5311 = vmatpush2.msra.mxu0 0.0
    %5312 = vmatprep.subr.mxu0 0.0
    %5313 = vmatpush2.msra.mxu0 0.0
    %5314 = vmatprep.subr.mxu0 0.0
    %5315 = vmatpush2.msra.mxu0 0.0
    %5316 = vmatprep.subr.mxu0 0.0
    %5317 = vmatpush2.msra.mxu0 0.0
    %5318 = vmatprep.subr.mxu0 0.0
    %5319 = vmatpush2.msra.mxu0 0.0
    %5320 = vmatprep.subr.mxu0 0.0
    %5321 = vmatpush2.msra.mxu0 0.0
    %5322 = vmatprep.subr.mxu0 0.0
    %5323 = vmatpush2.msra.mxu0 0.0
    %5324 = vmatprep.subr.mxu0 0.0
    %5325 = vmatpush2.msra.mxu0 0.0
    %5326 = vmatprep.subr.mxu0 0.0
    %5327 = vmatpush2.msra.mxu0 0.0
    %5328 = vmatprep.subr.mxu0 0.0
    %5329 = vmatpush2.msra.mxu0 0.0
    %5330 = vmatprep.subr.mxu0 0.0
    %5331 = vmatpush2.msra.mxu0 0.0
    %5332 = vmatprep.subr.mxu0 0.0
    %5333 = vmatpush2.msra.mxu0 0.0
    %5334 = vmatprep.mubr.f32.mxu0 0.0
    %5335 = vmatmul.mubr.f32.gmra.mxu0 %v5268
    %v5336 = vpop.f32.mrf.mxu0
    %v5337 = vadd.f32 0.0, %v5336
    %v5338 = vpop.f32.mrf.mxu0
    %5339 = vdwg.mxu0
    %v5340 = vmul.f32 %v5337, 0.5
    %v5341 = vsub.f32 %v183, %v5340
    %v5343 = vsel %vm160, %v5191, 0
    %5345 = vmatprep.subr.mxu0 0.0
    %5346 = vmatpush1.msra.mxu0 0.0
    %5347 = vmatprep.subr.mxu0 0.0
    %5348 = vmatpush1.msra.mxu0 0.0
    %5349 = vmatprep.subr.mxu0 0.0
    %5350 = vmatpush1.msra.mxu0 0.0
    %5351 = vmatprep.subr.mxu0 0.0
    %5352 = vmatpush1.msra.mxu0 0.0
    %5353 = vmatprep.subr.mxu0 0.0
    %5354 = vmatpush1.msra.mxu0 0.0
    %5355 = vmatprep.subr.mxu0 0.0
    %5356 = vmatpush1.msra.mxu0 0.0
    %5357 = vmatprep.subr.mxu0 0.0
    %5358 = vmatpush1.msra.mxu0 0.0
    %5359 = vmatprep.subr.mxu0 0.0
    %5360 = vmatpush1.msra.mxu0 0.0
    %5361 = vmatprep.subr.mxu0 0.0
    %5362 = vmatpush1.msra.mxu0 0.0
    %5363 = vmatprep.subr.mxu0 0.0
    %5364 = vmatpush1.msra.mxu0 0.0
    %5365 = vmatprep.subr.mxu0 0.0
    %5366 = vmatpush1.msra.mxu0 0.0
    %5367 = vmatprep.subr.mxu0 0.0
    %5368 = vmatpush1.msra.mxu0 0.0
    %5369 = vmatprep.subr.mxu0 0.0
    %5370 = vmatpush1.msra.mxu0 0.0
    %5371 = vmatprep.subr.mxu0 0.0
    %5372 = vmatpush1.msra.mxu0 0.0
    %5373 = vmatprep.subr.mxu0 0.0
    %5374 = vmatpush1.msra.mxu0 0.0
    %5375 = vmatprep.subr.mxu0 0.0
    %5376 = vmatpush1.msra.mxu0 %v5341
    %5377 = vmatprep.subr.mxu0 0.0
    %5378 = vmatpush2.msra.mxu0 0.0
    %5379 = vmatprep.subr.mxu0 0.0
    %5380 = vmatpush2.msra.mxu0 0.0
    %5381 = vmatprep.subr.mxu0 0.0
    %5382 = vmatpush2.msra.mxu0 0.0
    %5383 = vmatprep.subr.mxu0 0.0
    %5384 = vmatpush2.msra.mxu0 0.0
    %5385 = vmatprep.subr.mxu0 0.0
    %5386 = vmatpush2.msra.mxu0 0.0
    %5387 = vmatprep.subr.mxu0 0.0
    %5388 = vmatpush2.msra.mxu0 0.0
    %5389 = vmatprep.subr.mxu0 0.0
    %5390 = vmatpush2.msra.mxu0 0.0
    %5391 = vmatprep.subr.mxu0 0.0
    %5392 = vmatpush2.msra.mxu0 0.0
    %5393 = vmatprep.subr.mxu0 0.0
    %5394 = vmatpush2.msra.mxu0 0.0
    %5395 = vmatprep.subr.mxu0 0.0
    %5396 = vmatpush2.msra.mxu0 0.0
    %5397 = vmatprep.subr.mxu0 0.0
    %5398 = vmatpush2.msra.mxu0 0.0
    %5399 = vmatprep.subr.mxu0 0.0
    %5400 = vmatpush2.msra.mxu0 0.0
    %5401 = vmatprep.subr.mxu0 0.0
    %5402 = vmatpush2.msra.mxu0 0.0
    %5403 = vmatprep.subr.mxu0 0.0
    %5404 = vmatpush2.msra.mxu0 0.0
    %5405 = vmatprep.subr.mxu0 0.0
    %5406 = vmatpush2.msra.mxu0 0.0
    %5407 = vmatprep.subr.mxu0 0.0
    %5408 = vmatpush2.msra.mxu0 0.0
    %5409 = vmatprep.mubr.f32.mxu0 0.0
    %5410 = vmatmul.mubr.f32.gmra.mxu0 %v5343
    %v5411 = vpop.f32.mrf.mxu0
    %v5412 = vadd.f32 0.0, %v5411
    %v5413 = vpop.f32.mrf.mxu0
    %5414 = vdwg.mxu0
    %v5415 = vmul.f32 %v26, %v26
    %v5416 = vsel %vm160, %v5415, 0.0
    %5417 = vadd.xlane.f32.xlu0 %v5416
    %v5418 = vpop.xlane.xlu0 %5417
    %v5419 = vrot.slane %v5418, 4
    %v5420 = vadd.f32 %v5418, %v5419
    %v5421 = vrot.slane %v5420, 2
    %v5422 = vadd.f32 %v5420, %v5421
    %v5423 = vrot.slane %v5422, 1
    %v5424 = vadd.f32 %v5422, %v5423
    %s5425 = vtos %v5424
    %v5426 = vstv %s5425
    %v5427 = vrsqrt.pop %v5426
    %v5428 = vmul.f32 %v5426, %v5427
    %vm5429 = vcmp.eq.f32.partialorder %v5426, inf
    %v5430 = vsel %vm5429, %v5426, %v5428
    %vm5431 = vcmp.eq.f32.partialorder %v5426, 0.0
    %v5432 = vand.u32 %v5426, 2147483648
    %v5433 = vsel %vm5431, %v5432, %v5430
    %s5434 = vtos %v5433
    %v5435 = vstv %s5434
    %v5436 = vrcp.pop %v5435
    %v5437 = vmul.f32 %v26, %v5436
    %5438 = vmatprep.subr.mxu0 0.0
    %5439 = vmatpush1.msra.mxu0 0.0
    %5440 = vmatprep.subr.mxu0 0.0
    %5441 = vmatpush1.msra.mxu0 0.0
    %5442 = vmatprep.subr.mxu0 0.0
    %5443 = vmatpush1.msra.mxu0 0.0
    %5444 = vmatprep.subr.mxu0 0.0
    %5445 = vmatpush1.msra.mxu0 0.0
    %5446 = vmatprep.subr.mxu0 0.0
    %5447 = vmatpush1.msra.mxu0 0.0
    %5448 = vmatprep.subr.mxu0 0.0
    %5449 = vmatpush1.msra.mxu0 0.0
    %5450 = vmatprep.subr.mxu0 0.0
    %5451 = vmatpush1.msra.mxu0 0.0
    %5452 = vmatprep.subr.mxu0 0.0
    %5453 = vmatpush1.msra.mxu0 0.0
    %5454 = vmatprep.subr.mxu0 0.0
    %5455 = vmatpush1.msra.mxu0 0.0
    %5456 = vmatprep.subr.mxu0 0.0
    %5457 = vmatpush1.msra.mxu0 0.0
    %5458 = vmatprep.subr.mxu0 0.0
    %5459 = vmatpush1.msra.mxu0 0.0
    %5460 = vmatprep.subr.mxu0 0.0
    %5461 = vmatpush1.msra.mxu0 0.0
    %5462 = vmatprep.subr.mxu0 0.0
    %5463 = vmatpush1.msra.mxu0 0.0
    %5464 = vmatprep.subr.mxu0 0.0
    %5465 = vmatpush1.msra.mxu0 0.0
    %5466 = vmatprep.subr.mxu0 0.0
    %5467 = vmatpush1.msra.mxu0 0.0
    %5468 = vmatprep.subr.mxu0 0.0
    %5469 = vmatpush1.msra.mxu0 %v5437
    %5470 = vmatprep.subr.mxu0 0.0
    %5471 = vmatpush2.msra.mxu0 0.0
    %5472 = vmatprep.subr.mxu0 0.0
    %5473 = vmatpush2.msra.mxu0 0.0
    %5474 = vmatprep.subr.mxu0 0.0
    %5475 = vmatpush2.msra.mxu0 0.0
    %5476 = vmatprep.subr.mxu0 0.0
    %5477 = vmatpush2.msra.mxu0 0.0
    %5478 = vmatprep.subr.mxu0 0.0
    %5479 = vmatpush2.msra.mxu0 0.0
    %5480 = vmatprep.subr.mxu0 0.0
    %5481 = vmatpush2.msra.mxu0 0.0
    %5482 = vmatprep.subr.mxu0 0.0
    %5483 = vmatpush2.msra.mxu0 0.0
    %5484 = vmatprep.subr.mxu0 0.0
    %5485 = vmatpush2.msra.mxu0 0.0
    %5486 = vmatprep.subr.mxu0 0.0
    %5487 = vmatpush2.msra.mxu0 0.0
    %5488 = vmatprep.subr.mxu0 0.0
    %5489 = vmatpush2.msra.mxu0 0.0
    %5490 = vmatprep.subr.mxu0 0.0
    %5491 = vmatpush2.msra.mxu0 0.0
    %5492 = vmatprep.subr.mxu0 0.0
    %5493 = vmatpush2.msra.mxu0 0.0
    %5494 = vmatprep.subr.mxu0 0.0
    %5495 = vmatpush2.msra.mxu0 0.0
    %5496 = vmatprep.subr.mxu0 0.0
    %5497 = vmatpush2.msra.mxu0 0.0
    %5498 = vmatprep.subr.mxu0 0.0
    %5499 = vmatpush2.msra.mxu0 0.0
    %5500 = vmatprep.subr.mxu0 0.0
    %5501 = vmatpush2.msra.mxu0 0.0
    %5502 = vmatprep.mubr.f32.mxu0 0.0
    %5503 = vmatmul.mubr.f32.gmra.mxu0 %v185
    %v5504 = vpop.f32.mrf.mxu0
    %v5505 = vadd.f32 0.0, %v5504
    %v5506 = vpop.f32.mrf.mxu0
    %5507 = vdwg.mxu0
    %v5508 = vmul.f32 %v5505, 0.5
    %v5509 = vsub.f32 %v183, %v5508
    %v5511 = vsel %vm160, %v5437, 0
    %5513 = vmatprep.subr.mxu0 0.0
    %5514 = vmatpush1.msra.mxu0 0.0
    %5515 = vmatprep.subr.mxu0 0.0
    %5516 = vmatpush1.msra.mxu0 0.0
    %5517 = vmatprep.subr.mxu0 0.0
    %5518 = vmatpush1.msra.mxu0 0.0
    %5519 = vmatprep.subr.mxu0 0.0
    %5520 = vmatpush1.msra.mxu0 0.0
    %5521 = vmatprep.subr.mxu0 0.0
    %5522 = vmatpush1.msra.mxu0 0.0
    %5523 = vmatprep.subr.mxu0 0.0
    %5524 = vmatpush1.msra.mxu0 0.0
    %5525 = vmatprep.subr.mxu0 0.0
    %5526 = vmatpush1.msra.mxu0 0.0
    %5527 = vmatprep.subr.mxu0 0.0
    %5528 = vmatpush1.msra.mxu0 0.0
    %5529 = vmatprep.subr.mxu0 0.0
    %5530 = vmatpush1.msra.mxu0 0.0
    %5531 = vmatprep.subr.mxu0 0.0
    %5532 = vmatpush1.msra.mxu0 0.0
    %5533 = vmatprep.subr.mxu0 0.0
    %5534 = vmatpush1.msra.mxu0 0.0
    %5535 = vmatprep.subr.mxu0 0.0
    %5536 = vmatpush1.msra.mxu0 0.0
    %5537 = vmatprep.subr.mxu0 0.0
    %5538 = vmatpush1.msra.mxu0 0.0
    %5539 = vmatprep.subr.mxu0 0.0
    %5540 = vmatpush1.msra.mxu0 0.0
    %5541 = vmatprep.subr.mxu0 0.0
    %5542 = vmatpush1.msra.mxu0 0.0
    %5543 = vmatprep.subr.mxu0 0.0
    %5544 = vmatpush1.msra.mxu0 %v5509
    %5545 = vmatprep.subr.mxu0 0.0
    %5546 = vmatpush2.msra.mxu0 0.0
    %5547 = vmatprep.subr.mxu0 0.0
    %5548 = vmatpush2.msra.mxu0 0.0
    %5549 = vmatprep.subr.mxu0 0.0
    %5550 = vmatpush2.msra.mxu0 0.0
    %5551 = vmatprep.subr.mxu0 0.0
    %5552 = vmatpush2.msra.mxu0 0.0
    %5553 = vmatprep.subr.mxu0 0.0
    %5554 = vmatpush2.msra.mxu0 0.0
    %5555 = vmatprep.subr.mxu0 0.0
    %5556 = vmatpush2.msra.mxu0 0.0
    %5557 = vmatprep.subr.mxu0 0.0
    %5558 = vmatpush2.msra.mxu0 0.0
    %5559 = vmatprep.subr.mxu0 0.0
    %5560 = vmatpush2.msra.mxu0 0.0
    %5561 = vmatprep.subr.mxu0 0.0
    %5562 = vmatpush2.msra.mxu0 0.0
    %5563 = vmatprep.subr.mxu0 0.0
    %5564 = vmatpush2.msra.mxu0 0.0
    %5565 = vmatprep.subr.mxu0 0.0
    %5566 = vmatpush2.msra.mxu0 0.0
    %5567 = vmatprep.subr.mxu0 0.0
    %5568 = vmatpush2.msra.mxu0 0.0
    %5569 = vmatprep.subr.mxu0 0.0
    %5570 = vmatpush2.msra.mxu0 0.0
    %5571 = vmatprep.subr.mxu0 0.0
    %5572 = vmatpush2.msra.mxu0 0.0
    %5573 = vmatprep.subr.mxu0 0.0
    %5574 = vmatpush2.msra.mxu0 0.0
    %5575 = vmatprep.subr.mxu0 0.0
    %5576 = vmatpush2.msra.mxu0 0.0
    %5577 = vmatprep.mubr.f32.mxu0 0.0
    %5578 = vmatmul.mubr.f32.gmra.mxu0 %v5511
    %v5579 = vpop.f32.mrf.mxu0
    %v5580 = vadd.f32 0.0, %v5579
    %v5581 = vpop.f32.mrf.mxu0
    %5582 = vdwg.mxu0
    %v5584 = vsel %vm160, %v5509, 0
    %5586 = vmatprep.subr.mxu0 0.0
    %5587 = vmatpush1.msra.mxu0 0.0
    %5588 = vmatprep.subr.mxu0 0.0
    %5589 = vmatpush1.msra.mxu0 0.0
    %5590 = vmatprep.subr.mxu0 0.0
    %5591 = vmatpush1.msra.mxu0 0.0
    %5592 = vmatprep.subr.mxu0 0.0
    %5593 = vmatpush1.msra.mxu0 0.0
    %5594 = vmatprep.subr.mxu0 0.0
    %5595 = vmatpush1.msra.mxu0 0.0
    %5596 = vmatprep.subr.mxu0 0.0
    %5597 = vmatpush1.msra.mxu0 0.0
    %5598 = vmatprep.subr.mxu0 0.0
    %5599 = vmatpush1.msra.mxu0 0.0
    %5600 = vmatprep.subr.mxu0 0.0
    %5601 = vmatpush1.msra.mxu0 0.0
    %5602 = vmatprep.subr.mxu0 0.0
    %5603 = vmatpush1.msra.mxu0 0.0
    %5604 = vmatprep.subr.mxu0 0.0
    %5605 = vmatpush1.msra.mxu0 0.0
    %5606 = vmatprep.subr.mxu0 0.0
    %5607 = vmatpush1.msra.mxu0 0.0
    %5608 = vmatprep.subr.mxu0 0.0
    %5609 = vmatpush1.msra.mxu0 0.0
    %5610 = vmatprep.subr.mxu0 0.0
    %5611 = vmatpush1.msra.mxu0 0.0
    %5612 = vmatprep.subr.mxu0 0.0
    %5613 = vmatpush1.msra.mxu0 0.0
    %5614 = vmatprep.subr.mxu0 0.0
    %5615 = vmatpush1.msra.mxu0 0.0
    %5616 = vmatprep.subr.mxu0 0.0
    %5617 = vmatpush1.msra.mxu0 %v34
    %5618 = vmatprep.subr.mxu0 0.0
    %5619 = vmatpush2.msra.mxu0 0.0
    %5620 = vmatprep.subr.mxu0 0.0
    %5621 = vmatpush2.msra.mxu0 0.0
    %5622 = vmatprep.subr.mxu0 0.0
    %5623 = vmatpush2.msra.mxu0 0.0
    %5624 = vmatprep.subr.mxu0 0.0
    %5625 = vmatpush2.msra.mxu0 0.0
    %5626 = vmatprep.subr.mxu0 0.0
    %5627 = vmatpush2.msra.mxu0 0.0
    %5628 = vmatprep.subr.mxu0 0.0
    %5629 = vmatpush2.msra.mxu0 0.0
    %5630 = vmatprep.subr.mxu0 0.0
    %5631 = vmatpush2.msra.mxu0 0.0
    %5632 = vmatprep.subr.mxu0 0.0
    %5633 = vmatpush2.msra.mxu0 0.0
    %5634 = vmatprep.subr.mxu0 0.0
    %5635 = vmatpush2.msra.mxu0 0.0
    %5636 = vmatprep.subr.mxu0 0.0
    %5637 = vmatpush2.msra.mxu0 0.0
    %5638 = vmatprep.subr.mxu0 0.0
    %5639 = vmatpush2.msra.mxu0 0.0
    %5640 = vmatprep.subr.mxu0 0.0
    %5641 = vmatpush2.msra.mxu0 0.0
    %5642 = vmatprep.subr.mxu0 0.0
    %5643 = vmatpush2.msra.mxu0 0.0
    %5644 = vmatprep.subr.mxu0 0.0
    %5645 = vmatpush2.msra.mxu0 0.0
    %5646 = vmatprep.subr.mxu0 0.0
    %5647 = vmatpush2.msra.mxu0 0.0
    %5648 = vmatprep.subr.mxu0 0.0
    %5649 = vmatpush2.msra.mxu0 0.0
    %5650 = vmatprep.mubr.f32.mxu0 0.0
    %5651 = vmatmul.mubr.f32.gmra.mxu0 %v5584
    %v5652 = vpop.f32.mrf.mxu0
    %v5653 = vadd.f32 0.0, %v5652
    %v5654 = vpop.f32.mrf.mxu0
    %5655 = vdwg.mxu0
    %v5657 = vsel %vm160, %v5653, 0
    %5659 = vmatprep.subr.mxu0 0.0
    %5660 = vmatpush1.msra.mxu0 0.0
    %5661 = vmatprep.subr.mxu0 0.0
    %5662 = vmatpush1.msra.mxu0 0.0
    %5663 = vmatprep.subr.mxu0 0.0
    %5664 = vmatpush1.msra.mxu0 0.0
    %5665 = vmatprep.subr.mxu0 0.0
    %5666 = vmatpush1.msra.mxu0 0.0
    %5667 = vmatprep.subr.mxu0 0.0
    %5668 = vmatpush1.msra.mxu0 0.0
    %5669 = vmatprep.subr.mxu0 0.0
    %5670 = vmatpush1.msra.mxu0 0.0
    %5671 = vmatprep.subr.mxu0 0.0
    %5672 = vmatpush1.msra.mxu0 0.0
    %5673 = vmatprep.subr.mxu0 0.0
    %5674 = vmatpush1.msra.mxu0 0.0
    %5675 = vmatprep.subr.mxu0 0.0
    %5676 = vmatpush1.msra.mxu0 0.0
    %5677 = vmatprep.subr.mxu0 0.0
    %5678 = vmatpush1.msra.mxu0 0.0
    %5679 = vmatprep.subr.mxu0 0.0
    %5680 = vmatpush1.msra.mxu0 0.0
    %5681 = vmatprep.subr.mxu0 0.0
    %5682 = vmatpush1.msra.mxu0 0.0
    %5683 = vmatprep.subr.mxu0 0.0
    %5684 = vmatpush1.msra.mxu0 0.0
    %5685 = vmatprep.subr.mxu0 0.0
    %5686 = vmatpush1.msra.mxu0 0.0
    %5687 = vmatprep.subr.mxu0 0.0
    %5688 = vmatpush1.msra.mxu0 0.0
    %5689 = vmatprep.subr.mxu0 0.0
    %5690 = vmatpush1.msra.mxu0 %v5580
    %5691 = vmatprep.subr.mxu0 0.0
    %5692 = vmatpush2.msra.mxu0 0.0
    %5693 = vmatprep.subr.mxu0 0.0
    %5694 = vmatpush2.msra.mxu0 0.0
    %5695 = vmatprep.subr.mxu0 0.0
    %5696 = vmatpush2.msra.mxu0 0.0
    %5697 = vmatprep.subr.mxu0 0.0
    %5698 = vmatpush2.msra.mxu0 0.0
    %5699 = vmatprep.subr.mxu0 0.0
    %5700 = vmatpush2.msra.mxu0 0.0
    %5701 = vmatprep.subr.mxu0 0.0
    %5702 = vmatpush2.msra.mxu0 0.0
    %5703 = vmatprep.subr.mxu0 0.0
    %5704 = vmatpush2.msra.mxu0 0.0
    %5705 = vmatprep.subr.mxu0 0.0
    %5706 = vmatpush2.msra.mxu0 0.0
    %5707 = vmatprep.subr.mxu0 0.0
    %5708 = vmatpush2.msra.mxu0 0.0
    %5709 = vmatprep.subr.mxu0 0.0
    %5710 = vmatpush2.msra.mxu0 0.0
    %5711 = vmatprep.subr.mxu0 0.0
    %5712 = vmatpush2.msra.mxu0 0.0
    %5713 = vmatprep.subr.mxu0 0.0
    %5714 = vmatpush2.msra.mxu0 0.0
    %5715 = vmatprep.subr.mxu0 0.0
    %5716 = vmatpush2.msra.mxu0 0.0
    %5717 = vmatprep.subr.mxu0 0.0
    %5718 = vmatpush2.msra.mxu0 0.0
    %5719 = vmatprep.subr.mxu0 0.0
    %5720 = vmatpush2.msra.mxu0 0.0
    %5721 = vmatprep.subr.mxu0 0.0
    %5722 = vmatpush2.msra.mxu0 0.0
    %5723 = vmatprep.mubr.f32.mxu0 0.0
    %5724 = vmatmul.mubr.f32.gmra.mxu0 %v5657
    %v5725 = vpop.f32.mrf.mxu0
    %v5726 = vadd.f32 0.0, %v5725
    %v5727 = vpop.f32.mrf.mxu0
    %5728 = vdwg.mxu0
    %v5729 = vmul.f32 %v5726, 0.5
    %v5730 = vsub.f32 %v183, %v5729
    %v5732 = vsel %vm160, %v5580, 0
    %5734 = vmatprep.subr.mxu0 0.0
    %5735 = vmatpush1.msra.mxu0 0.0
    %5736 = vmatprep.subr.mxu0 0.0
    %5737 = vmatpush1.msra.mxu0 0.0
    %5738 = vmatprep.subr.mxu0 0.0
    %5739 = vmatpush1.msra.mxu0 0.0
    %5740 = vmatprep.subr.mxu0 0.0
    %5741 = vmatpush1.msra.mxu0 0.0
    %5742 = vmatprep.subr.mxu0 0.0
    %5743 = vmatpush1.msra.mxu0 0.0
    %5744 = vmatprep.subr.mxu0 0.0
    %5745 = vmatpush1.msra.mxu0 0.0
    %5746 = vmatprep.subr.mxu0 0.0
    %5747 = vmatpush1.msra.mxu0 0.0
    %5748 = vmatprep.subr.mxu0 0.0
    %5749 = vmatpush1.msra.mxu0 0.0
    %5750 = vmatprep.subr.mxu0 0.0
    %5751 = vmatpush1.msra.mxu0 0.0
    %5752 = vmatprep.subr.mxu0 0.0
    %5753 = vmatpush1.msra.mxu0 0.0
    %5754 = vmatprep.subr.mxu0 0.0
    %5755 = vmatpush1.msra.mxu0 0.0
    %5756 = vmatprep.subr.mxu0 0.0
    %5757 = vmatpush1.msra.mxu0 0.0
    %5758 = vmatprep.subr.mxu0 0.0
    %5759 = vmatpush1.msra.mxu0 0.0
    %5760 = vmatprep.subr.mxu0 0.0
    %5761 = vmatpush1.msra.mxu0 0.0
    %5762 = vmatprep.subr.mxu0 0.0
    %5763 = vmatpush1.msra.mxu0 0.0
    %5764 = vmatprep.subr.mxu0 0.0
    %5765 = vmatpush1.msra.mxu0 %v5730
    %5766 = vmatprep.subr.mxu0 0.0
    %5767 = vmatpush2.msra.mxu0 0.0
    %5768 = vmatprep.subr.mxu0 0.0
    %5769 = vmatpush2.msra.mxu0 0.0
    %5770 = vmatprep.subr.mxu0 0.0
    %5771 = vmatpush2.msra.mxu0 0.0
    %5772 = vmatprep.subr.mxu0 0.0
    %5773 = vmatpush2.msra.mxu0 0.0
    %5774 = vmatprep.subr.mxu0 0.0
    %5775 = vmatpush2.msra.mxu0 0.0
    %5776 = vmatprep.subr.mxu0 0.0
    %5777 = vmatpush2.msra.mxu0 0.0
    %5778 = vmatprep.subr.mxu0 0.0
    %5779 = vmatpush2.msra.mxu0 0.0
    %5780 = vmatprep.subr.mxu0 0.0
    %5781 = vmatpush2.msra.mxu0 0.0
    %5782 = vmatprep.subr.mxu0 0.0
    %5783 = vmatpush2.msra.mxu0 0.0
    %5784 = vmatprep.subr.mxu0 0.0
    %5785 = vmatpush2.msra.mxu0 0.0
    %5786 = vmatprep.subr.mxu0 0.0
    %5787 = vmatpush2.msra.mxu0 0.0
    %5788 = vmatprep.subr.mxu0 0.0
    %5789 = vmatpush2.msra.mxu0 0.0
    %5790 = vmatprep.subr.mxu0 0.0
    %5791 = vmatpush2.msra.mxu0 0.0
    %5792 = vmatprep.subr.mxu0 0.0
    %5793 = vmatpush2.msra.mxu0 0.0
    %5794 = vmatprep.subr.mxu0 0.0
    %5795 = vmatpush2.msra.mxu0 0.0
    %5796 = vmatprep.subr.mxu0 0.0
    %5797 = vmatpush2.msra.mxu0 0.0
    %5798 = vmatprep.mubr.f32.mxu0 0.0
    %5799 = vmatmul.mubr.f32.gmra.mxu0 %v5732
    %v5800 = vpop.f32.mrf.mxu0
    %v5801 = vadd.f32 0.0, %v5800
    %v5802 = vpop.f32.mrf.mxu0
    %5803 = vdwg.mxu0
    %v5805 = vsel %vm160, %v5730, 0
    %5807 = vmatprep.subr.mxu0 0.0
    %5808 = vmatpush1.msra.mxu0 0.0
    %5809 = vmatprep.subr.mxu0 0.0
    %5810 = vmatpush1.msra.mxu0 0.0
    %5811 = vmatprep.subr.mxu0 0.0
    %5812 = vmatpush1.msra.mxu0 0.0
    %5813 = vmatprep.subr.mxu0 0.0
    %5814 = vmatpush1.msra.mxu0 0.0
    %5815 = vmatprep.subr.mxu0 0.0
    %5816 = vmatpush1.msra.mxu0 0.0
    %5817 = vmatprep.subr.mxu0 0.0
    %5818 = vmatpush1.msra.mxu0 0.0
    %5819 = vmatprep.subr.mxu0 0.0
    %5820 = vmatpush1.msra.mxu0 0.0
    %5821 = vmatprep.subr.mxu0 0.0
    %5822 = vmatpush1.msra.mxu0 0.0
    %5823 = vmatprep.subr.mxu0 0.0
    %5824 = vmatpush1.msra.mxu0 0.0
    %5825 = vmatprep.subr.mxu0 0.0
    %5826 = vmatpush1.msra.mxu0 0.0
    %5827 = vmatprep.subr.mxu0 0.0
    %5828 = vmatpush1.msra.mxu0 0.0
    %5829 = vmatprep.subr.mxu0 0.0
    %5830 = vmatpush1.msra.mxu0 0.0
    %5831 = vmatprep.subr.mxu0 0.0
    %5832 = vmatpush1.msra.mxu0 0.0
    %5833 = vmatprep.subr.mxu0 0.0
    %5834 = vmatpush1.msra.mxu0 0.0
    %5835 = vmatprep.subr.mxu0 0.0
    %5836 = vmatpush1.msra.mxu0 0.0
    %5837 = vmatprep.subr.mxu0 0.0
    %5838 = vmatpush1.msra.mxu0 %v5653
    %5839 = vmatprep.subr.mxu0 0.0
    %5840 = vmatpush2.msra.mxu0 0.0
    %5841 = vmatprep.subr.mxu0 0.0
    %5842 = vmatpush2.msra.mxu0 0.0
    %5843 = vmatprep.subr.mxu0 0.0
    %5844 = vmatpush2.msra.mxu0 0.0
    %5845 = vmatprep.subr.mxu0 0.0
    %5846 = vmatpush2.msra.mxu0 0.0
    %5847 = vmatprep.subr.mxu0 0.0
    %5848 = vmatpush2.msra.mxu0 0.0
    %5849 = vmatprep.subr.mxu0 0.0
    %5850 = vmatpush2.msra.mxu0 0.0
    %5851 = vmatprep.subr.mxu0 0.0
    %5852 = vmatpush2.msra.mxu0 0.0
    %5853 = vmatprep.subr.mxu0 0.0
    %5854 = vmatpush2.msra.mxu0 0.0
    %5855 = vmatprep.subr.mxu0 0.0
    %5856 = vmatpush2.msra.mxu0 0.0
    %5857 = vmatprep.subr.mxu0 0.0
    %5858 = vmatpush2.msra.mxu0 0.0
    %5859 = vmatprep.subr.mxu0 0.0
    %5860 = vmatpush2.msra.mxu0 0.0
    %5861 = vmatprep.subr.mxu0 0.0
    %5862 = vmatpush2.msra.mxu0 0.0
    %5863 = vmatprep.subr.mxu0 0.0
    %5864 = vmatpush2.msra.mxu0 0.0
    %5865 = vmatprep.subr.mxu0 0.0
    %5866 = vmatpush2.msra.mxu0 0.0
    %5867 = vmatprep.subr.mxu0 0.0
    %5868 = vmatpush2.msra.mxu0 0.0
    %5869 = vmatprep.subr.mxu0 0.0
    %5870 = vmatpush2.msra.mxu0 0.0
    %5871 = vmatprep.mubr.f32.mxu0 0.0
    %5872 = vmatmul.mubr.f32.gmra.mxu0 %v5805
    %v5873 = vpop.f32.mrf.mxu0
    %v5874 = vadd.f32 0.0, %v5873
    %v5875 = vpop.f32.mrf.mxu0
    %5876 = vdwg.mxu0
    %v5878 = vsel %vm160, %v5874, 0
    %5880 = vmatprep.subr.mxu0 0.0
    %5881 = vmatpush1.msra.mxu0 0.0
    %5882 = vmatprep.subr.mxu0 0.0
    %5883 = vmatpush1.msra.mxu0 0.0
    %5884 = vmatprep.subr.mxu0 0.0
    %5885 = vmatpush1.msra.mxu0 0.0
    %5886 = vmatprep.subr.mxu0 0.0
    %5887 = vmatpush1.msra.mxu0 0.0
    %5888 = vmatprep.subr.mxu0 0.0
    %5889 = vmatpush1.msra.mxu0 0.0
    %5890 = vmatprep.subr.mxu0 0.0
    %5891 = vmatpush1.msra.mxu0 0.0
    %5892 = vmatprep.subr.mxu0 0.0
    %5893 = vmatpush1.msra.mxu0 0.0
    %5894 = vmatprep.subr.mxu0 0.0
    %5895 = vmatpush1.msra.mxu0 0.0
    %5896 = vmatprep.subr.mxu0 0.0
    %5897 = vmatpush1.msra.mxu0 0.0
    %5898 = vmatprep.subr.mxu0 0.0
    %5899 = vmatpush1.msra.mxu0 0.0
    %5900 = vmatprep.subr.mxu0 0.0
    %5901 = vmatpush1.msra.mxu0 0.0
    %5902 = vmatprep.subr.mxu0 0.0
    %5903 = vmatpush1.msra.mxu0 0.0
    %5904 = vmatprep.subr.mxu0 0.0
    %5905 = vmatpush1.msra.mxu0 0.0
    %5906 = vmatprep.subr.mxu0 0.0
    %5907 = vmatpush1.msra.mxu0 0.0
    %5908 = vmatprep.subr.mxu0 0.0
    %5909 = vmatpush1.msra.mxu0 0.0
    %5910 = vmatprep.subr.mxu0 0.0
    %5911 = vmatpush1.msra.mxu0 %v5801
    %5912 = vmatprep.subr.mxu0 0.0
    %5913 = vmatpush2.msra.mxu0 0.0
    %5914 = vmatprep.subr.mxu0 0.0
    %5915 = vmatpush2.msra.mxu0 0.0
    %5916 = vmatprep.subr.mxu0 0.0
    %5917 = vmatpush2.msra.mxu0 0.0
    %5918 = vmatprep.subr.mxu0 0.0
    %5919 = vmatpush2.msra.mxu0 0.0
    %5920 = vmatprep.subr.mxu0 0.0
    %5921 = vmatpush2.msra.mxu0 0.0
    %5922 = vmatprep.subr.mxu0 0.0
    %5923 = vmatpush2.msra.mxu0 0.0
    %5924 = vmatprep.subr.mxu0 0.0
    %5925 = vmatpush2.msra.mxu0 0.0
    %5926 = vmatprep.subr.mxu0 0.0
    %5927 = vmatpush2.msra.mxu0 0.0
    %5928 = vmatprep.subr.mxu0 0.0
    %5929 = vmatpush2.msra.mxu0 0.0
    %5930 = vmatprep.subr.mxu0 0.0
    %5931 = vmatpush2.msra.mxu0 0.0
    %5932 = vmatprep.subr.mxu0 0.0
    %5933 = vmatpush2.msra.mxu0 0.0
    %5934 = vmatprep.subr.mxu0 0.0
    %5935 = vmatpush2.msra.mxu0 0.0
    %5936 = vmatprep.subr.mxu0 0.0
    %5937 = vmatpush2.msra.mxu0 0.0
    %5938 = vmatprep.subr.mxu0 0.0
    %5939 = vmatpush2.msra.mxu0 0.0
    %5940 = vmatprep.subr.mxu0 0.0
    %5941 = vmatpush2.msra.mxu0 0.0
    %5942 = vmatprep.subr.mxu0 0.0
    %5943 = vmatpush2.msra.mxu0 0.0
    %5944 = vmatprep.mubr.f32.mxu0 0.0
    %5945 = vmatmul.mubr.f32.gmra.mxu0 %v5878
    %v5946 = vpop.f32.mrf.mxu0
    %v5947 = vadd.f32 0.0, %v5946
    %v5948 = vpop.f32.mrf.mxu0
    %5949 = vdwg.mxu0
    %v5950 = vmul.f32 %v5947, 0.5
    %v5951 = vsub.f32 %v183, %v5950
    %v5953 = vsel %vm160, %v5801, 0
    %5955 = vmatprep.subr.mxu0 0.0
    %5956 = vmatpush1.msra.mxu0 0.0
    %5957 = vmatprep.subr.mxu0 0.0
    %5958 = vmatpush1.msra.mxu0 0.0
    %5959 = vmatprep.subr.mxu0 0.0
    %5960 = vmatpush1.msra.mxu0 0.0
    %5961 = vmatprep.subr.mxu0 0.0
    %5962 = vmatpush1.msra.mxu0 0.0
    %5963 = vmatprep.subr.mxu0 0.0
    %5964 = vmatpush1.msra.mxu0 0.0
    %5965 = vmatprep.subr.mxu0 0.0
    %5966 = vmatpush1.msra.mxu0 0.0
    %5967 = vmatprep.subr.mxu0 0.0
    %5968 = vmatpush1.msra.mxu0 0.0
    %5969 = vmatprep.subr.mxu0 0.0
    %5970 = vmatpush1.msra.mxu0 0.0
    %5971 = vmatprep.subr.mxu0 0.0
    %5972 = vmatpush1.msra.mxu0 0.0
    %5973 = vmatprep.subr.mxu0 0.0
    %5974 = vmatpush1.msra.mxu0 0.0
    %5975 = vmatprep.subr.mxu0 0.0
    %5976 = vmatpush1.msra.mxu0 0.0
    %5977 = vmatprep.subr.mxu0 0.0
    %5978 = vmatpush1.msra.mxu0 0.0
    %5979 = vmatprep.subr.mxu0 0.0
    %5980 = vmatpush1.msra.mxu0 0.0
    %5981 = vmatprep.subr.mxu0 0.0
    %5982 = vmatpush1.msra.mxu0 0.0
    %5983 = vmatprep.subr.mxu0 0.0
    %5984 = vmatpush1.msra.mxu0 0.0
    %5985 = vmatprep.subr.mxu0 0.0
    %5986 = vmatpush1.msra.mxu0 %v5951
    %5987 = vmatprep.subr.mxu0 0.0
    %5988 = vmatpush2.msra.mxu0 0.0
    %5989 = vmatprep.subr.mxu0 0.0
    %5990 = vmatpush2.msra.mxu0 0.0
    %5991 = vmatprep.subr.mxu0 0.0
    %5992 = vmatpush2.msra.mxu0 0.0
    %5993 = vmatprep.subr.mxu0 0.0
    %5994 = vmatpush2.msra.mxu0 0.0
    %5995 = vmatprep.subr.mxu0 0.0
    %5996 = vmatpush2.msra.mxu0 0.0
    %5997 = vmatprep.subr.mxu0 0.0
    %5998 = vmatpush2.msra.mxu0 0.0
    %5999 = vmatprep.subr.mxu0 0.0
    %6000 = vmatpush2.msra.mxu0 0.0
    %6001 = vmatprep.subr.mxu0 0.0
    %6002 = vmatpush2.msra.mxu0 0.0
    %6003 = vmatprep.subr.mxu0 0.0
    %6004 = vmatpush2.msra.mxu0 0.0
    %6005 = vmatprep.subr.mxu0 0.0
    %6006 = vmatpush2.msra.mxu0 0.0
    %6007 = vmatprep.subr.mxu0 0.0
    %6008 = vmatpush2.msra.mxu0 0.0
    %6009 = vmatprep.subr.mxu0 0.0
    %6010 = vmatpush2.msra.mxu0 0.0
    %6011 = vmatprep.subr.mxu0 0.0
    %6012 = vmatpush2.msra.mxu0 0.0
    %6013 = vmatprep.subr.mxu0 0.0
    %6014 = vmatpush2.msra.mxu0 0.0
    %6015 = vmatprep.subr.mxu0 0.0
    %6016 = vmatpush2.msra.mxu0 0.0
    %6017 = vmatprep.subr.mxu0 0.0
    %6018 = vmatpush2.msra.mxu0 0.0
    %6019 = vmatprep.mubr.f32.mxu0 0.0
    %6020 = vmatmul.mubr.f32.gmra.mxu0 %v5953
    %v6021 = vpop.f32.mrf.mxu0
    %v6022 = vadd.f32 0.0, %v6021
    %v6023 = vpop.f32.mrf.mxu0
    %6024 = vdwg.mxu0
    %v6026 = vsel %vm160, %v5951, 0
    %6028 = vmatprep.subr.mxu0 0.0
    %6029 = vmatpush1.msra.mxu0 0.0
    %6030 = vmatprep.subr.mxu0 0.0
    %6031 = vmatpush1.msra.mxu0 0.0
    %6032 = vmatprep.subr.mxu0 0.0
    %6033 = vmatpush1.msra.mxu0 0.0
    %6034 = vmatprep.subr.mxu0 0.0
    %6035 = vmatpush1.msra.mxu0 0.0
    %6036 = vmatprep.subr.mxu0 0.0
    %6037 = vmatpush1.msra.mxu0 0.0
    %6038 = vmatprep.subr.mxu0 0.0
    %6039 = vmatpush1.msra.mxu0 0.0
    %6040 = vmatprep.subr.mxu0 0.0
    %6041 = vmatpush1.msra.mxu0 0.0
    %6042 = vmatprep.subr.mxu0 0.0
    %6043 = vmatpush1.msra.mxu0 0.0
    %6044 = vmatprep.subr.mxu0 0.0
    %6045 = vmatpush1.msra.mxu0 0.0
    %6046 = vmatprep.subr.mxu0 0.0
    %6047 = vmatpush1.msra.mxu0 0.0
    %6048 = vmatprep.subr.mxu0 0.0
    %6049 = vmatpush1.msra.mxu0 0.0
    %6050 = vmatprep.subr.mxu0 0.0
    %6051 = vmatpush1.msra.mxu0 0.0
    %6052 = vmatprep.subr.mxu0 0.0
    %6053 = vmatpush1.msra.mxu0 0.0
    %6054 = vmatprep.subr.mxu0 0.0
    %6055 = vmatpush1.msra.mxu0 0.0
    %6056 = vmatprep.subr.mxu0 0.0
    %6057 = vmatpush1.msra.mxu0 0.0
    %6058 = vmatprep.subr.mxu0 0.0
    %6059 = vmatpush1.msra.mxu0 %v5874
    %6060 = vmatprep.subr.mxu0 0.0
    %6061 = vmatpush2.msra.mxu0 0.0
    %6062 = vmatprep.subr.mxu0 0.0
    %6063 = vmatpush2.msra.mxu0 0.0
    %6064 = vmatprep.subr.mxu0 0.0
    %6065 = vmatpush2.msra.mxu0 0.0
    %6066 = vmatprep.subr.mxu0 0.0
    %6067 = vmatpush2.msra.mxu0 0.0
    %6068 = vmatprep.subr.mxu0 0.0
    %6069 = vmatpush2.msra.mxu0 0.0
    %6070 = vmatprep.subr.mxu0 0.0
    %6071 = vmatpush2.msra.mxu0 0.0
    %6072 = vmatprep.subr.mxu0 0.0
    %6073 = vmatpush2.msra.mxu0 0.0
    %6074 = vmatprep.subr.mxu0 0.0
    %6075 = vmatpush2.msra.mxu0 0.0
    %6076 = vmatprep.subr.mxu0 0.0
    %6077 = vmatpush2.msra.mxu0 0.0
    %6078 = vmatprep.subr.mxu0 0.0
    %6079 = vmatpush2.msra.mxu0 0.0
    %6080 = vmatprep.subr.mxu0 0.0
    %6081 = vmatpush2.msra.mxu0 0.0
    %6082 = vmatprep.subr.mxu0 0.0
    %6083 = vmatpush2.msra.mxu0 0.0
    %6084 = vmatprep.subr.mxu0 0.0
    %6085 = vmatpush2.msra.mxu0 0.0
    %6086 = vmatprep.subr.mxu0 0.0
    %6087 = vmatpush2.msra.mxu0 0.0
    %6088 = vmatprep.subr.mxu0 0.0
    %6089 = vmatpush2.msra.mxu0 0.0
    %6090 = vmatprep.subr.mxu0 0.0
    %6091 = vmatpush2.msra.mxu0 0.0
    %6092 = vmatprep.mubr.f32.mxu0 0.0
    %6093 = vmatmul.mubr.f32.gmra.mxu0 %v6026
    %v6094 = vpop.f32.mrf.mxu0
    %v6095 = vadd.f32 0.0, %v6094
    %v6096 = vpop.f32.mrf.mxu0
    %6097 = vdwg.mxu0
    %v6099 = vsel %vm160, %v6095, 0
    %6101 = vmatprep.subr.mxu0 0.0
    %6102 = vmatpush1.msra.mxu0 0.0
    %6103 = vmatprep.subr.mxu0 0.0
    %6104 = vmatpush1.msra.mxu0 0.0
    %6105 = vmatprep.subr.mxu0 0.0
    %6106 = vmatpush1.msra.mxu0 0.0
    %6107 = vmatprep.subr.mxu0 0.0
    %6108 = vmatpush1.msra.mxu0 0.0
    %6109 = vmatprep.subr.mxu0 0.0
    %6110 = vmatpush1.msra.mxu0 0.0
    %6111 = vmatprep.subr.mxu0 0.0
    %6112 = vmatpush1.msra.mxu0 0.0
    %6113 = vmatprep.subr.mxu0 0.0
    %6114 = vmatpush1.msra.mxu0 0.0
    %6115 = vmatprep.subr.mxu0 0.0
    %6116 = vmatpush1.msra.mxu0 0.0
    %6117 = vmatprep.subr.mxu0 0.0
    %6118 = vmatpush1.msra.mxu0 0.0
    %6119 = vmatprep.subr.mxu0 0.0
    %6120 = vmatpush1.msra.mxu0 0.0
    %6121 = vmatprep.subr.mxu0 0.0
    %6122 = vmatpush1.msra.mxu0 0.0
    %6123 = vmatprep.subr.mxu0 0.0
    %6124 = vmatpush1.msra.mxu0 0.0
    %6125 = vmatprep.subr.mxu0 0.0
    %6126 = vmatpush1.msra.mxu0 0.0
    %6127 = vmatprep.subr.mxu0 0.0
    %6128 = vmatpush1.msra.mxu0 0.0
    %6129 = vmatprep.subr.mxu0 0.0
    %6130 = vmatpush1.msra.mxu0 0.0
    %6131 = vmatprep.subr.mxu0 0.0
    %6132 = vmatpush1.msra.mxu0 %v6022
    %6133 = vmatprep.subr.mxu0 0.0
    %6134 = vmatpush2.msra.mxu0 0.0
    %6135 = vmatprep.subr.mxu0 0.0
    %6136 = vmatpush2.msra.mxu0 0.0
    %6137 = vmatprep.subr.mxu0 0.0
    %6138 = vmatpush2.msra.mxu0 0.0
    %6139 = vmatprep.subr.mxu0 0.0
    %6140 = vmatpush2.msra.mxu0 0.0
    %6141 = vmatprep.subr.mxu0 0.0
    %6142 = vmatpush2.msra.mxu0 0.0
    %6143 = vmatprep.subr.mxu0 0.0
    %6144 = vmatpush2.msra.mxu0 0.0
    %6145 = vmatprep.subr.mxu0 0.0
    %6146 = vmatpush2.msra.mxu0 0.0
    %6147 = vmatprep.subr.mxu0 0.0
    %6148 = vmatpush2.msra.mxu0 0.0
    %6149 = vmatprep.subr.mxu0 0.0
    %6150 = vmatpush2.msra.mxu0 0.0
    %6151 = vmatprep.subr.mxu0 0.0
    %6152 = vmatpush2.msra.mxu0 0.0
    %6153 = vmatprep.subr.mxu0 0.0
    %6154 = vmatpush2.msra.mxu0 0.0
    %6155 = vmatprep.subr.mxu0 0.0
    %6156 = vmatpush2.msra.mxu0 0.0
    %6157 = vmatprep.subr.mxu0 0.0
    %6158 = vmatpush2.msra.mxu0 0.0
    %6159 = vmatprep.subr.mxu0 0.0
    %6160 = vmatpush2.msra.mxu0 0.0
    %6161 = vmatprep.subr.mxu0 0.0
    %6162 = vmatpush2.msra.mxu0 0.0
    %6163 = vmatprep.subr.mxu0 0.0
    %6164 = vmatpush2.msra.mxu0 0.0
    %6165 = vmatprep.mubr.f32.mxu0 0.0
    %6166 = vmatmul.mubr.f32.gmra.mxu0 %v6099
    %v6167 = vpop.f32.mrf.mxu0
    %v6168 = vadd.f32 0.0, %v6167
    %v6169 = vpop.f32.mrf.mxu0
    %6170 = vdwg.mxu0
    %v6171 = vmul.f32 %v6168, 0.5
    %v6172 = vsub.f32 %v183, %v6171
    %v6174 = vsel %vm160, %v6022, 0
    %6176 = vmatprep.subr.mxu0 0.0
    %6177 = vmatpush1.msra.mxu0 0.0
    %6178 = vmatprep.subr.mxu0 0.0
    %6179 = vmatpush1.msra.mxu0 0.0
    %6180 = vmatprep.subr.mxu0 0.0
    %6181 = vmatpush1.msra.mxu0 0.0
    %6182 = vmatprep.subr.mxu0 0.0
    %6183 = vmatpush1.msra.mxu0 0.0
    %6184 = vmatprep.subr.mxu0 0.0
    %6185 = vmatpush1.msra.mxu0 0.0
    %6186 = vmatprep.subr.mxu0 0.0
    %6187 = vmatpush1.msra.mxu0 0.0
    %6188 = vmatprep.subr.mxu0 0.0
    %6189 = vmatpush1.msra.mxu0 0.0
    %6190 = vmatprep.subr.mxu0 0.0
    %6191 = vmatpush1.msra.mxu0 0.0
    %6192 = vmatprep.subr.mxu0 0.0
    %6193 = vmatpush1.msra.mxu0 0.0
    %6194 = vmatprep.subr.mxu0 0.0
    %6195 = vmatpush1.msra.mxu0 0.0
    %6196 = vmatprep.subr.mxu0 0.0
    %6197 = vmatpush1.msra.mxu0 0.0
    %6198 = vmatprep.subr.mxu0 0.0
    %6199 = vmatpush1.msra.mxu0 0.0
    %6200 = vmatprep.subr.mxu0 0.0
    %6201 = vmatpush1.msra.mxu0 0.0
    %6202 = vmatprep.subr.mxu0 0.0
    %6203 = vmatpush1.msra.mxu0 0.0
    %6204 = vmatprep.subr.mxu0 0.0
    %6205 = vmatpush1.msra.mxu0 0.0
    %6206 = vmatprep.subr.mxu0 0.0
    %6207 = vmatpush1.msra.mxu0 %v6172
    %6208 = vmatprep.subr.mxu0 0.0
    %6209 = vmatpush2.msra.mxu0 0.0
    %6210 = vmatprep.subr.mxu0 0.0
    %6211 = vmatpush2.msra.mxu0 0.0
    %6212 = vmatprep.subr.mxu0 0.0
    %6213 = vmatpush2.msra.mxu0 0.0
    %6214 = vmatprep.subr.mxu0 0.0
    %6215 = vmatpush2.msra.mxu0 0.0
    %6216 = vmatprep.subr.mxu0 0.0
    %6217 = vmatpush2.msra.mxu0 0.0
    %6218 = vmatprep.subr.mxu0 0.0
    %6219 = vmatpush2.msra.mxu0 0.0
    %6220 = vmatprep.subr.mxu0 0.0
    %6221 = vmatpush2.msra.mxu0 0.0
    %6222 = vmatprep.subr.mxu0 0.0
    %6223 = vmatpush2.msra.mxu0 0.0
    %6224 = vmatprep.subr.mxu0 0.0
    %6225 = vmatpush2.msra.mxu0 0.0
    %6226 = vmatprep.subr.mxu0 0.0
    %6227 = vmatpush2.msra.mxu0 0.0
    %6228 = vmatprep.subr.mxu0 0.0
    %6229 = vmatpush2.msra.mxu0 0.0
    %6230 = vmatprep.subr.mxu0 0.0
    %6231 = vmatpush2.msra.mxu0 0.0
    %6232 = vmatprep.subr.mxu0 0.0
    %6233 = vmatpush2.msra.mxu0 0.0
    %6234 = vmatprep.subr.mxu0 0.0
    %6235 = vmatpush2.msra.mxu0 0.0
    %6236 = vmatprep.subr.mxu0 0.0
    %6237 = vmatpush2.msra.mxu0 0.0
    %6238 = vmatprep.subr.mxu0 0.0
    %6239 = vmatpush2.msra.mxu0 0.0
    %6240 = vmatprep.mubr.f32.mxu0 0.0
    %6241 = vmatmul.mubr.f32.gmra.mxu0 %v6174
    %v6242 = vpop.f32.mrf.mxu0
    %v6243 = vadd.f32 0.0, %v6242
    %v6244 = vpop.f32.mrf.mxu0
    %6245 = vdwg.mxu0
    %v6247 = vsel %vm160, %v6172, 0
    %6249 = vmatprep.subr.mxu0 0.0
    %6250 = vmatpush1.msra.mxu0 0.0
    %6251 = vmatprep.subr.mxu0 0.0
    %6252 = vmatpush1.msra.mxu0 0.0
    %6253 = vmatprep.subr.mxu0 0.0
    %6254 = vmatpush1.msra.mxu0 0.0
    %6255 = vmatprep.subr.mxu0 0.0
    %6256 = vmatpush1.msra.mxu0 0.0
    %6257 = vmatprep.subr.mxu0 0.0
    %6258 = vmatpush1.msra.mxu0 0.0
    %6259 = vmatprep.subr.mxu0 0.0
    %6260 = vmatpush1.msra.mxu0 0.0
    %6261 = vmatprep.subr.mxu0 0.0
    %6262 = vmatpush1.msra.mxu0 0.0
    %6263 = vmatprep.subr.mxu0 0.0
    %6264 = vmatpush1.msra.mxu0 0.0
    %6265 = vmatprep.subr.mxu0 0.0
    %6266 = vmatpush1.msra.mxu0 0.0
    %6267 = vmatprep.subr.mxu0 0.0
    %6268 = vmatpush1.msra.mxu0 0.0
    %6269 = vmatprep.subr.mxu0 0.0
    %6270 = vmatpush1.msra.mxu0 0.0
    %6271 = vmatprep.subr.mxu0 0.0
    %6272 = vmatpush1.msra.mxu0 0.0
    %6273 = vmatprep.subr.mxu0 0.0
    %6274 = vmatpush1.msra.mxu0 0.0
    %6275 = vmatprep.subr.mxu0 0.0
    %6276 = vmatpush1.msra.mxu0 0.0
    %6277 = vmatprep.subr.mxu0 0.0
    %6278 = vmatpush1.msra.mxu0 0.0
    %6279 = vmatprep.subr.mxu0 0.0
    %6280 = vmatpush1.msra.mxu0 %v6095
    %6281 = vmatprep.subr.mxu0 0.0
    %6282 = vmatpush2.msra.mxu0 0.0
    %6283 = vmatprep.subr.mxu0 0.0
    %6284 = vmatpush2.msra.mxu0 0.0
    %6285 = vmatprep.subr.mxu0 0.0
    %6286 = vmatpush2.msra.mxu0 0.0
    %6287 = vmatprep.subr.mxu0 0.0
    %6288 = vmatpush2.msra.mxu0 0.0
    %6289 = vmatprep.subr.mxu0 0.0
    %6290 = vmatpush2.msra.mxu0 0.0
    %6291 = vmatprep.subr.mxu0 0.0
    %6292 = vmatpush2.msra.mxu0 0.0
    %6293 = vmatprep.subr.mxu0 0.0
    %6294 = vmatpush2.msra.mxu0 0.0
    %6295 = vmatprep.subr.mxu0 0.0
    %6296 = vmatpush2.msra.mxu0 0.0
    %6297 = vmatprep.subr.mxu0 0.0
    %6298 = vmatpush2.msra.mxu0 0.0
    %6299 = vmatprep.subr.mxu0 0.0
    %6300 = vmatpush2.msra.mxu0 0.0
    %6301 = vmatprep.subr.mxu0 0.0
    %6302 = vmatpush2.msra.mxu0 0.0
    %6303 = vmatprep.subr.mxu0 0.0
    %6304 = vmatpush2.msra.mxu0 0.0
    %6305 = vmatprep.subr.mxu0 0.0
    %6306 = vmatpush2.msra.mxu0 0.0
    %6307 = vmatprep.subr.mxu0 0.0
    %6308 = vmatpush2.msra.mxu0 0.0
    %6309 = vmatprep.subr.mxu0 0.0
    %6310 = vmatpush2.msra.mxu0 0.0
    %6311 = vmatprep.subr.mxu0 0.0
    %6312 = vmatpush2.msra.mxu0 0.0
    %6313 = vmatprep.mubr.f32.mxu0 0.0
    %6314 = vmatmul.mubr.f32.gmra.mxu0 %v6247
    %v6315 = vpop.f32.mrf.mxu0
    %v6316 = vadd.f32 0.0, %v6315
    %v6317 = vpop.f32.mrf.mxu0
    %6318 = vdwg.mxu0
    %v6320 = vsel %vm160, %v6316, 0
    %6322 = vmatprep.subr.mxu0 0.0
    %6323 = vmatpush1.msra.mxu0 0.0
    %6324 = vmatprep.subr.mxu0 0.0
    %6325 = vmatpush1.msra.mxu0 0.0
    %6326 = vmatprep.subr.mxu0 0.0
    %6327 = vmatpush1.msra.mxu0 0.0
    %6328 = vmatprep.subr.mxu0 0.0
    %6329 = vmatpush1.msra.mxu0 0.0
    %6330 = vmatprep.subr.mxu0 0.0
    %6331 = vmatpush1.msra.mxu0 0.0
    %6332 = vmatprep.subr.mxu0 0.0
    %6333 = vmatpush1.msra.mxu0 0.0
    %6334 = vmatprep.subr.mxu0 0.0
    %6335 = vmatpush1.msra.mxu0 0.0
    %6336 = vmatprep.subr.mxu0 0.0
    %6337 = vmatpush1.msra.mxu0 0.0
    %6338 = vmatprep.subr.mxu0 0.0
    %6339 = vmatpush1.msra.mxu0 0.0
    %6340 = vmatprep.subr.mxu0 0.0
    %6341 = vmatpush1.msra.mxu0 0.0
    %6342 = vmatprep.subr.mxu0 0.0
    %6343 = vmatpush1.msra.mxu0 0.0
    %6344 = vmatprep.subr.mxu0 0.0
    %6345 = vmatpush1.msra.mxu0 0.0
    %6346 = vmatprep.subr.mxu0 0.0
    %6347 = vmatpush1.msra.mxu0 0.0
    %6348 = vmatprep.subr.mxu0 0.0
    %6349 = vmatpush1.msra.mxu0 0.0
    %6350 = vmatprep.subr.mxu0 0.0
    %6351 = vmatpush1.msra.mxu0 0.0
    %6352 = vmatprep.subr.mxu0 0.0
    %6353 = vmatpush1.msra.mxu0 %v6243
    %6354 = vmatprep.subr.mxu0 0.0
    %6355 = vmatpush2.msra.mxu0 0.0
    %6356 = vmatprep.subr.mxu0 0.0
    %6357 = vmatpush2.msra.mxu0 0.0
    %6358 = vmatprep.subr.mxu0 0.0
    %6359 = vmatpush2.msra.mxu0 0.0
    %6360 = vmatprep.subr.mxu0 0.0
    %6361 = vmatpush2.msra.mxu0 0.0
    %6362 = vmatprep.subr.mxu0 0.0
    %6363 = vmatpush2.msra.mxu0 0.0
    %6364 = vmatprep.subr.mxu0 0.0
    %6365 = vmatpush2.msra.mxu0 0.0
    %6366 = vmatprep.subr.mxu0 0.0
    %6367 = vmatpush2.msra.mxu0 0.0
    %6368 = vmatprep.subr.mxu0 0.0
    %6369 = vmatpush2.msra.mxu0 0.0
    %6370 = vmatprep.subr.mxu0 0.0
    %6371 = vmatpush2.msra.mxu0 0.0
    %6372 = vmatprep.subr.mxu0 0.0
    %6373 = vmatpush2.msra.mxu0 0.0
    %6374 = vmatprep.subr.mxu0 0.0
    %6375 = vmatpush2.msra.mxu0 0.0
    %6376 = vmatprep.subr.mxu0 0.0
    %6377 = vmatpush2.msra.mxu0 0.0
    %6378 = vmatprep.subr.mxu0 0.0
    %6379 = vmatpush2.msra.mxu0 0.0
    %6380 = vmatprep.subr.mxu0 0.0
    %6381 = vmatpush2.msra.mxu0 0.0
    %6382 = vmatprep.subr.mxu0 0.0
    %6383 = vmatpush2.msra.mxu0 0.0
    %6384 = vmatprep.subr.mxu0 0.0
    %6385 = vmatpush2.msra.mxu0 0.0
    %6386 = vmatprep.mubr.f32.mxu0 0.0
    %6387 = vmatmul.mubr.f32.gmra.mxu0 %v6320
    %v6388 = vpop.f32.mrf.mxu0
    %v6389 = vadd.f32 0.0, %v6388
    %v6390 = vpop.f32.mrf.mxu0
    %6391 = vdwg.mxu0
    %v6392 = vmul.f32 %v6389, 0.5
    %v6393 = vsub.f32 %v183, %v6392
    %v6395 = vsel %vm160, %v6243, 0
    %6397 = vmatprep.subr.mxu0 0.0
    %6398 = vmatpush1.msra.mxu0 0.0
    %6399 = vmatprep.subr.mxu0 0.0
    %6400 = vmatpush1.msra.mxu0 0.0
    %6401 = vmatprep.subr.mxu0 0.0
    %6402 = vmatpush1.msra.mxu0 0.0
    %6403 = vmatprep.subr.mxu0 0.0
    %6404 = vmatpush1.msra.mxu0 0.0
    %6405 = vmatprep.subr.mxu0 0.0
    %6406 = vmatpush1.msra.mxu0 0.0
    %6407 = vmatprep.subr.mxu0 0.0
    %6408 = vmatpush1.msra.mxu0 0.0
    %6409 = vmatprep.subr.mxu0 0.0
    %6410 = vmatpush1.msra.mxu0 0.0
    %6411 = vmatprep.subr.mxu0 0.0
    %6412 = vmatpush1.msra.mxu0 0.0
    %6413 = vmatprep.subr.mxu0 0.0
    %6414 = vmatpush1.msra.mxu0 0.0
    %6415 = vmatprep.subr.mxu0 0.0
    %6416 = vmatpush1.msra.mxu0 0.0
    %6417 = vmatprep.subr.mxu0 0.0
    %6418 = vmatpush1.msra.mxu0 0.0
    %6419 = vmatprep.subr.mxu0 0.0
    %6420 = vmatpush1.msra.mxu0 0.0
    %6421 = vmatprep.subr.mxu0 0.0
    %6422 = vmatpush1.msra.mxu0 0.0
    %6423 = vmatprep.subr.mxu0 0.0
    %6424 = vmatpush1.msra.mxu0 0.0
    %6425 = vmatprep.subr.mxu0 0.0
    %6426 = vmatpush1.msra.mxu0 0.0
    %6427 = vmatprep.subr.mxu0 0.0
    %6428 = vmatpush1.msra.mxu0 %v6393
    %6429 = vmatprep.subr.mxu0 0.0
    %6430 = vmatpush2.msra.mxu0 0.0
    %6431 = vmatprep.subr.mxu0 0.0
    %6432 = vmatpush2.msra.mxu0 0.0
    %6433 = vmatprep.subr.mxu0 0.0
    %6434 = vmatpush2.msra.mxu0 0.0
    %6435 = vmatprep.subr.mxu0 0.0
    %6436 = vmatpush2.msra.mxu0 0.0
    %6437 = vmatprep.subr.mxu0 0.0
    %6438 = vmatpush2.msra.mxu0 0.0
    %6439 = vmatprep.subr.mxu0 0.0
    %6440 = vmatpush2.msra.mxu0 0.0
    %6441 = vmatprep.subr.mxu0 0.0
    %6442 = vmatpush2.msra.mxu0 0.0
    %6443 = vmatprep.subr.mxu0 0.0
    %6444 = vmatpush2.msra.mxu0 0.0
    %6445 = vmatprep.subr.mxu0 0.0
    %6446 = vmatpush2.msra.mxu0 0.0
    %6447 = vmatprep.subr.mxu0 0.0
    %6448 = vmatpush2.msra.mxu0 0.0
    %6449 = vmatprep.subr.mxu0 0.0
    %6450 = vmatpush2.msra.mxu0 0.0
    %6451 = vmatprep.subr.mxu0 0.0
    %6452 = vmatpush2.msra.mxu0 0.0
    %6453 = vmatprep.subr.mxu0 0.0
    %6454 = vmatpush2.msra.mxu0 0.0
    %6455 = vmatprep.subr.mxu0 0.0
    %6456 = vmatpush2.msra.mxu0 0.0
    %6457 = vmatprep.subr.mxu0 0.0
    %6458 = vmatpush2.msra.mxu0 0.0
    %6459 = vmatprep.subr.mxu0 0.0
    %6460 = vmatpush2.msra.mxu0 0.0
    %6461 = vmatprep.mubr.f32.mxu0 0.0
    %6462 = vmatmul.mubr.f32.gmra.mxu0 %v6395
    %v6463 = vpop.f32.mrf.mxu0
    %v6464 = vadd.f32 0.0, %v6463
    %v6465 = vpop.f32.mrf.mxu0
    %6466 = vdwg.mxu0
    %v6468 = vsel %vm160, %v6393, 0
    %6470 = vmatprep.subr.mxu0 0.0
    %6471 = vmatpush1.msra.mxu0 0.0
    %6472 = vmatprep.subr.mxu0 0.0
    %6473 = vmatpush1.msra.mxu0 0.0
    %6474 = vmatprep.subr.mxu0 0.0
    %6475 = vmatpush1.msra.mxu0 0.0
    %6476 = vmatprep.subr.mxu0 0.0
    %6477 = vmatpush1.msra.mxu0 0.0
    %6478 = vmatprep.subr.mxu0 0.0
    %6479 = vmatpush1.msra.mxu0 0.0
    %6480 = vmatprep.subr.mxu0 0.0
    %6481 = vmatpush1.msra.mxu0 0.0
    %6482 = vmatprep.subr.mxu0 0.0
    %6483 = vmatpush1.msra.mxu0 0.0
    %6484 = vmatprep.subr.mxu0 0.0
    %6485 = vmatpush1.msra.mxu0 0.0
    %6486 = vmatprep.subr.mxu0 0.0
    %6487 = vmatpush1.msra.mxu0 0.0
    %6488 = vmatprep.subr.mxu0 0.0
    %6489 = vmatpush1.msra.mxu0 0.0
    %6490 = vmatprep.subr.mxu0 0.0
    %6491 = vmatpush1.msra.mxu0 0.0
    %6492 = vmatprep.subr.mxu0 0.0
    %6493 = vmatpush1.msra.mxu0 0.0
    %6494 = vmatprep.subr.mxu0 0.0
    %6495 = vmatpush1.msra.mxu0 0.0
    %6496 = vmatprep.subr.mxu0 0.0
    %6497 = vmatpush1.msra.mxu0 0.0
    %6498 = vmatprep.subr.mxu0 0.0
    %6499 = vmatpush1.msra.mxu0 0.0
    %6500 = vmatprep.subr.mxu0 0.0
    %6501 = vmatpush1.msra.mxu0 %v6316
    %6502 = vmatprep.subr.mxu0 0.0
    %6503 = vmatpush2.msra.mxu0 0.0
    %6504 = vmatprep.subr.mxu0 0.0
    %6505 = vmatpush2.msra.mxu0 0.0
    %6506 = vmatprep.subr.mxu0 0.0
    %6507 = vmatpush2.msra.mxu0 0.0
    %6508 = vmatprep.subr.mxu0 0.0
    %6509 = vmatpush2.msra.mxu0 0.0
    %6510 = vmatprep.subr.mxu0 0.0
    %6511 = vmatpush2.msra.mxu0 0.0
    %6512 = vmatprep.subr.mxu0 0.0
    %6513 = vmatpush2.msra.mxu0 0.0
    %6514 = vmatprep.subr.mxu0 0.0
    %6515 = vmatpush2.msra.mxu0 0.0
    %6516 = vmatprep.subr.mxu0 0.0
    %6517 = vmatpush2.msra.mxu0 0.0
    %6518 = vmatprep.subr.mxu0 0.0
    %6519 = vmatpush2.msra.mxu0 0.0
    %6520 = vmatprep.subr.mxu0 0.0
    %6521 = vmatpush2.msra.mxu0 0.0
    %6522 = vmatprep.subr.mxu0 0.0
    %6523 = vmatpush2.msra.mxu0 0.0
    %6524 = vmatprep.subr.mxu0 0.0
    %6525 = vmatpush2.msra.mxu0 0.0
    %6526 = vmatprep.subr.mxu0 0.0
    %6527 = vmatpush2.msra.mxu0 0.0
    %6528 = vmatprep.subr.mxu0 0.0
    %6529 = vmatpush2.msra.mxu0 0.0
    %6530 = vmatprep.subr.mxu0 0.0
    %6531 = vmatpush2.msra.mxu0 0.0
    %6532 = vmatprep.subr.mxu0 0.0
    %6533 = vmatpush2.msra.mxu0 0.0
    %6534 = vmatprep.mubr.f32.mxu0 0.0
    %6535 = vmatmul.mubr.f32.gmra.mxu0 %v6468
    %v6536 = vpop.f32.mrf.mxu0
    %v6537 = vadd.f32 0.0, %v6536
    %v6538 = vpop.f32.mrf.mxu0
    %6539 = vdwg.mxu0
    %v6541 = vsel %vm160, %v6537, 0
    %6543 = vmatprep.subr.mxu0 0.0
    %6544 = vmatpush1.msra.mxu0 0.0
    %6545 = vmatprep.subr.mxu0 0.0
    %6546 = vmatpush1.msra.mxu0 0.0
    %6547 = vmatprep.subr.mxu0 0.0
    %6548 = vmatpush1.msra.mxu0 0.0
    %6549 = vmatprep.subr.mxu0 0.0
    %6550 = vmatpush1.msra.mxu0 0.0
    %6551 = vmatprep.subr.mxu0 0.0
    %6552 = vmatpush1.msra.mxu0 0.0
    %6553 = vmatprep.subr.mxu0 0.0
    %6554 = vmatpush1.msra.mxu0 0.0
    %6555 = vmatprep.subr.mxu0 0.0
    %6556 = vmatpush1.msra.mxu0 0.0
    %6557 = vmatprep.subr.mxu0 0.0
    %6558 = vmatpush1.msra.mxu0 0.0
    %6559 = vmatprep.subr.mxu0 0.0
    %6560 = vmatpush1.msra.mxu0 0.0
    %6561 = vmatprep.subr.mxu0 0.0
    %6562 = vmatpush1.msra.mxu0 0.0
    %6563 = vmatprep.subr.mxu0 0.0
    %6564 = vmatpush1.msra.mxu0 0.0
    %6565 = vmatprep.subr.mxu0 0.0
    %6566 = vmatpush1.msra.mxu0 0.0
    %6567 = vmatprep.subr.mxu0 0.0
    %6568 = vmatpush1.msra.mxu0 0.0
    %6569 = vmatprep.subr.mxu0 0.0
    %6570 = vmatpush1.msra.mxu0 0.0
    %6571 = vmatprep.subr.mxu0 0.0
    %6572 = vmatpush1.msra.mxu0 0.0
    %6573 = vmatprep.subr.mxu0 0.0
    %6574 = vmatpush1.msra.mxu0 %v6464
    %6575 = vmatprep.subr.mxu0 0.0
    %6576 = vmatpush2.msra.mxu0 0.0
    %6577 = vmatprep.subr.mxu0 0.0
    %6578 = vmatpush2.msra.mxu0 0.0
    %6579 = vmatprep.subr.mxu0 0.0
    %6580 = vmatpush2.msra.mxu0 0.0
    %6581 = vmatprep.subr.mxu0 0.0
    %6582 = vmatpush2.msra.mxu0 0.0
    %6583 = vmatprep.subr.mxu0 0.0
    %6584 = vmatpush2.msra.mxu0 0.0
    %6585 = vmatprep.subr.mxu0 0.0
    %6586 = vmatpush2.msra.mxu0 0.0
    %6587 = vmatprep.subr.mxu0 0.0
    %6588 = vmatpush2.msra.mxu0 0.0
    %6589 = vmatprep.subr.mxu0 0.0
    %6590 = vmatpush2.msra.mxu0 0.0
    %6591 = vmatprep.subr.mxu0 0.0
    %6592 = vmatpush2.msra.mxu0 0.0
    %6593 = vmatprep.subr.mxu0 0.0
    %6594 = vmatpush2.msra.mxu0 0.0
    %6595 = vmatprep.subr.mxu0 0.0
    %6596 = vmatpush2.msra.mxu0 0.0
    %6597 = vmatprep.subr.mxu0 0.0
    %6598 = vmatpush2.msra.mxu0 0.0
    %6599 = vmatprep.subr.mxu0 0.0
    %6600 = vmatpush2.msra.mxu0 0.0
    %6601 = vmatprep.subr.mxu0 0.0
    %6602 = vmatpush2.msra.mxu0 0.0
    %6603 = vmatprep.subr.mxu0 0.0
    %6604 = vmatpush2.msra.mxu0 0.0
    %6605 = vmatprep.subr.mxu0 0.0
    %6606 = vmatpush2.msra.mxu0 0.0
    %6607 = vmatprep.mubr.f32.mxu0 0.0
    %6608 = vmatmul.mubr.f32.gmra.mxu0 %v6541
    %v6609 = vpop.f32.mrf.mxu0
    %v6610 = vadd.f32 0.0, %v6609
    %v6611 = vpop.f32.mrf.mxu0
    %6612 = vdwg.mxu0
    %v6613 = vmul.f32 %v6610, 0.5
    %v6614 = vsub.f32 %v183, %v6613
    %v6616 = vsel %vm160, %v6464, 0
    %6618 = vmatprep.subr.mxu0 0.0
    %6619 = vmatpush1.msra.mxu0 0.0
    %6620 = vmatprep.subr.mxu0 0.0
    %6621 = vmatpush1.msra.mxu0 0.0
    %6622 = vmatprep.subr.mxu0 0.0
    %6623 = vmatpush1.msra.mxu0 0.0
    %6624 = vmatprep.subr.mxu0 0.0
    %6625 = vmatpush1.msra.mxu0 0.0
    %6626 = vmatprep.subr.mxu0 0.0
    %6627 = vmatpush1.msra.mxu0 0.0
    %6628 = vmatprep.subr.mxu0 0.0
    %6629 = vmatpush1.msra.mxu0 0.0
    %6630 = vmatprep.subr.mxu0 0.0
    %6631 = vmatpush1.msra.mxu0 0.0
    %6632 = vmatprep.subr.mxu0 0.0
    %6633 = vmatpush1.msra.mxu0 0.0
    %6634 = vmatprep.subr.mxu0 0.0
    %6635 = vmatpush1.msra.mxu0 0.0
    %6636 = vmatprep.subr.mxu0 0.0
    %6637 = vmatpush1.msra.mxu0 0.0
    %6638 = vmatprep.subr.mxu0 0.0
    %6639 = vmatpush1.msra.mxu0 0.0
    %6640 = vmatprep.subr.mxu0 0.0
    %6641 = vmatpush1.msra.mxu0 0.0
    %6642 = vmatprep.subr.mxu0 0.0
    %6643 = vmatpush1.msra.mxu0 0.0
    %6644 = vmatprep.subr.mxu0 0.0
    %6645 = vmatpush1.msra.mxu0 0.0
    %6646 = vmatprep.subr.mxu0 0.0
    %6647 = vmatpush1.msra.mxu0 0.0
    %6648 = vmatprep.subr.mxu0 0.0
    %6649 = vmatpush1.msra.mxu0 %v6614
    %6650 = vmatprep.subr.mxu0 0.0
    %6651 = vmatpush2.msra.mxu0 0.0
    %6652 = vmatprep.subr.mxu0 0.0
    %6653 = vmatpush2.msra.mxu0 0.0
    %6654 = vmatprep.subr.mxu0 0.0
    %6655 = vmatpush2.msra.mxu0 0.0
    %6656 = vmatprep.subr.mxu0 0.0
    %6657 = vmatpush2.msra.mxu0 0.0
    %6658 = vmatprep.subr.mxu0 0.0
    %6659 = vmatpush2.msra.mxu0 0.0
    %6660 = vmatprep.subr.mxu0 0.0
    %6661 = vmatpush2.msra.mxu0 0.0
    %6662 = vmatprep.subr.mxu0 0.0
    %6663 = vmatpush2.msra.mxu0 0.0
    %6664 = vmatprep.subr.mxu0 0.0
    %6665 = vmatpush2.msra.mxu0 0.0
    %6666 = vmatprep.subr.mxu0 0.0
    %6667 = vmatpush2.msra.mxu0 0.0
    %6668 = vmatprep.subr.mxu0 0.0
    %6669 = vmatpush2.msra.mxu0 0.0
    %6670 = vmatprep.subr.mxu0 0.0
    %6671 = vmatpush2.msra.mxu0 0.0
    %6672 = vmatprep.subr.mxu0 0.0
    %6673 = vmatpush2.msra.mxu0 0.0
    %6674 = vmatprep.subr.mxu0 0.0
    %6675 = vmatpush2.msra.mxu0 0.0
    %6676 = vmatprep.subr.mxu0 0.0
    %6677 = vmatpush2.msra.mxu0 0.0
    %6678 = vmatprep.subr.mxu0 0.0
    %6679 = vmatpush2.msra.mxu0 0.0
    %6680 = vmatprep.subr.mxu0 0.0
    %6681 = vmatpush2.msra.mxu0 0.0
    %6682 = vmatprep.mubr.f32.mxu0 0.0
    %6683 = vmatmul.mubr.f32.gmra.mxu0 %v6616
    %v6684 = vpop.f32.mrf.mxu0
    %v6685 = vadd.f32 0.0, %v6684
    %v6686 = vpop.f32.mrf.mxu0
    %6687 = vdwg.mxu0
    %v6689 = vsel %vm160, %v6614, 0
    %6691 = vmatprep.subr.mxu0 0.0
    %6692 = vmatpush1.msra.mxu0 0.0
    %6693 = vmatprep.subr.mxu0 0.0
    %6694 = vmatpush1.msra.mxu0 0.0
    %6695 = vmatprep.subr.mxu0 0.0
    %6696 = vmatpush1.msra.mxu0 0.0
    %6697 = vmatprep.subr.mxu0 0.0
    %6698 = vmatpush1.msra.mxu0 0.0
    %6699 = vmatprep.subr.mxu0 0.0
    %6700 = vmatpush1.msra.mxu0 0.0
    %6701 = vmatprep.subr.mxu0 0.0
    %6702 = vmatpush1.msra.mxu0 0.0
    %6703 = vmatprep.subr.mxu0 0.0
    %6704 = vmatpush1.msra.mxu0 0.0
    %6705 = vmatprep.subr.mxu0 0.0
    %6706 = vmatpush1.msra.mxu0 0.0
    %6707 = vmatprep.subr.mxu0 0.0
    %6708 = vmatpush1.msra.mxu0 0.0
    %6709 = vmatprep.subr.mxu0 0.0
    %6710 = vmatpush1.msra.mxu0 0.0
    %6711 = vmatprep.subr.mxu0 0.0
    %6712 = vmatpush1.msra.mxu0 0.0
    %6713 = vmatprep.subr.mxu0 0.0
    %6714 = vmatpush1.msra.mxu0 0.0
    %6715 = vmatprep.subr.mxu0 0.0
    %6716 = vmatpush1.msra.mxu0 0.0
    %6717 = vmatprep.subr.mxu0 0.0
    %6718 = vmatpush1.msra.mxu0 0.0
    %6719 = vmatprep.subr.mxu0 0.0
    %6720 = vmatpush1.msra.mxu0 0.0
    %6721 = vmatprep.subr.mxu0 0.0
    %6722 = vmatpush1.msra.mxu0 %v6537
    %6723 = vmatprep.subr.mxu0 0.0
    %6724 = vmatpush2.msra.mxu0 0.0
    %6725 = vmatprep.subr.mxu0 0.0
    %6726 = vmatpush2.msra.mxu0 0.0
    %6727 = vmatprep.subr.mxu0 0.0
    %6728 = vmatpush2.msra.mxu0 0.0
    %6729 = vmatprep.subr.mxu0 0.0
    %6730 = vmatpush2.msra.mxu0 0.0
    %6731 = vmatprep.subr.mxu0 0.0
    %6732 = vmatpush2.msra.mxu0 0.0
    %6733 = vmatprep.subr.mxu0 0.0
    %6734 = vmatpush2.msra.mxu0 0.0
    %6735 = vmatprep.subr.mxu0 0.0
    %6736 = vmatpush2.msra.mxu0 0.0
    %6737 = vmatprep.subr.mxu0 0.0
    %6738 = vmatpush2.msra.mxu0 0.0
    %6739 = vmatprep.subr.mxu0 0.0
    %6740 = vmatpush2.msra.mxu0 0.0
    %6741 = vmatprep.subr.mxu0 0.0
    %6742 = vmatpush2.msra.mxu0 0.0
    %6743 = vmatprep.subr.mxu0 0.0
    %6744 = vmatpush2.msra.mxu0 0.0
    %6745 = vmatprep.subr.mxu0 0.0
    %6746 = vmatpush2.msra.mxu0 0.0
    %6747 = vmatprep.subr.mxu0 0.0
    %6748 = vmatpush2.msra.mxu0 0.0
    %6749 = vmatprep.subr.mxu0 0.0
    %6750 = vmatpush2.msra.mxu0 0.0
    %6751 = vmatprep.subr.mxu0 0.0
    %6752 = vmatpush2.msra.mxu0 0.0
    %6753 = vmatprep.subr.mxu0 0.0
    %6754 = vmatpush2.msra.mxu0 0.0
    %6755 = vmatprep.mubr.f32.mxu0 0.0
    %6756 = vmatmul.mubr.f32.gmra.mxu0 %v6689
    %v6757 = vpop.f32.mrf.mxu0
    %v6758 = vadd.f32 0.0, %v6757
    %v6759 = vpop.f32.mrf.mxu0
    %6760 = vdwg.mxu0
    %v6762 = vsel %vm160, %v6758, 0
    %6764 = vmatprep.subr.mxu0 0.0
    %6765 = vmatpush1.msra.mxu0 0.0
    %6766 = vmatprep.subr.mxu0 0.0
    %6767 = vmatpush1.msra.mxu0 0.0
    %6768 = vmatprep.subr.mxu0 0.0
    %6769 = vmatpush1.msra.mxu0 0.0
    %6770 = vmatprep.subr.mxu0 0.0
    %6771 = vmatpush1.msra.mxu0 0.0
    %6772 = vmatprep.subr.mxu0 0.0
    %6773 = vmatpush1.msra.mxu0 0.0
    %6774 = vmatprep.subr.mxu0 0.0
    %6775 = vmatpush1.msra.mxu0 0.0
    %6776 = vmatprep.subr.mxu0 0.0
    %6777 = vmatpush1.msra.mxu0 0.0
    %6778 = vmatprep.subr.mxu0 0.0
    %6779 = vmatpush1.msra.mxu0 0.0
    %6780 = vmatprep.subr.mxu0 0.0
    %6781 = vmatpush1.msra.mxu0 0.0
    %6782 = vmatprep.subr.mxu0 0.0
    %6783 = vmatpush1.msra.mxu0 0.0
    %6784 = vmatprep.subr.mxu0 0.0
    %6785 = vmatpush1.msra.mxu0 0.0
    %6786 = vmatprep.subr.mxu0 0.0
    %6787 = vmatpush1.msra.mxu0 0.0
    %6788 = vmatprep.subr.mxu0 0.0
    %6789 = vmatpush1.msra.mxu0 0.0
    %6790 = vmatprep.subr.mxu0 0.0
    %6791 = vmatpush1.msra.mxu0 0.0
    %6792 = vmatprep.subr.mxu0 0.0
    %6793 = vmatpush1.msra.mxu0 0.0
    %6794 = vmatprep.subr.mxu0 0.0
    %6795 = vmatpush1.msra.mxu0 %v6685
    %6796 = vmatprep.subr.mxu0 0.0
    %6797 = vmatpush2.msra.mxu0 0.0
    %6798 = vmatprep.subr.mxu0 0.0
    %6799 = vmatpush2.msra.mxu0 0.0
    %6800 = vmatprep.subr.mxu0 0.0
    %6801 = vmatpush2.msra.mxu0 0.0
    %6802 = vmatprep.subr.mxu0 0.0
    %6803 = vmatpush2.msra.mxu0 0.0
    %6804 = vmatprep.subr.mxu0 0.0
    %6805 = vmatpush2.msra.mxu0 0.0
    %6806 = vmatprep.subr.mxu0 0.0
    %6807 = vmatpush2.msra.mxu0 0.0
    %6808 = vmatprep.subr.mxu0 0.0
    %6809 = vmatpush2.msra.mxu0 0.0
    %6810 = vmatprep.subr.mxu0 0.0
    %6811 = vmatpush2.msra.mxu0 0.0
    %6812 = vmatprep.subr.mxu0 0.0
    %6813 = vmatpush2.msra.mxu0 0.0
    %6814 = vmatprep.subr.mxu0 0.0
    %6815 = vmatpush2.msra.mxu0 0.0
    %6816 = vmatprep.subr.mxu0 0.0
    %6817 = vmatpush2.msra.mxu0 0.0
    %6818 = vmatprep.subr.mxu0 0.0
    %6819 = vmatpush2.msra.mxu0 0.0
    %6820 = vmatprep.subr.mxu0 0.0
    %6821 = vmatpush2.msra.mxu0 0.0
    %6822 = vmatprep.subr.mxu0 0.0
    %6823 = vmatpush2.msra.mxu0 0.0
    %6824 = vmatprep.subr.mxu0 0.0
    %6825 = vmatpush2.msra.mxu0 0.0
    %6826 = vmatprep.subr.mxu0 0.0
    %6827 = vmatpush2.msra.mxu0 0.0
    %6828 = vmatprep.mubr.f32.mxu0 0.0
    %6829 = vmatmul.mubr.f32.gmra.mxu0 %v6762
    %v6830 = vpop.f32.mrf.mxu0
    %v6831 = vadd.f32 0.0, %v6830
    %v6832 = vpop.f32.mrf.mxu0
    %6833 = vdwg.mxu0
    %v6834 = vmul.f32 %v6831, 0.5
    %v6835 = vsub.f32 %v183, %v6834
    %v6837 = vsel %vm160, %v6685, 0
    %6839 = vmatprep.subr.mxu0 0.0
    %6840 = vmatpush1.msra.mxu0 0.0
    %6841 = vmatprep.subr.mxu0 0.0
    %6842 = vmatpush1.msra.mxu0 0.0
    %6843 = vmatprep.subr.mxu0 0.0
    %6844 = vmatpush1.msra.mxu0 0.0
    %6845 = vmatprep.subr.mxu0 0.0
    %6846 = vmatpush1.msra.mxu0 0.0
    %6847 = vmatprep.subr.mxu0 0.0
    %6848 = vmatpush1.msra.mxu0 0.0
    %6849 = vmatprep.subr.mxu0 0.0
    %6850 = vmatpush1.msra.mxu0 0.0
    %6851 = vmatprep.subr.mxu0 0.0
    %6852 = vmatpush1.msra.mxu0 0.0
    %6853 = vmatprep.subr.mxu0 0.0
    %6854 = vmatpush1.msra.mxu0 0.0
    %6855 = vmatprep.subr.mxu0 0.0
    %6856 = vmatpush1.msra.mxu0 0.0
    %6857 = vmatprep.subr.mxu0 0.0
    %6858 = vmatpush1.msra.mxu0 0.0
    %6859 = vmatprep.subr.mxu0 0.0
    %6860 = vmatpush1.msra.mxu0 0.0
    %6861 = vmatprep.subr.mxu0 0.0
    %6862 = vmatpush1.msra.mxu0 0.0
    %6863 = vmatprep.subr.mxu0 0.0
    %6864 = vmatpush1.msra.mxu0 0.0
    %6865 = vmatprep.subr.mxu0 0.0
    %6866 = vmatpush1.msra.mxu0 0.0
    %6867 = vmatprep.subr.mxu0 0.0
    %6868 = vmatpush1.msra.mxu0 0.0
    %6869 = vmatprep.subr.mxu0 0.0
    %6870 = vmatpush1.msra.mxu0 %v6835
    %6871 = vmatprep.subr.mxu0 0.0
    %6872 = vmatpush2.msra.mxu0 0.0
    %6873 = vmatprep.subr.mxu0 0.0
    %6874 = vmatpush2.msra.mxu0 0.0
    %6875 = vmatprep.subr.mxu0 0.0
    %6876 = vmatpush2.msra.mxu0 0.0
    %6877 = vmatprep.subr.mxu0 0.0
    %6878 = vmatpush2.msra.mxu0 0.0
    %6879 = vmatprep.subr.mxu0 0.0
    %6880 = vmatpush2.msra.mxu0 0.0
    %6881 = vmatprep.subr.mxu0 0.0
    %6882 = vmatpush2.msra.mxu0 0.0
    %6883 = vmatprep.subr.mxu0 0.0
    %6884 = vmatpush2.msra.mxu0 0.0
    %6885 = vmatprep.subr.mxu0 0.0
    %6886 = vmatpush2.msra.mxu0 0.0
    %6887 = vmatprep.subr.mxu0 0.0
    %6888 = vmatpush2.msra.mxu0 0.0
    %6889 = vmatprep.subr.mxu0 0.0
    %6890 = vmatpush2.msra.mxu0 0.0
    %6891 = vmatprep.subr.mxu0 0.0
    %6892 = vmatpush2.msra.mxu0 0.0
    %6893 = vmatprep.subr.mxu0 0.0
    %6894 = vmatpush2.msra.mxu0 0.0
    %6895 = vmatprep.subr.mxu0 0.0
    %6896 = vmatpush2.msra.mxu0 0.0
    %6897 = vmatprep.subr.mxu0 0.0
    %6898 = vmatpush2.msra.mxu0 0.0
    %6899 = vmatprep.subr.mxu0 0.0
    %6900 = vmatpush2.msra.mxu0 0.0
    %6901 = vmatprep.subr.mxu0 0.0
    %6902 = vmatpush2.msra.mxu0 0.0
    %6903 = vmatprep.mubr.f32.mxu0 0.0
    %6904 = vmatmul.mubr.f32.gmra.mxu0 %v6837
    %v6905 = vpop.f32.mrf.mxu0
    %v6906 = vadd.f32 0.0, %v6905
    %v6907 = vpop.f32.mrf.mxu0
    %6908 = vdwg.mxu0
    %v6910 = vsel %vm160, %v6835, 0
    %6912 = vmatprep.subr.mxu0 0.0
    %6913 = vmatpush1.msra.mxu0 0.0
    %6914 = vmatprep.subr.mxu0 0.0
    %6915 = vmatpush1.msra.mxu0 0.0
    %6916 = vmatprep.subr.mxu0 0.0
    %6917 = vmatpush1.msra.mxu0 0.0
    %6918 = vmatprep.subr.mxu0 0.0
    %6919 = vmatpush1.msra.mxu0 0.0
    %6920 = vmatprep.subr.mxu0 0.0
    %6921 = vmatpush1.msra.mxu0 0.0
    %6922 = vmatprep.subr.mxu0 0.0
    %6923 = vmatpush1.msra.mxu0 0.0
    %6924 = vmatprep.subr.mxu0 0.0
    %6925 = vmatpush1.msra.mxu0 0.0
    %6926 = vmatprep.subr.mxu0 0.0
    %6927 = vmatpush1.msra.mxu0 0.0
    %6928 = vmatprep.subr.mxu0 0.0
    %6929 = vmatpush1.msra.mxu0 0.0
    %6930 = vmatprep.subr.mxu0 0.0
    %6931 = vmatpush1.msra.mxu0 0.0
    %6932 = vmatprep.subr.mxu0 0.0
    %6933 = vmatpush1.msra.mxu0 0.0
    %6934 = vmatprep.subr.mxu0 0.0
    %6935 = vmatpush1.msra.mxu0 0.0
    %6936 = vmatprep.subr.mxu0 0.0
    %6937 = vmatpush1.msra.mxu0 0.0
    %6938 = vmatprep.subr.mxu0 0.0
    %6939 = vmatpush1.msra.mxu0 0.0
    %6940 = vmatprep.subr.mxu0 0.0
    %6941 = vmatpush1.msra.mxu0 0.0
    %6942 = vmatprep.subr.mxu0 0.0
    %6943 = vmatpush1.msra.mxu0 %v6758
    %6944 = vmatprep.subr.mxu0 0.0
    %6945 = vmatpush2.msra.mxu0 0.0
    %6946 = vmatprep.subr.mxu0 0.0
    %6947 = vmatpush2.msra.mxu0 0.0
    %6948 = vmatprep.subr.mxu0 0.0
    %6949 = vmatpush2.msra.mxu0 0.0
    %6950 = vmatprep.subr.mxu0 0.0
    %6951 = vmatpush2.msra.mxu0 0.0
    %6952 = vmatprep.subr.mxu0 0.0
    %6953 = vmatpush2.msra.mxu0 0.0
    %6954 = vmatprep.subr.mxu0 0.0
    %6955 = vmatpush2.msra.mxu0 0.0
    %6956 = vmatprep.subr.mxu0 0.0
    %6957 = vmatpush2.msra.mxu0 0.0
    %6958 = vmatprep.subr.mxu0 0.0
    %6959 = vmatpush2.msra.mxu0 0.0
    %6960 = vmatprep.subr.mxu0 0.0
    %6961 = vmatpush2.msra.mxu0 0.0
    %6962 = vmatprep.subr.mxu0 0.0
    %6963 = vmatpush2.msra.mxu0 0.0
    %6964 = vmatprep.subr.mxu0 0.0
    %6965 = vmatpush2.msra.mxu0 0.0
    %6966 = vmatprep.subr.mxu0 0.0
    %6967 = vmatpush2.msra.mxu0 0.0
    %6968 = vmatprep.subr.mxu0 0.0
    %6969 = vmatpush2.msra.mxu0 0.0
    %6970 = vmatprep.subr.mxu0 0.0
    %6971 = vmatpush2.msra.mxu0 0.0
    %6972 = vmatprep.subr.mxu0 0.0
    %6973 = vmatpush2.msra.mxu0 0.0
    %6974 = vmatprep.subr.mxu0 0.0
    %6975 = vmatpush2.msra.mxu0 0.0
    %6976 = vmatprep.mubr.f32.mxu0 0.0
    %6977 = vmatmul.mubr.f32.gmra.mxu0 %v6910
    %v6978 = vpop.f32.mrf.mxu0
    %v6979 = vadd.f32 0.0, %v6978
    %v6980 = vpop.f32.mrf.mxu0
    %6981 = vdwg.mxu0
    %v6983 = vsel %vm160, %v6979, 0
    %6985 = vmatprep.subr.mxu0 0.0
    %6986 = vmatpush1.msra.mxu0 0.0
    %6987 = vmatprep.subr.mxu0 0.0
    %6988 = vmatpush1.msra.mxu0 0.0
    %6989 = vmatprep.subr.mxu0 0.0
    %6990 = vmatpush1.msra.mxu0 0.0
    %6991 = vmatprep.subr.mxu0 0.0
    %6992 = vmatpush1.msra.mxu0 0.0
    %6993 = vmatprep.subr.mxu0 0.0
    %6994 = vmatpush1.msra.mxu0 0.0
    %6995 = vmatprep.subr.mxu0 0.0
    %6996 = vmatpush1.msra.mxu0 0.0
    %6997 = vmatprep.subr.mxu0 0.0
    %6998 = vmatpush1.msra.mxu0 0.0
    %6999 = vmatprep.subr.mxu0 0.0
    %7000 = vmatpush1.msra.mxu0 0.0
    %7001 = vmatprep.subr.mxu0 0.0
    %7002 = vmatpush1.msra.mxu0 0.0
    %7003 = vmatprep.subr.mxu0 0.0
    %7004 = vmatpush1.msra.mxu0 0.0
    %7005 = vmatprep.subr.mxu0 0.0
    %7006 = vmatpush1.msra.mxu0 0.0
    %7007 = vmatprep.subr.mxu0 0.0
    %7008 = vmatpush1.msra.mxu0 0.0
    %7009 = vmatprep.subr.mxu0 0.0
    %7010 = vmatpush1.msra.mxu0 0.0
    %7011 = vmatprep.subr.mxu0 0.0
    %7012 = vmatpush1.msra.mxu0 0.0
    %7013 = vmatprep.subr.mxu0 0.0
    %7014 = vmatpush1.msra.mxu0 0.0
    %7015 = vmatprep.subr.mxu0 0.0
    %7016 = vmatpush1.msra.mxu0 %v6906
    %7017 = vmatprep.subr.mxu0 0.0
    %7018 = vmatpush2.msra.mxu0 0.0
    %7019 = vmatprep.subr.mxu0 0.0
    %7020 = vmatpush2.msra.mxu0 0.0
    %7021 = vmatprep.subr.mxu0 0.0
    %7022 = vmatpush2.msra.mxu0 0.0
    %7023 = vmatprep.subr.mxu0 0.0
    %7024 = vmatpush2.msra.mxu0 0.0
    %7025 = vmatprep.subr.mxu0 0.0
    %7026 = vmatpush2.msra.mxu0 0.0
    %7027 = vmatprep.subr.mxu0 0.0
    %7028 = vmatpush2.msra.mxu0 0.0
    %7029 = vmatprep.subr.mxu0 0.0
    %7030 = vmatpush2.msra.mxu0 0.0
    %7031 = vmatprep.subr.mxu0 0.0
    %7032 = vmatpush2.msra.mxu0 0.0
    %7033 = vmatprep.subr.mxu0 0.0
    %7034 = vmatpush2.msra.mxu0 0.0
    %7035 = vmatprep.subr.mxu0 0.0
    %7036 = vmatpush2.msra.mxu0 0.0
    %7037 = vmatprep.subr.mxu0 0.0
    %7038 = vmatpush2.msra.mxu0 0.0
    %7039 = vmatprep.subr.mxu0 0.0
    %7040 = vmatpush2.msra.mxu0 0.0
    %7041 = vmatprep.subr.mxu0 0.0
    %7042 = vmatpush2.msra.mxu0 0.0
    %7043 = vmatprep.subr.mxu0 0.0
    %7044 = vmatpush2.msra.mxu0 0.0
    %7045 = vmatprep.subr.mxu0 0.0
    %7046 = vmatpush2.msra.mxu0 0.0
    %7047 = vmatprep.subr.mxu0 0.0
    %7048 = vmatpush2.msra.mxu0 0.0
    %7049 = vmatprep.mubr.f32.mxu0 0.0
    %7050 = vmatmul.mubr.f32.gmra.mxu0 %v6983
    %v7051 = vpop.f32.mrf.mxu0
    %v7052 = vadd.f32 0.0, %v7051
    %v7053 = vpop.f32.mrf.mxu0
    %7054 = vdwg.mxu0
    %v7055 = vmul.f32 %v7052, 0.5
    %v7056 = vsub.f32 %v183, %v7055
    %v7058 = vsel %vm160, %v6906, 0
    %7060 = vmatprep.subr.mxu0 0.0
    %7061 = vmatpush1.msra.mxu0 0.0
    %7062 = vmatprep.subr.mxu0 0.0
    %7063 = vmatpush1.msra.mxu0 0.0
    %7064 = vmatprep.subr.mxu0 0.0
    %7065 = vmatpush1.msra.mxu0 0.0
    %7066 = vmatprep.subr.mxu0 0.0
    %7067 = vmatpush1.msra.mxu0 0.0
    %7068 = vmatprep.subr.mxu0 0.0
    %7069 = vmatpush1.msra.mxu0 0.0
    %7070 = vmatprep.subr.mxu0 0.0
    %7071 = vmatpush1.msra.mxu0 0.0
    %7072 = vmatprep.subr.mxu0 0.0
    %7073 = vmatpush1.msra.mxu0 0.0
    %7074 = vmatprep.subr.mxu0 0.0
    %7075 = vmatpush1.msra.mxu0 0.0
    %7076 = vmatprep.subr.mxu0 0.0
    %7077 = vmatpush1.msra.mxu0 0.0
    %7078 = vmatprep.subr.mxu0 0.0
    %7079 = vmatpush1.msra.mxu0 0.0
    %7080 = vmatprep.subr.mxu0 0.0
    %7081 = vmatpush1.msra.mxu0 0.0
    %7082 = vmatprep.subr.mxu0 0.0
    %7083 = vmatpush1.msra.mxu0 0.0
    %7084 = vmatprep.subr.mxu0 0.0
    %7085 = vmatpush1.msra.mxu0 0.0
    %7086 = vmatprep.subr.mxu0 0.0
    %7087 = vmatpush1.msra.mxu0 0.0
    %7088 = vmatprep.subr.mxu0 0.0
    %7089 = vmatpush1.msra.mxu0 0.0
    %7090 = vmatprep.subr.mxu0 0.0
    %7091 = vmatpush1.msra.mxu0 %v7056
    %7092 = vmatprep.subr.mxu0 0.0
    %7093 = vmatpush2.msra.mxu0 0.0
    %7094 = vmatprep.subr.mxu0 0.0
    %7095 = vmatpush2.msra.mxu0 0.0
    %7096 = vmatprep.subr.mxu0 0.0
    %7097 = vmatpush2.msra.mxu0 0.0
    %7098 = vmatprep.subr.mxu0 0.0
    %7099 = vmatpush2.msra.mxu0 0.0
    %7100 = vmatprep.subr.mxu0 0.0
    %7101 = vmatpush2.msra.mxu0 0.0
    %7102 = vmatprep.subr.mxu0 0.0
    %7103 = vmatpush2.msra.mxu0 0.0
    %7104 = vmatprep.subr.mxu0 0.0
    %7105 = vmatpush2.msra.mxu0 0.0
    %7106 = vmatprep.subr.mxu0 0.0
    %7107 = vmatpush2.msra.mxu0 0.0
    %7108 = vmatprep.subr.mxu0 0.0
    %7109 = vmatpush2.msra.mxu0 0.0
    %7110 = vmatprep.subr.mxu0 0.0
    %7111 = vmatpush2.msra.mxu0 0.0
    %7112 = vmatprep.subr.mxu0 0.0
    %7113 = vmatpush2.msra.mxu0 0.0
    %7114 = vmatprep.subr.mxu0 0.0
    %7115 = vmatpush2.msra.mxu0 0.0
    %7116 = vmatprep.subr.mxu0 0.0
    %7117 = vmatpush2.msra.mxu0 0.0
    %7118 = vmatprep.subr.mxu0 0.0
    %7119 = vmatpush2.msra.mxu0 0.0
    %7120 = vmatprep.subr.mxu0 0.0
    %7121 = vmatpush2.msra.mxu0 0.0
    %7122 = vmatprep.subr.mxu0 0.0
    %7123 = vmatpush2.msra.mxu0 0.0
    %7124 = vmatprep.mubr.f32.mxu0 0.0
    %7125 = vmatmul.mubr.f32.gmra.mxu0 %v7058
    %v7126 = vpop.f32.mrf.mxu0
    %v7127 = vadd.f32 0.0, %v7126
    %v7128 = vpop.f32.mrf.mxu0
    %7129 = vdwg.mxu0
    %v7131 = vsel %vm160, %v7056, 0
    %7133 = vmatprep.subr.mxu0 0.0
    %7134 = vmatpush1.msra.mxu0 0.0
    %7135 = vmatprep.subr.mxu0 0.0
    %7136 = vmatpush1.msra.mxu0 0.0
    %7137 = vmatprep.subr.mxu0 0.0
    %7138 = vmatpush1.msra.mxu0 0.0
    %7139 = vmatprep.subr.mxu0 0.0
    %7140 = vmatpush1.msra.mxu0 0.0
    %7141 = vmatprep.subr.mxu0 0.0
    %7142 = vmatpush1.msra.mxu0 0.0
    %7143 = vmatprep.subr.mxu0 0.0
    %7144 = vmatpush1.msra.mxu0 0.0
    %7145 = vmatprep.subr.mxu0 0.0
    %7146 = vmatpush1.msra.mxu0 0.0
    %7147 = vmatprep.subr.mxu0 0.0
    %7148 = vmatpush1.msra.mxu0 0.0
    %7149 = vmatprep.subr.mxu0 0.0
    %7150 = vmatpush1.msra.mxu0 0.0
    %7151 = vmatprep.subr.mxu0 0.0
    %7152 = vmatpush1.msra.mxu0 0.0
    %7153 = vmatprep.subr.mxu0 0.0
    %7154 = vmatpush1.msra.mxu0 0.0
    %7155 = vmatprep.subr.mxu0 0.0
    %7156 = vmatpush1.msra.mxu0 0.0
    %7157 = vmatprep.subr.mxu0 0.0
    %7158 = vmatpush1.msra.mxu0 0.0
    %7159 = vmatprep.subr.mxu0 0.0
    %7160 = vmatpush1.msra.mxu0 0.0
    %7161 = vmatprep.subr.mxu0 0.0
    %7162 = vmatpush1.msra.mxu0 0.0
    %7163 = vmatprep.subr.mxu0 0.0
    %7164 = vmatpush1.msra.mxu0 %v6979
    %7165 = vmatprep.subr.mxu0 0.0
    %7166 = vmatpush2.msra.mxu0 0.0
    %7167 = vmatprep.subr.mxu0 0.0
    %7168 = vmatpush2.msra.mxu0 0.0
    %7169 = vmatprep.subr.mxu0 0.0
    %7170 = vmatpush2.msra.mxu0 0.0
    %7171 = vmatprep.subr.mxu0 0.0
    %7172 = vmatpush2.msra.mxu0 0.0
    %7173 = vmatprep.subr.mxu0 0.0
    %7174 = vmatpush2.msra.mxu0 0.0
    %7175 = vmatprep.subr.mxu0 0.0
    %7176 = vmatpush2.msra.mxu0 0.0
    %7177 = vmatprep.subr.mxu0 0.0
    %7178 = vmatpush2.msra.mxu0 0.0
    %7179 = vmatprep.subr.mxu0 0.0
    %7180 = vmatpush2.msra.mxu0 0.0
    %7181 = vmatprep.subr.mxu0 0.0
    %7182 = vmatpush2.msra.mxu0 0.0
    %7183 = vmatprep.subr.mxu0 0.0
    %7184 = vmatpush2.msra.mxu0 0.0
    %7185 = vmatprep.subr.mxu0 0.0
    %7186 = vmatpush2.msra.mxu0 0.0
    %7187 = vmatprep.subr.mxu0 0.0
    %7188 = vmatpush2.msra.mxu0 0.0
    %7189 = vmatprep.subr.mxu0 0.0
    %7190 = vmatpush2.msra.mxu0 0.0
    %7191 = vmatprep.subr.mxu0 0.0
    %7192 = vmatpush2.msra.mxu0 0.0
    %7193 = vmatprep.subr.mxu0 0.0
    %7194 = vmatpush2.msra.mxu0 0.0
    %7195 = vmatprep.subr.mxu0 0.0
    %7196 = vmatpush2.msra.mxu0 0.0
    %7197 = vmatprep.mubr.f32.mxu0 0.0
    %7198 = vmatmul.mubr.f32.gmra.mxu0 %v7131
    %v7199 = vpop.f32.mrf.mxu0
    %v7200 = vadd.f32 0.0, %v7199
    %v7201 = vpop.f32.mrf.mxu0
    %7202 = vdwg.mxu0
    %v7204 = vsel %vm160, %v7200, 0
    %7206 = vmatprep.subr.mxu0 0.0
    %7207 = vmatpush1.msra.mxu0 0.0
    %7208 = vmatprep.subr.mxu0 0.0
    %7209 = vmatpush1.msra.mxu0 0.0
    %7210 = vmatprep.subr.mxu0 0.0
    %7211 = vmatpush1.msra.mxu0 0.0
    %7212 = vmatprep.subr.mxu0 0.0
    %7213 = vmatpush1.msra.mxu0 0.0
    %7214 = vmatprep.subr.mxu0 0.0
    %7215 = vmatpush1.msra.mxu0 0.0
    %7216 = vmatprep.subr.mxu0 0.0
    %7217 = vmatpush1.msra.mxu0 0.0
    %7218 = vmatprep.subr.mxu0 0.0
    %7219 = vmatpush1.msra.mxu0 0.0
    %7220 = vmatprep.subr.mxu0 0.0
    %7221 = vmatpush1.msra.mxu0 0.0
    %7222 = vmatprep.subr.mxu0 0.0
    %7223 = vmatpush1.msra.mxu0 0.0
    %7224 = vmatprep.subr.mxu0 0.0
    %7225 = vmatpush1.msra.mxu0 0.0
    %7226 = vmatprep.subr.mxu0 0.0
    %7227 = vmatpush1.msra.mxu0 0.0
    %7228 = vmatprep.subr.mxu0 0.0
    %7229 = vmatpush1.msra.mxu0 0.0
    %7230 = vmatprep.subr.mxu0 0.0
    %7231 = vmatpush1.msra.mxu0 0.0
    %7232 = vmatprep.subr.mxu0 0.0
    %7233 = vmatpush1.msra.mxu0 0.0
    %7234 = vmatprep.subr.mxu0 0.0
    %7235 = vmatpush1.msra.mxu0 0.0
    %7236 = vmatprep.subr.mxu0 0.0
    %7237 = vmatpush1.msra.mxu0 %v7127
    %7238 = vmatprep.subr.mxu0 0.0
    %7239 = vmatpush2.msra.mxu0 0.0
    %7240 = vmatprep.subr.mxu0 0.0
    %7241 = vmatpush2.msra.mxu0 0.0
    %7242 = vmatprep.subr.mxu0 0.0
    %7243 = vmatpush2.msra.mxu0 0.0
    %7244 = vmatprep.subr.mxu0 0.0
    %7245 = vmatpush2.msra.mxu0 0.0
    %7246 = vmatprep.subr.mxu0 0.0
    %7247 = vmatpush2.msra.mxu0 0.0
    %7248 = vmatprep.subr.mxu0 0.0
    %7249 = vmatpush2.msra.mxu0 0.0
    %7250 = vmatprep.subr.mxu0 0.0
    %7251 = vmatpush2.msra.mxu0 0.0
    %7252 = vmatprep.subr.mxu0 0.0
    %7253 = vmatpush2.msra.mxu0 0.0
    %7254 = vmatprep.subr.mxu0 0.0
    %7255 = vmatpush2.msra.mxu0 0.0
    %7256 = vmatprep.subr.mxu0 0.0
    %7257 = vmatpush2.msra.mxu0 0.0
    %7258 = vmatprep.subr.mxu0 0.0
    %7259 = vmatpush2.msra.mxu0 0.0
    %7260 = vmatprep.subr.mxu0 0.0
    %7261 = vmatpush2.msra.mxu0 0.0
    %7262 = vmatprep.subr.mxu0 0.0
    %7263 = vmatpush2.msra.mxu0 0.0
    %7264 = vmatprep.subr.mxu0 0.0
    %7265 = vmatpush2.msra.mxu0 0.0
    %7266 = vmatprep.subr.mxu0 0.0
    %7267 = vmatpush2.msra.mxu0 0.0
    %7268 = vmatprep.subr.mxu0 0.0
    %7269 = vmatpush2.msra.mxu0 0.0
    %7270 = vmatprep.mubr.f32.mxu0 0.0
    %7271 = vmatmul.mubr.f32.gmra.mxu0 %v7204
    %v7272 = vpop.f32.mrf.mxu0
    %v7273 = vadd.f32 0.0, %v7272
    %v7274 = vpop.f32.mrf.mxu0
    %7275 = vdwg.mxu0
    %v7276 = vmul.f32 %v7273, 0.5
    %v7277 = vsub.f32 %v183, %v7276
    %v7279 = vsel %vm160, %v7127, 0
    %7281 = vmatprep.subr.mxu0 0.0
    %7282 = vmatpush1.msra.mxu0 0.0
    %7283 = vmatprep.subr.mxu0 0.0
    %7284 = vmatpush1.msra.mxu0 0.0
    %7285 = vmatprep.subr.mxu0 0.0
    %7286 = vmatpush1.msra.mxu0 0.0
    %7287 = vmatprep.subr.mxu0 0.0
    %7288 = vmatpush1.msra.mxu0 0.0
    %7289 = vmatprep.subr.mxu0 0.0
    %7290 = vmatpush1.msra.mxu0 0.0
    %7291 = vmatprep.subr.mxu0 0.0
    %7292 = vmatpush1.msra.mxu0 0.0
    %7293 = vmatprep.subr.mxu0 0.0
    %7294 = vmatpush1.msra.mxu0 0.0
    %7295 = vmatprep.subr.mxu0 0.0
    %7296 = vmatpush1.msra.mxu0 0.0
    %7297 = vmatprep.subr.mxu0 0.0
    %7298 = vmatpush1.msra.mxu0 0.0
    %7299 = vmatprep.subr.mxu0 0.0
    %7300 = vmatpush1.msra.mxu0 0.0
    %7301 = vmatprep.subr.mxu0 0.0
    %7302 = vmatpush1.msra.mxu0 0.0
    %7303 = vmatprep.subr.mxu0 0.0
    %7304 = vmatpush1.msra.mxu0 0.0
    %7305 = vmatprep.subr.mxu0 0.0
    %7306 = vmatpush1.msra.mxu0 0.0
    %7307 = vmatprep.subr.mxu0 0.0
    %7308 = vmatpush1.msra.mxu0 0.0
    %7309 = vmatprep.subr.mxu0 0.0
    %7310 = vmatpush1.msra.mxu0 0.0
    %7311 = vmatprep.subr.mxu0 0.0
    %7312 = vmatpush1.msra.mxu0 %v7277
    %7313 = vmatprep.subr.mxu0 0.0
    %7314 = vmatpush2.msra.mxu0 0.0
    %7315 = vmatprep.subr.mxu0 0.0
    %7316 = vmatpush2.msra.mxu0 0.0
    %7317 = vmatprep.subr.mxu0 0.0
    %7318 = vmatpush2.msra.mxu0 0.0
    %7319 = vmatprep.subr.mxu0 0.0
    %7320 = vmatpush2.msra.mxu0 0.0
    %7321 = vmatprep.subr.mxu0 0.0
    %7322 = vmatpush2.msra.mxu0 0.0
    %7323 = vmatprep.subr.mxu0 0.0
    %7324 = vmatpush2.msra.mxu0 0.0
    %7325 = vmatprep.subr.mxu0 0.0
    %7326 = vmatpush2.msra.mxu0 0.0
    %7327 = vmatprep.subr.mxu0 0.0
    %7328 = vmatpush2.msra.mxu0 0.0
    %7329 = vmatprep.subr.mxu0 0.0
    %7330 = vmatpush2.msra.mxu0 0.0
    %7331 = vmatprep.subr.mxu0 0.0
    %7332 = vmatpush2.msra.mxu0 0.0
    %7333 = vmatprep.subr.mxu0 0.0
    %7334 = vmatpush2.msra.mxu0 0.0
    %7335 = vmatprep.subr.mxu0 0.0
    %7336 = vmatpush2.msra.mxu0 0.0
    %7337 = vmatprep.subr.mxu0 0.0
    %7338 = vmatpush2.msra.mxu0 0.0
    %7339 = vmatprep.subr.mxu0 0.0
    %7340 = vmatpush2.msra.mxu0 0.0
    %7341 = vmatprep.subr.mxu0 0.0
    %7342 = vmatpush2.msra.mxu0 0.0
    %7343 = vmatprep.subr.mxu0 0.0
    %7344 = vmatpush2.msra.mxu0 0.0
    %7345 = vmatprep.mubr.f32.mxu0 0.0
    %7346 = vmatmul.mubr.f32.gmra.mxu0 %v7279
    %v7347 = vpop.f32.mrf.mxu0
    %v7348 = vadd.f32 0.0, %v7347
    %v7349 = vpop.f32.mrf.mxu0
    %7350 = vdwg.mxu0
    %v7352 = vsel %vm160, %v7277, 0
    %7354 = vmatprep.subr.mxu0 0.0
    %7355 = vmatpush1.msra.mxu0 0.0
    %7356 = vmatprep.subr.mxu0 0.0
    %7357 = vmatpush1.msra.mxu0 0.0
    %7358 = vmatprep.subr.mxu0 0.0
    %7359 = vmatpush1.msra.mxu0 0.0
    %7360 = vmatprep.subr.mxu0 0.0
    %7361 = vmatpush1.msra.mxu0 0.0
    %7362 = vmatprep.subr.mxu0 0.0
    %7363 = vmatpush1.msra.mxu0 0.0
    %7364 = vmatprep.subr.mxu0 0.0
    %7365 = vmatpush1.msra.mxu0 0.0
    %7366 = vmatprep.subr.mxu0 0.0
    %7367 = vmatpush1.msra.mxu0 0.0
    %7368 = vmatprep.subr.mxu0 0.0
    %7369 = vmatpush1.msra.mxu0 0.0
    %7370 = vmatprep.subr.mxu0 0.0
    %7371 = vmatpush1.msra.mxu0 0.0
    %7372 = vmatprep.subr.mxu0 0.0
    %7373 = vmatpush1.msra.mxu0 0.0
    %7374 = vmatprep.subr.mxu0 0.0
    %7375 = vmatpush1.msra.mxu0 0.0
    %7376 = vmatprep.subr.mxu0 0.0
    %7377 = vmatpush1.msra.mxu0 0.0
    %7378 = vmatprep.subr.mxu0 0.0
    %7379 = vmatpush1.msra.mxu0 0.0
    %7380 = vmatprep.subr.mxu0 0.0
    %7381 = vmatpush1.msra.mxu0 0.0
    %7382 = vmatprep.subr.mxu0 0.0
    %7383 = vmatpush1.msra.mxu0 0.0
    %7384 = vmatprep.subr.mxu0 0.0
    %7385 = vmatpush1.msra.mxu0 %v7200
    %7386 = vmatprep.subr.mxu0 0.0
    %7387 = vmatpush2.msra.mxu0 0.0
    %7388 = vmatprep.subr.mxu0 0.0
    %7389 = vmatpush2.msra.mxu0 0.0
    %7390 = vmatprep.subr.mxu0 0.0
    %7391 = vmatpush2.msra.mxu0 0.0
    %7392 = vmatprep.subr.mxu0 0.0
    %7393 = vmatpush2.msra.mxu0 0.0
    %7394 = vmatprep.subr.mxu0 0.0
    %7395 = vmatpush2.msra.mxu0 0.0
    %7396 = vmatprep.subr.mxu0 0.0
    %7397 = vmatpush2.msra.mxu0 0.0
    %7398 = vmatprep.subr.mxu0 0.0
    %7399 = vmatpush2.msra.mxu0 0.0
    %7400 = vmatprep.subr.mxu0 0.0
    %7401 = vmatpush2.msra.mxu0 0.0
    %7402 = vmatprep.subr.mxu0 0.0
    %7403 = vmatpush2.msra.mxu0 0.0
    %7404 = vmatprep.subr.mxu0 0.0
    %7405 = vmatpush2.msra.mxu0 0.0
    %7406 = vmatprep.subr.mxu0 0.0
    %7407 = vmatpush2.msra.mxu0 0.0
    %7408 = vmatprep.subr.mxu0 0.0
    %7409 = vmatpush2.msra.mxu0 0.0
    %7410 = vmatprep.subr.mxu0 0.0
    %7411 = vmatpush2.msra.mxu0 0.0
    %7412 = vmatprep.subr.mxu0 0.0
    %7413 = vmatpush2.msra.mxu0 0.0
    %7414 = vmatprep.subr.mxu0 0.0
    %7415 = vmatpush2.msra.mxu0 0.0
    %7416 = vmatprep.subr.mxu0 0.0
    %7417 = vmatpush2.msra.mxu0 0.0
    %7418 = vmatprep.mubr.f32.mxu0 0.0
    %7419 = vmatmul.mubr.f32.gmra.mxu0 %v7352
    %v7420 = vpop.f32.mrf.mxu0
    %v7421 = vadd.f32 0.0, %v7420
    %v7422 = vpop.f32.mrf.mxu0
    %7423 = vdwg.mxu0
    %v7425 = vsel %vm160, %v7421, 0
    %7427 = vmatprep.subr.mxu0 0.0
    %7428 = vmatpush1.msra.mxu0 0.0
    %7429 = vmatprep.subr.mxu0 0.0
    %7430 = vmatpush1.msra.mxu0 0.0
    %7431 = vmatprep.subr.mxu0 0.0
    %7432 = vmatpush1.msra.mxu0 0.0
    %7433 = vmatprep.subr.mxu0 0.0
    %7434 = vmatpush1.msra.mxu0 0.0
    %7435 = vmatprep.subr.mxu0 0.0
    %7436 = vmatpush1.msra.mxu0 0.0
    %7437 = vmatprep.subr.mxu0 0.0
    %7438 = vmatpush1.msra.mxu0 0.0
    %7439 = vmatprep.subr.mxu0 0.0
    %7440 = vmatpush1.msra.mxu0 0.0
    %7441 = vmatprep.subr.mxu0 0.0
    %7442 = vmatpush1.msra.mxu0 0.0
    %7443 = vmatprep.subr.mxu0 0.0
    %7444 = vmatpush1.msra.mxu0 0.0
    %7445 = vmatprep.subr.mxu0 0.0
    %7446 = vmatpush1.msra.mxu0 0.0
    %7447 = vmatprep.subr.mxu0 0.0
    %7448 = vmatpush1.msra.mxu0 0.0
    %7449 = vmatprep.subr.mxu0 0.0
    %7450 = vmatpush1.msra.mxu0 0.0
    %7451 = vmatprep.subr.mxu0 0.0
    %7452 = vmatpush1.msra.mxu0 0.0
    %7453 = vmatprep.subr.mxu0 0.0
    %7454 = vmatpush1.msra.mxu0 0.0
    %7455 = vmatprep.subr.mxu0 0.0
    %7456 = vmatpush1.msra.mxu0 0.0
    %7457 = vmatprep.subr.mxu0 0.0
    %7458 = vmatpush1.msra.mxu0 %v7348
    %7459 = vmatprep.subr.mxu0 0.0
    %7460 = vmatpush2.msra.mxu0 0.0
    %7461 = vmatprep.subr.mxu0 0.0
    %7462 = vmatpush2.msra.mxu0 0.0
    %7463 = vmatprep.subr.mxu0 0.0
    %7464 = vmatpush2.msra.mxu0 0.0
    %7465 = vmatprep.subr.mxu0 0.0
    %7466 = vmatpush2.msra.mxu0 0.0
    %7467 = vmatprep.subr.mxu0 0.0
    %7468 = vmatpush2.msra.mxu0 0.0
    %7469 = vmatprep.subr.mxu0 0.0
    %7470 = vmatpush2.msra.mxu0 0.0
    %7471 = vmatprep.subr.mxu0 0.0
    %7472 = vmatpush2.msra.mxu0 0.0
    %7473 = vmatprep.subr.mxu0 0.0
    %7474 = vmatpush2.msra.mxu0 0.0
    %7475 = vmatprep.subr.mxu0 0.0
    %7476 = vmatpush2.msra.mxu0 0.0
    %7477 = vmatprep.subr.mxu0 0.0
    %7478 = vmatpush2.msra.mxu0 0.0
    %7479 = vmatprep.subr.mxu0 0.0
    %7480 = vmatpush2.msra.mxu0 0.0
    %7481 = vmatprep.subr.mxu0 0.0
    %7482 = vmatpush2.msra.mxu0 0.0
    %7483 = vmatprep.subr.mxu0 0.0
    %7484 = vmatpush2.msra.mxu0 0.0
    %7485 = vmatprep.subr.mxu0 0.0
    %7486 = vmatpush2.msra.mxu0 0.0
    %7487 = vmatprep.subr.mxu0 0.0
    %7488 = vmatpush2.msra.mxu0 0.0
    %7489 = vmatprep.subr.mxu0 0.0
    %7490 = vmatpush2.msra.mxu0 0.0
    %7491 = vmatprep.mubr.f32.mxu0 0.0
    %7492 = vmatmul.mubr.f32.gmra.mxu0 %v7425
    %v7493 = vpop.f32.mrf.mxu0
    %v7494 = vadd.f32 0.0, %v7493
    %v7495 = vpop.f32.mrf.mxu0
    %7496 = vdwg.mxu0
    %v7497 = vmul.f32 %v7494, 0.5
    %v7498 = vsub.f32 %v183, %v7497
    %v7500 = vsel %vm160, %v7348, 0
    %7502 = vmatprep.subr.mxu0 0.0
    %7503 = vmatpush1.msra.mxu0 0.0
    %7504 = vmatprep.subr.mxu0 0.0
    %7505 = vmatpush1.msra.mxu0 0.0
    %7506 = vmatprep.subr.mxu0 0.0
    %7507 = vmatpush1.msra.mxu0 0.0
    %7508 = vmatprep.subr.mxu0 0.0
    %7509 = vmatpush1.msra.mxu0 0.0
    %7510 = vmatprep.subr.mxu0 0.0
    %7511 = vmatpush1.msra.mxu0 0.0
    %7512 = vmatprep.subr.mxu0 0.0
    %7513 = vmatpush1.msra.mxu0 0.0
    %7514 = vmatprep.subr.mxu0 0.0
    %7515 = vmatpush1.msra.mxu0 0.0
    %7516 = vmatprep.subr.mxu0 0.0
    %7517 = vmatpush1.msra.mxu0 0.0
    %7518 = vmatprep.subr.mxu0 0.0
    %7519 = vmatpush1.msra.mxu0 0.0
    %7520 = vmatprep.subr.mxu0 0.0
    %7521 = vmatpush1.msra.mxu0 0.0
    %7522 = vmatprep.subr.mxu0 0.0
    %7523 = vmatpush1.msra.mxu0 0.0
    %7524 = vmatprep.subr.mxu0 0.0
    %7525 = vmatpush1.msra.mxu0 0.0
    %7526 = vmatprep.subr.mxu0 0.0
    %7527 = vmatpush1.msra.mxu0 0.0
    %7528 = vmatprep.subr.mxu0 0.0
    %7529 = vmatpush1.msra.mxu0 0.0
    %7530 = vmatprep.subr.mxu0 0.0
    %7531 = vmatpush1.msra.mxu0 0.0
    %7532 = vmatprep.subr.mxu0 0.0
    %7533 = vmatpush1.msra.mxu0 %v7498
    %7534 = vmatprep.subr.mxu0 0.0
    %7535 = vmatpush2.msra.mxu0 0.0
    %7536 = vmatprep.subr.mxu0 0.0
    %7537 = vmatpush2.msra.mxu0 0.0
    %7538 = vmatprep.subr.mxu0 0.0
    %7539 = vmatpush2.msra.mxu0 0.0
    %7540 = vmatprep.subr.mxu0 0.0
    %7541 = vmatpush2.msra.mxu0 0.0
    %7542 = vmatprep.subr.mxu0 0.0
    %7543 = vmatpush2.msra.mxu0 0.0
    %7544 = vmatprep.subr.mxu0 0.0
    %7545 = vmatpush2.msra.mxu0 0.0
    %7546 = vmatprep.subr.mxu0 0.0
    %7547 = vmatpush2.msra.mxu0 0.0
    %7548 = vmatprep.subr.mxu0 0.0
    %7549 = vmatpush2.msra.mxu0 0.0
    %7550 = vmatprep.subr.mxu0 0.0
    %7551 = vmatpush2.msra.mxu0 0.0
    %7552 = vmatprep.subr.mxu0 0.0
    %7553 = vmatpush2.msra.mxu0 0.0
    %7554 = vmatprep.subr.mxu0 0.0
    %7555 = vmatpush2.msra.mxu0 0.0
    %7556 = vmatprep.subr.mxu0 0.0
    %7557 = vmatpush2.msra.mxu0 0.0
    %7558 = vmatprep.subr.mxu0 0.0
    %7559 = vmatpush2.msra.mxu0 0.0
    %7560 = vmatprep.subr.mxu0 0.0
    %7561 = vmatpush2.msra.mxu0 0.0
    %7562 = vmatprep.subr.mxu0 0.0
    %7563 = vmatpush2.msra.mxu0 0.0
    %7564 = vmatprep.subr.mxu0 0.0
    %7565 = vmatpush2.msra.mxu0 0.0
    %7566 = vmatprep.mubr.f32.mxu0 0.0
    %7567 = vmatmul.mubr.f32.gmra.mxu0 %v7500
    %v7568 = vpop.f32.mrf.mxu0
    %v7569 = vadd.f32 0.0, %v7568
    %v7570 = vpop.f32.mrf.mxu0
    %7571 = vdwg.mxu0
    %v7573 = vsel %vm160, %v7498, 0
    %7575 = vmatprep.subr.mxu0 0.0
    %7576 = vmatpush1.msra.mxu0 0.0
    %7577 = vmatprep.subr.mxu0 0.0
    %7578 = vmatpush1.msra.mxu0 0.0
    %7579 = vmatprep.subr.mxu0 0.0
    %7580 = vmatpush1.msra.mxu0 0.0
    %7581 = vmatprep.subr.mxu0 0.0
    %7582 = vmatpush1.msra.mxu0 0.0
    %7583 = vmatprep.subr.mxu0 0.0
    %7584 = vmatpush1.msra.mxu0 0.0
    %7585 = vmatprep.subr.mxu0 0.0
    %7586 = vmatpush1.msra.mxu0 0.0
    %7587 = vmatprep.subr.mxu0 0.0
    %7588 = vmatpush1.msra.mxu0 0.0
    %7589 = vmatprep.subr.mxu0 0.0
    %7590 = vmatpush1.msra.mxu0 0.0
    %7591 = vmatprep.subr.mxu0 0.0
    %7592 = vmatpush1.msra.mxu0 0.0
    %7593 = vmatprep.subr.mxu0 0.0
    %7594 = vmatpush1.msra.mxu0 0.0
    %7595 = vmatprep.subr.mxu0 0.0
    %7596 = vmatpush1.msra.mxu0 0.0
    %7597 = vmatprep.subr.mxu0 0.0
    %7598 = vmatpush1.msra.mxu0 0.0
    %7599 = vmatprep.subr.mxu0 0.0
    %7600 = vmatpush1.msra.mxu0 0.0
    %7601 = vmatprep.subr.mxu0 0.0
    %7602 = vmatpush1.msra.mxu0 0.0
    %7603 = vmatprep.subr.mxu0 0.0
    %7604 = vmatpush1.msra.mxu0 0.0
    %7605 = vmatprep.subr.mxu0 0.0
    %7606 = vmatpush1.msra.mxu0 %v7421
    %7607 = vmatprep.subr.mxu0 0.0
    %7608 = vmatpush2.msra.mxu0 0.0
    %7609 = vmatprep.subr.mxu0 0.0
    %7610 = vmatpush2.msra.mxu0 0.0
    %7611 = vmatprep.subr.mxu0 0.0
    %7612 = vmatpush2.msra.mxu0 0.0
    %7613 = vmatprep.subr.mxu0 0.0
    %7614 = vmatpush2.msra.mxu0 0.0
    %7615 = vmatprep.subr.mxu0 0.0
    %7616 = vmatpush2.msra.mxu0 0.0
    %7617 = vmatprep.subr.mxu0 0.0
    %7618 = vmatpush2.msra.mxu0 0.0
    %7619 = vmatprep.subr.mxu0 0.0
    %7620 = vmatpush2.msra.mxu0 0.0
    %7621 = vmatprep.subr.mxu0 0.0
    %7622 = vmatpush2.msra.mxu0 0.0
    %7623 = vmatprep.subr.mxu0 0.0
    %7624 = vmatpush2.msra.mxu0 0.0
    %7625 = vmatprep.subr.mxu0 0.0
    %7626 = vmatpush2.msra.mxu0 0.0
    %7627 = vmatprep.subr.mxu0 0.0
    %7628 = vmatpush2.msra.mxu0 0.0
    %7629 = vmatprep.subr.mxu0 0.0
    %7630 = vmatpush2.msra.mxu0 0.0
    %7631 = vmatprep.subr.mxu0 0.0
    %7632 = vmatpush2.msra.mxu0 0.0
    %7633 = vmatprep.subr.mxu0 0.0
    %7634 = vmatpush2.msra.mxu0 0.0
    %7635 = vmatprep.subr.mxu0 0.0
    %7636 = vmatpush2.msra.mxu0 0.0
    %7637 = vmatprep.subr.mxu0 0.0
    %7638 = vmatpush2.msra.mxu0 0.0
    %7639 = vmatprep.mubr.f32.mxu0 0.0
    %7640 = vmatmul.mubr.f32.gmra.mxu0 %v7573
    %v7641 = vpop.f32.mrf.mxu0
    %v7642 = vadd.f32 0.0, %v7641
    %v7643 = vpop.f32.mrf.mxu0
    %7644 = vdwg.mxu0
    %v7646 = vsel %vm160, %v7642, 0
    %7648 = vmatprep.subr.mxu0 0.0
    %7649 = vmatpush1.msra.mxu0 0.0
    %7650 = vmatprep.subr.mxu0 0.0
    %7651 = vmatpush1.msra.mxu0 0.0
    %7652 = vmatprep.subr.mxu0 0.0
    %7653 = vmatpush1.msra.mxu0 0.0
    %7654 = vmatprep.subr.mxu0 0.0
    %7655 = vmatpush1.msra.mxu0 0.0
    %7656 = vmatprep.subr.mxu0 0.0
    %7657 = vmatpush1.msra.mxu0 0.0
    %7658 = vmatprep.subr.mxu0 0.0
    %7659 = vmatpush1.msra.mxu0 0.0
    %7660 = vmatprep.subr.mxu0 0.0
    %7661 = vmatpush1.msra.mxu0 0.0
    %7662 = vmatprep.subr.mxu0 0.0
    %7663 = vmatpush1.msra.mxu0 0.0
    %7664 = vmatprep.subr.mxu0 0.0
    %7665 = vmatpush1.msra.mxu0 0.0
    %7666 = vmatprep.subr.mxu0 0.0
    %7667 = vmatpush1.msra.mxu0 0.0
    %7668 = vmatprep.subr.mxu0 0.0
    %7669 = vmatpush1.msra.mxu0 0.0
    %7670 = vmatprep.subr.mxu0 0.0
    %7671 = vmatpush1.msra.mxu0 0.0
    %7672 = vmatprep.subr.mxu0 0.0
    %7673 = vmatpush1.msra.mxu0 0.0
    %7674 = vmatprep.subr.mxu0 0.0
    %7675 = vmatpush1.msra.mxu0 0.0
    %7676 = vmatprep.subr.mxu0 0.0
    %7677 = vmatpush1.msra.mxu0 0.0
    %7678 = vmatprep.subr.mxu0 0.0
    %7679 = vmatpush1.msra.mxu0 %v7569
    %7680 = vmatprep.subr.mxu0 0.0
    %7681 = vmatpush2.msra.mxu0 0.0
    %7682 = vmatprep.subr.mxu0 0.0
    %7683 = vmatpush2.msra.mxu0 0.0
    %7684 = vmatprep.subr.mxu0 0.0
    %7685 = vmatpush2.msra.mxu0 0.0
    %7686 = vmatprep.subr.mxu0 0.0
    %7687 = vmatpush2.msra.mxu0 0.0
    %7688 = vmatprep.subr.mxu0 0.0
    %7689 = vmatpush2.msra.mxu0 0.0
    %7690 = vmatprep.subr.mxu0 0.0
    %7691 = vmatpush2.msra.mxu0 0.0
    %7692 = vmatprep.subr.mxu0 0.0
    %7693 = vmatpush2.msra.mxu0 0.0
    %7694 = vmatprep.subr.mxu0 0.0
    %7695 = vmatpush2.msra.mxu0 0.0
    %7696 = vmatprep.subr.mxu0 0.0
    %7697 = vmatpush2.msra.mxu0 0.0
    %7698 = vmatprep.subr.mxu0 0.0
    %7699 = vmatpush2.msra.mxu0 0.0
    %7700 = vmatprep.subr.mxu0 0.0
    %7701 = vmatpush2.msra.mxu0 0.0
    %7702 = vmatprep.subr.mxu0 0.0
    %7703 = vmatpush2.msra.mxu0 0.0
    %7704 = vmatprep.subr.mxu0 0.0
    %7705 = vmatpush2.msra.mxu0 0.0
    %7706 = vmatprep.subr.mxu0 0.0
    %7707 = vmatpush2.msra.mxu0 0.0
    %7708 = vmatprep.subr.mxu0 0.0
    %7709 = vmatpush2.msra.mxu0 0.0
    %7710 = vmatprep.subr.mxu0 0.0
    %7711 = vmatpush2.msra.mxu0 0.0
    %7712 = vmatprep.mubr.f32.mxu0 0.0
    %7713 = vmatmul.mubr.f32.gmra.mxu0 %v7646
    %v7714 = vpop.f32.mrf.mxu0
    %v7715 = vadd.f32 0.0, %v7714
    %v7716 = vpop.f32.mrf.mxu0
    %7717 = vdwg.mxu0
    %v7718 = vmul.f32 %v7715, 0.5
    %v7719 = vsub.f32 %v183, %v7718
    %v7721 = vsel %vm160, %v7569, 0
    %7723 = vmatprep.subr.mxu0 0.0
    %7724 = vmatpush1.msra.mxu0 0.0
    %7725 = vmatprep.subr.mxu0 0.0
    %7726 = vmatpush1.msra.mxu0 0.0
    %7727 = vmatprep.subr.mxu0 0.0
    %7728 = vmatpush1.msra.mxu0 0.0
    %7729 = vmatprep.subr.mxu0 0.0
    %7730 = vmatpush1.msra.mxu0 0.0
    %7731 = vmatprep.subr.mxu0 0.0
    %7732 = vmatpush1.msra.mxu0 0.0
    %7733 = vmatprep.subr.mxu0 0.0
    %7734 = vmatpush1.msra.mxu0 0.0
    %7735 = vmatprep.subr.mxu0 0.0
    %7736 = vmatpush1.msra.mxu0 0.0
    %7737 = vmatprep.subr.mxu0 0.0
    %7738 = vmatpush1.msra.mxu0 0.0
    %7739 = vmatprep.subr.mxu0 0.0
    %7740 = vmatpush1.msra.mxu0 0.0
    %7741 = vmatprep.subr.mxu0 0.0
    %7742 = vmatpush1.msra.mxu0 0.0
    %7743 = vmatprep.subr.mxu0 0.0
    %7744 = vmatpush1.msra.mxu0 0.0
    %7745 = vmatprep.subr.mxu0 0.0
    %7746 = vmatpush1.msra.mxu0 0.0
    %7747 = vmatprep.subr.mxu0 0.0
    %7748 = vmatpush1.msra.mxu0 0.0
    %7749 = vmatprep.subr.mxu0 0.0
    %7750 = vmatpush1.msra.mxu0 0.0
    %7751 = vmatprep.subr.mxu0 0.0
    %7752 = vmatpush1.msra.mxu0 0.0
    %7753 = vmatprep.subr.mxu0 0.0
    %7754 = vmatpush1.msra.mxu0 %v7719
    %7755 = vmatprep.subr.mxu0 0.0
    %7756 = vmatpush2.msra.mxu0 0.0
    %7757 = vmatprep.subr.mxu0 0.0
    %7758 = vmatpush2.msra.mxu0 0.0
    %7759 = vmatprep.subr.mxu0 0.0
    %7760 = vmatpush2.msra.mxu0 0.0
    %7761 = vmatprep.subr.mxu0 0.0
    %7762 = vmatpush2.msra.mxu0 0.0
    %7763 = vmatprep.subr.mxu0 0.0
    %7764 = vmatpush2.msra.mxu0 0.0
    %7765 = vmatprep.subr.mxu0 0.0
    %7766 = vmatpush2.msra.mxu0 0.0
    %7767 = vmatprep.subr.mxu0 0.0
    %7768 = vmatpush2.msra.mxu0 0.0
    %7769 = vmatprep.subr.mxu0 0.0
    %7770 = vmatpush2.msra.mxu0 0.0
    %7771 = vmatprep.subr.mxu0 0.0
    %7772 = vmatpush2.msra.mxu0 0.0
    %7773 = vmatprep.subr.mxu0 0.0
    %7774 = vmatpush2.msra.mxu0 0.0
    %7775 = vmatprep.subr.mxu0 0.0
    %7776 = vmatpush2.msra.mxu0 0.0
    %7777 = vmatprep.subr.mxu0 0.0
    %7778 = vmatpush2.msra.mxu0 0.0
    %7779 = vmatprep.subr.mxu0 0.0
    %7780 = vmatpush2.msra.mxu0 0.0
    %7781 = vmatprep.subr.mxu0 0.0
    %7782 = vmatpush2.msra.mxu0 0.0
    %7783 = vmatprep.subr.mxu0 0.0
    %7784 = vmatpush2.msra.mxu0 0.0
    %7785 = vmatprep.subr.mxu0 0.0
    %7786 = vmatpush2.msra.mxu0 0.0
    %7787 = vmatprep.mubr.f32.mxu0 0.0
    %7788 = vmatmul.mubr.f32.gmra.mxu0 %v7721
    %v7789 = vpop.f32.mrf.mxu0
    %v7790 = vadd.f32 0.0, %v7789
    %v7791 = vpop.f32.mrf.mxu0
    %7792 = vdwg.mxu0
    %v7794 = vsel %vm160, %v7719, 0
    %7796 = vmatprep.subr.mxu0 0.0
    %7797 = vmatpush1.msra.mxu0 0.0
    %7798 = vmatprep.subr.mxu0 0.0
    %7799 = vmatpush1.msra.mxu0 0.0
    %7800 = vmatprep.subr.mxu0 0.0
    %7801 = vmatpush1.msra.mxu0 0.0
    %7802 = vmatprep.subr.mxu0 0.0
    %7803 = vmatpush1.msra.mxu0 0.0
    %7804 = vmatprep.subr.mxu0 0.0
    %7805 = vmatpush1.msra.mxu0 0.0
    %7806 = vmatprep.subr.mxu0 0.0
    %7807 = vmatpush1.msra.mxu0 0.0
    %7808 = vmatprep.subr.mxu0 0.0
    %7809 = vmatpush1.msra.mxu0 0.0
    %7810 = vmatprep.subr.mxu0 0.0
    %7811 = vmatpush1.msra.mxu0 0.0
    %7812 = vmatprep.subr.mxu0 0.0
    %7813 = vmatpush1.msra.mxu0 0.0
    %7814 = vmatprep.subr.mxu0 0.0
    %7815 = vmatpush1.msra.mxu0 0.0
    %7816 = vmatprep.subr.mxu0 0.0
    %7817 = vmatpush1.msra.mxu0 0.0
    %7818 = vmatprep.subr.mxu0 0.0
    %7819 = vmatpush1.msra.mxu0 0.0
    %7820 = vmatprep.subr.mxu0 0.0
    %7821 = vmatpush1.msra.mxu0 0.0
    %7822 = vmatprep.subr.mxu0 0.0
    %7823 = vmatpush1.msra.mxu0 0.0
    %7824 = vmatprep.subr.mxu0 0.0
    %7825 = vmatpush1.msra.mxu0 0.0
    %7826 = vmatprep.subr.mxu0 0.0
    %7827 = vmatpush1.msra.mxu0 %v7642
    %7828 = vmatprep.subr.mxu0 0.0
    %7829 = vmatpush2.msra.mxu0 0.0
    %7830 = vmatprep.subr.mxu0 0.0
    %7831 = vmatpush2.msra.mxu0 0.0
    %7832 = vmatprep.subr.mxu0 0.0
    %7833 = vmatpush2.msra.mxu0 0.0
    %7834 = vmatprep.subr.mxu0 0.0
    %7835 = vmatpush2.msra.mxu0 0.0
    %7836 = vmatprep.subr.mxu0 0.0
    %7837 = vmatpush2.msra.mxu0 0.0
    %7838 = vmatprep.subr.mxu0 0.0
    %7839 = vmatpush2.msra.mxu0 0.0
    %7840 = vmatprep.subr.mxu0 0.0
    %7841 = vmatpush2.msra.mxu0 0.0
    %7842 = vmatprep.subr.mxu0 0.0
    %7843 = vmatpush2.msra.mxu0 0.0
    %7844 = vmatprep.subr.mxu0 0.0
    %7845 = vmatpush2.msra.mxu0 0.0
    %7846 = vmatprep.subr.mxu0 0.0
    %7847 = vmatpush2.msra.mxu0 0.0
    %7848 = vmatprep.subr.mxu0 0.0
    %7849 = vmatpush2.msra.mxu0 0.0
    %7850 = vmatprep.subr.mxu0 0.0
    %7851 = vmatpush2.msra.mxu0 0.0
    %7852 = vmatprep.subr.mxu0 0.0
    %7853 = vmatpush2.msra.mxu0 0.0
    %7854 = vmatprep.subr.mxu0 0.0
    %7855 = vmatpush2.msra.mxu0 0.0
    %7856 = vmatprep.subr.mxu0 0.0
    %7857 = vmatpush2.msra.mxu0 0.0
    %7858 = vmatprep.subr.mxu0 0.0
    %7859 = vmatpush2.msra.mxu0 0.0
    %7860 = vmatprep.mubr.f32.mxu0 0.0
    %7861 = vmatmul.mubr.f32.gmra.mxu0 %v7794
    %v7862 = vpop.f32.mrf.mxu0
    %v7863 = vadd.f32 0.0, %v7862
    %v7864 = vpop.f32.mrf.mxu0
    %7865 = vdwg.mxu0
    %v7867 = vsel %vm160, %v7863, 0
    %7869 = vmatprep.subr.mxu0 0.0
    %7870 = vmatpush1.msra.mxu0 0.0
    %7871 = vmatprep.subr.mxu0 0.0
    %7872 = vmatpush1.msra.mxu0 0.0
    %7873 = vmatprep.subr.mxu0 0.0
    %7874 = vmatpush1.msra.mxu0 0.0
    %7875 = vmatprep.subr.mxu0 0.0
    %7876 = vmatpush1.msra.mxu0 0.0
    %7877 = vmatprep.subr.mxu0 0.0
    %7878 = vmatpush1.msra.mxu0 0.0
    %7879 = vmatprep.subr.mxu0 0.0
    %7880 = vmatpush1.msra.mxu0 0.0
    %7881 = vmatprep.subr.mxu0 0.0
    %7882 = vmatpush1.msra.mxu0 0.0
    %7883 = vmatprep.subr.mxu0 0.0
    %7884 = vmatpush1.msra.mxu0 0.0
    %7885 = vmatprep.subr.mxu0 0.0
    %7886 = vmatpush1.msra.mxu0 0.0
    %7887 = vmatprep.subr.mxu0 0.0
    %7888 = vmatpush1.msra.mxu0 0.0
    %7889 = vmatprep.subr.mxu0 0.0
    %7890 = vmatpush1.msra.mxu0 0.0
    %7891 = vmatprep.subr.mxu0 0.0
    %7892 = vmatpush1.msra.mxu0 0.0
    %7893 = vmatprep.subr.mxu0 0.0
    %7894 = vmatpush1.msra.mxu0 0.0
    %7895 = vmatprep.subr.mxu0 0.0
    %7896 = vmatpush1.msra.mxu0 0.0
    %7897 = vmatprep.subr.mxu0 0.0
    %7898 = vmatpush1.msra.mxu0 0.0
    %7899 = vmatprep.subr.mxu0 0.0
    %7900 = vmatpush1.msra.mxu0 %v7790
    %7901 = vmatprep.subr.mxu0 0.0
    %7902 = vmatpush2.msra.mxu0 0.0
    %7903 = vmatprep.subr.mxu0 0.0
    %7904 = vmatpush2.msra.mxu0 0.0
    %7905 = vmatprep.subr.mxu0 0.0
    %7906 = vmatpush2.msra.mxu0 0.0
    %7907 = vmatprep.subr.mxu0 0.0
    %7908 = vmatpush2.msra.mxu0 0.0
    %7909 = vmatprep.subr.mxu0 0.0
    %7910 = vmatpush2.msra.mxu0 0.0
    %7911 = vmatprep.subr.mxu0 0.0
    %7912 = vmatpush2.msra.mxu0 0.0
    %7913 = vmatprep.subr.mxu0 0.0
    %7914 = vmatpush2.msra.mxu0 0.0
    %7915 = vmatprep.subr.mxu0 0.0
    %7916 = vmatpush2.msra.mxu0 0.0
    %7917 = vmatprep.subr.mxu0 0.0
    %7918 = vmatpush2.msra.mxu0 0.0
    %7919 = vmatprep.subr.mxu0 0.0
    %7920 = vmatpush2.msra.mxu0 0.0
    %7921 = vmatprep.subr.mxu0 0.0
    %7922 = vmatpush2.msra.mxu0 0.0
    %7923 = vmatprep.subr.mxu0 0.0
    %7924 = vmatpush2.msra.mxu0 0.0
    %7925 = vmatprep.subr.mxu0 0.0
    %7926 = vmatpush2.msra.mxu0 0.0
    %7927 = vmatprep.subr.mxu0 0.0
    %7928 = vmatpush2.msra.mxu0 0.0
    %7929 = vmatprep.subr.mxu0 0.0
    %7930 = vmatpush2.msra.mxu0 0.0
    %7931 = vmatprep.subr.mxu0 0.0
    %7932 = vmatpush2.msra.mxu0 0.0
    %7933 = vmatprep.mubr.f32.mxu0 0.0
    %7934 = vmatmul.mubr.f32.gmra.mxu0 %v7867
    %v7935 = vpop.f32.mrf.mxu0
    %v7936 = vadd.f32 0.0, %v7935
    %v7937 = vpop.f32.mrf.mxu0
    %7938 = vdwg.mxu0
    %v7939 = vmul.f32 %v7936, 0.5
    %v7940 = vsub.f32 %v183, %v7939
    %v7942 = vsel %vm160, %v7790, 0
    %7944 = vmatprep.subr.mxu0 0.0
    %7945 = vmatpush1.msra.mxu0 0.0
    %7946 = vmatprep.subr.mxu0 0.0
    %7947 = vmatpush1.msra.mxu0 0.0
    %7948 = vmatprep.subr.mxu0 0.0
    %7949 = vmatpush1.msra.mxu0 0.0
    %7950 = vmatprep.subr.mxu0 0.0
    %7951 = vmatpush1.msra.mxu0 0.0
    %7952 = vmatprep.subr.mxu0 0.0
    %7953 = vmatpush1.msra.mxu0 0.0
    %7954 = vmatprep.subr.mxu0 0.0
    %7955 = vmatpush1.msra.mxu0 0.0
    %7956 = vmatprep.subr.mxu0 0.0
    %7957 = vmatpush1.msra.mxu0 0.0
    %7958 = vmatprep.subr.mxu0 0.0
    %7959 = vmatpush1.msra.mxu0 0.0
    %7960 = vmatprep.subr.mxu0 0.0
    %7961 = vmatpush1.msra.mxu0 0.0
    %7962 = vmatprep.subr.mxu0 0.0
    %7963 = vmatpush1.msra.mxu0 0.0
    %7964 = vmatprep.subr.mxu0 0.0
    %7965 = vmatpush1.msra.mxu0 0.0
    %7966 = vmatprep.subr.mxu0 0.0
    %7967 = vmatpush1.msra.mxu0 0.0
    %7968 = vmatprep.subr.mxu0 0.0
    %7969 = vmatpush1.msra.mxu0 0.0
    %7970 = vmatprep.subr.mxu0 0.0
    %7971 = vmatpush1.msra.mxu0 0.0
    %7972 = vmatprep.subr.mxu0 0.0
    %7973 = vmatpush1.msra.mxu0 0.0
    %7974 = vmatprep.subr.mxu0 0.0
    %7975 = vmatpush1.msra.mxu0 %v7940
    %7976 = vmatprep.subr.mxu0 0.0
    %7977 = vmatpush2.msra.mxu0 0.0
    %7978 = vmatprep.subr.mxu0 0.0
    %7979 = vmatpush2.msra.mxu0 0.0
    %7980 = vmatprep.subr.mxu0 0.0
    %7981 = vmatpush2.msra.mxu0 0.0
    %7982 = vmatprep.subr.mxu0 0.0
    %7983 = vmatpush2.msra.mxu0 0.0
    %7984 = vmatprep.subr.mxu0 0.0
    %7985 = vmatpush2.msra.mxu0 0.0
    %7986 = vmatprep.subr.mxu0 0.0
    %7987 = vmatpush2.msra.mxu0 0.0
    %7988 = vmatprep.subr.mxu0 0.0
    %7989 = vmatpush2.msra.mxu0 0.0
    %7990 = vmatprep.subr.mxu0 0.0
    %7991 = vmatpush2.msra.mxu0 0.0
    %7992 = vmatprep.subr.mxu0 0.0
    %7993 = vmatpush2.msra.mxu0 0.0
    %7994 = vmatprep.subr.mxu0 0.0
    %7995 = vmatpush2.msra.mxu0 0.0
    %7996 = vmatprep.subr.mxu0 0.0
    %7997 = vmatpush2.msra.mxu0 0.0
    %7998 = vmatprep.subr.mxu0 0.0
    %7999 = vmatpush2.msra.mxu0 0.0
    %8000 = vmatprep.subr.mxu0 0.0
    %8001 = vmatpush2.msra.mxu0 0.0
    %8002 = vmatprep.subr.mxu0 0.0
    %8003 = vmatpush2.msra.mxu0 0.0
    %8004 = vmatprep.subr.mxu0 0.0
    %8005 = vmatpush2.msra.mxu0 0.0
    %8006 = vmatprep.subr.mxu0 0.0
    %8007 = vmatpush2.msra.mxu0 0.0
    %8008 = vmatprep.mubr.f32.mxu0 0.0
    %8009 = vmatmul.mubr.f32.gmra.mxu0 %v7942
    %v8010 = vpop.f32.mrf.mxu0
    %v8011 = vadd.f32 0.0, %v8010
    %v8012 = vpop.f32.mrf.mxu0
    %8013 = vdwg.mxu0
    %v8015 = vsel %vm160, %v7940, 0
    %8017 = vmatprep.subr.mxu0 0.0
    %8018 = vmatpush1.msra.mxu0 0.0
    %8019 = vmatprep.subr.mxu0 0.0
    %8020 = vmatpush1.msra.mxu0 0.0
    %8021 = vmatprep.subr.mxu0 0.0
    %8022 = vmatpush1.msra.mxu0 0.0
    %8023 = vmatprep.subr.mxu0 0.0
    %8024 = vmatpush1.msra.mxu0 0.0
    %8025 = vmatprep.subr.mxu0 0.0
    %8026 = vmatpush1.msra.mxu0 0.0
    %8027 = vmatprep.subr.mxu0 0.0
    %8028 = vmatpush1.msra.mxu0 0.0
    %8029 = vmatprep.subr.mxu0 0.0
    %8030 = vmatpush1.msra.mxu0 0.0
    %8031 = vmatprep.subr.mxu0 0.0
    %8032 = vmatpush1.msra.mxu0 0.0
    %8033 = vmatprep.subr.mxu0 0.0
    %8034 = vmatpush1.msra.mxu0 0.0
    %8035 = vmatprep.subr.mxu0 0.0
    %8036 = vmatpush1.msra.mxu0 0.0
    %8037 = vmatprep.subr.mxu0 0.0
    %8038 = vmatpush1.msra.mxu0 0.0
    %8039 = vmatprep.subr.mxu0 0.0
    %8040 = vmatpush1.msra.mxu0 0.0
    %8041 = vmatprep.subr.mxu0 0.0
    %8042 = vmatpush1.msra.mxu0 0.0
    %8043 = vmatprep.subr.mxu0 0.0
    %8044 = vmatpush1.msra.mxu0 0.0
    %8045 = vmatprep.subr.mxu0 0.0
    %8046 = vmatpush1.msra.mxu0 0.0
    %8047 = vmatprep.subr.mxu0 0.0
    %8048 = vmatpush1.msra.mxu0 %v7863
    %8049 = vmatprep.subr.mxu0 0.0
    %8050 = vmatpush2.msra.mxu0 0.0
    %8051 = vmatprep.subr.mxu0 0.0
    %8052 = vmatpush2.msra.mxu0 0.0
    %8053 = vmatprep.subr.mxu0 0.0
    %8054 = vmatpush2.msra.mxu0 0.0
    %8055 = vmatprep.subr.mxu0 0.0
    %8056 = vmatpush2.msra.mxu0 0.0
    %8057 = vmatprep.subr.mxu0 0.0
    %8058 = vmatpush2.msra.mxu0 0.0
    %8059 = vmatprep.subr.mxu0 0.0
    %8060 = vmatpush2.msra.mxu0 0.0
    %8061 = vmatprep.subr.mxu0 0.0
    %8062 = vmatpush2.msra.mxu0 0.0
    %8063 = vmatprep.subr.mxu0 0.0
    %8064 = vmatpush2.msra.mxu0 0.0
    %8065 = vmatprep.subr.mxu0 0.0
    %8066 = vmatpush2.msra.mxu0 0.0
    %8067 = vmatprep.subr.mxu0 0.0
    %8068 = vmatpush2.msra.mxu0 0.0
    %8069 = vmatprep.subr.mxu0 0.0
    %8070 = vmatpush2.msra.mxu0 0.0
    %8071 = vmatprep.subr.mxu0 0.0
    %8072 = vmatpush2.msra.mxu0 0.0
    %8073 = vmatprep.subr.mxu0 0.0
    %8074 = vmatpush2.msra.mxu0 0.0
    %8075 = vmatprep.subr.mxu0 0.0
    %8076 = vmatpush2.msra.mxu0 0.0
    %8077 = vmatprep.subr.mxu0 0.0
    %8078 = vmatpush2.msra.mxu0 0.0
    %8079 = vmatprep.subr.mxu0 0.0
    %8080 = vmatpush2.msra.mxu0 0.0
    %8081 = vmatprep.mubr.f32.mxu0 0.0
    %8082 = vmatmul.mubr.f32.gmra.mxu0 %v8015
    %v8083 = vpop.f32.mrf.mxu0
    %v8084 = vadd.f32 0.0, %v8083
    %v8085 = vpop.f32.mrf.mxu0
    %8086 = vdwg.mxu0
    %v8088 = vsel %vm160, %v8084, 0
    %8090 = vmatprep.subr.mxu0 0.0
    %8091 = vmatpush1.msra.mxu0 0.0
    %8092 = vmatprep.subr.mxu0 0.0
    %8093 = vmatpush1.msra.mxu0 0.0
    %8094 = vmatprep.subr.mxu0 0.0
    %8095 = vmatpush1.msra.mxu0 0.0
    %8096 = vmatprep.subr.mxu0 0.0
    %8097 = vmatpush1.msra.mxu0 0.0
    %8098 = vmatprep.subr.mxu0 0.0
    %8099 = vmatpush1.msra.mxu0 0.0
    %8100 = vmatprep.subr.mxu0 0.0
    %8101 = vmatpush1.msra.mxu0 0.0
    %8102 = vmatprep.subr.mxu0 0.0
    %8103 = vmatpush1.msra.mxu0 0.0
    %8104 = vmatprep.subr.mxu0 0.0
    %8105 = vmatpush1.msra.mxu0 0.0
    %8106 = vmatprep.subr.mxu0 0.0
    %8107 = vmatpush1.msra.mxu0 0.0
    %8108 = vmatprep.subr.mxu0 0.0
    %8109 = vmatpush1.msra.mxu0 0.0
    %8110 = vmatprep.subr.mxu0 0.0
    %8111 = vmatpush1.msra.mxu0 0.0
    %8112 = vmatprep.subr.mxu0 0.0
    %8113 = vmatpush1.msra.mxu0 0.0
    %8114 = vmatprep.subr.mxu0 0.0
    %8115 = vmatpush1.msra.mxu0 0.0
    %8116 = vmatprep.subr.mxu0 0.0
    %8117 = vmatpush1.msra.mxu0 0.0
    %8118 = vmatprep.subr.mxu0 0.0
    %8119 = vmatpush1.msra.mxu0 0.0
    %8120 = vmatprep.subr.mxu0 0.0
    %8121 = vmatpush1.msra.mxu0 %v8011
    %8122 = vmatprep.subr.mxu0 0.0
    %8123 = vmatpush2.msra.mxu0 0.0
    %8124 = vmatprep.subr.mxu0 0.0
    %8125 = vmatpush2.msra.mxu0 0.0
    %8126 = vmatprep.subr.mxu0 0.0
    %8127 = vmatpush2.msra.mxu0 0.0
    %8128 = vmatprep.subr.mxu0 0.0
    %8129 = vmatpush2.msra.mxu0 0.0
    %8130 = vmatprep.subr.mxu0 0.0
    %8131 = vmatpush2.msra.mxu0 0.0
    %8132 = vmatprep.subr.mxu0 0.0
    %8133 = vmatpush2.msra.mxu0 0.0
    %8134 = vmatprep.subr.mxu0 0.0
    %8135 = vmatpush2.msra.mxu0 0.0
    %8136 = vmatprep.subr.mxu0 0.0
    %8137 = vmatpush2.msra.mxu0 0.0
    %8138 = vmatprep.subr.mxu0 0.0
    %8139 = vmatpush2.msra.mxu0 0.0
    %8140 = vmatprep.subr.mxu0 0.0
    %8141 = vmatpush2.msra.mxu0 0.0
    %8142 = vmatprep.subr.mxu0 0.0
    %8143 = vmatpush2.msra.mxu0 0.0
    %8144 = vmatprep.subr.mxu0 0.0
    %8145 = vmatpush2.msra.mxu0 0.0
    %8146 = vmatprep.subr.mxu0 0.0
    %8147 = vmatpush2.msra.mxu0 0.0
    %8148 = vmatprep.subr.mxu0 0.0
    %8149 = vmatpush2.msra.mxu0 0.0
    %8150 = vmatprep.subr.mxu0 0.0
    %8151 = vmatpush2.msra.mxu0 0.0
    %8152 = vmatprep.subr.mxu0 0.0
    %8153 = vmatpush2.msra.mxu0 0.0
    %8154 = vmatprep.mubr.f32.mxu0 0.0
    %8155 = vmatmul.mubr.f32.gmra.mxu0 %v8088
    %v8156 = vpop.f32.mrf.mxu0
    %v8157 = vadd.f32 0.0, %v8156
    %v8158 = vpop.f32.mrf.mxu0
    %8159 = vdwg.mxu0
    %v8160 = vmul.f32 %v8157, 0.5
    %v8161 = vsub.f32 %v183, %v8160
    %v8163 = vsel %vm160, %v8011, 0
    %8165 = vmatprep.subr.mxu0 0.0
    %8166 = vmatpush1.msra.mxu0 0.0
    %8167 = vmatprep.subr.mxu0 0.0
    %8168 = vmatpush1.msra.mxu0 0.0
    %8169 = vmatprep.subr.mxu0 0.0
    %8170 = vmatpush1.msra.mxu0 0.0
    %8171 = vmatprep.subr.mxu0 0.0
    %8172 = vmatpush1.msra.mxu0 0.0
    %8173 = vmatprep.subr.mxu0 0.0
    %8174 = vmatpush1.msra.mxu0 0.0
    %8175 = vmatprep.subr.mxu0 0.0
    %8176 = vmatpush1.msra.mxu0 0.0
    %8177 = vmatprep.subr.mxu0 0.0
    %8178 = vmatpush1.msra.mxu0 0.0
    %8179 = vmatprep.subr.mxu0 0.0
    %8180 = vmatpush1.msra.mxu0 0.0
    %8181 = vmatprep.subr.mxu0 0.0
    %8182 = vmatpush1.msra.mxu0 0.0
    %8183 = vmatprep.subr.mxu0 0.0
    %8184 = vmatpush1.msra.mxu0 0.0
    %8185 = vmatprep.subr.mxu0 0.0
    %8186 = vmatpush1.msra.mxu0 0.0
    %8187 = vmatprep.subr.mxu0 0.0
    %8188 = vmatpush1.msra.mxu0 0.0
    %8189 = vmatprep.subr.mxu0 0.0
    %8190 = vmatpush1.msra.mxu0 0.0
    %8191 = vmatprep.subr.mxu0 0.0
    %8192 = vmatpush1.msra.mxu0 0.0
    %8193 = vmatprep.subr.mxu0 0.0
    %8194 = vmatpush1.msra.mxu0 0.0
    %8195 = vmatprep.subr.mxu0 0.0
    %8196 = vmatpush1.msra.mxu0 %v8161
    %8197 = vmatprep.subr.mxu0 0.0
    %8198 = vmatpush2.msra.mxu0 0.0
    %8199 = vmatprep.subr.mxu0 0.0
    %8200 = vmatpush2.msra.mxu0 0.0
    %8201 = vmatprep.subr.mxu0 0.0
    %8202 = vmatpush2.msra.mxu0 0.0
    %8203 = vmatprep.subr.mxu0 0.0
    %8204 = vmatpush2.msra.mxu0 0.0
    %8205 = vmatprep.subr.mxu0 0.0
    %8206 = vmatpush2.msra.mxu0 0.0
    %8207 = vmatprep.subr.mxu0 0.0
    %8208 = vmatpush2.msra.mxu0 0.0
    %8209 = vmatprep.subr.mxu0 0.0
    %8210 = vmatpush2.msra.mxu0 0.0
    %8211 = vmatprep.subr.mxu0 0.0
    %8212 = vmatpush2.msra.mxu0 0.0
    %8213 = vmatprep.subr.mxu0 0.0
    %8214 = vmatpush2.msra.mxu0 0.0
    %8215 = vmatprep.subr.mxu0 0.0
    %8216 = vmatpush2.msra.mxu0 0.0
    %8217 = vmatprep.subr.mxu0 0.0
    %8218 = vmatpush2.msra.mxu0 0.0
    %8219 = vmatprep.subr.mxu0 0.0
    %8220 = vmatpush2.msra.mxu0 0.0
    %8221 = vmatprep.subr.mxu0 0.0
    %8222 = vmatpush2.msra.mxu0 0.0
    %8223 = vmatprep.subr.mxu0 0.0
    %8224 = vmatpush2.msra.mxu0 0.0
    %8225 = vmatprep.subr.mxu0 0.0
    %8226 = vmatpush2.msra.mxu0 0.0
    %8227 = vmatprep.subr.mxu0 0.0
    %8228 = vmatpush2.msra.mxu0 0.0
    %8229 = vmatprep.mubr.f32.mxu0 0.0
    %8230 = vmatmul.mubr.f32.gmra.mxu0 %v8163
    %v8231 = vpop.f32.mrf.mxu0
    %v8232 = vadd.f32 0.0, %v8231
    %v8233 = vpop.f32.mrf.mxu0
    %8234 = vdwg.mxu0
    %v8236 = vsel %vm160, %v8161, 0
    %8238 = vmatprep.subr.mxu0 0.0
    %8239 = vmatpush1.msra.mxu0 0.0
    %8240 = vmatprep.subr.mxu0 0.0
    %8241 = vmatpush1.msra.mxu0 0.0
    %8242 = vmatprep.subr.mxu0 0.0
    %8243 = vmatpush1.msra.mxu0 0.0
    %8244 = vmatprep.subr.mxu0 0.0
    %8245 = vmatpush1.msra.mxu0 0.0
    %8246 = vmatprep.subr.mxu0 0.0
    %8247 = vmatpush1.msra.mxu0 0.0
    %8248 = vmatprep.subr.mxu0 0.0
    %8249 = vmatpush1.msra.mxu0 0.0
    %8250 = vmatprep.subr.mxu0 0.0
    %8251 = vmatpush1.msra.mxu0 0.0
    %8252 = vmatprep.subr.mxu0 0.0
    %8253 = vmatpush1.msra.mxu0 0.0
    %8254 = vmatprep.subr.mxu0 0.0
    %8255 = vmatpush1.msra.mxu0 0.0
    %8256 = vmatprep.subr.mxu0 0.0
    %8257 = vmatpush1.msra.mxu0 0.0
    %8258 = vmatprep.subr.mxu0 0.0
    %8259 = vmatpush1.msra.mxu0 0.0
    %8260 = vmatprep.subr.mxu0 0.0
    %8261 = vmatpush1.msra.mxu0 0.0
    %8262 = vmatprep.subr.mxu0 0.0
    %8263 = vmatpush1.msra.mxu0 0.0
    %8264 = vmatprep.subr.mxu0 0.0
    %8265 = vmatpush1.msra.mxu0 0.0
    %8266 = vmatprep.subr.mxu0 0.0
    %8267 = vmatpush1.msra.mxu0 0.0
    %8268 = vmatprep.subr.mxu0 0.0
    %8269 = vmatpush1.msra.mxu0 %v8084
    %8270 = vmatprep.subr.mxu0 0.0
    %8271 = vmatpush2.msra.mxu0 0.0
    %8272 = vmatprep.subr.mxu0 0.0
    %8273 = vmatpush2.msra.mxu0 0.0
    %8274 = vmatprep.subr.mxu0 0.0
    %8275 = vmatpush2.msra.mxu0 0.0
    %8276 = vmatprep.subr.mxu0 0.0
    %8277 = vmatpush2.msra.mxu0 0.0
    %8278 = vmatprep.subr.mxu0 0.0
    %8279 = vmatpush2.msra.mxu0 0.0
    %8280 = vmatprep.subr.mxu0 0.0
    %8281 = vmatpush2.msra.mxu0 0.0
    %8282 = vmatprep.subr.mxu0 0.0
    %8283 = vmatpush2.msra.mxu0 0.0
    %8284 = vmatprep.subr.mxu0 0.0
    %8285 = vmatpush2.msra.mxu0 0.0
    %8286 = vmatprep.subr.mxu0 0.0
    %8287 = vmatpush2.msra.mxu0 0.0
    %8288 = vmatprep.subr.mxu0 0.0
    %8289 = vmatpush2.msra.mxu0 0.0
    %8290 = vmatprep.subr.mxu0 0.0
    %8291 = vmatpush2.msra.mxu0 0.0
    %8292 = vmatprep.subr.mxu0 0.0
    %8293 = vmatpush2.msra.mxu0 0.0
    %8294 = vmatprep.subr.mxu0 0.0
    %8295 = vmatpush2.msra.mxu0 0.0
    %8296 = vmatprep.subr.mxu0 0.0
    %8297 = vmatpush2.msra.mxu0 0.0
    %8298 = vmatprep.subr.mxu0 0.0
    %8299 = vmatpush2.msra.mxu0 0.0
    %8300 = vmatprep.subr.mxu0 0.0
    %8301 = vmatpush2.msra.mxu0 0.0
    %8302 = vmatprep.mubr.f32.mxu0 0.0
    %8303 = vmatmul.mubr.f32.gmra.mxu0 %v8236
    %v8304 = vpop.f32.mrf.mxu0
    %v8305 = vadd.f32 0.0, %v8304
    %v8306 = vpop.f32.mrf.mxu0
    %8307 = vdwg.mxu0
    %v8309 = vsel %vm160, %v8305, 0
    %8311 = vmatprep.subr.mxu0 0.0
    %8312 = vmatpush1.msra.mxu0 0.0
    %8313 = vmatprep.subr.mxu0 0.0
    %8314 = vmatpush1.msra.mxu0 0.0
    %8315 = vmatprep.subr.mxu0 0.0
    %8316 = vmatpush1.msra.mxu0 0.0
    %8317 = vmatprep.subr.mxu0 0.0
    %8318 = vmatpush1.msra.mxu0 0.0
    %8319 = vmatprep.subr.mxu0 0.0
    %8320 = vmatpush1.msra.mxu0 0.0
    %8321 = vmatprep.subr.mxu0 0.0
    %8322 = vmatpush1.msra.mxu0 0.0
    %8323 = vmatprep.subr.mxu0 0.0
    %8324 = vmatpush1.msra.mxu0 0.0
    %8325 = vmatprep.subr.mxu0 0.0
    %8326 = vmatpush1.msra.mxu0 0.0
    %8327 = vmatprep.subr.mxu0 0.0
    %8328 = vmatpush1.msra.mxu0 0.0
    %8329 = vmatprep.subr.mxu0 0.0
    %8330 = vmatpush1.msra.mxu0 0.0
    %8331 = vmatprep.subr.mxu0 0.0
    %8332 = vmatpush1.msra.mxu0 0.0
    %8333 = vmatprep.subr.mxu0 0.0
    %8334 = vmatpush1.msra.mxu0 0.0
    %8335 = vmatprep.subr.mxu0 0.0
    %8336 = vmatpush1.msra.mxu0 0.0
    %8337 = vmatprep.subr.mxu0 0.0
    %8338 = vmatpush1.msra.mxu0 0.0
    %8339 = vmatprep.subr.mxu0 0.0
    %8340 = vmatpush1.msra.mxu0 0.0
    %8341 = vmatprep.subr.mxu0 0.0
    %8342 = vmatpush1.msra.mxu0 %v8232
    %8343 = vmatprep.subr.mxu0 0.0
    %8344 = vmatpush2.msra.mxu0 0.0
    %8345 = vmatprep.subr.mxu0 0.0
    %8346 = vmatpush2.msra.mxu0 0.0
    %8347 = vmatprep.subr.mxu0 0.0
    %8348 = vmatpush2.msra.mxu0 0.0
    %8349 = vmatprep.subr.mxu0 0.0
    %8350 = vmatpush2.msra.mxu0 0.0
    %8351 = vmatprep.subr.mxu0 0.0
    %8352 = vmatpush2.msra.mxu0 0.0
    %8353 = vmatprep.subr.mxu0 0.0
    %8354 = vmatpush2.msra.mxu0 0.0
    %8355 = vmatprep.subr.mxu0 0.0
    %8356 = vmatpush2.msra.mxu0 0.0
    %8357 = vmatprep.subr.mxu0 0.0
    %8358 = vmatpush2.msra.mxu0 0.0
    %8359 = vmatprep.subr.mxu0 0.0
    %8360 = vmatpush2.msra.mxu0 0.0
    %8361 = vmatprep.subr.mxu0 0.0
    %8362 = vmatpush2.msra.mxu0 0.0
    %8363 = vmatprep.subr.mxu0 0.0
    %8364 = vmatpush2.msra.mxu0 0.0
    %8365 = vmatprep.subr.mxu0 0.0
    %8366 = vmatpush2.msra.mxu0 0.0
    %8367 = vmatprep.subr.mxu0 0.0
    %8368 = vmatpush2.msra.mxu0 0.0
    %8369 = vmatprep.subr.mxu0 0.0
    %8370 = vmatpush2.msra.mxu0 0.0
    %8371 = vmatprep.subr.mxu0 0.0
    %8372 = vmatpush2.msra.mxu0 0.0
    %8373 = vmatprep.subr.mxu0 0.0
    %8374 = vmatpush2.msra.mxu0 0.0
    %8375 = vmatprep.mubr.f32.mxu0 0.0
    %8376 = vmatmul.mubr.f32.gmra.mxu0 %v8309
    %v8377 = vpop.f32.mrf.mxu0
    %v8378 = vadd.f32 0.0, %v8377
    %v8379 = vpop.f32.mrf.mxu0
    %8380 = vdwg.mxu0
    %v8381 = vmul.f32 %v8378, 0.5
    %v8382 = vsub.f32 %v183, %v8381
    %v8384 = vsel %vm160, %v8232, 0
    %8386 = vmatprep.subr.mxu0 0.0
    %8387 = vmatpush1.msra.mxu0 0.0
    %8388 = vmatprep.subr.mxu0 0.0
    %8389 = vmatpush1.msra.mxu0 0.0
    %8390 = vmatprep.subr.mxu0 0.0
    %8391 = vmatpush1.msra.mxu0 0.0
    %8392 = vmatprep.subr.mxu0 0.0
    %8393 = vmatpush1.msra.mxu0 0.0
    %8394 = vmatprep.subr.mxu0 0.0
    %8395 = vmatpush1.msra.mxu0 0.0
    %8396 = vmatprep.subr.mxu0 0.0
    %8397 = vmatpush1.msra.mxu0 0.0
    %8398 = vmatprep.subr.mxu0 0.0
    %8399 = vmatpush1.msra.mxu0 0.0
    %8400 = vmatprep.subr.mxu0 0.0
    %8401 = vmatpush1.msra.mxu0 0.0
    %8402 = vmatprep.subr.mxu0 0.0
    %8403 = vmatpush1.msra.mxu0 0.0
    %8404 = vmatprep.subr.mxu0 0.0
    %8405 = vmatpush1.msra.mxu0 0.0
    %8406 = vmatprep.subr.mxu0 0.0
    %8407 = vmatpush1.msra.mxu0 0.0
    %8408 = vmatprep.subr.mxu0 0.0
    %8409 = vmatpush1.msra.mxu0 0.0
    %8410 = vmatprep.subr.mxu0 0.0
    %8411 = vmatpush1.msra.mxu0 0.0
    %8412 = vmatprep.subr.mxu0 0.0
    %8413 = vmatpush1.msra.mxu0 0.0
    %8414 = vmatprep.subr.mxu0 0.0
    %8415 = vmatpush1.msra.mxu0 0.0
    %8416 = vmatprep.subr.mxu0 0.0
    %8417 = vmatpush1.msra.mxu0 %v8382
    %8418 = vmatprep.subr.mxu0 0.0
    %8419 = vmatpush2.msra.mxu0 0.0
    %8420 = vmatprep.subr.mxu0 0.0
    %8421 = vmatpush2.msra.mxu0 0.0
    %8422 = vmatprep.subr.mxu0 0.0
    %8423 = vmatpush2.msra.mxu0 0.0
    %8424 = vmatprep.subr.mxu0 0.0
    %8425 = vmatpush2.msra.mxu0 0.0
    %8426 = vmatprep.subr.mxu0 0.0
    %8427 = vmatpush2.msra.mxu0 0.0
    %8428 = vmatprep.subr.mxu0 0.0
    %8429 = vmatpush2.msra.mxu0 0.0
    %8430 = vmatprep.subr.mxu0 0.0
    %8431 = vmatpush2.msra.mxu0 0.0
    %8432 = vmatprep.subr.mxu0 0.0
    %8433 = vmatpush2.msra.mxu0 0.0
    %8434 = vmatprep.subr.mxu0 0.0
    %8435 = vmatpush2.msra.mxu0 0.0
    %8436 = vmatprep.subr.mxu0 0.0
    %8437 = vmatpush2.msra.mxu0 0.0
    %8438 = vmatprep.subr.mxu0 0.0
    %8439 = vmatpush2.msra.mxu0 0.0
    %8440 = vmatprep.subr.mxu0 0.0
    %8441 = vmatpush2.msra.mxu0 0.0
    %8442 = vmatprep.subr.mxu0 0.0
    %8443 = vmatpush2.msra.mxu0 0.0
    %8444 = vmatprep.subr.mxu0 0.0
    %8445 = vmatpush2.msra.mxu0 0.0
    %8446 = vmatprep.subr.mxu0 0.0
    %8447 = vmatpush2.msra.mxu0 0.0
    %8448 = vmatprep.subr.mxu0 0.0
    %8449 = vmatpush2.msra.mxu0 0.0
    %8450 = vmatprep.mubr.f32.mxu0 0.0
    %8451 = vmatmul.mubr.f32.gmra.mxu0 %v8384
    %v8452 = vpop.f32.mrf.mxu0
    %v8453 = vadd.f32 0.0, %v8452
    %v8454 = vpop.f32.mrf.mxu0
    %8455 = vdwg.mxu0
    %v8457 = vsel %vm160, %v8382, 0
    %8459 = vmatprep.subr.mxu0 0.0
    %8460 = vmatpush1.msra.mxu0 0.0
    %8461 = vmatprep.subr.mxu0 0.0
    %8462 = vmatpush1.msra.mxu0 0.0
    %8463 = vmatprep.subr.mxu0 0.0
    %8464 = vmatpush1.msra.mxu0 0.0
    %8465 = vmatprep.subr.mxu0 0.0
    %8466 = vmatpush1.msra.mxu0 0.0
    %8467 = vmatprep.subr.mxu0 0.0
    %8468 = vmatpush1.msra.mxu0 0.0
    %8469 = vmatprep.subr.mxu0 0.0
    %8470 = vmatpush1.msra.mxu0 0.0
    %8471 = vmatprep.subr.mxu0 0.0
    %8472 = vmatpush1.msra.mxu0 0.0
    %8473 = vmatprep.subr.mxu0 0.0
    %8474 = vmatpush1.msra.mxu0 0.0
    %8475 = vmatprep.subr.mxu0 0.0
    %8476 = vmatpush1.msra.mxu0 0.0
    %8477 = vmatprep.subr.mxu0 0.0
    %8478 = vmatpush1.msra.mxu0 0.0
    %8479 = vmatprep.subr.mxu0 0.0
    %8480 = vmatpush1.msra.mxu0 0.0
    %8481 = vmatprep.subr.mxu0 0.0
    %8482 = vmatpush1.msra.mxu0 0.0
    %8483 = vmatprep.subr.mxu0 0.0
    %8484 = vmatpush1.msra.mxu0 0.0
    %8485 = vmatprep.subr.mxu0 0.0
    %8486 = vmatpush1.msra.mxu0 0.0
    %8487 = vmatprep.subr.mxu0 0.0
    %8488 = vmatpush1.msra.mxu0 0.0
    %8489 = vmatprep.subr.mxu0 0.0
    %8490 = vmatpush1.msra.mxu0 %v8305
    %8491 = vmatprep.subr.mxu0 0.0
    %8492 = vmatpush2.msra.mxu0 0.0
    %8493 = vmatprep.subr.mxu0 0.0
    %8494 = vmatpush2.msra.mxu0 0.0
    %8495 = vmatprep.subr.mxu0 0.0
    %8496 = vmatpush2.msra.mxu0 0.0
    %8497 = vmatprep.subr.mxu0 0.0
    %8498 = vmatpush2.msra.mxu0 0.0
    %8499 = vmatprep.subr.mxu0 0.0
    %8500 = vmatpush2.msra.mxu0 0.0
    %8501 = vmatprep.subr.mxu0 0.0
    %8502 = vmatpush2.msra.mxu0 0.0
    %8503 = vmatprep.subr.mxu0 0.0
    %8504 = vmatpush2.msra.mxu0 0.0
    %8505 = vmatprep.subr.mxu0 0.0
    %8506 = vmatpush2.msra.mxu0 0.0
    %8507 = vmatprep.subr.mxu0 0.0
    %8508 = vmatpush2.msra.mxu0 0.0
    %8509 = vmatprep.subr.mxu0 0.0
    %8510 = vmatpush2.msra.mxu0 0.0
    %8511 = vmatprep.subr.mxu0 0.0
    %8512 = vmatpush2.msra.mxu0 0.0
    %8513 = vmatprep.subr.mxu0 0.0
    %8514 = vmatpush2.msra.mxu0 0.0
    %8515 = vmatprep.subr.mxu0 0.0
    %8516 = vmatpush2.msra.mxu0 0.0
    %8517 = vmatprep.subr.mxu0 0.0
    %8518 = vmatpush2.msra.mxu0 0.0
    %8519 = vmatprep.subr.mxu0 0.0
    %8520 = vmatpush2.msra.mxu0 0.0
    %8521 = vmatprep.subr.mxu0 0.0
    %8522 = vmatpush2.msra.mxu0 0.0
    %8523 = vmatprep.mubr.f32.mxu0 0.0
    %8524 = vmatmul.mubr.f32.gmra.mxu0 %v8457
    %v8525 = vpop.f32.mrf.mxu0
    %v8526 = vadd.f32 0.0, %v8525
    %v8527 = vpop.f32.mrf.mxu0
    %8528 = vdwg.mxu0
    %v8530 = vsel %vm160, %v8526, 0
    %8532 = vmatprep.subr.mxu0 0.0
    %8533 = vmatpush1.msra.mxu0 0.0
    %8534 = vmatprep.subr.mxu0 0.0
    %8535 = vmatpush1.msra.mxu0 0.0
    %8536 = vmatprep.subr.mxu0 0.0
    %8537 = vmatpush1.msra.mxu0 0.0
    %8538 = vmatprep.subr.mxu0 0.0
    %8539 = vmatpush1.msra.mxu0 0.0
    %8540 = vmatprep.subr.mxu0 0.0
    %8541 = vmatpush1.msra.mxu0 0.0
    %8542 = vmatprep.subr.mxu0 0.0
    %8543 = vmatpush1.msra.mxu0 0.0
    %8544 = vmatprep.subr.mxu0 0.0
    %8545 = vmatpush1.msra.mxu0 0.0
    %8546 = vmatprep.subr.mxu0 0.0
    %8547 = vmatpush1.msra.mxu0 0.0
    %8548 = vmatprep.subr.mxu0 0.0
    %8549 = vmatpush1.msra.mxu0 0.0
    %8550 = vmatprep.subr.mxu0 0.0
    %8551 = vmatpush1.msra.mxu0 0.0
    %8552 = vmatprep.subr.mxu0 0.0
    %8553 = vmatpush1.msra.mxu0 0.0
    %8554 = vmatprep.subr.mxu0 0.0
    %8555 = vmatpush1.msra.mxu0 0.0
    %8556 = vmatprep.subr.mxu0 0.0
    %8557 = vmatpush1.msra.mxu0 0.0
    %8558 = vmatprep.subr.mxu0 0.0
    %8559 = vmatpush1.msra.mxu0 0.0
    %8560 = vmatprep.subr.mxu0 0.0
    %8561 = vmatpush1.msra.mxu0 0.0
    %8562 = vmatprep.subr.mxu0 0.0
    %8563 = vmatpush1.msra.mxu0 %v8453
    %8564 = vmatprep.subr.mxu0 0.0
    %8565 = vmatpush2.msra.mxu0 0.0
    %8566 = vmatprep.subr.mxu0 0.0
    %8567 = vmatpush2.msra.mxu0 0.0
    %8568 = vmatprep.subr.mxu0 0.0
    %8569 = vmatpush2.msra.mxu0 0.0
    %8570 = vmatprep.subr.mxu0 0.0
    %8571 = vmatpush2.msra.mxu0 0.0
    %8572 = vmatprep.subr.mxu0 0.0
    %8573 = vmatpush2.msra.mxu0 0.0
    %8574 = vmatprep.subr.mxu0 0.0
    %8575 = vmatpush2.msra.mxu0 0.0
    %8576 = vmatprep.subr.mxu0 0.0
    %8577 = vmatpush2.msra.mxu0 0.0
    %8578 = vmatprep.subr.mxu0 0.0
    %8579 = vmatpush2.msra.mxu0 0.0
    %8580 = vmatprep.subr.mxu0 0.0
    %8581 = vmatpush2.msra.mxu0 0.0
    %8582 = vmatprep.subr.mxu0 0.0
    %8583 = vmatpush2.msra.mxu0 0.0
    %8584 = vmatprep.subr.mxu0 0.0
    %8585 = vmatpush2.msra.mxu0 0.0
    %8586 = vmatprep.subr.mxu0 0.0
    %8587 = vmatpush2.msra.mxu0 0.0
    %8588 = vmatprep.subr.mxu0 0.0
    %8589 = vmatpush2.msra.mxu0 0.0
    %8590 = vmatprep.subr.mxu0 0.0
    %8591 = vmatpush2.msra.mxu0 0.0
    %8592 = vmatprep.subr.mxu0 0.0
    %8593 = vmatpush2.msra.mxu0 0.0
    %8594 = vmatprep.subr.mxu0 0.0
    %8595 = vmatpush2.msra.mxu0 0.0
    %8596 = vmatprep.mubr.f32.mxu0 0.0
    %8597 = vmatmul.mubr.f32.gmra.mxu0 %v8530
    %v8598 = vpop.f32.mrf.mxu0
    %v8599 = vadd.f32 0.0, %v8598
    %v8600 = vpop.f32.mrf.mxu0
    %8601 = vdwg.mxu0
    %v8602 = vmul.f32 %v8599, 0.5
    %v8603 = vsub.f32 %v183, %v8602
    %v8605 = vsel %vm160, %v8453, 0
    %8607 = vmatprep.subr.mxu0 0.0
    %8608 = vmatpush1.msra.mxu0 0.0
    %8609 = vmatprep.subr.mxu0 0.0
    %8610 = vmatpush1.msra.mxu0 0.0
    %8611 = vmatprep.subr.mxu0 0.0
    %8612 = vmatpush1.msra.mxu0 0.0
    %8613 = vmatprep.subr.mxu0 0.0
    %8614 = vmatpush1.msra.mxu0 0.0
    %8615 = vmatprep.subr.mxu0 0.0
    %8616 = vmatpush1.msra.mxu0 0.0
    %8617 = vmatprep.subr.mxu0 0.0
    %8618 = vmatpush1.msra.mxu0 0.0
    %8619 = vmatprep.subr.mxu0 0.0
    %8620 = vmatpush1.msra.mxu0 0.0
    %8621 = vmatprep.subr.mxu0 0.0
    %8622 = vmatpush1.msra.mxu0 0.0
    %8623 = vmatprep.subr.mxu0 0.0
    %8624 = vmatpush1.msra.mxu0 0.0
    %8625 = vmatprep.subr.mxu0 0.0
    %8626 = vmatpush1.msra.mxu0 0.0
    %8627 = vmatprep.subr.mxu0 0.0
    %8628 = vmatpush1.msra.mxu0 0.0
    %8629 = vmatprep.subr.mxu0 0.0
    %8630 = vmatpush1.msra.mxu0 0.0
    %8631 = vmatprep.subr.mxu0 0.0
    %8632 = vmatpush1.msra.mxu0 0.0
    %8633 = vmatprep.subr.mxu0 0.0
    %8634 = vmatpush1.msra.mxu0 0.0
    %8635 = vmatprep.subr.mxu0 0.0
    %8636 = vmatpush1.msra.mxu0 0.0
    %8637 = vmatprep.subr.mxu0 0.0
    %8638 = vmatpush1.msra.mxu0 %v8603
    %8639 = vmatprep.subr.mxu0 0.0
    %8640 = vmatpush2.msra.mxu0 0.0
    %8641 = vmatprep.subr.mxu0 0.0
    %8642 = vmatpush2.msra.mxu0 0.0
    %8643 = vmatprep.subr.mxu0 0.0
    %8644 = vmatpush2.msra.mxu0 0.0
    %8645 = vmatprep.subr.mxu0 0.0
    %8646 = vmatpush2.msra.mxu0 0.0
    %8647 = vmatprep.subr.mxu0 0.0
    %8648 = vmatpush2.msra.mxu0 0.0
    %8649 = vmatprep.subr.mxu0 0.0
    %8650 = vmatpush2.msra.mxu0 0.0
    %8651 = vmatprep.subr.mxu0 0.0
    %8652 = vmatpush2.msra.mxu0 0.0
    %8653 = vmatprep.subr.mxu0 0.0
    %8654 = vmatpush2.msra.mxu0 0.0
    %8655 = vmatprep.subr.mxu0 0.0
    %8656 = vmatpush2.msra.mxu0 0.0
    %8657 = vmatprep.subr.mxu0 0.0
    %8658 = vmatpush2.msra.mxu0 0.0
    %8659 = vmatprep.subr.mxu0 0.0
    %8660 = vmatpush2.msra.mxu0 0.0
    %8661 = vmatprep.subr.mxu0 0.0
    %8662 = vmatpush2.msra.mxu0 0.0
    %8663 = vmatprep.subr.mxu0 0.0
    %8664 = vmatpush2.msra.mxu0 0.0
    %8665 = vmatprep.subr.mxu0 0.0
    %8666 = vmatpush2.msra.mxu0 0.0
    %8667 = vmatprep.subr.mxu0 0.0
    %8668 = vmatpush2.msra.mxu0 0.0
    %8669 = vmatprep.subr.mxu0 0.0
    %8670 = vmatpush2.msra.mxu0 0.0
    %8671 = vmatprep.mubr.f32.mxu0 0.0
    %8672 = vmatmul.mubr.f32.gmra.mxu0 %v8605
    %v8673 = vpop.f32.mrf.mxu0
    %v8674 = vadd.f32 0.0, %v8673
    %v8675 = vpop.f32.mrf.mxu0
    %8676 = vdwg.mxu0
    %v8678 = vsel %vm160, %v8603, 0
    %8680 = vmatprep.subr.mxu0 0.0
    %8681 = vmatpush1.msra.mxu0 0.0
    %8682 = vmatprep.subr.mxu0 0.0
    %8683 = vmatpush1.msra.mxu0 0.0
    %8684 = vmatprep.subr.mxu0 0.0
    %8685 = vmatpush1.msra.mxu0 0.0
    %8686 = vmatprep.subr.mxu0 0.0
    %8687 = vmatpush1.msra.mxu0 0.0
    %8688 = vmatprep.subr.mxu0 0.0
    %8689 = vmatpush1.msra.mxu0 0.0
    %8690 = vmatprep.subr.mxu0 0.0
    %8691 = vmatpush1.msra.mxu0 0.0
    %8692 = vmatprep.subr.mxu0 0.0
    %8693 = vmatpush1.msra.mxu0 0.0
    %8694 = vmatprep.subr.mxu0 0.0
    %8695 = vmatpush1.msra.mxu0 0.0
    %8696 = vmatprep.subr.mxu0 0.0
    %8697 = vmatpush1.msra.mxu0 0.0
    %8698 = vmatprep.subr.mxu0 0.0
    %8699 = vmatpush1.msra.mxu0 0.0
    %8700 = vmatprep.subr.mxu0 0.0
    %8701 = vmatpush1.msra.mxu0 0.0
    %8702 = vmatprep.subr.mxu0 0.0
    %8703 = vmatpush1.msra.mxu0 0.0
    %8704 = vmatprep.subr.mxu0 0.0
    %8705 = vmatpush1.msra.mxu0 0.0
    %8706 = vmatprep.subr.mxu0 0.0
    %8707 = vmatpush1.msra.mxu0 0.0
    %8708 = vmatprep.subr.mxu0 0.0
    %8709 = vmatpush1.msra.mxu0 0.0
    %8710 = vmatprep.subr.mxu0 0.0
    %8711 = vmatpush1.msra.mxu0 %v8526
    %8712 = vmatprep.subr.mxu0 0.0
    %8713 = vmatpush2.msra.mxu0 0.0
    %8714 = vmatprep.subr.mxu0 0.0
    %8715 = vmatpush2.msra.mxu0 0.0
    %8716 = vmatprep.subr.mxu0 0.0
    %8717 = vmatpush2.msra.mxu0 0.0
    %8718 = vmatprep.subr.mxu0 0.0
    %8719 = vmatpush2.msra.mxu0 0.0
    %8720 = vmatprep.subr.mxu0 0.0
    %8721 = vmatpush2.msra.mxu0 0.0
    %8722 = vmatprep.subr.mxu0 0.0
    %8723 = vmatpush2.msra.mxu0 0.0
    %8724 = vmatprep.subr.mxu0 0.0
    %8725 = vmatpush2.msra.mxu0 0.0
    %8726 = vmatprep.subr.mxu0 0.0
    %8727 = vmatpush2.msra.mxu0 0.0
    %8728 = vmatprep.subr.mxu0 0.0
    %8729 = vmatpush2.msra.mxu0 0.0
    %8730 = vmatprep.subr.mxu0 0.0
    %8731 = vmatpush2.msra.mxu0 0.0
    %8732 = vmatprep.subr.mxu0 0.0
    %8733 = vmatpush2.msra.mxu0 0.0
    %8734 = vmatprep.subr.mxu0 0.0
    %8735 = vmatpush2.msra.mxu0 0.0
    %8736 = vmatprep.subr.mxu0 0.0
    %8737 = vmatpush2.msra.mxu0 0.0
    %8738 = vmatprep.subr.mxu0 0.0
    %8739 = vmatpush2.msra.mxu0 0.0
    %8740 = vmatprep.subr.mxu0 0.0
    %8741 = vmatpush2.msra.mxu0 0.0
    %8742 = vmatprep.subr.mxu0 0.0
    %8743 = vmatpush2.msra.mxu0 0.0
    %8744 = vmatprep.mubr.f32.mxu0 0.0
    %8745 = vmatmul.mubr.f32.gmra.mxu0 %v8678
    %v8746 = vpop.f32.mrf.mxu0
    %v8747 = vadd.f32 0.0, %v8746
    %v8748 = vpop.f32.mrf.mxu0
    %8749 = vdwg.mxu0
    %v8751 = vsel %vm160, %v8747, 0
    %8753 = vmatprep.subr.mxu0 0.0
    %8754 = vmatpush1.msra.mxu0 0.0
    %8755 = vmatprep.subr.mxu0 0.0
    %8756 = vmatpush1.msra.mxu0 0.0
    %8757 = vmatprep.subr.mxu0 0.0
    %8758 = vmatpush1.msra.mxu0 0.0
    %8759 = vmatprep.subr.mxu0 0.0
    %8760 = vmatpush1.msra.mxu0 0.0
    %8761 = vmatprep.subr.mxu0 0.0
    %8762 = vmatpush1.msra.mxu0 0.0
    %8763 = vmatprep.subr.mxu0 0.0
    %8764 = vmatpush1.msra.mxu0 0.0
    %8765 = vmatprep.subr.mxu0 0.0
    %8766 = vmatpush1.msra.mxu0 0.0
    %8767 = vmatprep.subr.mxu0 0.0
    %8768 = vmatpush1.msra.mxu0 0.0
    %8769 = vmatprep.subr.mxu0 0.0
    %8770 = vmatpush1.msra.mxu0 0.0
    %8771 = vmatprep.subr.mxu0 0.0
    %8772 = vmatpush1.msra.mxu0 0.0
    %8773 = vmatprep.subr.mxu0 0.0
    %8774 = vmatpush1.msra.mxu0 0.0
    %8775 = vmatprep.subr.mxu0 0.0
    %8776 = vmatpush1.msra.mxu0 0.0
    %8777 = vmatprep.subr.mxu0 0.0
    %8778 = vmatpush1.msra.mxu0 0.0
    %8779 = vmatprep.subr.mxu0 0.0
    %8780 = vmatpush1.msra.mxu0 0.0
    %8781 = vmatprep.subr.mxu0 0.0
    %8782 = vmatpush1.msra.mxu0 0.0
    %8783 = vmatprep.subr.mxu0 0.0
    %8784 = vmatpush1.msra.mxu0 %v8674
    %8785 = vmatprep.subr.mxu0 0.0
    %8786 = vmatpush2.msra.mxu0 0.0
    %8787 = vmatprep.subr.mxu0 0.0
    %8788 = vmatpush2.msra.mxu0 0.0
    %8789 = vmatprep.subr.mxu0 0.0
    %8790 = vmatpush2.msra.mxu0 0.0
    %8791 = vmatprep.subr.mxu0 0.0
    %8792 = vmatpush2.msra.mxu0 0.0
    %8793 = vmatprep.subr.mxu0 0.0
    %8794 = vmatpush2.msra.mxu0 0.0
    %8795 = vmatprep.subr.mxu0 0.0
    %8796 = vmatpush2.msra.mxu0 0.0
    %8797 = vmatprep.subr.mxu0 0.0
    %8798 = vmatpush2.msra.mxu0 0.0
    %8799 = vmatprep.subr.mxu0 0.0
    %8800 = vmatpush2.msra.mxu0 0.0
    %8801 = vmatprep.subr.mxu0 0.0
    %8802 = vmatpush2.msra.mxu0 0.0
    %8803 = vmatprep.subr.mxu0 0.0
    %8804 = vmatpush2.msra.mxu0 0.0
    %8805 = vmatprep.subr.mxu0 0.0
    %8806 = vmatpush2.msra.mxu0 0.0
    %8807 = vmatprep.subr.mxu0 0.0
    %8808 = vmatpush2.msra.mxu0 0.0
    %8809 = vmatprep.subr.mxu0 0.0
    %8810 = vmatpush2.msra.mxu0 0.0
    %8811 = vmatprep.subr.mxu0 0.0
    %8812 = vmatpush2.msra.mxu0 0.0
    %8813 = vmatprep.subr.mxu0 0.0
    %8814 = vmatpush2.msra.mxu0 0.0
    %8815 = vmatprep.subr.mxu0 0.0
    %8816 = vmatpush2.msra.mxu0 0.0
    %8817 = vmatprep.mubr.f32.mxu0 0.0
    %8818 = vmatmul.mubr.f32.gmra.mxu0 %v8751
    %v8819 = vpop.f32.mrf.mxu0
    %v8820 = vadd.f32 0.0, %v8819
    %v8821 = vpop.f32.mrf.mxu0
    %8822 = vdwg.mxu0
    %v8823 = vmul.f32 %v8820, 0.5
    %v8824 = vsub.f32 %v183, %v8823
    %v8826 = vsel %vm160, %v8674, 0
    %8828 = vmatprep.subr.mxu0 0.0
    %8829 = vmatpush1.msra.mxu0 0.0
    %8830 = vmatprep.subr.mxu0 0.0
    %8831 = vmatpush1.msra.mxu0 0.0
    %8832 = vmatprep.subr.mxu0 0.0
    %8833 = vmatpush1.msra.mxu0 0.0
    %8834 = vmatprep.subr.mxu0 0.0
    %8835 = vmatpush1.msra.mxu0 0.0
    %8836 = vmatprep.subr.mxu0 0.0
    %8837 = vmatpush1.msra.mxu0 0.0
    %8838 = vmatprep.subr.mxu0 0.0
    %8839 = vmatpush1.msra.mxu0 0.0
    %8840 = vmatprep.subr.mxu0 0.0
    %8841 = vmatpush1.msra.mxu0 0.0
    %8842 = vmatprep.subr.mxu0 0.0
    %8843 = vmatpush1.msra.mxu0 0.0
    %8844 = vmatprep.subr.mxu0 0.0
    %8845 = vmatpush1.msra.mxu0 0.0
    %8846 = vmatprep.subr.mxu0 0.0
    %8847 = vmatpush1.msra.mxu0 0.0
    %8848 = vmatprep.subr.mxu0 0.0
    %8849 = vmatpush1.msra.mxu0 0.0
    %8850 = vmatprep.subr.mxu0 0.0
    %8851 = vmatpush1.msra.mxu0 0.0
    %8852 = vmatprep.subr.mxu0 0.0
    %8853 = vmatpush1.msra.mxu0 0.0
    %8854 = vmatprep.subr.mxu0 0.0
    %8855 = vmatpush1.msra.mxu0 0.0
    %8856 = vmatprep.subr.mxu0 0.0
    %8857 = vmatpush1.msra.mxu0 0.0
    %8858 = vmatprep.subr.mxu0 0.0
    %8859 = vmatpush1.msra.mxu0 %v8824
    %8860 = vmatprep.subr.mxu0 0.0
    %8861 = vmatpush2.msra.mxu0 0.0
    %8862 = vmatprep.subr.mxu0 0.0
    %8863 = vmatpush2.msra.mxu0 0.0
    %8864 = vmatprep.subr.mxu0 0.0
    %8865 = vmatpush2.msra.mxu0 0.0
    %8866 = vmatprep.subr.mxu0 0.0
    %8867 = vmatpush2.msra.mxu0 0.0
    %8868 = vmatprep.subr.mxu0 0.0
    %8869 = vmatpush2.msra.mxu0 0.0
    %8870 = vmatprep.subr.mxu0 0.0
    %8871 = vmatpush2.msra.mxu0 0.0
    %8872 = vmatprep.subr.mxu0 0.0
    %8873 = vmatpush2.msra.mxu0 0.0
    %8874 = vmatprep.subr.mxu0 0.0
    %8875 = vmatpush2.msra.mxu0 0.0
    %8876 = vmatprep.subr.mxu0 0.0
    %8877 = vmatpush2.msra.mxu0 0.0
    %8878 = vmatprep.subr.mxu0 0.0
    %8879 = vmatpush2.msra.mxu0 0.0
    %8880 = vmatprep.subr.mxu0 0.0
    %8881 = vmatpush2.msra.mxu0 0.0
    %8882 = vmatprep.subr.mxu0 0.0
    %8883 = vmatpush2.msra.mxu0 0.0
    %8884 = vmatprep.subr.mxu0 0.0
    %8885 = vmatpush2.msra.mxu0 0.0
    %8886 = vmatprep.subr.mxu0 0.0
    %8887 = vmatpush2.msra.mxu0 0.0
    %8888 = vmatprep.subr.mxu0 0.0
    %8889 = vmatpush2.msra.mxu0 0.0
    %8890 = vmatprep.subr.mxu0 0.0
    %8891 = vmatpush2.msra.mxu0 0.0
    %8892 = vmatprep.mubr.f32.mxu0 0.0
    %8893 = vmatmul.mubr.f32.gmra.mxu0 %v8826
    %v8894 = vpop.f32.mrf.mxu0
    %v8895 = vadd.f32 0.0, %v8894
    %v8896 = vpop.f32.mrf.mxu0
    %8897 = vdwg.mxu0
    %v8899 = vsel %vm160, %v8824, 0
    %8901 = vmatprep.subr.mxu0 0.0
    %8902 = vmatpush1.msra.mxu0 0.0
    %8903 = vmatprep.subr.mxu0 0.0
    %8904 = vmatpush1.msra.mxu0 0.0
    %8905 = vmatprep.subr.mxu0 0.0
    %8906 = vmatpush1.msra.mxu0 0.0
    %8907 = vmatprep.subr.mxu0 0.0
    %8908 = vmatpush1.msra.mxu0 0.0
    %8909 = vmatprep.subr.mxu0 0.0
    %8910 = vmatpush1.msra.mxu0 0.0
    %8911 = vmatprep.subr.mxu0 0.0
    %8912 = vmatpush1.msra.mxu0 0.0
    %8913 = vmatprep.subr.mxu0 0.0
    %8914 = vmatpush1.msra.mxu0 0.0
    %8915 = vmatprep.subr.mxu0 0.0
    %8916 = vmatpush1.msra.mxu0 0.0
    %8917 = vmatprep.subr.mxu0 0.0
    %8918 = vmatpush1.msra.mxu0 0.0
    %8919 = vmatprep.subr.mxu0 0.0
    %8920 = vmatpush1.msra.mxu0 0.0
    %8921 = vmatprep.subr.mxu0 0.0
    %8922 = vmatpush1.msra.mxu0 0.0
    %8923 = vmatprep.subr.mxu0 0.0
    %8924 = vmatpush1.msra.mxu0 0.0
    %8925 = vmatprep.subr.mxu0 0.0
    %8926 = vmatpush1.msra.mxu0 0.0
    %8927 = vmatprep.subr.mxu0 0.0
    %8928 = vmatpush1.msra.mxu0 0.0
    %8929 = vmatprep.subr.mxu0 0.0
    %8930 = vmatpush1.msra.mxu0 0.0
    %8931 = vmatprep.subr.mxu0 0.0
    %8932 = vmatpush1.msra.mxu0 %v8747
    %8933 = vmatprep.subr.mxu0 0.0
    %8934 = vmatpush2.msra.mxu0 0.0
    %8935 = vmatprep.subr.mxu0 0.0
    %8936 = vmatpush2.msra.mxu0 0.0
    %8937 = vmatprep.subr.mxu0 0.0
    %8938 = vmatpush2.msra.mxu0 0.0
    %8939 = vmatprep.subr.mxu0 0.0
    %8940 = vmatpush2.msra.mxu0 0.0
    %8941 = vmatprep.subr.mxu0 0.0
    %8942 = vmatpush2.msra.mxu0 0.0
    %8943 = vmatprep.subr.mxu0 0.0
    %8944 = vmatpush2.msra.mxu0 0.0
    %8945 = vmatprep.subr.mxu0 0.0
    %8946 = vmatpush2.msra.mxu0 0.0
    %8947 = vmatprep.subr.mxu0 0.0
    %8948 = vmatpush2.msra.mxu0 0.0
    %8949 = vmatprep.subr.mxu0 0.0
    %8950 = vmatpush2.msra.mxu0 0.0
    %8951 = vmatprep.subr.mxu0 0.0
    %8952 = vmatpush2.msra.mxu0 0.0
    %8953 = vmatprep.subr.mxu0 0.0
    %8954 = vmatpush2.msra.mxu0 0.0
    %8955 = vmatprep.subr.mxu0 0.0
    %8956 = vmatpush2.msra.mxu0 0.0
    %8957 = vmatprep.subr.mxu0 0.0
    %8958 = vmatpush2.msra.mxu0 0.0
    %8959 = vmatprep.subr.mxu0 0.0
    %8960 = vmatpush2.msra.mxu0 0.0
    %8961 = vmatprep.subr.mxu0 0.0
    %8962 = vmatpush2.msra.mxu0 0.0
    %8963 = vmatprep.subr.mxu0 0.0
    %8964 = vmatpush2.msra.mxu0 0.0
    %8965 = vmatprep.mubr.f32.mxu0 0.0
    %8966 = vmatmul.mubr.f32.gmra.mxu0 %v8899
    %v8967 = vpop.f32.mrf.mxu0
    %v8968 = vadd.f32 0.0, %v8967
    %v8969 = vpop.f32.mrf.mxu0
    %8970 = vdwg.mxu0
    %v8972 = vsel %vm160, %v8968, 0
    %8974 = vmatprep.subr.mxu0 0.0
    %8975 = vmatpush1.msra.mxu0 0.0
    %8976 = vmatprep.subr.mxu0 0.0
    %8977 = vmatpush1.msra.mxu0 0.0
    %8978 = vmatprep.subr.mxu0 0.0
    %8979 = vmatpush1.msra.mxu0 0.0
    %8980 = vmatprep.subr.mxu0 0.0
    %8981 = vmatpush1.msra.mxu0 0.0
    %8982 = vmatprep.subr.mxu0 0.0
    %8983 = vmatpush1.msra.mxu0 0.0
    %8984 = vmatprep.subr.mxu0 0.0
    %8985 = vmatpush1.msra.mxu0 0.0
    %8986 = vmatprep.subr.mxu0 0.0
    %8987 = vmatpush1.msra.mxu0 0.0
    %8988 = vmatprep.subr.mxu0 0.0
    %8989 = vmatpush1.msra.mxu0 0.0
    %8990 = vmatprep.subr.mxu0 0.0
    %8991 = vmatpush1.msra.mxu0 0.0
    %8992 = vmatprep.subr.mxu0 0.0
    %8993 = vmatpush1.msra.mxu0 0.0
    %8994 = vmatprep.subr.mxu0 0.0
    %8995 = vmatpush1.msra.mxu0 0.0
    %8996 = vmatprep.subr.mxu0 0.0
    %8997 = vmatpush1.msra.mxu0 0.0
    %8998 = vmatprep.subr.mxu0 0.0
    %8999 = vmatpush1.msra.mxu0 0.0
    %9000 = vmatprep.subr.mxu0 0.0
    %9001 = vmatpush1.msra.mxu0 0.0
    %9002 = vmatprep.subr.mxu0 0.0
    %9003 = vmatpush1.msra.mxu0 0.0
    %9004 = vmatprep.subr.mxu0 0.0
    %9005 = vmatpush1.msra.mxu0 %v8895
    %9006 = vmatprep.subr.mxu0 0.0
    %9007 = vmatpush2.msra.mxu0 0.0
    %9008 = vmatprep.subr.mxu0 0.0
    %9009 = vmatpush2.msra.mxu0 0.0
    %9010 = vmatprep.subr.mxu0 0.0
    %9011 = vmatpush2.msra.mxu0 0.0
    %9012 = vmatprep.subr.mxu0 0.0
    %9013 = vmatpush2.msra.mxu0 0.0
    %9014 = vmatprep.subr.mxu0 0.0
    %9015 = vmatpush2.msra.mxu0 0.0
    %9016 = vmatprep.subr.mxu0 0.0
    %9017 = vmatpush2.msra.mxu0 0.0
    %9018 = vmatprep.subr.mxu0 0.0
    %9019 = vmatpush2.msra.mxu0 0.0
    %9020 = vmatprep.subr.mxu0 0.0
    %9021 = vmatpush2.msra.mxu0 0.0
    %9022 = vmatprep.subr.mxu0 0.0
    %9023 = vmatpush2.msra.mxu0 0.0
    %9024 = vmatprep.subr.mxu0 0.0
    %9025 = vmatpush2.msra.mxu0 0.0
    %9026 = vmatprep.subr.mxu0 0.0
    %9027 = vmatpush2.msra.mxu0 0.0
    %9028 = vmatprep.subr.mxu0 0.0
    %9029 = vmatpush2.msra.mxu0 0.0
    %9030 = vmatprep.subr.mxu0 0.0
    %9031 = vmatpush2.msra.mxu0 0.0
    %9032 = vmatprep.subr.mxu0 0.0
    %9033 = vmatpush2.msra.mxu0 0.0
    %9034 = vmatprep.subr.mxu0 0.0
    %9035 = vmatpush2.msra.mxu0 0.0
    %9036 = vmatprep.subr.mxu0 0.0
    %9037 = vmatpush2.msra.mxu0 0.0
    %9038 = vmatprep.mubr.f32.mxu0 0.0
    %9039 = vmatmul.mubr.f32.gmra.mxu0 %v8972
    %v9040 = vpop.f32.mrf.mxu0
    %v9041 = vadd.f32 0.0, %v9040
    %v9042 = vpop.f32.mrf.mxu0
    %9043 = vdwg.mxu0
    %v9044 = vmul.f32 %v9041, 0.5
    %v9045 = vsub.f32 %v183, %v9044
    %v9047 = vsel %vm160, %v8895, 0
    %9049 = vmatprep.subr.mxu0 0.0
    %9050 = vmatpush1.msra.mxu0 0.0
    %9051 = vmatprep.subr.mxu0 0.0
    %9052 = vmatpush1.msra.mxu0 0.0
    %9053 = vmatprep.subr.mxu0 0.0
    %9054 = vmatpush1.msra.mxu0 0.0
    %9055 = vmatprep.subr.mxu0 0.0
    %9056 = vmatpush1.msra.mxu0 0.0
    %9057 = vmatprep.subr.mxu0 0.0
    %9058 = vmatpush1.msra.mxu0 0.0
    %9059 = vmatprep.subr.mxu0 0.0
    %9060 = vmatpush1.msra.mxu0 0.0
    %9061 = vmatprep.subr.mxu0 0.0
    %9062 = vmatpush1.msra.mxu0 0.0
    %9063 = vmatprep.subr.mxu0 0.0
    %9064 = vmatpush1.msra.mxu0 0.0
    %9065 = vmatprep.subr.mxu0 0.0
    %9066 = vmatpush1.msra.mxu0 0.0
    %9067 = vmatprep.subr.mxu0 0.0
    %9068 = vmatpush1.msra.mxu0 0.0
    %9069 = vmatprep.subr.mxu0 0.0
    %9070 = vmatpush1.msra.mxu0 0.0
    %9071 = vmatprep.subr.mxu0 0.0
    %9072 = vmatpush1.msra.mxu0 0.0
    %9073 = vmatprep.subr.mxu0 0.0
    %9074 = vmatpush1.msra.mxu0 0.0
    %9075 = vmatprep.subr.mxu0 0.0
    %9076 = vmatpush1.msra.mxu0 0.0
    %9077 = vmatprep.subr.mxu0 0.0
    %9078 = vmatpush1.msra.mxu0 0.0
    %9079 = vmatprep.subr.mxu0 0.0
    %9080 = vmatpush1.msra.mxu0 %v9045
    %9081 = vmatprep.subr.mxu0 0.0
    %9082 = vmatpush2.msra.mxu0 0.0
    %9083 = vmatprep.subr.mxu0 0.0
    %9084 = vmatpush2.msra.mxu0 0.0
    %9085 = vmatprep.subr.mxu0 0.0
    %9086 = vmatpush2.msra.mxu0 0.0
    %9087 = vmatprep.subr.mxu0 0.0
    %9088 = vmatpush2.msra.mxu0 0.0
    %9089 = vmatprep.subr.mxu0 0.0
    %9090 = vmatpush2.msra.mxu0 0.0
    %9091 = vmatprep.subr.mxu0 0.0
    %9092 = vmatpush2.msra.mxu0 0.0
    %9093 = vmatprep.subr.mxu0 0.0
    %9094 = vmatpush2.msra.mxu0 0.0
    %9095 = vmatprep.subr.mxu0 0.0
    %9096 = vmatpush2.msra.mxu0 0.0
    %9097 = vmatprep.subr.mxu0 0.0
    %9098 = vmatpush2.msra.mxu0 0.0
    %9099 = vmatprep.subr.mxu0 0.0
    %9100 = vmatpush2.msra.mxu0 0.0
    %9101 = vmatprep.subr.mxu0 0.0
    %9102 = vmatpush2.msra.mxu0 0.0
    %9103 = vmatprep.subr.mxu0 0.0
    %9104 = vmatpush2.msra.mxu0 0.0
    %9105 = vmatprep.subr.mxu0 0.0
    %9106 = vmatpush2.msra.mxu0 0.0
    %9107 = vmatprep.subr.mxu0 0.0
    %9108 = vmatpush2.msra.mxu0 0.0
    %9109 = vmatprep.subr.mxu0 0.0
    %9110 = vmatpush2.msra.mxu0 0.0
    %9111 = vmatprep.subr.mxu0 0.0
    %9112 = vmatpush2.msra.mxu0 0.0
    %9113 = vmatprep.mubr.f32.mxu0 0.0
    %9114 = vmatmul.mubr.f32.gmra.mxu0 %v9047
    %v9115 = vpop.f32.mrf.mxu0
    %v9116 = vadd.f32 0.0, %v9115
    %v9117 = vpop.f32.mrf.mxu0
    %9118 = vdwg.mxu0
    %v9120 = vsel %vm160, %v9045, 0
    %9122 = vmatprep.subr.mxu0 0.0
    %9123 = vmatpush1.msra.mxu0 0.0
    %9124 = vmatprep.subr.mxu0 0.0
    %9125 = vmatpush1.msra.mxu0 0.0
    %9126 = vmatprep.subr.mxu0 0.0
    %9127 = vmatpush1.msra.mxu0 0.0
    %9128 = vmatprep.subr.mxu0 0.0
    %9129 = vmatpush1.msra.mxu0 0.0
    %9130 = vmatprep.subr.mxu0 0.0
    %9131 = vmatpush1.msra.mxu0 0.0
    %9132 = vmatprep.subr.mxu0 0.0
    %9133 = vmatpush1.msra.mxu0 0.0
    %9134 = vmatprep.subr.mxu0 0.0
    %9135 = vmatpush1.msra.mxu0 0.0
    %9136 = vmatprep.subr.mxu0 0.0
    %9137 = vmatpush1.msra.mxu0 0.0
    %9138 = vmatprep.subr.mxu0 0.0
    %9139 = vmatpush1.msra.mxu0 0.0
    %9140 = vmatprep.subr.mxu0 0.0
    %9141 = vmatpush1.msra.mxu0 0.0
    %9142 = vmatprep.subr.mxu0 0.0
    %9143 = vmatpush1.msra.mxu0 0.0
    %9144 = vmatprep.subr.mxu0 0.0
    %9145 = vmatpush1.msra.mxu0 0.0
    %9146 = vmatprep.subr.mxu0 0.0
    %9147 = vmatpush1.msra.mxu0 0.0
    %9148 = vmatprep.subr.mxu0 0.0
    %9149 = vmatpush1.msra.mxu0 0.0
    %9150 = vmatprep.subr.mxu0 0.0
    %9151 = vmatpush1.msra.mxu0 0.0
    %9152 = vmatprep.subr.mxu0 0.0
    %9153 = vmatpush1.msra.mxu0 %v8968
    %9154 = vmatprep.subr.mxu0 0.0
    %9155 = vmatpush2.msra.mxu0 0.0
    %9156 = vmatprep.subr.mxu0 0.0
    %9157 = vmatpush2.msra.mxu0 0.0
    %9158 = vmatprep.subr.mxu0 0.0
    %9159 = vmatpush2.msra.mxu0 0.0
    %9160 = vmatprep.subr.mxu0 0.0
    %9161 = vmatpush2.msra.mxu0 0.0
    %9162 = vmatprep.subr.mxu0 0.0
    %9163 = vmatpush2.msra.mxu0 0.0
    %9164 = vmatprep.subr.mxu0 0.0
    %9165 = vmatpush2.msra.mxu0 0.0
    %9166 = vmatprep.subr.mxu0 0.0
    %9167 = vmatpush2.msra.mxu0 0.0
    %9168 = vmatprep.subr.mxu0 0.0
    %9169 = vmatpush2.msra.mxu0 0.0
    %9170 = vmatprep.subr.mxu0 0.0
    %9171 = vmatpush2.msra.mxu0 0.0
    %9172 = vmatprep.subr.mxu0 0.0
    %9173 = vmatpush2.msra.mxu0 0.0
    %9174 = vmatprep.subr.mxu0 0.0
    %9175 = vmatpush2.msra.mxu0 0.0
    %9176 = vmatprep.subr.mxu0 0.0
    %9177 = vmatpush2.msra.mxu0 0.0
    %9178 = vmatprep.subr.mxu0 0.0
    %9179 = vmatpush2.msra.mxu0 0.0
    %9180 = vmatprep.subr.mxu0 0.0
    %9181 = vmatpush2.msra.mxu0 0.0
    %9182 = vmatprep.subr.mxu0 0.0
    %9183 = vmatpush2.msra.mxu0 0.0
    %9184 = vmatprep.subr.mxu0 0.0
    %9185 = vmatpush2.msra.mxu0 0.0
    %9186 = vmatprep.mubr.f32.mxu0 0.0
    %9187 = vmatmul.mubr.f32.gmra.mxu0 %v9120
    %v9188 = vpop.f32.mrf.mxu0
    %v9189 = vadd.f32 0.0, %v9188
    %v9190 = vpop.f32.mrf.mxu0
    %9191 = vdwg.mxu0
    %v9193 = vsel %vm160, %v9189, 0
    %9195 = vmatprep.subr.mxu0 0.0
    %9196 = vmatpush1.msra.mxu0 0.0
    %9197 = vmatprep.subr.mxu0 0.0
    %9198 = vmatpush1.msra.mxu0 0.0
    %9199 = vmatprep.subr.mxu0 0.0
    %9200 = vmatpush1.msra.mxu0 0.0
    %9201 = vmatprep.subr.mxu0 0.0
    %9202 = vmatpush1.msra.mxu0 0.0
    %9203 = vmatprep.subr.mxu0 0.0
    %9204 = vmatpush1.msra.mxu0 0.0
    %9205 = vmatprep.subr.mxu0 0.0
    %9206 = vmatpush1.msra.mxu0 0.0
    %9207 = vmatprep.subr.mxu0 0.0
    %9208 = vmatpush1.msra.mxu0 0.0
    %9209 = vmatprep.subr.mxu0 0.0
    %9210 = vmatpush1.msra.mxu0 0.0
    %9211 = vmatprep.subr.mxu0 0.0
    %9212 = vmatpush1.msra.mxu0 0.0
    %9213 = vmatprep.subr.mxu0 0.0
    %9214 = vmatpush1.msra.mxu0 0.0
    %9215 = vmatprep.subr.mxu0 0.0
    %9216 = vmatpush1.msra.mxu0 0.0
    %9217 = vmatprep.subr.mxu0 0.0
    %9218 = vmatpush1.msra.mxu0 0.0
    %9219 = vmatprep.subr.mxu0 0.0
    %9220 = vmatpush1.msra.mxu0 0.0
    %9221 = vmatprep.subr.mxu0 0.0
    %9222 = vmatpush1.msra.mxu0 0.0
    %9223 = vmatprep.subr.mxu0 0.0
    %9224 = vmatpush1.msra.mxu0 0.0
    %9225 = vmatprep.subr.mxu0 0.0
    %9226 = vmatpush1.msra.mxu0 %v9116
    %9227 = vmatprep.subr.mxu0 0.0
    %9228 = vmatpush2.msra.mxu0 0.0
    %9229 = vmatprep.subr.mxu0 0.0
    %9230 = vmatpush2.msra.mxu0 0.0
    %9231 = vmatprep.subr.mxu0 0.0
    %9232 = vmatpush2.msra.mxu0 0.0
    %9233 = vmatprep.subr.mxu0 0.0
    %9234 = vmatpush2.msra.mxu0 0.0
    %9235 = vmatprep.subr.mxu0 0.0
    %9236 = vmatpush2.msra.mxu0 0.0
    %9237 = vmatprep.subr.mxu0 0.0
    %9238 = vmatpush2.msra.mxu0 0.0
    %9239 = vmatprep.subr.mxu0 0.0
    %9240 = vmatpush2.msra.mxu0 0.0
    %9241 = vmatprep.subr.mxu0 0.0
    %9242 = vmatpush2.msra.mxu0 0.0
    %9243 = vmatprep.subr.mxu0 0.0
    %9244 = vmatpush2.msra.mxu0 0.0
    %9245 = vmatprep.subr.mxu0 0.0
    %9246 = vmatpush2.msra.mxu0 0.0
    %9247 = vmatprep.subr.mxu0 0.0
    %9248 = vmatpush2.msra.mxu0 0.0
    %9249 = vmatprep.subr.mxu0 0.0
    %9250 = vmatpush2.msra.mxu0 0.0
    %9251 = vmatprep.subr.mxu0 0.0
    %9252 = vmatpush2.msra.mxu0 0.0
    %9253 = vmatprep.subr.mxu0 0.0
    %9254 = vmatpush2.msra.mxu0 0.0
    %9255 = vmatprep.subr.mxu0 0.0
    %9256 = vmatpush2.msra.mxu0 0.0
    %9257 = vmatprep.subr.mxu0 0.0
    %9258 = vmatpush2.msra.mxu0 0.0
    %9259 = vmatprep.mubr.f32.mxu0 0.0
    %9260 = vmatmul.mubr.f32.gmra.mxu0 %v9193
    %v9261 = vpop.f32.mrf.mxu0
    %v9262 = vadd.f32 0.0, %v9261
    %v9263 = vpop.f32.mrf.mxu0
    %9264 = vdwg.mxu0
    %v9265 = vmul.f32 %v9262, 0.5
    %v9266 = vsub.f32 %v183, %v9265
    %v9268 = vsel %vm160, %v9116, 0
    %9270 = vmatprep.subr.mxu0 0.0
    %9271 = vmatpush1.msra.mxu0 0.0
    %9272 = vmatprep.subr.mxu0 0.0
    %9273 = vmatpush1.msra.mxu0 0.0
    %9274 = vmatprep.subr.mxu0 0.0
    %9275 = vmatpush1.msra.mxu0 0.0
    %9276 = vmatprep.subr.mxu0 0.0
    %9277 = vmatpush1.msra.mxu0 0.0
    %9278 = vmatprep.subr.mxu0 0.0
    %9279 = vmatpush1.msra.mxu0 0.0
    %9280 = vmatprep.subr.mxu0 0.0
    %9281 = vmatpush1.msra.mxu0 0.0
    %9282 = vmatprep.subr.mxu0 0.0
    %9283 = vmatpush1.msra.mxu0 0.0
    %9284 = vmatprep.subr.mxu0 0.0
    %9285 = vmatpush1.msra.mxu0 0.0
    %9286 = vmatprep.subr.mxu0 0.0
    %9287 = vmatpush1.msra.mxu0 0.0
    %9288 = vmatprep.subr.mxu0 0.0
    %9289 = vmatpush1.msra.mxu0 0.0
    %9290 = vmatprep.subr.mxu0 0.0
    %9291 = vmatpush1.msra.mxu0 0.0
    %9292 = vmatprep.subr.mxu0 0.0
    %9293 = vmatpush1.msra.mxu0 0.0
    %9294 = vmatprep.subr.mxu0 0.0
    %9295 = vmatpush1.msra.mxu0 0.0
    %9296 = vmatprep.subr.mxu0 0.0
    %9297 = vmatpush1.msra.mxu0 0.0
    %9298 = vmatprep.subr.mxu0 0.0
    %9299 = vmatpush1.msra.mxu0 0.0
    %9300 = vmatprep.subr.mxu0 0.0
    %9301 = vmatpush1.msra.mxu0 %v9266
    %9302 = vmatprep.subr.mxu0 0.0
    %9303 = vmatpush2.msra.mxu0 0.0
    %9304 = vmatprep.subr.mxu0 0.0
    %9305 = vmatpush2.msra.mxu0 0.0
    %9306 = vmatprep.subr.mxu0 0.0
    %9307 = vmatpush2.msra.mxu0 0.0
    %9308 = vmatprep.subr.mxu0 0.0
    %9309 = vmatpush2.msra.mxu0 0.0
    %9310 = vmatprep.subr.mxu0 0.0
    %9311 = vmatpush2.msra.mxu0 0.0
    %9312 = vmatprep.subr.mxu0 0.0
    %9313 = vmatpush2.msra.mxu0 0.0
    %9314 = vmatprep.subr.mxu0 0.0
    %9315 = vmatpush2.msra.mxu0 0.0
    %9316 = vmatprep.subr.mxu0 0.0
    %9317 = vmatpush2.msra.mxu0 0.0
    %9318 = vmatprep.subr.mxu0 0.0
    %9319 = vmatpush2.msra.mxu0 0.0
    %9320 = vmatprep.subr.mxu0 0.0
    %9321 = vmatpush2.msra.mxu0 0.0
    %9322 = vmatprep.subr.mxu0 0.0
    %9323 = vmatpush2.msra.mxu0 0.0
    %9324 = vmatprep.subr.mxu0 0.0
    %9325 = vmatpush2.msra.mxu0 0.0
    %9326 = vmatprep.subr.mxu0 0.0
    %9327 = vmatpush2.msra.mxu0 0.0
    %9328 = vmatprep.subr.mxu0 0.0
    %9329 = vmatpush2.msra.mxu0 0.0
    %9330 = vmatprep.subr.mxu0 0.0
    %9331 = vmatpush2.msra.mxu0 0.0
    %9332 = vmatprep.subr.mxu0 0.0
    %9333 = vmatpush2.msra.mxu0 0.0
    %9334 = vmatprep.mubr.f32.mxu0 0.0
    %9335 = vmatmul.mubr.f32.gmra.mxu0 %v9268
    %v9336 = vpop.f32.mrf.mxu0
    %v9337 = vadd.f32 0.0, %v9336
    %v9338 = vpop.f32.mrf.mxu0
    %9339 = vdwg.mxu0
    %v9341 = vsel %vm160, %v9266, 0
    %9343 = vmatprep.subr.mxu0 0.0
    %9344 = vmatpush1.msra.mxu0 0.0
    %9345 = vmatprep.subr.mxu0 0.0
    %9346 = vmatpush1.msra.mxu0 0.0
    %9347 = vmatprep.subr.mxu0 0.0
    %9348 = vmatpush1.msra.mxu0 0.0
    %9349 = vmatprep.subr.mxu0 0.0
    %9350 = vmatpush1.msra.mxu0 0.0
    %9351 = vmatprep.subr.mxu0 0.0
    %9352 = vmatpush1.msra.mxu0 0.0
    %9353 = vmatprep.subr.mxu0 0.0
    %9354 = vmatpush1.msra.mxu0 0.0
    %9355 = vmatprep.subr.mxu0 0.0
    %9356 = vmatpush1.msra.mxu0 0.0
    %9357 = vmatprep.subr.mxu0 0.0
    %9358 = vmatpush1.msra.mxu0 0.0
    %9359 = vmatprep.subr.mxu0 0.0
    %9360 = vmatpush1.msra.mxu0 0.0
    %9361 = vmatprep.subr.mxu0 0.0
    %9362 = vmatpush1.msra.mxu0 0.0
    %9363 = vmatprep.subr.mxu0 0.0
    %9364 = vmatpush1.msra.mxu0 0.0
    %9365 = vmatprep.subr.mxu0 0.0
    %9366 = vmatpush1.msra.mxu0 0.0
    %9367 = vmatprep.subr.mxu0 0.0
    %9368 = vmatpush1.msra.mxu0 0.0
    %9369 = vmatprep.subr.mxu0 0.0
    %9370 = vmatpush1.msra.mxu0 0.0
    %9371 = vmatprep.subr.mxu0 0.0
    %9372 = vmatpush1.msra.mxu0 0.0
    %9373 = vmatprep.subr.mxu0 0.0
    %9374 = vmatpush1.msra.mxu0 %v9189
    %9375 = vmatprep.subr.mxu0 0.0
    %9376 = vmatpush2.msra.mxu0 0.0
    %9377 = vmatprep.subr.mxu0 0.0
    %9378 = vmatpush2.msra.mxu0 0.0
    %9379 = vmatprep.subr.mxu0 0.0
    %9380 = vmatpush2.msra.mxu0 0.0
    %9381 = vmatprep.subr.mxu0 0.0
    %9382 = vmatpush2.msra.mxu0 0.0
    %9383 = vmatprep.subr.mxu0 0.0
    %9384 = vmatpush2.msra.mxu0 0.0
    %9385 = vmatprep.subr.mxu0 0.0
    %9386 = vmatpush2.msra.mxu0 0.0
    %9387 = vmatprep.subr.mxu0 0.0
    %9388 = vmatpush2.msra.mxu0 0.0
    %9389 = vmatprep.subr.mxu0 0.0
    %9390 = vmatpush2.msra.mxu0 0.0
    %9391 = vmatprep.subr.mxu0 0.0
    %9392 = vmatpush2.msra.mxu0 0.0
    %9393 = vmatprep.subr.mxu0 0.0
    %9394 = vmatpush2.msra.mxu0 0.0
    %9395 = vmatprep.subr.mxu0 0.0
    %9396 = vmatpush2.msra.mxu0 0.0
    %9397 = vmatprep.subr.mxu0 0.0
    %9398 = vmatpush2.msra.mxu0 0.0
    %9399 = vmatprep.subr.mxu0 0.0
    %9400 = vmatpush2.msra.mxu0 0.0
    %9401 = vmatprep.subr.mxu0 0.0
    %9402 = vmatpush2.msra.mxu0 0.0
    %9403 = vmatprep.subr.mxu0 0.0
    %9404 = vmatpush2.msra.mxu0 0.0
    %9405 = vmatprep.subr.mxu0 0.0
    %9406 = vmatpush2.msra.mxu0 0.0
    %9407 = vmatprep.mubr.f32.mxu0 0.0
    %9408 = vmatmul.mubr.f32.gmra.mxu0 %v9341
    %v9409 = vpop.f32.mrf.mxu0
    %v9410 = vadd.f32 0.0, %v9409
    %v9411 = vpop.f32.mrf.mxu0
    %9412 = vdwg.mxu0
    %v9414 = vsel %vm160, %v9410, 0
    %9416 = vmatprep.subr.mxu0 0.0
    %9417 = vmatpush1.msra.mxu0 0.0
    %9418 = vmatprep.subr.mxu0 0.0
    %9419 = vmatpush1.msra.mxu0 0.0
    %9420 = vmatprep.subr.mxu0 0.0
    %9421 = vmatpush1.msra.mxu0 0.0
    %9422 = vmatprep.subr.mxu0 0.0
    %9423 = vmatpush1.msra.mxu0 0.0
    %9424 = vmatprep.subr.mxu0 0.0
    %9425 = vmatpush1.msra.mxu0 0.0
    %9426 = vmatprep.subr.mxu0 0.0
    %9427 = vmatpush1.msra.mxu0 0.0
    %9428 = vmatprep.subr.mxu0 0.0
    %9429 = vmatpush1.msra.mxu0 0.0
    %9430 = vmatprep.subr.mxu0 0.0
    %9431 = vmatpush1.msra.mxu0 0.0
    %9432 = vmatprep.subr.mxu0 0.0
    %9433 = vmatpush1.msra.mxu0 0.0
    %9434 = vmatprep.subr.mxu0 0.0
    %9435 = vmatpush1.msra.mxu0 0.0
    %9436 = vmatprep.subr.mxu0 0.0
    %9437 = vmatpush1.msra.mxu0 0.0
    %9438 = vmatprep.subr.mxu0 0.0
    %9439 = vmatpush1.msra.mxu0 0.0
    %9440 = vmatprep.subr.mxu0 0.0
    %9441 = vmatpush1.msra.mxu0 0.0
    %9442 = vmatprep.subr.mxu0 0.0
    %9443 = vmatpush1.msra.mxu0 0.0
    %9444 = vmatprep.subr.mxu0 0.0
    %9445 = vmatpush1.msra.mxu0 0.0
    %9446 = vmatprep.subr.mxu0 0.0
    %9447 = vmatpush1.msra.mxu0 %v9337
    %9448 = vmatprep.subr.mxu0 0.0
    %9449 = vmatpush2.msra.mxu0 0.0
    %9450 = vmatprep.subr.mxu0 0.0
    %9451 = vmatpush2.msra.mxu0 0.0
    %9452 = vmatprep.subr.mxu0 0.0
    %9453 = vmatpush2.msra.mxu0 0.0
    %9454 = vmatprep.subr.mxu0 0.0
    %9455 = vmatpush2.msra.mxu0 0.0
    %9456 = vmatprep.subr.mxu0 0.0
    %9457 = vmatpush2.msra.mxu0 0.0
    %9458 = vmatprep.subr.mxu0 0.0
    %9459 = vmatpush2.msra.mxu0 0.0
    %9460 = vmatprep.subr.mxu0 0.0
    %9461 = vmatpush2.msra.mxu0 0.0
    %9462 = vmatprep.subr.mxu0 0.0
    %9463 = vmatpush2.msra.mxu0 0.0
    %9464 = vmatprep.subr.mxu0 0.0
    %9465 = vmatpush2.msra.mxu0 0.0
    %9466 = vmatprep.subr.mxu0 0.0
    %9467 = vmatpush2.msra.mxu0 0.0
    %9468 = vmatprep.subr.mxu0 0.0
    %9469 = vmatpush2.msra.mxu0 0.0
    %9470 = vmatprep.subr.mxu0 0.0
    %9471 = vmatpush2.msra.mxu0 0.0
    %9472 = vmatprep.subr.mxu0 0.0
    %9473 = vmatpush2.msra.mxu0 0.0
    %9474 = vmatprep.subr.mxu0 0.0
    %9475 = vmatpush2.msra.mxu0 0.0
    %9476 = vmatprep.subr.mxu0 0.0
    %9477 = vmatpush2.msra.mxu0 0.0
    %9478 = vmatprep.subr.mxu0 0.0
    %9479 = vmatpush2.msra.mxu0 0.0
    %9480 = vmatprep.mubr.f32.mxu0 0.0
    %9481 = vmatmul.mubr.f32.gmra.mxu0 %v9414
    %v9482 = vpop.f32.mrf.mxu0
    %v9483 = vadd.f32 0.0, %v9482
    %v9484 = vpop.f32.mrf.mxu0
    %9485 = vdwg.mxu0
    %v9486 = vmul.f32 %v9483, 0.5
    %v9487 = vsub.f32 %v183, %v9486
    %v9489 = vsel %vm160, %v9337, 0
    %9491 = vmatprep.subr.mxu0 0.0
    %9492 = vmatpush1.msra.mxu0 0.0
    %9493 = vmatprep.subr.mxu0 0.0
    %9494 = vmatpush1.msra.mxu0 0.0
    %9495 = vmatprep.subr.mxu0 0.0
    %9496 = vmatpush1.msra.mxu0 0.0
    %9497 = vmatprep.subr.mxu0 0.0
    %9498 = vmatpush1.msra.mxu0 0.0
    %9499 = vmatprep.subr.mxu0 0.0
    %9500 = vmatpush1.msra.mxu0 0.0
    %9501 = vmatprep.subr.mxu0 0.0
    %9502 = vmatpush1.msra.mxu0 0.0
    %9503 = vmatprep.subr.mxu0 0.0
    %9504 = vmatpush1.msra.mxu0 0.0
    %9505 = vmatprep.subr.mxu0 0.0
    %9506 = vmatpush1.msra.mxu0 0.0
    %9507 = vmatprep.subr.mxu0 0.0
    %9508 = vmatpush1.msra.mxu0 0.0
    %9509 = vmatprep.subr.mxu0 0.0
    %9510 = vmatpush1.msra.mxu0 0.0
    %9511 = vmatprep.subr.mxu0 0.0
    %9512 = vmatpush1.msra.mxu0 0.0
    %9513 = vmatprep.subr.mxu0 0.0
    %9514 = vmatpush1.msra.mxu0 0.0
    %9515 = vmatprep.subr.mxu0 0.0
    %9516 = vmatpush1.msra.mxu0 0.0
    %9517 = vmatprep.subr.mxu0 0.0
    %9518 = vmatpush1.msra.mxu0 0.0
    %9519 = vmatprep.subr.mxu0 0.0
    %9520 = vmatpush1.msra.mxu0 0.0
    %9521 = vmatprep.subr.mxu0 0.0
    %9522 = vmatpush1.msra.mxu0 %v9487
    %9523 = vmatprep.subr.mxu0 0.0
    %9524 = vmatpush2.msra.mxu0 0.0
    %9525 = vmatprep.subr.mxu0 0.0
    %9526 = vmatpush2.msra.mxu0 0.0
    %9527 = vmatprep.subr.mxu0 0.0
    %9528 = vmatpush2.msra.mxu0 0.0
    %9529 = vmatprep.subr.mxu0 0.0
    %9530 = vmatpush2.msra.mxu0 0.0
    %9531 = vmatprep.subr.mxu0 0.0
    %9532 = vmatpush2.msra.mxu0 0.0
    %9533 = vmatprep.subr.mxu0 0.0
    %9534 = vmatpush2.msra.mxu0 0.0
    %9535 = vmatprep.subr.mxu0 0.0
    %9536 = vmatpush2.msra.mxu0 0.0
    %9537 = vmatprep.subr.mxu0 0.0
    %9538 = vmatpush2.msra.mxu0 0.0
    %9539 = vmatprep.subr.mxu0 0.0
    %9540 = vmatpush2.msra.mxu0 0.0
    %9541 = vmatprep.subr.mxu0 0.0
    %9542 = vmatpush2.msra.mxu0 0.0
    %9543 = vmatprep.subr.mxu0 0.0
    %9544 = vmatpush2.msra.mxu0 0.0
    %9545 = vmatprep.subr.mxu0 0.0
    %9546 = vmatpush2.msra.mxu0 0.0
    %9547 = vmatprep.subr.mxu0 0.0
    %9548 = vmatpush2.msra.mxu0 0.0
    %9549 = vmatprep.subr.mxu0 0.0
    %9550 = vmatpush2.msra.mxu0 0.0
    %9551 = vmatprep.subr.mxu0 0.0
    %9552 = vmatpush2.msra.mxu0 0.0
    %9553 = vmatprep.subr.mxu0 0.0
    %9554 = vmatpush2.msra.mxu0 0.0
    %9555 = vmatprep.mubr.f32.mxu0 0.0
    %9556 = vmatmul.mubr.f32.gmra.mxu0 %v9489
    %v9557 = vpop.f32.mrf.mxu0
    %v9558 = vadd.f32 0.0, %v9557
    %v9559 = vpop.f32.mrf.mxu0
    %9560 = vdwg.mxu0
    %v9562 = vsel %vm160, %v9487, 0
    %9564 = vmatprep.subr.mxu0 0.0
    %9565 = vmatpush1.msra.mxu0 0.0
    %9566 = vmatprep.subr.mxu0 0.0
    %9567 = vmatpush1.msra.mxu0 0.0
    %9568 = vmatprep.subr.mxu0 0.0
    %9569 = vmatpush1.msra.mxu0 0.0
    %9570 = vmatprep.subr.mxu0 0.0
    %9571 = vmatpush1.msra.mxu0 0.0
    %9572 = vmatprep.subr.mxu0 0.0
    %9573 = vmatpush1.msra.mxu0 0.0
    %9574 = vmatprep.subr.mxu0 0.0
    %9575 = vmatpush1.msra.mxu0 0.0
    %9576 = vmatprep.subr.mxu0 0.0
    %9577 = vmatpush1.msra.mxu0 0.0
    %9578 = vmatprep.subr.mxu0 0.0
    %9579 = vmatpush1.msra.mxu0 0.0
    %9580 = vmatprep.subr.mxu0 0.0
    %9581 = vmatpush1.msra.mxu0 0.0
    %9582 = vmatprep.subr.mxu0 0.0
    %9583 = vmatpush1.msra.mxu0 0.0
    %9584 = vmatprep.subr.mxu0 0.0
    %9585 = vmatpush1.msra.mxu0 0.0
    %9586 = vmatprep.subr.mxu0 0.0
    %9587 = vmatpush1.msra.mxu0 0.0
    %9588 = vmatprep.subr.mxu0 0.0
    %9589 = vmatpush1.msra.mxu0 0.0
    %9590 = vmatprep.subr.mxu0 0.0
    %9591 = vmatpush1.msra.mxu0 0.0
    %9592 = vmatprep.subr.mxu0 0.0
    %9593 = vmatpush1.msra.mxu0 0.0
    %9594 = vmatprep.subr.mxu0 0.0
    %9595 = vmatpush1.msra.mxu0 %v9410
    %9596 = vmatprep.subr.mxu0 0.0
    %9597 = vmatpush2.msra.mxu0 0.0
    %9598 = vmatprep.subr.mxu0 0.0
    %9599 = vmatpush2.msra.mxu0 0.0
    %9600 = vmatprep.subr.mxu0 0.0
    %9601 = vmatpush2.msra.mxu0 0.0
    %9602 = vmatprep.subr.mxu0 0.0
    %9603 = vmatpush2.msra.mxu0 0.0
    %9604 = vmatprep.subr.mxu0 0.0
    %9605 = vmatpush2.msra.mxu0 0.0
    %9606 = vmatprep.subr.mxu0 0.0
    %9607 = vmatpush2.msra.mxu0 0.0
    %9608 = vmatprep.subr.mxu0 0.0
    %9609 = vmatpush2.msra.mxu0 0.0
    %9610 = vmatprep.subr.mxu0 0.0
    %9611 = vmatpush2.msra.mxu0 0.0
    %9612 = vmatprep.subr.mxu0 0.0
    %9613 = vmatpush2.msra.mxu0 0.0
    %9614 = vmatprep.subr.mxu0 0.0
    %9615 = vmatpush2.msra.mxu0 0.0
    %9616 = vmatprep.subr.mxu0 0.0
    %9617 = vmatpush2.msra.mxu0 0.0
    %9618 = vmatprep.subr.mxu0 0.0
    %9619 = vmatpush2.msra.mxu0 0.0
    %9620 = vmatprep.subr.mxu0 0.0
    %9621 = vmatpush2.msra.mxu0 0.0
    %9622 = vmatprep.subr.mxu0 0.0
    %9623 = vmatpush2.msra.mxu0 0.0
    %9624 = vmatprep.subr.mxu0 0.0
    %9625 = vmatpush2.msra.mxu0 0.0
    %9626 = vmatprep.subr.mxu0 0.0
    %9627 = vmatpush2.msra.mxu0 0.0
    %9628 = vmatprep.mubr.f32.mxu0 0.0
    %9629 = vmatmul.mubr.f32.gmra.mxu0 %v9562
    %v9630 = vpop.f32.mrf.mxu0
    %v9631 = vadd.f32 0.0, %v9630
    %v9632 = vpop.f32.mrf.mxu0
    %9633 = vdwg.mxu0
    %v9635 = vsel %vm160, %v9631, 0
    %9637 = vmatprep.subr.mxu0 0.0
    %9638 = vmatpush1.msra.mxu0 0.0
    %9639 = vmatprep.subr.mxu0 0.0
    %9640 = vmatpush1.msra.mxu0 0.0
    %9641 = vmatprep.subr.mxu0 0.0
    %9642 = vmatpush1.msra.mxu0 0.0
    %9643 = vmatprep.subr.mxu0 0.0
    %9644 = vmatpush1.msra.mxu0 0.0
    %9645 = vmatprep.subr.mxu0 0.0
    %9646 = vmatpush1.msra.mxu0 0.0
    %9647 = vmatprep.subr.mxu0 0.0
    %9648 = vmatpush1.msra.mxu0 0.0
    %9649 = vmatprep.subr.mxu0 0.0
    %9650 = vmatpush1.msra.mxu0 0.0
    %9651 = vmatprep.subr.mxu0 0.0
    %9652 = vmatpush1.msra.mxu0 0.0
    %9653 = vmatprep.subr.mxu0 0.0
    %9654 = vmatpush1.msra.mxu0 0.0
    %9655 = vmatprep.subr.mxu0 0.0
    %9656 = vmatpush1.msra.mxu0 0.0
    %9657 = vmatprep.subr.mxu0 0.0
    %9658 = vmatpush1.msra.mxu0 0.0
    %9659 = vmatprep.subr.mxu0 0.0
    %9660 = vmatpush1.msra.mxu0 0.0
    %9661 = vmatprep.subr.mxu0 0.0
    %9662 = vmatpush1.msra.mxu0 0.0
    %9663 = vmatprep.subr.mxu0 0.0
    %9664 = vmatpush1.msra.mxu0 0.0
    %9665 = vmatprep.subr.mxu0 0.0
    %9666 = vmatpush1.msra.mxu0 0.0
    %9667 = vmatprep.subr.mxu0 0.0
    %9668 = vmatpush1.msra.mxu0 %v9558
    %9669 = vmatprep.subr.mxu0 0.0
    %9670 = vmatpush2.msra.mxu0 0.0
    %9671 = vmatprep.subr.mxu0 0.0
    %9672 = vmatpush2.msra.mxu0 0.0
    %9673 = vmatprep.subr.mxu0 0.0
    %9674 = vmatpush2.msra.mxu0 0.0
    %9675 = vmatprep.subr.mxu0 0.0
    %9676 = vmatpush2.msra.mxu0 0.0
    %9677 = vmatprep.subr.mxu0 0.0
    %9678 = vmatpush2.msra.mxu0 0.0
    %9679 = vmatprep.subr.mxu0 0.0
    %9680 = vmatpush2.msra.mxu0 0.0
    %9681 = vmatprep.subr.mxu0 0.0
    %9682 = vmatpush2.msra.mxu0 0.0
    %9683 = vmatprep.subr.mxu0 0.0
    %9684 = vmatpush2.msra.mxu0 0.0
    %9685 = vmatprep.subr.mxu0 0.0
    %9686 = vmatpush2.msra.mxu0 0.0
    %9687 = vmatprep.subr.mxu0 0.0
    %9688 = vmatpush2.msra.mxu0 0.0
    %9689 = vmatprep.subr.mxu0 0.0
    %9690 = vmatpush2.msra.mxu0 0.0
    %9691 = vmatprep.subr.mxu0 0.0
    %9692 = vmatpush2.msra.mxu0 0.0
    %9693 = vmatprep.subr.mxu0 0.0
    %9694 = vmatpush2.msra.mxu0 0.0
    %9695 = vmatprep.subr.mxu0 0.0
    %9696 = vmatpush2.msra.mxu0 0.0
    %9697 = vmatprep.subr.mxu0 0.0
    %9698 = vmatpush2.msra.mxu0 0.0
    %9699 = vmatprep.subr.mxu0 0.0
    %9700 = vmatpush2.msra.mxu0 0.0
    %9701 = vmatprep.mubr.f32.mxu0 0.0
    %9702 = vmatmul.mubr.f32.gmra.mxu0 %v9635
    %v9703 = vpop.f32.mrf.mxu0
    %v9704 = vadd.f32 0.0, %v9703
    %v9705 = vpop.f32.mrf.mxu0
    %9706 = vdwg.mxu0
    %v9707 = vmul.f32 %v9704, 0.5
    %v9708 = vsub.f32 %v183, %v9707
    %v9710 = vsel %vm160, %v9558, 0
    %9712 = vmatprep.subr.mxu0 0.0
    %9713 = vmatpush1.msra.mxu0 0.0
    %9714 = vmatprep.subr.mxu0 0.0
    %9715 = vmatpush1.msra.mxu0 0.0
    %9716 = vmatprep.subr.mxu0 0.0
    %9717 = vmatpush1.msra.mxu0 0.0
    %9718 = vmatprep.subr.mxu0 0.0
    %9719 = vmatpush1.msra.mxu0 0.0
    %9720 = vmatprep.subr.mxu0 0.0
    %9721 = vmatpush1.msra.mxu0 0.0
    %9722 = vmatprep.subr.mxu0 0.0
    %9723 = vmatpush1.msra.mxu0 0.0
    %9724 = vmatprep.subr.mxu0 0.0
    %9725 = vmatpush1.msra.mxu0 0.0
    %9726 = vmatprep.subr.mxu0 0.0
    %9727 = vmatpush1.msra.mxu0 0.0
    %9728 = vmatprep.subr.mxu0 0.0
    %9729 = vmatpush1.msra.mxu0 0.0
    %9730 = vmatprep.subr.mxu0 0.0
    %9731 = vmatpush1.msra.mxu0 0.0
    %9732 = vmatprep.subr.mxu0 0.0
    %9733 = vmatpush1.msra.mxu0 0.0
    %9734 = vmatprep.subr.mxu0 0.0
    %9735 = vmatpush1.msra.mxu0 0.0
    %9736 = vmatprep.subr.mxu0 0.0
    %9737 = vmatpush1.msra.mxu0 0.0
    %9738 = vmatprep.subr.mxu0 0.0
    %9739 = vmatpush1.msra.mxu0 0.0
    %9740 = vmatprep.subr.mxu0 0.0
    %9741 = vmatpush1.msra.mxu0 0.0
    %9742 = vmatprep.subr.mxu0 0.0
    %9743 = vmatpush1.msra.mxu0 %v9708
    %9744 = vmatprep.subr.mxu0 0.0
    %9745 = vmatpush2.msra.mxu0 0.0
    %9746 = vmatprep.subr.mxu0 0.0
    %9747 = vmatpush2.msra.mxu0 0.0
    %9748 = vmatprep.subr.mxu0 0.0
    %9749 = vmatpush2.msra.mxu0 0.0
    %9750 = vmatprep.subr.mxu0 0.0
    %9751 = vmatpush2.msra.mxu0 0.0
    %9752 = vmatprep.subr.mxu0 0.0
    %9753 = vmatpush2.msra.mxu0 0.0
    %9754 = vmatprep.subr.mxu0 0.0
    %9755 = vmatpush2.msra.mxu0 0.0
    %9756 = vmatprep.subr.mxu0 0.0
    %9757 = vmatpush2.msra.mxu0 0.0
    %9758 = vmatprep.subr.mxu0 0.0
    %9759 = vmatpush2.msra.mxu0 0.0
    %9760 = vmatprep.subr.mxu0 0.0
    %9761 = vmatpush2.msra.mxu0 0.0
    %9762 = vmatprep.subr.mxu0 0.0
    %9763 = vmatpush2.msra.mxu0 0.0
    %9764 = vmatprep.subr.mxu0 0.0
    %9765 = vmatpush2.msra.mxu0 0.0
    %9766 = vmatprep.subr.mxu0 0.0
    %9767 = vmatpush2.msra.mxu0 0.0
    %9768 = vmatprep.subr.mxu0 0.0
    %9769 = vmatpush2.msra.mxu0 0.0
    %9770 = vmatprep.subr.mxu0 0.0
    %9771 = vmatpush2.msra.mxu0 0.0
    %9772 = vmatprep.subr.mxu0 0.0
    %9773 = vmatpush2.msra.mxu0 0.0
    %9774 = vmatprep.subr.mxu0 0.0
    %9775 = vmatpush2.msra.mxu0 0.0
    %9776 = vmatprep.mubr.f32.mxu0 0.0
    %9777 = vmatmul.mubr.f32.gmra.mxu0 %v9710
    %v9778 = vpop.f32.mrf.mxu0
    %v9779 = vadd.f32 0.0, %v9778
    %v9780 = vpop.f32.mrf.mxu0
    %9781 = vdwg.mxu0
    %v9783 = vsel %vm160, %v9708, 0
    %9785 = vmatprep.subr.mxu0 0.0
    %9786 = vmatpush1.msra.mxu0 0.0
    %9787 = vmatprep.subr.mxu0 0.0
    %9788 = vmatpush1.msra.mxu0 0.0
    %9789 = vmatprep.subr.mxu0 0.0
    %9790 = vmatpush1.msra.mxu0 0.0
    %9791 = vmatprep.subr.mxu0 0.0
    %9792 = vmatpush1.msra.mxu0 0.0
    %9793 = vmatprep.subr.mxu0 0.0
    %9794 = vmatpush1.msra.mxu0 0.0
    %9795 = vmatprep.subr.mxu0 0.0
    %9796 = vmatpush1.msra.mxu0 0.0
    %9797 = vmatprep.subr.mxu0 0.0
    %9798 = vmatpush1.msra.mxu0 0.0
    %9799 = vmatprep.subr.mxu0 0.0
    %9800 = vmatpush1.msra.mxu0 0.0
    %9801 = vmatprep.subr.mxu0 0.0
    %9802 = vmatpush1.msra.mxu0 0.0
    %9803 = vmatprep.subr.mxu0 0.0
    %9804 = vmatpush1.msra.mxu0 0.0
    %9805 = vmatprep.subr.mxu0 0.0
    %9806 = vmatpush1.msra.mxu0 0.0
    %9807 = vmatprep.subr.mxu0 0.0
    %9808 = vmatpush1.msra.mxu0 0.0
    %9809 = vmatprep.subr.mxu0 0.0
    %9810 = vmatpush1.msra.mxu0 0.0
    %9811 = vmatprep.subr.mxu0 0.0
    %9812 = vmatpush1.msra.mxu0 0.0
    %9813 = vmatprep.subr.mxu0 0.0
    %9814 = vmatpush1.msra.mxu0 0.0
    %9815 = vmatprep.subr.mxu0 0.0
    %9816 = vmatpush1.msra.mxu0 %v9631
    %9817 = vmatprep.subr.mxu0 0.0
    %9818 = vmatpush2.msra.mxu0 0.0
    %9819 = vmatprep.subr.mxu0 0.0
    %9820 = vmatpush2.msra.mxu0 0.0
    %9821 = vmatprep.subr.mxu0 0.0
    %9822 = vmatpush2.msra.mxu0 0.0
    %9823 = vmatprep.subr.mxu0 0.0
    %9824 = vmatpush2.msra.mxu0 0.0
    %9825 = vmatprep.subr.mxu0 0.0
    %9826 = vmatpush2.msra.mxu0 0.0
    %9827 = vmatprep.subr.mxu0 0.0
    %9828 = vmatpush2.msra.mxu0 0.0
    %9829 = vmatprep.subr.mxu0 0.0
    %9830 = vmatpush2.msra.mxu0 0.0
    %9831 = vmatprep.subr.mxu0 0.0
    %9832 = vmatpush2.msra.mxu0 0.0
    %9833 = vmatprep.subr.mxu0 0.0
    %9834 = vmatpush2.msra.mxu0 0.0
    %9835 = vmatprep.subr.mxu0 0.0
    %9836 = vmatpush2.msra.mxu0 0.0
    %9837 = vmatprep.subr.mxu0 0.0
    %9838 = vmatpush2.msra.mxu0 0.0
    %9839 = vmatprep.subr.mxu0 0.0
    %9840 = vmatpush2.msra.mxu0 0.0
    %9841 = vmatprep.subr.mxu0 0.0
    %9842 = vmatpush2.msra.mxu0 0.0
    %9843 = vmatprep.subr.mxu0 0.0
    %9844 = vmatpush2.msra.mxu0 0.0
    %9845 = vmatprep.subr.mxu0 0.0
    %9846 = vmatpush2.msra.mxu0 0.0
    %9847 = vmatprep.subr.mxu0 0.0
    %9848 = vmatpush2.msra.mxu0 0.0
    %9849 = vmatprep.mubr.f32.mxu0 0.0
    %9850 = vmatmul.mubr.f32.gmra.mxu0 %v9783
    %v9851 = vpop.f32.mrf.mxu0
    %v9852 = vadd.f32 0.0, %v9851
    %v9853 = vpop.f32.mrf.mxu0
    %9854 = vdwg.mxu0
    %v9856 = vsel %vm160, %v9852, 0
    %9858 = vmatprep.subr.mxu0 0.0
    %9859 = vmatpush1.msra.mxu0 0.0
    %9860 = vmatprep.subr.mxu0 0.0
    %9861 = vmatpush1.msra.mxu0 0.0
    %9862 = vmatprep.subr.mxu0 0.0
    %9863 = vmatpush1.msra.mxu0 0.0
    %9864 = vmatprep.subr.mxu0 0.0
    %9865 = vmatpush1.msra.mxu0 0.0
    %9866 = vmatprep.subr.mxu0 0.0
    %9867 = vmatpush1.msra.mxu0 0.0
    %9868 = vmatprep.subr.mxu0 0.0
    %9869 = vmatpush1.msra.mxu0 0.0
    %9870 = vmatprep.subr.mxu0 0.0
    %9871 = vmatpush1.msra.mxu0 0.0
    %9872 = vmatprep.subr.mxu0 0.0
    %9873 = vmatpush1.msra.mxu0 0.0
    %9874 = vmatprep.subr.mxu0 0.0
    %9875 = vmatpush1.msra.mxu0 0.0
    %9876 = vmatprep.subr.mxu0 0.0
    %9877 = vmatpush1.msra.mxu0 0.0
    %9878 = vmatprep.subr.mxu0 0.0
    %9879 = vmatpush1.msra.mxu0 0.0
    %9880 = vmatprep.subr.mxu0 0.0
    %9881 = vmatpush1.msra.mxu0 0.0
    %9882 = vmatprep.subr.mxu0 0.0
    %9883 = vmatpush1.msra.mxu0 0.0
    %9884 = vmatprep.subr.mxu0 0.0
    %9885 = vmatpush1.msra.mxu0 0.0
    %9886 = vmatprep.subr.mxu0 0.0
    %9887 = vmatpush1.msra.mxu0 0.0
    %9888 = vmatprep.subr.mxu0 0.0
    %9889 = vmatpush1.msra.mxu0 %v9779
    %9890 = vmatprep.subr.mxu0 0.0
    %9891 = vmatpush2.msra.mxu0 0.0
    %9892 = vmatprep.subr.mxu0 0.0
    %9893 = vmatpush2.msra.mxu0 0.0
    %9894 = vmatprep.subr.mxu0 0.0
    %9895 = vmatpush2.msra.mxu0 0.0
    %9896 = vmatprep.subr.mxu0 0.0
    %9897 = vmatpush2.msra.mxu0 0.0
    %9898 = vmatprep.subr.mxu0 0.0
    %9899 = vmatpush2.msra.mxu0 0.0
    %9900 = vmatprep.subr.mxu0 0.0
    %9901 = vmatpush2.msra.mxu0 0.0
    %9902 = vmatprep.subr.mxu0 0.0
    %9903 = vmatpush2.msra.mxu0 0.0
    %9904 = vmatprep.subr.mxu0 0.0
    %9905 = vmatpush2.msra.mxu0 0.0
    %9906 = vmatprep.subr.mxu0 0.0
    %9907 = vmatpush2.msra.mxu0 0.0
    %9908 = vmatprep.subr.mxu0 0.0
    %9909 = vmatpush2.msra.mxu0 0.0
    %9910 = vmatprep.subr.mxu0 0.0
    %9911 = vmatpush2.msra.mxu0 0.0
    %9912 = vmatprep.subr.mxu0 0.0
    %9913 = vmatpush2.msra.mxu0 0.0
    %9914 = vmatprep.subr.mxu0 0.0
    %9915 = vmatpush2.msra.mxu0 0.0
    %9916 = vmatprep.subr.mxu0 0.0
    %9917 = vmatpush2.msra.mxu0 0.0
    %9918 = vmatprep.subr.mxu0 0.0
    %9919 = vmatpush2.msra.mxu0 0.0
    %9920 = vmatprep.subr.mxu0 0.0
    %9921 = vmatpush2.msra.mxu0 0.0
    %9922 = vmatprep.mubr.f32.mxu0 0.0
    %9923 = vmatmul.mubr.f32.gmra.mxu0 %v9856
    %v9924 = vpop.f32.mrf.mxu0
    %v9925 = vadd.f32 0.0, %v9924
    %v9926 = vpop.f32.mrf.mxu0
    %9927 = vdwg.mxu0
    %v9928 = vmul.f32 %v9925, 0.5
    %v9929 = vsub.f32 %v183, %v9928
    %v9931 = vsel %vm160, %v9779, 0
    %9933 = vmatprep.subr.mxu0 0.0
    %9934 = vmatpush1.msra.mxu0 0.0
    %9935 = vmatprep.subr.mxu0 0.0
    %9936 = vmatpush1.msra.mxu0 0.0
    %9937 = vmatprep.subr.mxu0 0.0
    %9938 = vmatpush1.msra.mxu0 0.0
    %9939 = vmatprep.subr.mxu0 0.0
    %9940 = vmatpush1.msra.mxu0 0.0
    %9941 = vmatprep.subr.mxu0 0.0
    %9942 = vmatpush1.msra.mxu0 0.0
    %9943 = vmatprep.subr.mxu0 0.0
    %9944 = vmatpush1.msra.mxu0 0.0
    %9945 = vmatprep.subr.mxu0 0.0
    %9946 = vmatpush1.msra.mxu0 0.0
    %9947 = vmatprep.subr.mxu0 0.0
    %9948 = vmatpush1.msra.mxu0 0.0
    %9949 = vmatprep.subr.mxu0 0.0
    %9950 = vmatpush1.msra.mxu0 0.0
    %9951 = vmatprep.subr.mxu0 0.0
    %9952 = vmatpush1.msra.mxu0 0.0
    %9953 = vmatprep.subr.mxu0 0.0
    %9954 = vmatpush1.msra.mxu0 0.0
    %9955 = vmatprep.subr.mxu0 0.0
    %9956 = vmatpush1.msra.mxu0 0.0
    %9957 = vmatprep.subr.mxu0 0.0
    %9958 = vmatpush1.msra.mxu0 0.0
    %9959 = vmatprep.subr.mxu0 0.0
    %9960 = vmatpush1.msra.mxu0 0.0
    %9961 = vmatprep.subr.mxu0 0.0
    %9962 = vmatpush1.msra.mxu0 0.0
    %9963 = vmatprep.subr.mxu0 0.0
    %9964 = vmatpush1.msra.mxu0 %v9929
    %9965 = vmatprep.subr.mxu0 0.0
    %9966 = vmatpush2.msra.mxu0 0.0
    %9967 = vmatprep.subr.mxu0 0.0
    %9968 = vmatpush2.msra.mxu0 0.0
    %9969 = vmatprep.subr.mxu0 0.0
    %9970 = vmatpush2.msra.mxu0 0.0
    %9971 = vmatprep.subr.mxu0 0.0
    %9972 = vmatpush2.msra.mxu0 0.0
    %9973 = vmatprep.subr.mxu0 0.0
    %9974 = vmatpush2.msra.mxu0 0.0
    %9975 = vmatprep.subr.mxu0 0.0
    %9976 = vmatpush2.msra.mxu0 0.0
    %9977 = vmatprep.subr.mxu0 0.0
    %9978 = vmatpush2.msra.mxu0 0.0
    %9979 = vmatprep.subr.mxu0 0.0
    %9980 = vmatpush2.msra.mxu0 0.0
    %9981 = vmatprep.subr.mxu0 0.0
    %9982 = vmatpush2.msra.mxu0 0.0
    %9983 = vmatprep.subr.mxu0 0.0
    %9984 = vmatpush2.msra.mxu0 0.0
    %9985 = vmatprep.subr.mxu0 0.0
    %9986 = vmatpush2.msra.mxu0 0.0
    %9987 = vmatprep.subr.mxu0 0.0
    %9988 = vmatpush2.msra.mxu0 0.0
    %9989 = vmatprep.subr.mxu0 0.0
    %9990 = vmatpush2.msra.mxu0 0.0
    %9991 = vmatprep.subr.mxu0 0.0
    %9992 = vmatpush2.msra.mxu0 0.0
    %9993 = vmatprep.subr.mxu0 0.0
    %9994 = vmatpush2.msra.mxu0 0.0
    %9995 = vmatprep.subr.mxu0 0.0
    %9996 = vmatpush2.msra.mxu0 0.0
    %9997 = vmatprep.mubr.f32.mxu0 0.0
    %9998 = vmatmul.mubr.f32.gmra.mxu0 %v9931
    %v9999 = vpop.f32.mrf.mxu0
    %v10000 = vadd.f32 0.0, %v9999
    %v10001 = vpop.f32.mrf.mxu0
    %10002 = vdwg.mxu0
    %v10004 = vsel %vm160, %v9929, 0
    %10006 = vmatprep.subr.mxu0 0.0
    %10007 = vmatpush1.msra.mxu0 0.0
    %10008 = vmatprep.subr.mxu0 0.0
    %10009 = vmatpush1.msra.mxu0 0.0
    %10010 = vmatprep.subr.mxu0 0.0
    %10011 = vmatpush1.msra.mxu0 0.0
    %10012 = vmatprep.subr.mxu0 0.0
    %10013 = vmatpush1.msra.mxu0 0.0
    %10014 = vmatprep.subr.mxu0 0.0
    %10015 = vmatpush1.msra.mxu0 0.0
    %10016 = vmatprep.subr.mxu0 0.0
    %10017 = vmatpush1.msra.mxu0 0.0
    %10018 = vmatprep.subr.mxu0 0.0
    %10019 = vmatpush1.msra.mxu0 0.0
    %10020 = vmatprep.subr.mxu0 0.0
    %10021 = vmatpush1.msra.mxu0 0.0
    %10022 = vmatprep.subr.mxu0 0.0
    %10023 = vmatpush1.msra.mxu0 0.0
    %10024 = vmatprep.subr.mxu0 0.0
    %10025 = vmatpush1.msra.mxu0 0.0
    %10026 = vmatprep.subr.mxu0 0.0
    %10027 = vmatpush1.msra.mxu0 0.0
    %10028 = vmatprep.subr.mxu0 0.0
    %10029 = vmatpush1.msra.mxu0 0.0
    %10030 = vmatprep.subr.mxu0 0.0
    %10031 = vmatpush1.msra.mxu0 0.0
    %10032 = vmatprep.subr.mxu0 0.0
    %10033 = vmatpush1.msra.mxu0 0.0
    %10034 = vmatprep.subr.mxu0 0.0
    %10035 = vmatpush1.msra.mxu0 0.0
    %10036 = vmatprep.subr.mxu0 0.0
    %10037 = vmatpush1.msra.mxu0 %v9852
    %10038 = vmatprep.subr.mxu0 0.0
    %10039 = vmatpush2.msra.mxu0 0.0
    %10040 = vmatprep.subr.mxu0 0.0
    %10041 = vmatpush2.msra.mxu0 0.0
    %10042 = vmatprep.subr.mxu0 0.0
    %10043 = vmatpush2.msra.mxu0 0.0
    %10044 = vmatprep.subr.mxu0 0.0
    %10045 = vmatpush2.msra.mxu0 0.0
    %10046 = vmatprep.subr.mxu0 0.0
    %10047 = vmatpush2.msra.mxu0 0.0
    %10048 = vmatprep.subr.mxu0 0.0
    %10049 = vmatpush2.msra.mxu0 0.0
    %10050 = vmatprep.subr.mxu0 0.0
    %10051 = vmatpush2.msra.mxu0 0.0
    %10052 = vmatprep.subr.mxu0 0.0
    %10053 = vmatpush2.msra.mxu0 0.0
    %10054 = vmatprep.subr.mxu0 0.0
    %10055 = vmatpush2.msra.mxu0 0.0
    %10056 = vmatprep.subr.mxu0 0.0
    %10057 = vmatpush2.msra.mxu0 0.0
    %10058 = vmatprep.subr.mxu0 0.0
    %10059 = vmatpush2.msra.mxu0 0.0
    %10060 = vmatprep.subr.mxu0 0.0
    %10061 = vmatpush2.msra.mxu0 0.0
    %10062 = vmatprep.subr.mxu0 0.0
    %10063 = vmatpush2.msra.mxu0 0.0
    %10064 = vmatprep.subr.mxu0 0.0
    %10065 = vmatpush2.msra.mxu0 0.0
    %10066 = vmatprep.subr.mxu0 0.0
    %10067 = vmatpush2.msra.mxu0 0.0
    %10068 = vmatprep.subr.mxu0 0.0
    %10069 = vmatpush2.msra.mxu0 0.0
    %10070 = vmatprep.mubr.f32.mxu0 0.0
    %10071 = vmatmul.mubr.f32.gmra.mxu0 %v10004
    %v10072 = vpop.f32.mrf.mxu0
    %v10073 = vadd.f32 0.0, %v10072
    %v10074 = vpop.f32.mrf.mxu0
    %10075 = vdwg.mxu0
    %v10077 = vsel %vm160, %v10073, 0
    %10079 = vmatprep.subr.mxu0 0.0
    %10080 = vmatpush1.msra.mxu0 0.0
    %10081 = vmatprep.subr.mxu0 0.0
    %10082 = vmatpush1.msra.mxu0 0.0
    %10083 = vmatprep.subr.mxu0 0.0
    %10084 = vmatpush1.msra.mxu0 0.0
    %10085 = vmatprep.subr.mxu0 0.0
    %10086 = vmatpush1.msra.mxu0 0.0
    %10087 = vmatprep.subr.mxu0 0.0
    %10088 = vmatpush1.msra.mxu0 0.0
    %10089 = vmatprep.subr.mxu0 0.0
    %10090 = vmatpush1.msra.mxu0 0.0
    %10091 = vmatprep.subr.mxu0 0.0
    %10092 = vmatpush1.msra.mxu0 0.0
    %10093 = vmatprep.subr.mxu0 0.0
    %10094 = vmatpush1.msra.mxu0 0.0
    %10095 = vmatprep.subr.mxu0 0.0
    %10096 = vmatpush1.msra.mxu0 0.0
    %10097 = vmatprep.subr.mxu0 0.0
    %10098 = vmatpush1.msra.mxu0 0.0
    %10099 = vmatprep.subr.mxu0 0.0
    %10100 = vmatpush1.msra.mxu0 0.0
    %10101 = vmatprep.subr.mxu0 0.0
    %10102 = vmatpush1.msra.mxu0 0.0
    %10103 = vmatprep.subr.mxu0 0.0
    %10104 = vmatpush1.msra.mxu0 0.0
    %10105 = vmatprep.subr.mxu0 0.0
    %10106 = vmatpush1.msra.mxu0 0.0
    %10107 = vmatprep.subr.mxu0 0.0
    %10108 = vmatpush1.msra.mxu0 0.0
    %10109 = vmatprep.subr.mxu0 0.0
    %10110 = vmatpush1.msra.mxu0 %v10000
    %10111 = vmatprep.subr.mxu0 0.0
    %10112 = vmatpush2.msra.mxu0 0.0
    %10113 = vmatprep.subr.mxu0 0.0
    %10114 = vmatpush2.msra.mxu0 0.0
    %10115 = vmatprep.subr.mxu0 0.0
    %10116 = vmatpush2.msra.mxu0 0.0
    %10117 = vmatprep.subr.mxu0 0.0
    %10118 = vmatpush2.msra.mxu0 0.0
    %10119 = vmatprep.subr.mxu0 0.0
    %10120 = vmatpush2.msra.mxu0 0.0
    %10121 = vmatprep.subr.mxu0 0.0
    %10122 = vmatpush2.msra.mxu0 0.0
    %10123 = vmatprep.subr.mxu0 0.0
    %10124 = vmatpush2.msra.mxu0 0.0
    %10125 = vmatprep.subr.mxu0 0.0
    %10126 = vmatpush2.msra.mxu0 0.0
    %10127 = vmatprep.subr.mxu0 0.0
    %10128 = vmatpush2.msra.mxu0 0.0
    %10129 = vmatprep.subr.mxu0 0.0
    %10130 = vmatpush2.msra.mxu0 0.0
    %10131 = vmatprep.subr.mxu0 0.0
    %10132 = vmatpush2.msra.mxu0 0.0
    %10133 = vmatprep.subr.mxu0 0.0
    %10134 = vmatpush2.msra.mxu0 0.0
    %10135 = vmatprep.subr.mxu0 0.0
    %10136 = vmatpush2.msra.mxu0 0.0
    %10137 = vmatprep.subr.mxu0 0.0
    %10138 = vmatpush2.msra.mxu0 0.0
    %10139 = vmatprep.subr.mxu0 0.0
    %10140 = vmatpush2.msra.mxu0 0.0
    %10141 = vmatprep.subr.mxu0 0.0
    %10142 = vmatpush2.msra.mxu0 0.0
    %10143 = vmatprep.mubr.f32.mxu0 0.0
    %10144 = vmatmul.mubr.f32.gmra.mxu0 %v10077
    %v10145 = vpop.f32.mrf.mxu0
    %v10146 = vadd.f32 0.0, %v10145
    %v10147 = vpop.f32.mrf.mxu0
    %10148 = vdwg.mxu0
    %v10149 = vmul.f32 %v10146, 0.5
    %v10150 = vsub.f32 %v183, %v10149
    %v10152 = vsel %vm160, %v10000, 0
    %10154 = vmatprep.subr.mxu0 0.0
    %10155 = vmatpush1.msra.mxu0 0.0
    %10156 = vmatprep.subr.mxu0 0.0
    %10157 = vmatpush1.msra.mxu0 0.0
    %10158 = vmatprep.subr.mxu0 0.0
    %10159 = vmatpush1.msra.mxu0 0.0
    %10160 = vmatprep.subr.mxu0 0.0
    %10161 = vmatpush1.msra.mxu0 0.0
    %10162 = vmatprep.subr.mxu0 0.0
    %10163 = vmatpush1.msra.mxu0 0.0
    %10164 = vmatprep.subr.mxu0 0.0
    %10165 = vmatpush1.msra.mxu0 0.0
    %10166 = vmatprep.subr.mxu0 0.0
    %10167 = vmatpush1.msra.mxu0 0.0
    %10168 = vmatprep.subr.mxu0 0.0
    %10169 = vmatpush1.msra.mxu0 0.0
    %10170 = vmatprep.subr.mxu0 0.0
    %10171 = vmatpush1.msra.mxu0 0.0
    %10172 = vmatprep.subr.mxu0 0.0
    %10173 = vmatpush1.msra.mxu0 0.0
    %10174 = vmatprep.subr.mxu0 0.0
    %10175 = vmatpush1.msra.mxu0 0.0
    %10176 = vmatprep.subr.mxu0 0.0
    %10177 = vmatpush1.msra.mxu0 0.0
    %10178 = vmatprep.subr.mxu0 0.0
    %10179 = vmatpush1.msra.mxu0 0.0
    %10180 = vmatprep.subr.mxu0 0.0
    %10181 = vmatpush1.msra.mxu0 0.0
    %10182 = vmatprep.subr.mxu0 0.0
    %10183 = vmatpush1.msra.mxu0 0.0
    %10184 = vmatprep.subr.mxu0 0.0
    %10185 = vmatpush1.msra.mxu0 %v10150
    %10186 = vmatprep.subr.mxu0 0.0
    %10187 = vmatpush2.msra.mxu0 0.0
    %10188 = vmatprep.subr.mxu0 0.0
    %10189 = vmatpush2.msra.mxu0 0.0
    %10190 = vmatprep.subr.mxu0 0.0
    %10191 = vmatpush2.msra.mxu0 0.0
    %10192 = vmatprep.subr.mxu0 0.0
    %10193 = vmatpush2.msra.mxu0 0.0
    %10194 = vmatprep.subr.mxu0 0.0
    %10195 = vmatpush2.msra.mxu0 0.0
    %10196 = vmatprep.subr.mxu0 0.0
    %10197 = vmatpush2.msra.mxu0 0.0
    %10198 = vmatprep.subr.mxu0 0.0
    %10199 = vmatpush2.msra.mxu0 0.0
    %10200 = vmatprep.subr.mxu0 0.0
    %10201 = vmatpush2.msra.mxu0 0.0
    %10202 = vmatprep.subr.mxu0 0.0
    %10203 = vmatpush2.msra.mxu0 0.0
    %10204 = vmatprep.subr.mxu0 0.0
    %10205 = vmatpush2.msra.mxu0 0.0
    %10206 = vmatprep.subr.mxu0 0.0
    %10207 = vmatpush2.msra.mxu0 0.0
    %10208 = vmatprep.subr.mxu0 0.0
    %10209 = vmatpush2.msra.mxu0 0.0
    %10210 = vmatprep.subr.mxu0 0.0
    %10211 = vmatpush2.msra.mxu0 0.0
    %10212 = vmatprep.subr.mxu0 0.0
    %10213 = vmatpush2.msra.mxu0 0.0
    %10214 = vmatprep.subr.mxu0 0.0
    %10215 = vmatpush2.msra.mxu0 0.0
    %10216 = vmatprep.subr.mxu0 0.0
    %10217 = vmatpush2.msra.mxu0 0.0
    %10218 = vmatprep.mubr.f32.mxu0 0.0
    %10219 = vmatmul.mubr.f32.gmra.mxu0 %v10152
    %v10220 = vpop.f32.mrf.mxu0
    %v10221 = vadd.f32 0.0, %v10220
    %v10222 = vpop.f32.mrf.mxu0
    %10223 = vdwg.mxu0
    %v10225 = vsel %vm160, %v10150, 0
    %10227 = vmatprep.subr.mxu0 0.0
    %10228 = vmatpush1.msra.mxu0 0.0
    %10229 = vmatprep.subr.mxu0 0.0
    %10230 = vmatpush1.msra.mxu0 0.0
    %10231 = vmatprep.subr.mxu0 0.0
    %10232 = vmatpush1.msra.mxu0 0.0
    %10233 = vmatprep.subr.mxu0 0.0
    %10234 = vmatpush1.msra.mxu0 0.0
    %10235 = vmatprep.subr.mxu0 0.0
    %10236 = vmatpush1.msra.mxu0 0.0
    %10237 = vmatprep.subr.mxu0 0.0
    %10238 = vmatpush1.msra.mxu0 0.0
    %10239 = vmatprep.subr.mxu0 0.0
    %10240 = vmatpush1.msra.mxu0 0.0
    %10241 = vmatprep.subr.mxu0 0.0
    %10242 = vmatpush1.msra.mxu0 0.0
    %10243 = vmatprep.subr.mxu0 0.0
    %10244 = vmatpush1.msra.mxu0 0.0
    %10245 = vmatprep.subr.mxu0 0.0
    %10246 = vmatpush1.msra.mxu0 0.0
    %10247 = vmatprep.subr.mxu0 0.0
    %10248 = vmatpush1.msra.mxu0 0.0
    %10249 = vmatprep.subr.mxu0 0.0
    %10250 = vmatpush1.msra.mxu0 0.0
    %10251 = vmatprep.subr.mxu0 0.0
    %10252 = vmatpush1.msra.mxu0 0.0
    %10253 = vmatprep.subr.mxu0 0.0
    %10254 = vmatpush1.msra.mxu0 0.0
    %10255 = vmatprep.subr.mxu0 0.0
    %10256 = vmatpush1.msra.mxu0 0.0
    %10257 = vmatprep.subr.mxu0 0.0
    %10258 = vmatpush1.msra.mxu0 %v10073
    %10259 = vmatprep.subr.mxu0 0.0
    %10260 = vmatpush2.msra.mxu0 0.0
    %10261 = vmatprep.subr.mxu0 0.0
    %10262 = vmatpush2.msra.mxu0 0.0
    %10263 = vmatprep.subr.mxu0 0.0
    %10264 = vmatpush2.msra.mxu0 0.0
    %10265 = vmatprep.subr.mxu0 0.0
    %10266 = vmatpush2.msra.mxu0 0.0
    %10267 = vmatprep.subr.mxu0 0.0
    %10268 = vmatpush2.msra.mxu0 0.0
    %10269 = vmatprep.subr.mxu0 0.0
    %10270 = vmatpush2.msra.mxu0 0.0
    %10271 = vmatprep.subr.mxu0 0.0
    %10272 = vmatpush2.msra.mxu0 0.0
    %10273 = vmatprep.subr.mxu0 0.0
    %10274 = vmatpush2.msra.mxu0 0.0
    %10275 = vmatprep.subr.mxu0 0.0
    %10276 = vmatpush2.msra.mxu0 0.0
    %10277 = vmatprep.subr.mxu0 0.0
    %10278 = vmatpush2.msra.mxu0 0.0
    %10279 = vmatprep.subr.mxu0 0.0
    %10280 = vmatpush2.msra.mxu0 0.0
    %10281 = vmatprep.subr.mxu0 0.0
    %10282 = vmatpush2.msra.mxu0 0.0
    %10283 = vmatprep.subr.mxu0 0.0
    %10284 = vmatpush2.msra.mxu0 0.0
    %10285 = vmatprep.subr.mxu0 0.0
    %10286 = vmatpush2.msra.mxu0 0.0
    %10287 = vmatprep.subr.mxu0 0.0
    %10288 = vmatpush2.msra.mxu0 0.0
    %10289 = vmatprep.subr.mxu0 0.0
    %10290 = vmatpush2.msra.mxu0 0.0
    %10291 = vmatprep.mubr.f32.mxu0 0.0
    %10292 = vmatmul.mubr.f32.gmra.mxu0 %v10225
    %v10293 = vpop.f32.mrf.mxu0
    %v10294 = vadd.f32 0.0, %v10293
    %v10295 = vpop.f32.mrf.mxu0
    %10296 = vdwg.mxu0
    %v10298 = vsel %vm160, %v10294, 0
    %10300 = vmatprep.subr.mxu0 0.0
    %10301 = vmatpush1.msra.mxu0 0.0
    %10302 = vmatprep.subr.mxu0 0.0
    %10303 = vmatpush1.msra.mxu0 0.0
    %10304 = vmatprep.subr.mxu0 0.0
    %10305 = vmatpush1.msra.mxu0 0.0
    %10306 = vmatprep.subr.mxu0 0.0
    %10307 = vmatpush1.msra.mxu0 0.0
    %10308 = vmatprep.subr.mxu0 0.0
    %10309 = vmatpush1.msra.mxu0 0.0
    %10310 = vmatprep.subr.mxu0 0.0
    %10311 = vmatpush1.msra.mxu0 0.0
    %10312 = vmatprep.subr.mxu0 0.0
    %10313 = vmatpush1.msra.mxu0 0.0
    %10314 = vmatprep.subr.mxu0 0.0
    %10315 = vmatpush1.msra.mxu0 0.0
    %10316 = vmatprep.subr.mxu0 0.0
    %10317 = vmatpush1.msra.mxu0 0.0
    %10318 = vmatprep.subr.mxu0 0.0
    %10319 = vmatpush1.msra.mxu0 0.0
    %10320 = vmatprep.subr.mxu0 0.0
    %10321 = vmatpush1.msra.mxu0 0.0
    %10322 = vmatprep.subr.mxu0 0.0
    %10323 = vmatpush1.msra.mxu0 0.0
    %10324 = vmatprep.subr.mxu0 0.0
    %10325 = vmatpush1.msra.mxu0 0.0
    %10326 = vmatprep.subr.mxu0 0.0
    %10327 = vmatpush1.msra.mxu0 0.0
    %10328 = vmatprep.subr.mxu0 0.0
    %10329 = vmatpush1.msra.mxu0 0.0
    %10330 = vmatprep.subr.mxu0 0.0
    %10331 = vmatpush1.msra.mxu0 %v10221
    %10332 = vmatprep.subr.mxu0 0.0
    %10333 = vmatpush2.msra.mxu0 0.0
    %10334 = vmatprep.subr.mxu0 0.0
    %10335 = vmatpush2.msra.mxu0 0.0
    %10336 = vmatprep.subr.mxu0 0.0
    %10337 = vmatpush2.msra.mxu0 0.0
    %10338 = vmatprep.subr.mxu0 0.0
    %10339 = vmatpush2.msra.mxu0 0.0
    %10340 = vmatprep.subr.mxu0 0.0
    %10341 = vmatpush2.msra.mxu0 0.0
    %10342 = vmatprep.subr.mxu0 0.0
    %10343 = vmatpush2.msra.mxu0 0.0
    %10344 = vmatprep.subr.mxu0 0.0
    %10345 = vmatpush2.msra.mxu0 0.0
    %10346 = vmatprep.subr.mxu0 0.0
    %10347 = vmatpush2.msra.mxu0 0.0
    %10348 = vmatprep.subr.mxu0 0.0
    %10349 = vmatpush2.msra.mxu0 0.0
    %10350 = vmatprep.subr.mxu0 0.0
    %10351 = vmatpush2.msra.mxu0 0.0
    %10352 = vmatprep.subr.mxu0 0.0
    %10353 = vmatpush2.msra.mxu0 0.0
    %10354 = vmatprep.subr.mxu0 0.0
    %10355 = vmatpush2.msra.mxu0 0.0
    %10356 = vmatprep.subr.mxu0 0.0
    %10357 = vmatpush2.msra.mxu0 0.0
    %10358 = vmatprep.subr.mxu0 0.0
    %10359 = vmatpush2.msra.mxu0 0.0
    %10360 = vmatprep.subr.mxu0 0.0
    %10361 = vmatpush2.msra.mxu0 0.0
    %10362 = vmatprep.subr.mxu0 0.0
    %10363 = vmatpush2.msra.mxu0 0.0
    %10364 = vmatprep.mubr.f32.mxu0 0.0
    %10365 = vmatmul.mubr.f32.gmra.mxu0 %v10298
    %v10366 = vpop.f32.mrf.mxu0
    %v10367 = vadd.f32 0.0, %v10366
    %v10368 = vpop.f32.mrf.mxu0
    %10369 = vdwg.mxu0
    %v10370 = vmul.f32 %v10367, 0.5
    %v10371 = vsub.f32 %v183, %v10370
    %v10373 = vsel %vm160, %v10221, 0
    %10375 = vmatprep.subr.mxu0 0.0
    %10376 = vmatpush1.msra.mxu0 0.0
    %10377 = vmatprep.subr.mxu0 0.0
    %10378 = vmatpush1.msra.mxu0 0.0
    %10379 = vmatprep.subr.mxu0 0.0
    %10380 = vmatpush1.msra.mxu0 0.0
    %10381 = vmatprep.subr.mxu0 0.0
    %10382 = vmatpush1.msra.mxu0 0.0
    %10383 = vmatprep.subr.mxu0 0.0
    %10384 = vmatpush1.msra.mxu0 0.0
    %10385 = vmatprep.subr.mxu0 0.0
    %10386 = vmatpush1.msra.mxu0 0.0
    %10387 = vmatprep.subr.mxu0 0.0
    %10388 = vmatpush1.msra.mxu0 0.0
    %10389 = vmatprep.subr.mxu0 0.0
    %10390 = vmatpush1.msra.mxu0 0.0
    %10391 = vmatprep.subr.mxu0 0.0
    %10392 = vmatpush1.msra.mxu0 0.0
    %10393 = vmatprep.subr.mxu0 0.0
    %10394 = vmatpush1.msra.mxu0 0.0
    %10395 = vmatprep.subr.mxu0 0.0
    %10396 = vmatpush1.msra.mxu0 0.0
    %10397 = vmatprep.subr.mxu0 0.0
    %10398 = vmatpush1.msra.mxu0 0.0
    %10399 = vmatprep.subr.mxu0 0.0
    %10400 = vmatpush1.msra.mxu0 0.0
    %10401 = vmatprep.subr.mxu0 0.0
    %10402 = vmatpush1.msra.mxu0 0.0
    %10403 = vmatprep.subr.mxu0 0.0
    %10404 = vmatpush1.msra.mxu0 0.0
    %10405 = vmatprep.subr.mxu0 0.0
    %10406 = vmatpush1.msra.mxu0 %v10371
    %10407 = vmatprep.subr.mxu0 0.0
    %10408 = vmatpush2.msra.mxu0 0.0
    %10409 = vmatprep.subr.mxu0 0.0
    %10410 = vmatpush2.msra.mxu0 0.0
    %10411 = vmatprep.subr.mxu0 0.0
    %10412 = vmatpush2.msra.mxu0 0.0
    %10413 = vmatprep.subr.mxu0 0.0
    %10414 = vmatpush2.msra.mxu0 0.0
    %10415 = vmatprep.subr.mxu0 0.0
    %10416 = vmatpush2.msra.mxu0 0.0
    %10417 = vmatprep.subr.mxu0 0.0
    %10418 = vmatpush2.msra.mxu0 0.0
    %10419 = vmatprep.subr.mxu0 0.0
    %10420 = vmatpush2.msra.mxu0 0.0
    %10421 = vmatprep.subr.mxu0 0.0
    %10422 = vmatpush2.msra.mxu0 0.0
    %10423 = vmatprep.subr.mxu0 0.0
    %10424 = vmatpush2.msra.mxu0 0.0
    %10425 = vmatprep.subr.mxu0 0.0
    %10426 = vmatpush2.msra.mxu0 0.0
    %10427 = vmatprep.subr.mxu0 0.0
    %10428 = vmatpush2.msra.mxu0 0.0
    %10429 = vmatprep.subr.mxu0 0.0
    %10430 = vmatpush2.msra.mxu0 0.0
    %10431 = vmatprep.subr.mxu0 0.0
    %10432 = vmatpush2.msra.mxu0 0.0
    %10433 = vmatprep.subr.mxu0 0.0
    %10434 = vmatpush2.msra.mxu0 0.0
    %10435 = vmatprep.subr.mxu0 0.0
    %10436 = vmatpush2.msra.mxu0 0.0
    %10437 = vmatprep.subr.mxu0 0.0
    %10438 = vmatpush2.msra.mxu0 0.0
    %10439 = vmatprep.mubr.f32.mxu0 0.0
    %10440 = vmatmul.mubr.f32.gmra.mxu0 %v10373
    %v10441 = vpop.f32.mrf.mxu0
    %v10442 = vadd.f32 0.0, %v10441
    %v10443 = vpop.f32.mrf.mxu0
    %10444 = vdwg.mxu0
    %v10446 = vsel %vm160, %v10371, 0
    %10448 = vmatprep.subr.mxu0 0.0
    %10449 = vmatpush1.msra.mxu0 0.0
    %10450 = vmatprep.subr.mxu0 0.0
    %10451 = vmatpush1.msra.mxu0 0.0
    %10452 = vmatprep.subr.mxu0 0.0
    %10453 = vmatpush1.msra.mxu0 0.0
    %10454 = vmatprep.subr.mxu0 0.0
    %10455 = vmatpush1.msra.mxu0 0.0
    %10456 = vmatprep.subr.mxu0 0.0
    %10457 = vmatpush1.msra.mxu0 0.0
    %10458 = vmatprep.subr.mxu0 0.0
    %10459 = vmatpush1.msra.mxu0 0.0
    %10460 = vmatprep.subr.mxu0 0.0
    %10461 = vmatpush1.msra.mxu0 0.0
    %10462 = vmatprep.subr.mxu0 0.0
    %10463 = vmatpush1.msra.mxu0 0.0
    %10464 = vmatprep.subr.mxu0 0.0
    %10465 = vmatpush1.msra.mxu0 0.0
    %10466 = vmatprep.subr.mxu0 0.0
    %10467 = vmatpush1.msra.mxu0 0.0
    %10468 = vmatprep.subr.mxu0 0.0
    %10469 = vmatpush1.msra.mxu0 0.0
    %10470 = vmatprep.subr.mxu0 0.0
    %10471 = vmatpush1.msra.mxu0 0.0
    %10472 = vmatprep.subr.mxu0 0.0
    %10473 = vmatpush1.msra.mxu0 0.0
    %10474 = vmatprep.subr.mxu0 0.0
    %10475 = vmatpush1.msra.mxu0 0.0
    %10476 = vmatprep.subr.mxu0 0.0
    %10477 = vmatpush1.msra.mxu0 0.0
    %10478 = vmatprep.subr.mxu0 0.0
    %10479 = vmatpush1.msra.mxu0 %v10294
    %10480 = vmatprep.subr.mxu0 0.0
    %10481 = vmatpush2.msra.mxu0 0.0
    %10482 = vmatprep.subr.mxu0 0.0
    %10483 = vmatpush2.msra.mxu0 0.0
    %10484 = vmatprep.subr.mxu0 0.0
    %10485 = vmatpush2.msra.mxu0 0.0
    %10486 = vmatprep.subr.mxu0 0.0
    %10487 = vmatpush2.msra.mxu0 0.0
    %10488 = vmatprep.subr.mxu0 0.0
    %10489 = vmatpush2.msra.mxu0 0.0
    %10490 = vmatprep.subr.mxu0 0.0
    %10491 = vmatpush2.msra.mxu0 0.0
    %10492 = vmatprep.subr.mxu0 0.0
    %10493 = vmatpush2.msra.mxu0 0.0
    %10494 = vmatprep.subr.mxu0 0.0
    %10495 = vmatpush2.msra.mxu0 0.0
    %10496 = vmatprep.subr.mxu0 0.0
    %10497 = vmatpush2.msra.mxu0 0.0
    %10498 = vmatprep.subr.mxu0 0.0
    %10499 = vmatpush2.msra.mxu0 0.0
    %10500 = vmatprep.subr.mxu0 0.0
    %10501 = vmatpush2.msra.mxu0 0.0
    %10502 = vmatprep.subr.mxu0 0.0
    %10503 = vmatpush2.msra.mxu0 0.0
    %10504 = vmatprep.subr.mxu0 0.0
    %10505 = vmatpush2.msra.mxu0 0.0
    %10506 = vmatprep.subr.mxu0 0.0
    %10507 = vmatpush2.msra.mxu0 0.0
    %10508 = vmatprep.subr.mxu0 0.0
    %10509 = vmatpush2.msra.mxu0 0.0
    %10510 = vmatprep.subr.mxu0 0.0
    %10511 = vmatpush2.msra.mxu0 0.0
    %10512 = vmatprep.mubr.f32.mxu0 0.0
    %10513 = vmatmul.mubr.f32.gmra.mxu0 %v10446
    %v10514 = vpop.f32.mrf.mxu0
    %v10515 = vadd.f32 0.0, %v10514
    %v10516 = vpop.f32.mrf.mxu0
    %10517 = vdwg.mxu0
    %v10519 = vsel %vm160, %v10515, 0
    %10521 = vmatprep.subr.mxu0 0.0
    %10522 = vmatpush1.msra.mxu0 0.0
    %10523 = vmatprep.subr.mxu0 0.0
    %10524 = vmatpush1.msra.mxu0 0.0
    %10525 = vmatprep.subr.mxu0 0.0
    %10526 = vmatpush1.msra.mxu0 0.0
    %10527 = vmatprep.subr.mxu0 0.0
    %10528 = vmatpush1.msra.mxu0 0.0
    %10529 = vmatprep.subr.mxu0 0.0
    %10530 = vmatpush1.msra.mxu0 0.0
    %10531 = vmatprep.subr.mxu0 0.0
    %10532 = vmatpush1.msra.mxu0 0.0
    %10533 = vmatprep.subr.mxu0 0.0
    %10534 = vmatpush1.msra.mxu0 0.0
    %10535 = vmatprep.subr.mxu0 0.0
    %10536 = vmatpush1.msra.mxu0 0.0
    %10537 = vmatprep.subr.mxu0 0.0
    %10538 = vmatpush1.msra.mxu0 0.0
    %10539 = vmatprep.subr.mxu0 0.0
    %10540 = vmatpush1.msra.mxu0 0.0
    %10541 = vmatprep.subr.mxu0 0.0
    %10542 = vmatpush1.msra.mxu0 0.0
    %10543 = vmatprep.subr.mxu0 0.0
    %10544 = vmatpush1.msra.mxu0 0.0
    %10545 = vmatprep.subr.mxu0 0.0
    %10546 = vmatpush1.msra.mxu0 0.0
    %10547 = vmatprep.subr.mxu0 0.0
    %10548 = vmatpush1.msra.mxu0 0.0
    %10549 = vmatprep.subr.mxu0 0.0
    %10550 = vmatpush1.msra.mxu0 0.0
    %10551 = vmatprep.subr.mxu0 0.0
    %10552 = vmatpush1.msra.mxu0 %v10442
    %10553 = vmatprep.subr.mxu0 0.0
    %10554 = vmatpush2.msra.mxu0 0.0
    %10555 = vmatprep.subr.mxu0 0.0
    %10556 = vmatpush2.msra.mxu0 0.0
    %10557 = vmatprep.subr.mxu0 0.0
    %10558 = vmatpush2.msra.mxu0 0.0
    %10559 = vmatprep.subr.mxu0 0.0
    %10560 = vmatpush2.msra.mxu0 0.0
    %10561 = vmatprep.subr.mxu0 0.0
    %10562 = vmatpush2.msra.mxu0 0.0
    %10563 = vmatprep.subr.mxu0 0.0
    %10564 = vmatpush2.msra.mxu0 0.0
    %10565 = vmatprep.subr.mxu0 0.0
    %10566 = vmatpush2.msra.mxu0 0.0
    %10567 = vmatprep.subr.mxu0 0.0
    %10568 = vmatpush2.msra.mxu0 0.0
    %10569 = vmatprep.subr.mxu0 0.0
    %10570 = vmatpush2.msra.mxu0 0.0
    %10571 = vmatprep.subr.mxu0 0.0
    %10572 = vmatpush2.msra.mxu0 0.0
    %10573 = vmatprep.subr.mxu0 0.0
    %10574 = vmatpush2.msra.mxu0 0.0
    %10575 = vmatprep.subr.mxu0 0.0
    %10576 = vmatpush2.msra.mxu0 0.0
    %10577 = vmatprep.subr.mxu0 0.0
    %10578 = vmatpush2.msra.mxu0 0.0
    %10579 = vmatprep.subr.mxu0 0.0
    %10580 = vmatpush2.msra.mxu0 0.0
    %10581 = vmatprep.subr.mxu0 0.0
    %10582 = vmatpush2.msra.mxu0 0.0
    %10583 = vmatprep.subr.mxu0 0.0
    %10584 = vmatpush2.msra.mxu0 0.0
    %10585 = vmatprep.mubr.f32.mxu0 0.0
    %10586 = vmatmul.mubr.f32.gmra.mxu0 %v10519
    %v10587 = vpop.f32.mrf.mxu0
    %v10588 = vadd.f32 0.0, %v10587
    %v10589 = vpop.f32.mrf.mxu0
    %10590 = vdwg.mxu0
    %v10591 = vmul.f32 %v10588, 0.5
    %v10592 = vsub.f32 %v183, %v10591
    %v10594 = vsel %vm160, %v10592, 0
    %10596 = vmatprep.subr.mxu0 0.0
    %10597 = vmatpush1.msra.mxu0 0.0
    %10598 = vmatprep.subr.mxu0 0.0
    %10599 = vmatpush1.msra.mxu0 0.0
    %10600 = vmatprep.subr.mxu0 0.0
    %10601 = vmatpush1.msra.mxu0 0.0
    %10602 = vmatprep.subr.mxu0 0.0
    %10603 = vmatpush1.msra.mxu0 0.0
    %10604 = vmatprep.subr.mxu0 0.0
    %10605 = vmatpush1.msra.mxu0 0.0
    %10606 = vmatprep.subr.mxu0 0.0
    %10607 = vmatpush1.msra.mxu0 0.0
    %10608 = vmatprep.subr.mxu0 0.0
    %10609 = vmatpush1.msra.mxu0 0.0
    %10610 = vmatprep.subr.mxu0 0.0
    %10611 = vmatpush1.msra.mxu0 0.0
    %10612 = vmatprep.subr.mxu0 0.0
    %10613 = vmatpush1.msra.mxu0 0.0
    %10614 = vmatprep.subr.mxu0 0.0
    %10615 = vmatpush1.msra.mxu0 0.0
    %10616 = vmatprep.subr.mxu0 0.0
    %10617 = vmatpush1.msra.mxu0 0.0
    %10618 = vmatprep.subr.mxu0 0.0
    %10619 = vmatpush1.msra.mxu0 0.0
    %10620 = vmatprep.subr.mxu0 0.0
    %10621 = vmatpush1.msra.mxu0 0.0
    %10622 = vmatprep.subr.mxu0 0.0
    %10623 = vmatpush1.msra.mxu0 0.0
    %10624 = vmatprep.subr.mxu0 0.0
    %10625 = vmatpush1.msra.mxu0 0.0
    %10626 = vmatprep.subr.mxu0 0.0
    %10627 = vmatpush1.msra.mxu0 %v10515
    %10628 = vmatprep.subr.mxu0 0.0
    %10629 = vmatpush2.msra.mxu0 0.0
    %10630 = vmatprep.subr.mxu0 0.0
    %10631 = vmatpush2.msra.mxu0 0.0
    %10632 = vmatprep.subr.mxu0 0.0
    %10633 = vmatpush2.msra.mxu0 0.0
    %10634 = vmatprep.subr.mxu0 0.0
    %10635 = vmatpush2.msra.mxu0 0.0
    %10636 = vmatprep.subr.mxu0 0.0
    %10637 = vmatpush2.msra.mxu0 0.0
    %10638 = vmatprep.subr.mxu0 0.0
    %10639 = vmatpush2.msra.mxu0 0.0
    %10640 = vmatprep.subr.mxu0 0.0
    %10641 = vmatpush2.msra.mxu0 0.0
    %10642 = vmatprep.subr.mxu0 0.0
    %10643 = vmatpush2.msra.mxu0 0.0
    %10644 = vmatprep.subr.mxu0 0.0
    %10645 = vmatpush2.msra.mxu0 0.0
    %10646 = vmatprep.subr.mxu0 0.0
    %10647 = vmatpush2.msra.mxu0 0.0
    %10648 = vmatprep.subr.mxu0 0.0
    %10649 = vmatpush2.msra.mxu0 0.0
    %10650 = vmatprep.subr.mxu0 0.0
    %10651 = vmatpush2.msra.mxu0 0.0
    %10652 = vmatprep.subr.mxu0 0.0
    %10653 = vmatpush2.msra.mxu0 0.0
    %10654 = vmatprep.subr.mxu0 0.0
    %10655 = vmatpush2.msra.mxu0 0.0
    %10656 = vmatprep.subr.mxu0 0.0
    %10657 = vmatpush2.msra.mxu0 0.0
    %10658 = vmatprep.subr.mxu0 0.0
    %10659 = vmatpush2.msra.mxu0 0.0
    %10660 = vmatprep.mubr.f32.mxu0 0.0
    %10661 = vmatmul.mubr.f32.gmra.mxu0 %v10594
    %v10662 = vpop.f32.mrf.mxu0
    %v10663 = vadd.f32 0.0, %v10662
    %v10664 = vpop.f32.mrf.mxu0
    %10665 = vdwg.mxu0
    %v10666 = vstv %s179
    %v10667 = vrsqrt.pop %v10666
    %v10668 = vmul.f32 %v10666, %v10667
    %vm10669 = vcmp.eq.f32.partialorder %v10666, inf
    %v10670 = vsel %vm10669, %v10666, %v10668
    %vm10671 = vcmp.eq.f32.partialorder %v10666, 0.0
    %v10672 = vand.u32 %v10666, 2147483648
    %v10673 = vsel %vm10671, %v10672, %v10670
    %s10674 = vtos %v10673
    %v10675 = vstv %s10674
    %v10676 = vmul.f32 %v10675, %v5412
    %v10677 = vstv %s5434
    %v10678 = vrsqrt.pop %v10677
    %v10679 = vmul.f32 %v10677, %v10678
    %vm10680 = vcmp.eq.f32.partialorder %v10677, inf
    %v10681 = vsel %vm10680, %v10677, %v10679
    %vm10682 = vcmp.eq.f32.partialorder %v10677, 0.0
    %v10683 = vand.u32 %v10677, 2147483648
    %v10684 = vsel %vm10682, %v10683, %v10681
    %s10685 = vtos %v10684
    %v10686 = vstv %s10685
    %v10687 = vrcp.pop %v10686
    %v10688 = vmul.f32 %v10663, %v10687
    %v10690 = vsel %vm160, %v10676, 0
    %10692 = vmatprep.subr.mxu0 0.0
    %10693 = vmatpush1.msra.mxu0 0.0
    %10694 = vmatprep.subr.mxu0 0.0
    %10695 = vmatpush1.msra.mxu0 0.0
    %10696 = vmatprep.subr.mxu0 0.0
    %10697 = vmatpush1.msra.mxu0 0.0
    %10698 = vmatprep.subr.mxu0 0.0
    %10699 = vmatpush1.msra.mxu0 0.0
    %10700 = vmatprep.subr.mxu0 0.0
    %10701 = vmatpush1.msra.mxu0 0.0
    %10702 = vmatprep.subr.mxu0 0.0
    %10703 = vmatpush1.msra.mxu0 0.0
    %10704 = vmatprep.subr.mxu0 0.0
    %10705 = vmatpush1.msra.mxu0 0.0
    %10706 = vmatprep.subr.mxu0 0.0
    %10707 = vmatpush1.msra.mxu0 0.0
    %10708 = vmatprep.subr.mxu0 0.0
    %10709 = vmatpush1.msra.mxu0 0.0
    %10710 = vmatprep.subr.mxu0 0.0
    %10711 = vmatpush1.msra.mxu0 0.0
    %10712 = vmatprep.subr.mxu0 0.0
    %10713 = vmatpush1.msra.mxu0 0.0
    %10714 = vmatprep.subr.mxu0 0.0
    %10715 = vmatpush1.msra.mxu0 0.0
    %10716 = vmatprep.subr.mxu0 0.0
    %10717 = vmatpush1.msra.mxu0 0.0
    %10718 = vmatprep.subr.mxu0 0.0
    %10719 = vmatpush1.msra.mxu0 0.0
    %10720 = vmatprep.subr.mxu0 0.0
    %10721 = vmatpush1.msra.mxu0 0.0
    %10722 = vmatprep.subr.mxu0 0.0
    %10723 = vmatpush1.msra.mxu0 %v27
    %10724 = vmatprep.subr.mxu0 0.0
    %10725 = vmatpush2.msra.mxu0 0.0
    %10726 = vmatprep.subr.mxu0 0.0
    %10727 = vmatpush2.msra.mxu0 0.0
    %10728 = vmatprep.subr.mxu0 0.0
    %10729 = vmatpush2.msra.mxu0 0.0
    %10730 = vmatprep.subr.mxu0 0.0
    %10731 = vmatpush2.msra.mxu0 0.0
    %10732 = vmatprep.subr.mxu0 0.0
    %10733 = vmatpush2.msra.mxu0 0.0
    %10734 = vmatprep.subr.mxu0 0.0
    %10735 = vmatpush2.msra.mxu0 0.0
    %10736 = vmatprep.subr.mxu0 0.0
    %10737 = vmatpush2.msra.mxu0 0.0
    %10738 = vmatprep.subr.mxu0 0.0
    %10739 = vmatpush2.msra.mxu0 0.0
    %10740 = vmatprep.subr.mxu0 0.0
    %10741 = vmatpush2.msra.mxu0 0.0
    %10742 = vmatprep.subr.mxu0 0.0
    %10743 = vmatpush2.msra.mxu0 0.0
    %10744 = vmatprep.subr.mxu0 0.0
    %10745 = vmatpush2.msra.mxu0 0.0
    %10746 = vmatprep.subr.mxu0 0.0
    %10747 = vmatpush2.msra.mxu0 0.0
    %10748 = vmatprep.subr.mxu0 0.0
    %10749 = vmatpush2.msra.mxu0 0.0
    %10750 = vmatprep.subr.mxu0 0.0
    %10751 = vmatpush2.msra.mxu0 0.0
    %10752 = vmatprep.subr.mxu0 0.0
    %10753 = vmatpush2.msra.mxu0 0.0
    %10754 = vmatprep.subr.mxu0 0.0
    %10755 = vmatpush2.msra.mxu0 0.0
    %10756 = vmatprep.mubr.f32.mxu0 0.0
    %10757 = vmatmul.mubr.f32.gmra.mxu0 %v10690
    %v10758 = vpop.f32.mrf.mxu0
    %v10759 = vadd.f32 0.0, %v10758
    %v10760 = vpop.f32.mrf.mxu0
    %10761 = vdwg.mxu0
    %v10763 = vsel %vm160, %v10759, 0
    %10765 = vmatprep.subr.mxu0 0.0
    %10766 = vmatpush1.msra.mxu0 0.0
    %10767 = vmatprep.subr.mxu0 0.0
    %10768 = vmatpush1.msra.mxu0 0.0
    %10769 = vmatprep.subr.mxu0 0.0
    %10770 = vmatpush1.msra.mxu0 0.0
    %10771 = vmatprep.subr.mxu0 0.0
    %10772 = vmatpush1.msra.mxu0 0.0
    %10773 = vmatprep.subr.mxu0 0.0
    %10774 = vmatpush1.msra.mxu0 0.0
    %10775 = vmatprep.subr.mxu0 0.0
    %10776 = vmatpush1.msra.mxu0 0.0
    %10777 = vmatprep.subr.mxu0 0.0
    %10778 = vmatpush1.msra.mxu0 0.0
    %10779 = vmatprep.subr.mxu0 0.0
    %10780 = vmatpush1.msra.mxu0 0.0
    %10781 = vmatprep.subr.mxu0 0.0
    %10782 = vmatpush1.msra.mxu0 0.0
    %10783 = vmatprep.subr.mxu0 0.0
    %10784 = vmatpush1.msra.mxu0 0.0
    %10785 = vmatprep.subr.mxu0 0.0
    %10786 = vmatpush1.msra.mxu0 0.0
    %10787 = vmatprep.subr.mxu0 0.0
    %10788 = vmatpush1.msra.mxu0 0.0
    %10789 = vmatprep.subr.mxu0 0.0
    %10790 = vmatpush1.msra.mxu0 0.0
    %10791 = vmatprep.subr.mxu0 0.0
    %10792 = vmatpush1.msra.mxu0 0.0
    %10793 = vmatprep.subr.mxu0 0.0
    %10794 = vmatpush1.msra.mxu0 0.0
    %10795 = vmatprep.subr.mxu0 0.0
    %10796 = vmatpush1.msra.mxu0 %v10688
    %10797 = vmatprep.subr.mxu0 0.0
    %10798 = vmatpush2.msra.mxu0 0.0
    %10799 = vmatprep.subr.mxu0 0.0
    %10800 = vmatpush2.msra.mxu0 0.0
    %10801 = vmatprep.subr.mxu0 0.0
    %10802 = vmatpush2.msra.mxu0 0.0
    %10803 = vmatprep.subr.mxu0 0.0
    %10804 = vmatpush2.msra.mxu0 0.0
    %10805 = vmatprep.subr.mxu0 0.0
    %10806 = vmatpush2.msra.mxu0 0.0
    %10807 = vmatprep.subr.mxu0 0.0
    %10808 = vmatpush2.msra.mxu0 0.0
    %10809 = vmatprep.subr.mxu0 0.0
    %10810 = vmatpush2.msra.mxu0 0.0
    %10811 = vmatprep.subr.mxu0 0.0
    %10812 = vmatpush2.msra.mxu0 0.0
    %10813 = vmatprep.subr.mxu0 0.0
    %10814 = vmatpush2.msra.mxu0 0.0
    %10815 = vmatprep.subr.mxu0 0.0
    %10816 = vmatpush2.msra.mxu0 0.0
    %10817 = vmatprep.subr.mxu0 0.0
    %10818 = vmatpush2.msra.mxu0 0.0
    %10819 = vmatprep.subr.mxu0 0.0
    %10820 = vmatpush2.msra.mxu0 0.0
    %10821 = vmatprep.subr.mxu0 0.0
    %10822 = vmatpush2.msra.mxu0 0.0
    %10823 = vmatprep.subr.mxu0 0.0
    %10824 = vmatpush2.msra.mxu0 0.0
    %10825 = vmatprep.subr.mxu0 0.0
    %10826 = vmatpush2.msra.mxu0 0.0
    %10827 = vmatprep.subr.mxu0 0.0
    %10828 = vmatpush2.msra.mxu0 0.0
    %10829 = vmatprep.mubr.f32.mxu0 0.0
    %10830 = vmatmul.mubr.f32.gmra.mxu0 %v10763
    %v10831 = vpop.f32.mrf.mxu0
    %v10832 = vadd.f32 0.0, %v10831
    %v10833 = vpop.f32.mrf.mxu0
    %10834 = vdwg.mxu0
    %v10835 = vadd.s32 %v29, 1
    %vm10836 = vcmp.eq.s32.totalorder %v31, %v10835
    %v10837 = vsel %vm10836, 1, 0
    %v10838 = vcvt.s32.f32 %v10837
    %vm10839 = vcmp.eq.s32.totalorder %v31, 0
    %v10840 = vsel %vm10839, 1, 0
    %v10841 = vcvt.s32.f32 %v10840
    %v10843 = vsel %vm35, %v23, 0
    %v10846 = vsel %vm35, %v24, 0
    %vm10848 = vcmask 1046528
    %v10850 = vsel %vm10848, %v10838, 0
    %10852 = vmatprep.subr.mxu0 0.0
    %10853 = vmatpush1.msra.mxu0 0.0
    %10854 = vmatprep.subr.mxu0 0.0
    %10855 = vmatpush1.msra.mxu0 0.0
    %10856 = vmatprep.subr.mxu0 0.0
    %10857 = vmatpush1.msra.mxu0 0.0
    %10858 = vmatprep.subr.mxu0 0.0
    %10859 = vmatpush1.msra.mxu0 0.0
    %10860 = vmatprep.subr.mxu0 0.0
    %10861 = vmatpush1.msra.mxu0 0.0
    %10862 = vmatprep.subr.mxu0 0.0
    %10863 = vmatpush1.msra.mxu0 0.0
    %10864 = vmatprep.subr.mxu0 0.0
    %10865 = vmatpush1.msra.mxu0 0.0
    %10866 = vmatprep.subr.mxu0 0.0
    %10867 = vmatpush1.msra.mxu0 0.0
    %10868 = vmatprep.subr.mxu0 0.0
    %10869 = vmatpush1.msra.mxu0 0.0
    %10870 = vmatprep.subr.mxu0 0.0
    %10871 = vmatpush1.msra.mxu0 0.0
    %10872 = vmatprep.subr.mxu0 0.0
    %10873 = vmatpush1.msra.mxu0 0.0
    %10874 = vmatprep.subr.mxu0 0.0
    %10875 = vmatpush1.msra.mxu0 0.0
    %10876 = vmatprep.subr.mxu0 0.0
    %10877 = vmatpush1.msra.mxu0 0.0
    %10878 = vmatprep.subr.mxu0 0.0
    %10879 = vmatpush1.msra.mxu0 0.0
    %10880 = vmatprep.subr.mxu0 0.0
    %10881 = vmatpush1.msra.mxu0 0.0
    %10882 = vmatprep.subr.mxu0 0.0
    %10883 = vmatpush1.msra.mxu0 %v10850
    %10884 = vmatprep.subr.mxu0 0.0
    %10885 = vmatpush2.msra.mxu0 0.0
    %10886 = vmatprep.subr.mxu0 0.0
    %10887 = vmatpush2.msra.mxu0 0.0
    %10888 = vmatprep.subr.mxu0 0.0
    %10889 = vmatpush2.msra.mxu0 0.0
    %10890 = vmatprep.subr.mxu0 0.0
    %10891 = vmatpush2.msra.mxu0 0.0
    %10892 = vmatprep.subr.mxu0 0.0
    %10893 = vmatpush2.msra.mxu0 0.0
    %10894 = vmatprep.subr.mxu0 0.0
    %10895 = vmatpush2.msra.mxu0 0.0
    %10896 = vmatprep.subr.mxu0 0.0
    %10897 = vmatpush2.msra.mxu0 0.0
    %10898 = vmatprep.subr.mxu0 0.0
    %10899 = vmatpush2.msra.mxu0 0.0
    %10900 = vmatprep.subr.mxu0 0.0
    %10901 = vmatpush2.msra.mxu0 0.0
    %10902 = vmatprep.subr.mxu0 0.0
    %10903 = vmatpush2.msra.mxu0 0.0
    %10904 = vmatprep.subr.mxu0 0.0
    %10905 = vmatpush2.msra.mxu0 0.0
    %10906 = vmatprep.subr.mxu0 0.0
    %10907 = vmatpush2.msra.mxu0 0.0
    %10908 = vmatprep.subr.mxu0 0.0
    %10909 = vmatpush2.msra.mxu0 0.0
    %10910 = vmatprep.subr.mxu0 0.0
    %10911 = vmatpush2.msra.mxu0 0.0
    %10912 = vmatprep.subr.mxu0 0.0
    %10913 = vmatpush2.msra.mxu0 0.0
    %10914 = vmatprep.subr.mxu0 0.0
    %10915 = vmatpush2.msra.mxu0 0.0
    %10916 = vmatprep.mubr.f32.mxu0 0.0
    %10917 = vmatmul.mubr.f32.gmra.mxu0 %v10843
    %v10918 = vpop.f32.mrf.mxu0
    %v10919 = vadd.f32 %v10841, %v10918
    %v10920 = vpop.f32.mrf.mxu0
    %10921 = vmatprep.mubr.f32.mxu0 0.0
    %10922 = vmatmul.mubr.f32.gmra.mxu0 %v10846
    %v10923 = vpop.f32.mrf.mxu0
    %v10924 = vadd.f32 %v10841, %v10923
    %v10925 = vpop.f32.mrf.mxu0
    %10926 = vdwg.mxu0
    %v10928 = vsel %vm160, %v10919, 0
    %v10931 = vsel %vm160, %v10924, 0
    %v10934 = vsel %vm160, %v10832, 0
    %10936 = vmatprep.subr.mxu0 0.0
    %10937 = vmatpush1.xpose.msra.mxu0 0.0
    %10938 = vmatprep.subr.mxu0 0.0
    %10939 = vmatpush1.xpose.msra.mxu0 0.0
    %10940 = vmatprep.subr.mxu0 0.0
    %10941 = vmatpush1.xpose.msra.mxu0 0.0
    %10942 = vmatprep.subr.mxu0 0.0
    %10943 = vmatpush1.xpose.msra.mxu0 0.0
    %10944 = vmatprep.subr.mxu0 0.0
    %10945 = vmatpush1.xpose.msra.mxu0 0.0
    %10946 = vmatprep.subr.mxu0 0.0
    %10947 = vmatpush1.xpose.msra.mxu0 0.0
    %10948 = vmatprep.subr.mxu0 0.0
    %10949 = vmatpush1.xpose.msra.mxu0 0.0
    %10950 = vmatprep.subr.mxu0 0.0
    %10951 = vmatpush1.xpose.msra.mxu0 0.0
    %10952 = vmatprep.subr.mxu0 0.0
    %10953 = vmatpush1.xpose.msra.mxu0 0.0
    %10954 = vmatprep.subr.mxu0 0.0
    %10955 = vmatpush1.xpose.msra.mxu0 0.0
    %10956 = vmatprep.subr.mxu0 0.0
    %10957 = vmatpush1.xpose.msra.mxu0 0.0
    %10958 = vmatprep.subr.mxu0 0.0
    %10959 = vmatpush1.xpose.msra.mxu0 0.0
    %10960 = vmatprep.subr.mxu0 0.0
    %10961 = vmatpush1.xpose.msra.mxu0 0.0
    %10962 = vmatprep.subr.mxu0 0.0
    %10963 = vmatpush1.xpose.msra.mxu0 0.0
    %10964 = vmatprep.subr.mxu0 0.0
    %10965 = vmatpush1.xpose.msra.mxu0 0.0
    %10966 = vmatprep.subr.mxu0 0.0
    %10967 = vmatpush1.xpose.msra.mxu0 %v10934
    %10968 = vmatprep.subr.mxu0 0.0
    %10969 = vmatpush2.xpose.msra.mxu0 0.0
    %10970 = vmatprep.subr.mxu0 0.0
    %10971 = vmatpush2.xpose.msra.mxu0 0.0
    %10972 = vmatprep.subr.mxu0 0.0
    %10973 = vmatpush2.xpose.msra.mxu0 0.0
    %10974 = vmatprep.subr.mxu0 0.0
    %10975 = vmatpush2.xpose.msra.mxu0 0.0
    %10976 = vmatprep.subr.mxu0 0.0
    %10977 = vmatpush2.xpose.msra.mxu0 0.0
    %10978 = vmatprep.subr.mxu0 0.0
    %10979 = vmatpush2.xpose.msra.mxu0 0.0
    %10980 = vmatprep.subr.mxu0 0.0
    %10981 = vmatpush2.xpose.msra.mxu0 0.0
    %10982 = vmatprep.subr.mxu0 0.0
    %10983 = vmatpush2.xpose.msra.mxu0 0.0
    %10984 = vmatprep.subr.mxu0 0.0
    %10985 = vmatpush2.xpose.msra.mxu0 0.0
    %10986 = vmatprep.subr.mxu0 0.0
    %10987 = vmatpush2.xpose.msra.mxu0 0.0
    %10988 = vmatprep.subr.mxu0 0.0
    %10989 = vmatpush2.xpose.msra.mxu0 0.0
    %10990 = vmatprep.subr.mxu0 0.0
    %10991 = vmatpush2.xpose.msra.mxu0 0.0
    %10992 = vmatprep.subr.mxu0 0.0
    %10993 = vmatpush2.xpose.msra.mxu0 0.0
    %10994 = vmatprep.subr.mxu0 0.0
    %10995 = vmatpush2.xpose.msra.mxu0 0.0
    %10996 = vmatprep.subr.mxu0 0.0
    %10997 = vmatpush2.xpose.msra.mxu0 0.0
    %10998 = vmatprep.subr.mxu0 0.0
    %10999 = vmatpush2.xpose.msra.mxu0 0.0
    %11000 = vmatprep.mubr.f32.mxu0 0.0
    %11001 = vmatmul.mubr.f32.gmra.mxu0 %v10928
    %v11002 = vpop.f32.mrf.mxu0
    %v11003 = vadd.f32 0.0, %v11002
    %v11004 = vpop.f32.mrf.mxu0
    %11005 = vmatprep.mubr.f32.mxu0 0.0
    %11006 = vmatmul.mubr.f32.gmra.mxu0 %v10931
    %v11007 = vpop.f32.mrf.mxu0
    %v11008 = vadd.f32 0.0, %v11007
    %v11009 = vpop.f32.mrf.mxu0
    %11010 = vdwg.mxu0
    %v11011 = vmul.f32 %v11003, %v11003
    %v11012 = vmul.f32 %v11008, %v11008
    %v11013 = vsel %vm160, %v11011, 0.0
    %v11014 = vsel %vm160, %v11012, 0.0
    %v11015 = vadd.f32 %v11013, %v11014
    %11016 = vadd.xlane.f32.xlu0 %v11015
    %v11017 = vpop.xlane.xlu0 %11016
    %v11018 = vrot.slane %v11017, 4
    %v11019 = vadd.f32 %v11017, %v11018
    %v11020 = vrot.slane %v11019, 2
    %v11021 = vadd.f32 %v11019, %v11020
    %v11022 = vrot.slane %v11021, 1
    %v11023 = vadd.f32 %v11021, %v11022
    %s11024 = vtos %v11023
    %v11026 = vsel %vm160, %v27, 0
    %11028 = vmatprep.subr.mxu0 0.0
    %11029 = vmatpush1.xpose.msra.mxu0 0.0
    %11030 = vmatprep.subr.mxu0 0.0
    %11031 = vmatpush1.xpose.msra.mxu0 0.0
    %11032 = vmatprep.subr.mxu0 0.0
    %11033 = vmatpush1.xpose.msra.mxu0 0.0
    %11034 = vmatprep.subr.mxu0 0.0
    %11035 = vmatpush1.xpose.msra.mxu0 0.0
    %11036 = vmatprep.subr.mxu0 0.0
    %11037 = vmatpush1.xpose.msra.mxu0 0.0
    %11038 = vmatprep.subr.mxu0 0.0
    %11039 = vmatpush1.xpose.msra.mxu0 0.0
    %11040 = vmatprep.subr.mxu0 0.0
    %11041 = vmatpush1.xpose.msra.mxu0 0.0
    %11042 = vmatprep.subr.mxu0 0.0
    %11043 = vmatpush1.xpose.msra.mxu0 0.0
    %11044 = vmatprep.subr.mxu0 0.0
    %11045 = vmatpush1.xpose.msra.mxu0 0.0
    %11046 = vmatprep.subr.mxu0 0.0
    %11047 = vmatpush1.xpose.msra.mxu0 0.0
    %11048 = vmatprep.subr.mxu0 0.0
    %11049 = vmatpush1.xpose.msra.mxu0 0.0
    %11050 = vmatprep.subr.mxu0 0.0
    %11051 = vmatpush1.xpose.msra.mxu0 0.0
    %11052 = vmatprep.subr.mxu0 0.0
    %11053 = vmatpush1.xpose.msra.mxu0 0.0
    %11054 = vmatprep.subr.mxu0 0.0
    %11055 = vmatpush1.xpose.msra.mxu0 0.0
    %11056 = vmatprep.subr.mxu0 0.0
    %11057 = vmatpush1.xpose.msra.mxu0 0.0
    %11058 = vmatprep.subr.mxu0 0.0
    %11059 = vmatpush1.xpose.msra.mxu0 %v11026
    %11060 = vmatprep.subr.mxu0 0.0
    %11061 = vmatpush2.xpose.msra.mxu0 0.0
    %11062 = vmatprep.subr.mxu0 0.0
    %11063 = vmatpush2.xpose.msra.mxu0 0.0
    %11064 = vmatprep.subr.mxu0 0.0
    %11065 = vmatpush2.xpose.msra.mxu0 0.0
    %11066 = vmatprep.subr.mxu0 0.0
    %11067 = vmatpush2.xpose.msra.mxu0 0.0
    %11068 = vmatprep.subr.mxu0 0.0
    %11069 = vmatpush2.xpose.msra.mxu0 0.0
    %11070 = vmatprep.subr.mxu0 0.0
    %11071 = vmatpush2.xpose.msra.mxu0 0.0
    %11072 = vmatprep.subr.mxu0 0.0
    %11073 = vmatpush2.xpose.msra.mxu0 0.0
    %11074 = vmatprep.subr.mxu0 0.0
    %11075 = vmatpush2.xpose.msra.mxu0 0.0
    %11076 = vmatprep.subr.mxu0 0.0
    %11077 = vmatpush2.xpose.msra.mxu0 0.0
    %11078 = vmatprep.subr.mxu0 0.0
    %11079 = vmatpush2.xpose.msra.mxu0 0.0
    %11080 = vmatprep.subr.mxu0 0.0
    %11081 = vmatpush2.xpose.msra.mxu0 0.0
    %11082 = vmatprep.subr.mxu0 0.0
    %11083 = vmatpush2.xpose.msra.mxu0 0.0
    %11084 = vmatprep.subr.mxu0 0.0
    %11085 = vmatpush2.xpose.msra.mxu0 0.0
    %11086 = vmatprep.subr.mxu0 0.0
    %11087 = vmatpush2.xpose.msra.mxu0 0.0
    %11088 = vmatprep.subr.mxu0 0.0
    %11089 = vmatpush2.xpose.msra.mxu0 0.0
    %11090 = vmatprep.subr.mxu0 0.0
    %11091 = vmatpush2.xpose.msra.mxu0 0.0
    %11092 = vmatprep.mubr.f32.mxu0 0.0
    %11093 = vmatmul.mubr.f32.gmra.mxu0 %v11026
    %v11094 = vpop.f32.mrf.mxu0
    %v11095 = vadd.f32 0.0, %v11094
    %v11096 = vpop.f32.mrf.mxu0
    %11097 = vdwg.mxu0
    %v11098 = vsub.f32 %v11095, %v34
    %v11099 = vmul.f32 %v11098, %v11098
    %v11100 = vsel %vm160, %v11099, 0.0
    %11101 = vadd.xlane.f32.xlu0 %v11100
    %v11102 = vpop.xlane.xlu0 %11101
    %v11103 = vrot.slane %v11102, 4
    %v11104 = vadd.f32 %v11102, %v11103
    %v11105 = vrot.slane %v11104, 2
    %v11106 = vadd.f32 %v11104, %v11105
    %v11107 = vrot.slane %v11106, 1
    %v11108 = vadd.f32 %v11106, %v11107
    %s11109 = vtos %v11108
    %s11110 = ssub.f32 1.0, %s143
    %s11111 = smul.f32 %s11110, %s11024
    %s11112 = sadd.f32 %s11111, %s11109
    %s11113 = scalar_lea.smem [#allocation2], 0
    %11114 = sst [smem:[%s11113]] %s11112
    %s11115 = smul.f32 %s11110, %s158
    %s11116 = scalar_lea.smem [#allocation2], 1
    %11117 = sst [smem:[%s11116]] %s11115
    // Predicated region
    $region22: #{tpu_custom_call.1} parent=1 // pred_check
      _
    $region23: #{tpu_custom_call.1} parent=1 // pred_check_branch
      %11119 = sbr.rel (0) target = $region25
    $region24: #{tpu_custom_call.1} parent=1 // pred_region
      %s11121 = ssub.s32 16, 16
      %11122 = vsyncadd [#allocation3], %s11121
      %11125 = dma.smem_to_hbm [#allocation2], 16, %s5, [#allocation3]
    $region25: #{tpu_custom_call.1} parent=1 // pred_fallthru
      _
    // Predicated region
    $region26: #{tpu_custom_call.1} parent=1 // pred_check
      _
    $region27: #{tpu_custom_call.1} parent=1 // pred_check_branch
      %11127 = sbr.rel (0) target = $region29
    $region28: #{tpu_custom_call.1} parent=1 // pred_region
      %11128 = dma.done [#allocation3], 16
    $region29: #{tpu_custom_call.1} parent=1 // pred_fallthru
      _
    %11129 = sfence
    %11130 = vsyncpa [#allocation3], 1

</llo_original>
